<compile_context>
chip_gen: v6e
topology: v6e:2x2x1
jax: 0.10.0
libtpu: 0.0.40
codegen_flags: <defaults>
</compile_context>

<pallas_src>
import functools

import jax
import jax.numpy as jnp
import numpy as np
from jax.experimental import pallas as pl
from jax.experimental.pallas import tpu as pltpu

EXPANSION = 4
BN_EPS = 1e-5
LANE = 128                       # channel (lane) padding granularity
ROW_TILE = 512                   # row-tile target (multiple of 8)
VMEM_LIMIT_BYTES = 64 * 1024 * 1024   # above the 16/32 MiB scoped defaults


# ----------------------------------------------------------------------------
# small helpers
# ----------------------------------------------------------------------------
def _round_up(x, m):
    return (x + m - 1) // m * m


def _row_tiling(rows, target=ROW_TILE):
    """Return (tile, padded_rows).

    tile is a multiple of 8 and <= max(target, round_up(rows, 8)).  If no exact
    divisor near the target exists, rows are padded up to a tile multiple
    (padded rows are masked out of the BN statistics by the kernels) instead of
    falling back to one giant block.
    """
    if rows <= target:
        t = _round_up(rows, 8)
        return t, t
    if rows % target == 0:
        return target, rows
    for cand in range(target, target // 2 - 1, -8):   # near-target exact divisor
        if rows % cand == 0:
            return cand, rows
    return target, _round_up(rows, target)


def _cp(dimension_semantics):
    return pltpu.CompilerParams(dimension_semantics=dimension_semantics,
                                vmem_limit_bytes=VMEM_LIMIT_BYTES)


def _pad2(w, r, c):
    return jnp.pad(w, ((0, r - w.shape[0]), (0, c - w.shape[1])))


def _padv(v, c):
    return jnp.pad(v, (0, c - v.shape[0])).reshape(1, c).astype(jnp.float32)


def _bn_scale_shift(col_sum, col_sumsq, count, gamma, beta):
    """Fold BN batch stats + affine into a per-channel (scale, shift) pair."""
    mean = col_sum / count
    var = jnp.maximum(col_sumsq / count - mean * mean, 0.0)
    inv = jax.lax.rsqrt(var + BN_EPS)
    scale = gamma * inv
    shift = beta - mean * scale
    return scale, shift


# ----------------------------------------------------------------------------
# Pallas kernels
# ----------------------------------------------------------------------------
def _mm_stats_kernel(x_ref, w_ref, scale_ref, shift_ref,
                     y_ref, sum_ref, ssq_ref,
                     *, fuse_bn_relu, rows_true, rows_pad):
    """y = [relu(x*scale+shift)] @ w ; emit per-tile partial channel sum/sumsq."""
    x = x_ref[...]
    if fuse_bn_relu:
        # normalize + ReLU of the producer stage, fused so its pre-BN slab is
        # read from HBM exactly once (and may be stored in bf16).
        x = jnp.maximum(x.astype(jnp.float32) * scale_ref[...] + shift_ref[...],
                        0.0)
        if rows_pad != rows_true:
            # zero the wrapper's row padding so it cannot pollute the stats
            # (only compiled when padding actually exists).
            tm = x.shape[0]
            rid = (pl.program_id(0) * tm
                   + jax.lax.broadcasted_iota(jnp.int32, x.shape, 0))
            x = jnp.where(rid < rows_true, x, 0.0)

    y = jnp.dot(x.astype(w_ref.dtype), w_ref[...],
                preferred_element_type=jnp.float32)
    y_ref[...] = y.astype(y_ref.dtype)

    # Per-tile partials (reduced in f32 by the wrapper) instead of a revisited
    # accumulator: keeps this grid axis 'parallel' (megacore on v7x) and is
    # better conditioned than one running f32 accumulator.
    sum_ref[...] = jnp.sum(y, axis=0, keepdims=True)[None]
    ssq_ref[...] = jnp.sum(y * y, axis=0, keepdims=True)[None]


def _conv3x3_bn_stats_kernel(y1_ref, w_ref, scale_ref, shift_ref,
                             y_ref, sum_ref, ssq_ref, xpad_ref,
                             *, stride, ho, wo):
    """3x3 / pad=1 conv of relu(bn1(y1)) as 9 shifted matmuls (no HBM im2col).

    The 1-pixel zero halo is built in a per-invocation VMEM scratch: the
    scratch is zero-filled (bulk aligned store, could be narrowed to the halo
    ring) and the bn1+relu'd interior is written once, so the largest
    intermediate never takes an extra HBM pad round trip.  The scratch is fully
    rewritten every grid step, so the 'parallel' grid sharding is safe.
    """
    _, h, w, c = y1_ref.shape
    cout = w_ref.shape[3]

    # zero halo container, then fused bn1 + relu of conv1's pre-BN output
    xpad_ref[...] = jnp.zeros_like(xpad_ref)
    o1 = jnp.maximum(
        y1_ref[0].astype(jnp.float32) * scale_ref[...] + shift_ref[...], 0.0)
    xpad_ref[pl.ds(1, h), pl.ds(1, w), :] = o1

    xp = xpad_ref[...]
    acc = jnp.zeros((ho * wo, cout), jnp.float32)
    for dh in range(3):
        for dw in range(3):
            xs = jax.lax.slice(
                xp, (dh, dw, 0),
                (dh + (ho - 1) * stride + 1, dw + (wo - 1) * stride + 1, c),
                (stride, stride, 1))
            acc = acc + jnp.dot(xs.reshape(ho * wo, c).astype(w_ref.dtype),
                                w_ref[dh, dw],
                                preferred_element_type=jnp.float32)
    y_ref[...] = acc.astype(y_ref.dtype)

    # per-image partial stats, reduced in the wrapper
    sum_ref[...] = jnp.sum(acc, axis=0, keepdims=True)[None]
    ssq_ref[...] = jnp.sum(acc * acc, axis=0, keepdims=True)[None]


def _bn_add_relu_kernel(y_ref, sc3_ref, sh3_ref, ys_ref, scs_ref, shs_ref, o_ref):
    """out = relu(bn3(y3) + bn_s(shortcut))  (pure elementwise, row-tiled)."""
    main = y_ref[...].astype(jnp.float32) * sc3_ref[...] + sh3_ref[...]
    shortcut = ys_ref[...].astype(jnp.float32) * scs_ref[...] + shs_ref[...]
    o_ref[...] = jnp.maximum(main + shortcut, 0.0)


# ----------------------------------------------------------------------------
# pallas_call wrappers
# ----------------------------------------------------------------------------
def matmul_stats(x2d, w_p, scale, shift, *, fuse_bn_relu, out_dtype):
    rows, cin_p = x2d.shape
    cout_p = w_p.shape[1]
    tm, rows_pad = _row_tiling(rows)
    if rows_pad != rows:
        x2d = jnp.pad(x2d, ((0, rows_pad - rows), (0, 0)))
    n_tiles = rows_pad // tm

    row_map = lambda i: (i, 0)
    rep_map = lambda i: (0, 0)
    stat_map = lambda i: (i, 0, 0)

    y, psum, pssq = pl.pallas_call(
        functools.partial(_mm_stats_kernel, fuse_bn_relu=fuse_bn_relu,
                          rows_true=rows, rows_pad=rows_pad),
        grid=(n_tiles,),
        in_specs=[
            pl.BlockSpec((tm, cin_p), row_map),        # activation row tile
            pl.BlockSpec((cin_p, cout_p), rep_map),    # weight (stays resident)
            pl.BlockSpec((1, cin_p), rep_map),         # producer-stage BN scale
            pl.BlockSpec((1, cin_p), rep_map),         # producer-stage BN shift
        ],
        out_specs=[
            pl.BlockSpec((tm, cout_p), row_map),       # pre-BN matmul output
            pl.BlockSpec((1, 1, cout_p), stat_map),    # per-tile partial sum
            pl.BlockSpec((1, 1, cout_p), stat_map),    # per-tile partial sumsq
        ],
        out_shape=(
            jax.ShapeDtypeStruct((rows_pad, cout_p), out_dtype),
            jax.ShapeDtypeStruct((n_tiles, 1, cout_p), jnp.float32),
            jax.ShapeDtypeStruct((n_tiles, 1, cout_p), jnp.float32),
        ),
        compiler_params=_cp(("parallel",)),
    )(x2d, w_p, scale, shift)

    if rows_pad != rows:
        y = y[:rows]
    return y, jnp.sum(psum, axis=0), jnp.sum(pssq, axis=0)


def conv3x3_bn_stats(y1_nhwc, w2_p, scale, shift, *, stride, out_dtype):
    n, h, w, c = y1_nhwc.shape
    ho = (h - 1) // stride + 1
    wo = (w - 1) // stride + 1
    cout = w2_p.shape[3]
    rep_map = lambda i: (0, 0)

    y, psum, pssq = pl.pallas_call(
        functools.partial(_conv3x3_bn_stats_kernel, stride=stride, ho=ho, wo=wo),
        grid=(n,),
        in_specs=[
            pl.BlockSpec((1, h, w, c), lambda i: (i, 0, 0, 0)),   # unpadded y1
            pl.BlockSpec((3, 3, c, cout), lambda i: (0, 0, 0, 0)),
            pl.BlockSpec((1, c), rep_map),
            pl.BlockSpec((1, c), rep_map),
        ],
        out_specs=[
            pl.BlockSpec((ho * wo, cout), lambda i: (i, 0)),
            pl.BlockSpec((1, 1, cout), lambda i: (i, 0, 0)),
            pl.BlockSpec((1, 1, cout), lambda i: (i, 0, 0)),
        ],
        out_shape=(
            jax.ShapeDtypeStruct((n * ho * wo, cout), out_dtype),
            jax.ShapeDtypeStruct((n, 1, cout), jnp.float32),
            jax.ShapeDtypeStruct((n, 1, cout), jnp.float32),
        ),
        scratch_shapes=[pltpu.VMEM((h + 2, w + 2, c), jnp.float32)],  # halo buf
        compiler_params=_cp(("parallel",)),
    )(y1_nhwc, w2_p, scale, shift)

    return y, jnp.sum(psum, axis=0), jnp.sum(pssq, axis=0)


def bn_add_relu(y3, scale3, shift3, ysc, scale_s, shift_s):
    rows, c = y3.shape
    tm, rows_pad = _row_tiling(rows)
    if rows_pad != rows:
        y3 = jnp.pad(y3, ((0, rows_pad - rows), (0, 0)))
        ysc = jnp.pad(ysc, ((0, rows_pad - rows), (0, 0)))
    row_map = lambda i: (i, 0)
    rep_map = lambda i: (0, 0)

    out = pl.pallas_call(
        _bn_add_relu_kernel,
        grid=(rows_pad // tm,),
        in_specs=[
            pl.BlockSpec((tm, c), row_map),
            pl.BlockSpec((1, c), rep_map),
            pl.BlockSpec((1, c), rep_map),
            pl.BlockSpec((tm, c), row_map),
            pl.BlockSpec((1, c), rep_map),
            pl.BlockSpec((1, c), rep_map),
        ],
        out_specs=pl.BlockSpec((tm, c), row_map),
        out_shape=jax.ShapeDtypeStruct((rows_pad, c), jnp.float32),
        compiler_params=_cp(("parallel",)),
    )(y3, scale3, shift3, ysc, scale_s, shift_s)
    return out[:rows] if rows_pad != rows else out


# ----------------------------------------------------------------------------
# full forward pass
# ----------------------------------------------------------------------------
def init_bottleneck_params(key, in_planes, planes, stride):
    out_planes = EXPANSION * planes
    ks = jax.random.split(key, 12)
    p = {
        # conv1 1x1 (Cin -> planes), weights laid out (Cin, Cout)
        "w1": 0.2 * jax.random.normal(ks[0], (in_planes, planes), jnp.float32),
        "g1": 1.0 + 0.1 * jax.random.normal(ks[1], (planes,), jnp.float32),
        "b1": 0.1 * jax.random.normal(ks[2], (planes,), jnp.float32),
        # conv2 3x3 (planes -> planes), weights laid out (kh, kw, Cin, Cout)
        "w2": 0.2 * jax.random.normal(ks[3], (3, 3, planes, planes), jnp.float32),
        "g2": 1.0 + 0.1 * jax.random.normal(ks[4], (planes,), jnp.float32),
        "b2": 0.1 * jax.random.normal(ks[5], (planes,), jnp.float32),
        # conv3 1x1 (planes -> 4*planes)
        "w3": 0.2 * jax.random.normal(ks[6], (planes, out_planes), jnp.float32),
        "g3": 1.0 + 0.1 * jax.random.normal(ks[7], (out_planes,), jnp.float32),
        "b3": 0.1 * jax.random.normal(ks[8], (out_planes,), jnp.float32),
    }
    if stride != 1 or in_planes != out_planes:
        p["ws"] = 0.2 * jax.random.normal(ks[9], (in_planes, out_planes), jnp.float32)
        p["gs"] = 1.0 + 0.1 * jax.random.normal(ks[10], (out_planes,), jnp.float32)
        p["bs"] = 0.1 * jax.random.normal(ks[11], (out_planes,), jnp.float32)
    return p


def bottleneck_forward(params, x_nchw, stride, matmul_dtype=jnp.bfloat16):
    n, cin, h, w = x_nchw.shape
    planes = params["w1"].shape[1]
    out_planes = params["w3"].shape[1]
    cin_p = _round_up(cin, LANE)
    p_p = _round_up(planes, LANE)
    o_p = _round_up(out_planes, LANE)
    inter_dtype = matmul_dtype   # pre-BN slabs stored at MXU precision (bf16)

    # lane-dense (128-padded) parameter layout; a real model would pre-pad once.
    w1 = _pad2(params["w1"], cin_p, p_p).astype(matmul_dtype)
    w2 = jnp.pad(params["w2"],
                 ((0, 0), (0, 0), (0, p_p - planes), (0, p_p - planes))
                 ).astype(matmul_dtype)
    w3 = _pad2(params["w3"], p_p, o_p).astype(matmul_dtype)
    g1, b1 = _padv(params["g1"], p_p), _padv(params["b1"], p_p)
    g2, b2 = _padv(params["g2"], p_p), _padv(params["b2"], p_p)
    g3, b3 = _padv(params["g3"], o_p), _padv(params["b3"], o_p)

    # TODO(synk): keep activations NHWC end-to-end across blocks so these
    # NCHW<->NHWC boundary transposes disappear from the per-block cost.
    x_nhwc = jnp.transpose(x_nchw, (0, 2, 3, 1))
    rows0 = n * h * w
    x2d = jnp.pad(x_nhwc.reshape(rows0, cin), ((0, 0), (0, cin_p - cin)))

    ones = jnp.ones((1, cin_p), jnp.float32)
    zeros = jnp.zeros((1, cin_p), jnp.float32)

    # stage 1: conv1 (1x1) -> pre-BN y1 (stored at matmul precision) + stats
    y1, s1, q1 = matmul_stats(x2d, w1, ones, zeros,
                              fuse_bn_relu=False, out_dtype=inter_dtype)
    scale1, shift1 = _bn_scale_shift(s1, q1, rows0, g1, b1)

    # stage 2: conv2 (3x3, stride, pad=1) with bn1+relu fused in-kernel; the
    # zero halo is built in VMEM scratch (no wrapper-side HBM pad round trip).
    y2, s2, q2 = conv3x3_bn_stats(y1.reshape(n, h, w, p_p), w2, scale1, shift1,
                                  stride=stride, out_dtype=inter_dtype)
    ho = (h - 1) // stride + 1
    wo = (w - 1) // stride + 1
    rows2 = n * ho * wo
    scale2, shift2 = _bn_scale_shift(s2, q2, rows2, g2, b2)

    # stage 3a: conv3 (1x1) with bn2+relu fused in-kernel
    y3, s3, q3 = matmul_stats(y2, w3, scale2, shift2,
                              fuse_bn_relu=True, out_dtype=inter_dtype)
    scale3, shift3 = _bn_scale_shift(s3, q3, rows2, g3, b3)

    # shortcut branch
    if "ws" in params:
        ws = _pad2(params["ws"], cin_p, o_p).astype(matmul_dtype)
        gs, bs = _padv(params["gs"], o_p), _padv(params["bs"], o_p)
        xs = x_nhwc[:, ::stride, ::stride, :]
        xs2d = jnp.pad(xs.reshape(rows2, cin), ((0, 0), (0, cin_p - cin)))
        ysc, ss, qs = matmul_stats(xs2d, ws, ones, zeros,
                                   fuse_bn_relu=False, out_dtype=inter_dtype)
        scale_s, shift_s = _bn_scale_shift(ss, qs, rows2, gs, bs)
    else:
        # identity shortcut (stride == 1 and in_planes == expansion*planes)
        ysc = x2d
        scale_s = jnp.ones((1, o_p), jnp.float32)
        shift_s = jnp.zeros((1, o_p), jnp.float32)

    # stage 3b: bn3 + shortcut-bn + add + relu (row-tiled elementwise kernel)
    out2d = bn_add_relu(y3, scale3, shift3, ysc, scale_s, shift_s)

    # TODO(synk): emit bf16/NHWC here and drop this epilogue slice+transpose
    # when chaining blocks.
    out = out2d[:, :out_planes].reshape(n, ho, wo, out_planes)
    return jnp.transpose(out, (0, 3, 1, 2))


# ----------------------------------------------------------------------------
# Pure-JAX reference (bf16/f32 MXU operands, f32 accumulation and BN stats)
# ----------------------------------------------------------------------------
def _mm_ref(x, w, dt):
    return jnp.dot(x.astype(dt), w.astype(dt), preferred_element_type=jnp.float32)


def _bn_ref(y, gamma, beta):
    cnt = y.shape[0]
    s = jnp.sum(y, axis=0, keepdims=True)
    q = jnp.sum(y * y, axis=0, keepdims=True)
    scale, shift = _bn_scale_shift(s, q, cnt, gamma[None, :], beta[None, :])
    return y * scale + shift


def im2col_3x3(x_nhwc, stride):
    n, h, w, c = x_nhwc.shape
    xp = jnp.pad(x_nhwc, ((0, 0), (1, 1), (1, 1), (0, 0)))
    ho = (h - 1) // stride + 1
    wo = (w - 1) // stride + 1
    cols = []
    for dh in range(3):
        for dw in range(3):
            cols.append(xp[:, dh:dh + (ho - 1) * stride + 1:stride,
                           dw:dw + (wo - 1) * stride + 1:stride, :])
    patches = jnp.concatenate(cols, axis=-1)
    return patches.reshape(n * ho * wo, 9 * c), ho, wo


def bottleneck_ref(params, x_nchw, stride, matmul_dtype=jnp.bfloat16):
    n, cin, h, w = x_nchw.shape
    planes = params["w1"].shape[1]
    out_planes = params["w3"].shape[1]
    x = jnp.transpose(x_nchw, (0, 2, 3, 1))
    x2d = x.reshape(n * h * w, cin)

    o1 = jnp.maximum(_bn_ref(_mm_ref(x2d, params["w1"], matmul_dtype),
                             params["g1"], params["b1"]), 0.0)
    patches, ho, wo = im2col_3x3(o1.reshape(n, h, w, planes), stride)
    o2 = jnp.maximum(
        _bn_ref(_mm_ref(patches, params["w2"].reshape(9 * planes, planes),
                        matmul_dtype),
                params["g2"], params["b2"]), 0.0)
    o3 = _bn_ref(_mm_ref(o2, params["w3"], matmul_dtype),
                 params["g3"], params["b3"])
    if "ws" in params:
        xs = x[:, ::stride, ::stride, :].reshape(n * ho * wo, cin)
        sc = _bn_ref(_mm_ref(xs, params["ws"], matmul_dtype),
                     params["gs"], params["bs"])
    else:
        sc = x2d
    out = jnp.maximum(o3 + sc, 0.0)
    return jnp.transpose(out.reshape(n, ho, wo, out_planes), (0, 3, 1, 2))


# ----------------------------------------------------------------------------
if __name__ == "__main__":
    key = jax.random.PRNGKey(0)
    N, H, W = 2, 16, 16

    fwd = jax.jit(bottleneck_forward, static_argnums=(2, 3))

    # (in_planes, planes, stride, matmul_dtype, tolerance)
    # bf16 cases use a looser tolerance: the pre-BN intermediates are now also
    # *stored* in bf16 (reference keeps them f32), adding ~0.4% rounding per
    # stage across three BN stages.
    cases = [
        (4, 4, 1, jnp.float32, 1e-3),    # conv shortcut, f32 path (tight check)
        (4, 4, 1, jnp.bfloat16, 5e-2),   # conv shortcut, bf16 MXU + bf16 slabs
        (16, 4, 1, jnp.bfloat16, 5e-2),  # identity shortcut (in == 4*planes)
    ]
    for in_planes, planes, stride, mm_dt, tol in cases:
        key, kx, kp = jax.random.split(key, 3)
        x = jax.random.normal(kx, (N, in_planes, H, W), jnp.float32)
        params = init_bottleneck_params(kp, in_planes, planes, stride)

        out = jax.block_until_ready(fwd(params, x, stride, mm_dt))
        ref = jax.block_until_ready(bottleneck_ref(params, x, stride, mm_dt))

        assert out.shape == ref.shape and out.shape[1] == EXPANSION * planes, out.shape
        np.testing.assert_allclose(np.asarray(out), np.asarray(ref),
                                   rtol=tol, atol=tol)

    print("KERNEL_OK")
</pallas_src>

<mosaic_0001>
module attributes {stable_mosaic.version = 11 : i64} {
  func.func @_mm_stats_kernel(%arg0: i32, %arg1: memref<512x128xf32, #tpu.memory_space<vmem>>, %arg2: memref<128x128xf32, #tpu.memory_space<vmem>>, %arg3: memref<1x128xf32, #tpu.memory_space<vmem>>, %arg4: memref<1x128xf32, #tpu.memory_space<vmem>>, %arg5: memref<512x128xf32, #tpu.memory_space<vmem>>, %arg6: memref<1x1x128xf32, #tpu.memory_space<vmem>>, %arg7: memref<1x1x128xf32, #tpu.memory_space<vmem>>) attributes {dimension_semantics = [#tpu.dimension_semantics<parallel>], iteration_bounds = array<i64: 1>, scalar_prefetch = 0 : i64, scratch_operands = 0 : i64, tpu.core_type = #tpu.core_type<tc>, window_params = [{transform_indices = @transform_0, window_bounds = array<i64: 512, 128>}, {pipeline_mode = #tpu.pipeline_mode<synchronous>, transform_indices = @transform_1, window_bounds = array<i64: 128, 128>}, {pipeline_mode = #tpu.pipeline_mode<synchronous>, transform_indices = @transform_2, window_bounds = array<i64: 1, 128>}, {pipeline_mode = #tpu.pipeline_mode<synchronous>, transform_indices = @transform_3, window_bounds = array<i64: 1, 128>}, {transform_indices = @transform_4, window_bounds = array<i64: 512, 128>}, {transform_indices = @transform_5, window_bounds = array<i64: 1, 1, 128>}, {transform_indices = @transform_6, window_bounds = array<i64: 1, 1, 128>}]} {
    %c0 = arith.constant 0 : index
    %c0_0 = arith.constant 0 : index
    %0 = vector.load %arg1[%c0, %c0_0] : memref<512x128xf32, #tpu.memory_space<vmem>>, vector<512x128xf32>
    %c0_1 = arith.constant 0 : index
    %c0_2 = arith.constant 0 : index
    %1 = vector.load %arg2[%c0_1, %c0_2] : memref<128x128xf32, #tpu.memory_space<vmem>>, vector<128x128xf32>
    %cst = arith.constant dense<0.000000e+00> : vector<512x128xf32>
    %2 = tpu.matmul %0, %1, %cst {dimension_numbers = #tpu.dot_dimension_numbers<[1], [0], [0], [1], [0, 0, 1, 1], [], []>} : vector<512x128xf32>, vector<128x128xf32>, vector<512x128xf32> -> vector<512x128xf32>
    %c0_3 = arith.constant 0 : index
    %c0_4 = arith.constant 0 : index
    %3 = vector.load %arg5[%c0_3, %c0_4] : memref<512x128xf32, #tpu.memory_space<vmem>>, vector<512x128xf32>
    tpu.vector_store %arg5[%c0_3, %c0_4], %2 {strides = array<i32>} : memref<512x128xf32, #tpu.memory_space<vmem>>, vector<512x128xf32>,
    %cst_5 = arith.constant dense<0.000000e+00> : vector<128xf32>
    %4 = vector.multi_reduction <add>, %2, %cst_5 [0] : vector<512x128xf32> to vector<128xf32>
    %5 = vector.shape_cast %4 : vector<128xf32> to vector<1x128xf32>
    %6 = vector.shape_cast %5 : vector<1x128xf32> to vector<1x1x128xf32>
    %c0_6 = arith.constant 0 : index
    %c0_7 = arith.constant 0 : index
    %c0_8 = arith.constant 0 : index
    %7 = vector.load %arg6[%c0_6, %c0_7, %c0_8] : memref<1x1x128xf32, #tpu.memory_space<vmem>>, vector<1x1x128xf32>
    tpu.vector_store %arg6[%c0_6, %c0_7, %c0_8], %6 {strides = array<i32>} : memref<1x1x128xf32, #tpu.memory_space<vmem>>, vector<1x1x128xf32>,
    %8 = arith.mulf %2, %2 : vector<512x128xf32>
    %cst_9 = arith.constant dense<0.000000e+00> : vector<128xf32>
    %9 = vector.multi_reduction <add>, %8, %cst_9 [0] : vector<512x128xf32> to vector<128xf32>
    %10 = vector.shape_cast %9 : vector<128xf32> to vector<1x128xf32>
    %11 = vector.shape_cast %10 : vector<1x128xf32> to vector<1x1x128xf32>
    %c0_10 = arith.constant 0 : index
    %c0_11 = arith.constant 0 : index
    %c0_12 = arith.constant 0 : index
    %12 = vector.load %arg7[%c0_10, %c0_11, %c0_12] : memref<1x1x128xf32, #tpu.memory_space<vmem>>, vector<1x1x128xf32>
    tpu.vector_store %arg7[%c0_10, %c0_11, %c0_12], %11 {strides = array<i32>} : memref<1x1x128xf32, #tpu.memory_space<vmem>>, vector<1x1x128xf32>,
    return
  }
  func.func @transform_0(%arg0: i32) -> (i32, i32) {
    %c0_i32 = arith.constant 0 : i32
    %c0_i32_0 = arith.constant 0 : i32
    return %arg0, %c0_i32 : i32, i32
  }
  func.func @transform_1(%arg0: i32) -> (i32, i32) {
    %c0_i32 = arith.constant 0 : i32
    %c0_i32_0 = arith.constant 0 : i32
    %c0_i32_1 = arith.constant 0 : i32
    return %c0_i32, %c0_i32_0 : i32, i32
  }
  func.func @transform_2(%arg0: i32) -> (i32, i32) {
    %c0_i32 = arith.constant 0 : i32
    %c0_i32_0 = arith.constant 0 : i32
    %c0_i32_1 = arith.constant 0 : i32
    return %c0_i32, %c0_i32_0 : i32, i32
  }
  func.func @transform_3(%arg0: i32) -> (i32, i32) {
    %c0_i32 = arith.constant 0 : i32
    %c0_i32_0 = arith.constant 0 : i32
    %c0_i32_1 = arith.constant 0 : i32
    return %c0_i32, %c0_i32_0 : i32, i32
  }
  func.func @transform_4(%arg0: i32) -> (i32, i32) {
    %c0_i32 = arith.constant 0 : i32
    %c0_i32_0 = arith.constant 0 : i32
    return %arg0, %c0_i32 : i32, i32
  }
  func.func @transform_5(%arg0: i32) -> (i32, i32, i32) {
    %c0_i32 = arith.constant 0 : i32
    %c0_i32_0 = arith.constant 0 : i32
    %c0_i32_1 = arith.constant 0 : i32
    return %arg0, %c0_i32, %c0_i32_0 : i32, i32, i32
  }
  func.func @transform_6(%arg0: i32) -> (i32, i32, i32) {
    %c0_i32 = arith.constant 0 : i32
    %c0_i32_0 = arith.constant 0 : i32
    %c0_i32_1 = arith.constant 0 : i32
    return %arg0, %c0_i32, %c0_i32_0 : i32, i32, i32
  }
}

module attributes {stable_mosaic.version = 11 : i64} {
  func.func @_conv3x3_bn_stats_kernel(%arg0: i32, %arg1: memref<1x16x16x128xf32, #tpu.memory_space<vmem>>, %arg2: memref<3x3x128x128xf32, #tpu.memory_space<vmem>>, %arg3: memref<1x128xf32, #tpu.memory_space<vmem>>, %arg4: memref<1x128xf32, #tpu.memory_space<vmem>>, %arg5: memref<256x128xf32, #tpu.memory_space<vmem>>, %arg6: memref<1x1x128xf32, #tpu.memory_space<vmem>>, %arg7: memref<1x1x128xf32, #tpu.memory_space<vmem>>, %arg8: memref<18x18x128xf32, #tpu.memory_space<vmem>>) attributes {dimension_semantics = [#tpu.dimension_semantics<parallel>], iteration_bounds = array<i64: 2>, scalar_prefetch = 0 : i64, scratch_operands = 1 : i64, tpu.core_type = #tpu.core_type<tc>, window_params = [{transform_indices = @transform_0, window_bounds = array<i64: 1, 16, 16, 128>}, {pipeline_mode = #tpu.pipeline_mode<synchronous>, transform_indices = @transform_1, window_bounds = array<i64: 3, 3, 128, 128>}, {pipeline_mode = #tpu.pipeline_mode<synchronous>, transform_indices = @transform_2, window_bounds = array<i64: 1, 128>}, {pipeline_mode = #tpu.pipeline_mode<synchronous>, transform_indices = @transform_3, window_bounds = array<i64: 1, 128>}, {transform_indices = @transform_4, window_bounds = array<i64: 256, 128>}, {transform_indices = @transform_5, window_bounds = array<i64: 1, 1, 128>}, {transform_indices = @transform_6, window_bounds = array<i64: 1, 1, 128>}]} {
    %cst = arith.constant 0.000000e+00 : f32
    %0 = vector.broadcast %cst : f32 to vector<18x18x128xf32>
    %c0 = arith.constant 0 : index
    %c0_0 = arith.constant 0 : index
    %c0_1 = arith.constant 0 : index
    %1 = vector.load %arg8[%c0, %c0_0, %c0_1] : memref<18x18x128xf32, #tpu.memory_space<vmem>>, vector<18x18x128xf32>
    tpu.vector_store %arg8[%c0, %c0_0, %c0_1], %0 {strides = array<i32>} : memref<18x18x128xf32, #tpu.memory_space<vmem>>, vector<18x18x128xf32>,
    %c0_2 = arith.constant 0 : index
    %c0_3 = arith.constant 0 : index
    %c0_4 = arith.constant 0 : index
    %c0_5 = arith.constant 0 : index
    %2 = vector.load %arg1[%c0_2, %c0_3, %c0_4, %c0_5] : memref<1x16x16x128xf32, #tpu.memory_space<vmem>>, vector<1x16x16x128xf32>
    %3 = vector.shape_cast %2 : vector<1x16x16x128xf32> to vector<16x16x128xf32>
    %c0_6 = arith.constant 0 : index
    %c0_7 = arith.constant 0 : index
    %4 = vector.load %arg3[%c0_6, %c0_7] : memref<1x128xf32, #tpu.memory_space<vmem>>, vector<1x128xf32>
    %5 = vector.shape_cast %4 : vector<1x128xf32> to vector<1x1x128xf32>
    %6 = vector.broadcast %5 : vector<1x1x128xf32> to vector<16x16x128xf32>
    %7 = arith.mulf %3, %6 : vector<16x16x128xf32>
    %c0_8 = arith.constant 0 : index
    %c0_9 = arith.constant 0 : index
    %8 = vector.load %arg4[%c0_8, %c0_9] : memref<1x128xf32, #tpu.memory_space<vmem>>, vector<1x128xf32>
    %9 = vector.shape_cast %8 : vector<1x128xf32> to vector<1x1x128xf32>
    %10 = vector.broadcast %9 : vector<1x1x128xf32> to vector<16x16x128xf32>
    %11 = arith.addf %7, %10 : vector<16x16x128xf32>
    %cst_10 = arith.constant 0.000000e+00 : f32
    %12 = vector.broadcast %cst_10 : f32 to vector<16x16x128xf32>
    %13 = arith.maximumf %11, %12 : vector<16x16x128xf32>
    %c1 = arith.constant 1 : index
    %c1_11 = arith.constant 1 : index
    %c0_12 = arith.constant 0 : index
    %14 = vector.load %arg8[%c1, %c1_11, %c0_12] : memref<18x18x128xf32, #tpu.memory_space<vmem>>, vector<16x16x128xf32>
    tpu.vector_store %arg8[%c1, %c1_11, %c0_12], %13 {strides = array<i32>} : memref<18x18x128xf32, #tpu.memory_space<vmem>>, vector<16x16x128xf32>,
    %c0_13 = arith.constant 0 : index
    %c0_14 = arith.constant 0 : index
    %c0_15 = arith.constant 0 : index
    %15 = vector.load %arg8[%c0_13, %c0_14, %c0_15] : memref<18x18x128xf32, #tpu.memory_space<vmem>>, vector<18x18x128xf32>
    %cst_16 = arith.constant 0.000000e+00 : f32
    %16 = vector.broadcast %cst_16 : f32 to vector<256x128xf32>
    %17 = vector.extract_strided_slice %15 {offsets = [0, 0, 0], sizes = [16, 16, 128], strides = [1, 1, 1]} : vector<18x18x128xf32> to vector<16x16x128xf32>
    %18 = vector.shape_cast %17 : vector<16x16x128xf32> to vector<256x128xf32>
    %c0_17 = arith.constant 0 : index
    %c0_18 = arith.constant 0 : index
    %c0_19 = arith.constant 0 : index
    %c0_20 = arith.constant 0 : index
    %19 = vector.load %arg2[%c0_17, %c0_18, %c0_19, %c0_20] : memref<3x3x128x128xf32, #tpu.memory_space<vmem>>, vector<1x1x128x128xf32>
    %20 = vector.shape_cast %19 : vector<1x1x128x128xf32> to vector<128x128xf32>
    %cst_21 = arith.constant dense<0.000000e+00> : vector<256x128xf32>
    %21 = tpu.matmul %18, %20, %cst_21 {dimension_numbers = #tpu.dot_dimension_numbers<[1], [0], [0], [1], [0, 0, 1, 1], [], []>} : vector<256x128xf32>, vector<128x128xf32>, vector<256x128xf32> -> vector<256x128xf32>
    %22 = arith.addf %16, %21 : vector<256x128xf32>
    %23 = vector.extract_strided_slice %15 {offsets = [0, 1, 0], sizes = [16, 16, 128], strides = [1, 1, 1]} : vector<18x18x128xf32> to vector<16x16x128xf32>
    %24 = vector.shape_cast %23 : vector<16x16x128xf32> to vector<256x128xf32>
    %c0_22 = arith.constant 0 : index
    %c1_23 = arith.constant 1 : index
    %c0_24 = arith.constant 0 : index
    %c0_25 = arith.constant 0 : index
    %25 = vector.load %arg2[%c0_22, %c1_23, %c0_24, %c0_25] : memref<3x3x128x128xf32, #tpu.memory_space<vmem>>, vector<1x1x128x128xf32>
    %26 = vector.shape_cast %25 : vector<1x1x128x128xf32> to vector<128x128xf32>
    %cst_26 = arith.constant dense<0.000000e+00> : vector<256x128xf32>
    %27 = tpu.matmul %24, %26, %cst_26 {dimension_numbers = #tpu.dot_dimension_numbers<[1], [0], [0], [1], [0, 0, 1, 1], [], []>} : vector<256x128xf32>, vector<128x128xf32>, vector<256x128xf32> -> vector<256x128xf32>
    %28 = arith.addf %22, %27 : vector<256x128xf32>
    %29 = vector.extract_strided_slice %15 {offsets = [0, 2, 0], sizes = [16, 16, 128], strides = [1, 1, 1]} : vector<18x18x128xf32> to vector<16x16x128xf32>
    %30 = vector.shape_cast %29 : vector<16x16x128xf32> to vector<256x128xf32>
    %c0_27 = arith.constant 0 : index
    %c2 = arith.constant 2 : index
    %c0_28 = arith.constant 0 : index
    %c0_29 = arith.constant 0 : index
    %31 = vector.load %arg2[%c0_27, %c2, %c0_28, %c0_29] : memref<3x3x128x128xf32, #tpu.memory_space<vmem>>, vector<1x1x128x128xf32>
    %32 = vector.shape_cast %31 : vector<1x1x128x128xf32> to vector<128x128xf32>
    %cst_30 = arith.constant dense<0.000000e+00> : vector<256x128xf32>
    %33 = tpu.matmul %30, %32, %cst_30 {dimension_numbers = #tpu.dot_dimension_numbers<[1], [0], [0], [1], [0, 0, 1, 1], [], []>} : vector<256x128xf32>, vector<128x128xf32>, vector<256x128xf32> -> vector<256x128xf32>
    %34 = arith.addf %28, %33 : vector<256x128xf32>
    %35 = vector.extract_strided_slice %15 {offsets = [1, 0, 0], sizes = [16, 16, 128], strides = [1, 1, 1]} : vector<18x18x128xf32> to vector<16x16x128xf32>
    %36 = vector.shape_cast %35 : vector<16x16x128xf32> to vector<256x128xf32>
    %c1_31 = arith.constant 1 : index
    %c0_32 = arith.constant 0 : index
    %c0_33 = arith.constant 0 : index
    %c0_34 = arith.constant 0 : index
    %37 = vector.load %arg2[%c1_31, %c0_32, %c0_33, %c0_34] : memref<3x3x128x128xf32, #tpu.memory_space<vmem>>, vector<1x1x128x128xf32>
    %38 = vector.shape_cast %37 : vector<1x1x128x128xf32> to vector<128x128xf32>
    %cst_35 = arith.constant dense<0.000000e+00> : vector<256x128xf32>
    %39 = tpu.matmul %36, %38, %cst_35 {dimension_numbers = #tpu.dot_dimension_numbers<[1], [0], [0], [1], [0, 0, 1, 1], [], []>} : vector<256x128xf32>, vector<128x128xf32>, vector<256x128xf32> -> vector<256x128xf32>
    %40 = arith.addf %34, %39 : vector<256x128xf32>
    %41 = vector.extract_strided_slice %15 {offsets = [1, 1, 0], sizes = [16, 16, 128], strides = [1, 1, 1]} : vector<18x18x128xf32> to vector<16x16x128xf32>
    %42 = vector.shape_cast %41 : vector<16x16x128xf32> to vector<256x128xf32>
    %c1_36 = arith.constant 1 : index
    %c1_37 = arith.constant 1 : index
    %c0_38 = arith.constant 0 : index
    %c0_39 = arith.constant 0 : index
    %43 = vector.load %arg2[%c1_36, %c1_37, %c0_38, %c0_39] : memref<3x3x128x128xf32, #tpu.memory_space<vmem>>, vector<1x1x128x128xf32>
    %44 = vector.shape_cast %43 : vector<1x1x128x128xf32> to vector<128x128xf32>
    %cst_40 = arith.constant dense<0.000000e+00> : vector<256x128xf32>
    %45 = tpu.matmul %42, %44, %cst_40 {dimension_numbers = #tpu.dot_dimension_numbers<[1], [0], [0], [1], [0, 0, 1, 1], [], []>} : vector<256x128xf32>, vector<128x128xf32>, vector<256x128xf32> -> vector<256x128xf32>
    %46 = arith.addf %40, %45 : vector<256x128xf32>
    %47 = vector.extract_strided_slice %15 {offsets = [1, 2, 0], sizes = [16, 16, 128], strides = [1, 1, 1]} : vector<18x18x128xf32> to vector<16x16x128xf32>
    %48 = vector.shape_cast %47 : vector<16x16x128xf32> to vector<256x128xf32>
    %c1_41 = arith.constant 1 : index
    %c2_42 = arith.constant 2 : index
    %c0_43 = arith.constant 0 : index
    %c0_44 = arith.constant 0 : index
    %49 = vector.load %arg2[%c1_41, %c2_42, %c0_43, %c0_44] : memref<3x3x128x128xf32, #tpu.memory_space<vmem>>, vector<1x1x128x128xf32>
    %50 = vector.shape_cast %49 : vector<1x1x128x128xf32> to vector<128x128xf32>
    %cst_45 = arith.constant dense<0.000000e+00> : vector<256x128xf32>
    %51 = tpu.matmul %48, %50, %cst_45 {dimension_numbers = #tpu.dot_dimension_numbers<[1], [0], [0], [1], [0, 0, 1, 1], [], []>} : vector<256x128xf32>, vector<128x128xf32>, vector<256x128xf32> -> vector<256x128xf32>
    %52 = arith.addf %46, %51 : vector<256x128xf32>
    %53 = vector.extract_strided_slice %15 {offsets = [2, 0, 0], sizes = [16, 16, 128], strides = [1, 1, 1]} : vector<18x18x128xf32> to vector<16x16x128xf32>
    %54 = vector.shape_cast %53 : vector<16x16x128xf32> to vector<256x128xf32>
    %c2_46 = arith.constant 2 : index
    %c0_47 = arith.constant 0 : index
    %c0_48 = arith.constant 0 : index
    %c0_49 = arith.constant 0 : index
    %55 = vector.load %arg2[%c2_46, %c0_47, %c0_48, %c0_49] : memref<3x3x128x128xf32, #tpu.memory_space<vmem>>, vector<1x1x128x128xf32>
    %56 = vector.shape_cast %55 : vector<1x1x128x128xf32> to vector<128x128xf32>
    %cst_50 = arith.constant dense<0.000000e+00> : vector<256x128xf32>
    %57 = tpu.matmul %54, %56, %cst_50 {dimension_numbers = #tpu.dot_dimension_numbers<[1], [0], [0], [1], [0, 0, 1, 1], [], []>} : vector<256x128xf32>, vector<128x128xf32>, vector<256x128xf32> -> vector<256x128xf32>
    %58 = arith.addf %52, %57 : vector<256x128xf32>
    %59 = vector.extract_strided_slice %15 {offsets = [2, 1, 0], sizes = [16, 16, 128], strides = [1, 1, 1]} : vector<18x18x128xf32> to vector<16x16x128xf32>
    %60 = vector.shape_cast %59 : vector<16x16x128xf32> to vector<256x128xf32>
    %c2_51 = arith.constant 2 : index
    %c1_52 = arith.constant 1 : index
    %c0_53 = arith.constant 0 : index
    %c0_54 = arith.constant 0 : index
    %61 = vector.load %arg2[%c2_51, %c1_52, %c0_53, %c0_54] : memref<3x3x128x128xf32, #tpu.memory_space<vmem>>, vector<1x1x128x128xf32>
    %62 = vector.shape_cast %61 : vector<1x1x128x128xf32> to vector<128x128xf32>
    %cst_55 = arith.constant dense<0.000000e+00> : vector<256x128xf32>
    %63 = tpu.matmul %60, %62, %cst_55 {dimension_numbers = #tpu.dot_dimension_numbers<[1], [0], [0], [1], [0, 0, 1, 1], [], []>} : vector<256x128xf32>, vector<128x128xf32>, vector<256x128xf32> -> vector<256x128xf32>
    %64 = arith.addf %58, %63 : vector<256x128xf32>
    %65 = vector.extract_strided_slice %15 {offsets = [2, 2, 0], sizes = [16, 16, 128], strides = [1, 1, 1]} : vector<18x18x128xf32> to vector<16x16x128xf32>
    %66 = vector.shape_cast %65 : vector<16x16x128xf32> to vector<256x128xf32>
    %c2_56 = arith.constant 2 : index
    %c2_57 = arith.constant 2 : index
    %c0_58 = arith.constant 0 : index
    %c0_59 = arith.constant 0 : index
    %67 = vector.load %arg2[%c2_56, %c2_57, %c0_58, %c0_59] : memref<3x3x128x128xf32, #tpu.memory_space<vmem>>, vector<1x1x128x128xf32>
    %68 = vector.shape_cast %67 : vector<1x1x128x128xf32> to vector<128x128xf32>
    %cst_60 = arith.constant dense<0.000000e+00> : vector<256x128xf32>
    %69 = tpu.matmul %66, %68, %cst_60 {dimension_numbers = #tpu.dot_dimension_numbers<[1], [0], [0], [1], [0, 0, 1, 1], [], []>} : vector<256x128xf32>, vector<128x128xf32>, vector<256x128xf32> -> vector<256x128xf32>
    %70 = arith.addf %64, %69 : vector<256x128xf32>
    %c0_61 = arith.constant 0 : index
    %c0_62 = arith.constant 0 : index
    %71 = vector.load %arg5[%c0_61, %c0_62] : memref<256x128xf32, #tpu.memory_space<vmem>>, vector<256x128xf32>
    tpu.vector_store %arg5[%c0_61, %c0_62], %70 {strides = array<i32>} : memref<256x128xf32, #tpu.memory_space<vmem>>, vector<256x128xf32>,
    %cst_63 = arith.constant dense<0.000000e+00> : vector<128xf32>
    %72 = vector.multi_reduction <add>, %70, %cst_63 [0] : vector<256x128xf32> to vector<128xf32>
    %73 = vector.shape_cast %72 : vector<128xf32> to vector<1x128xf32>
    %74 = vector.shape_cast %73 : vector<1x128xf32> to vector<1x1x128xf32>
    %c0_64 = arith.constant 0 : index
    %c0_65 = arith.constant 0 : index
    %c0_66 = arith.constant 0 : index
    %75 = vector.load %arg6[%c0_64, %c0_65, %c0_66] : memref<1x1x128xf32, #tpu.memory_space<vmem>>, vector<1x1x128xf32>
    tpu.vector_store %arg6[%c0_64, %c0_65, %c0_66], %74 {strides = array<i32>} : memref<1x1x128xf32, #tpu.memory_space<vmem>>, vector<1x1x128xf32>,
    %76 = arith.mulf %70, %70 : vector<256x128xf32>
    %cst_67 = arith.constant dense<0.000000e+00> : vector<128xf32>
    %77 = vector.multi_reduction <add>, %76, %cst_67 [0] : vector<256x128xf32> to vector<128xf32>
    %78 = vector.shape_cast %77 : vector<128xf32> to vector<1x128xf32>
    %79 = vector.shape_cast %78 : vector<1x128xf32> to vector<1x1x128xf32>
    %c0_68 = arith.constant 0 : index
    %c0_69 = arith.constant 0 : index
    %c0_70 = arith.constant 0 : index
    %80 = vector.load %arg7[%c0_68, %c0_69, %c0_70] : memref<1x1x128xf32, #tpu.memory_space<vmem>>, vector<1x1x128xf32>
    tpu.vector_store %arg7[%c0_68, %c0_69, %c0_70], %79 {strides = array<i32>} : memref<1x1x128xf32, #tpu.memory_space<vmem>>, vector<1x1x128xf32>,
    return
  }
  func.func @transform_0(%arg0: i32) -> (i32, i32, i32, i32) {
    %c0_i32 = arith.constant 0 : i32
    %c0_i32_0 = arith.constant 0 : i32
    %c0_i32_1 = arith.constant 0 : i32
    %c0_i32_2 = arith.constant 0 : i32
    return %arg0, %c0_i32, %c0_i32_0, %c0_i32_1 : i32, i32, i32, i32
  }
  func.func @transform_1(%arg0: i32) -> (i32, i32, i32, i32) {
    %c0_i32 = arith.constant 0 : i32
    %c0_i32_0 = arith.constant 0 : i32
    %c0_i32_1 = arith.constant 0 : i32
    %c0_i32_2 = arith.constant 0 : i32
    %c0_i32_3 = arith.constant 0 : i32
    return %c0_i32, %c0_i32_0, %c0_i32_1, %c0_i32_2 : i32, i32, i32, i32
  }
  func.func @transform_2(%arg0: i32) -> (i32, i32) {
    %c0_i32 = arith.constant 0 : i32
    %c0_i32_0 = arith.constant 0 : i32
    %c0_i32_1 = arith.constant 0 : i32
    return %c0_i32, %c0_i32_0 : i32, i32
  }
  func.func @transform_3(%arg0: i32) -> (i32, i32) {
    %c0_i32 = arith.constant 0 : i32
    %c0_i32_0 = arith.constant 0 : i32
    %c0_i32_1 = arith.constant 0 : i32
    return %c0_i32, %c0_i32_0 : i32, i32
  }
  func.func @transform_4(%arg0: i32) -> (i32, i32) {
    %c0_i32 = arith.constant 0 : i32
    %c0_i32_0 = arith.constant 0 : i32
    return %arg0, %c0_i32 : i32, i32
  }
  func.func @transform_5(%arg0: i32) -> (i32, i32, i32) {
    %c0_i32 = arith.constant 0 : i32
    %c0_i32_0 = arith.constant 0 : i32
    %c0_i32_1 = arith.constant 0 : i32
    return %arg0, %c0_i32, %c0_i32_0 : i32, i32, i32
  }
  func.func @transform_6(%arg0: i32) -> (i32, i32, i32) {
    %c0_i32 = arith.constant 0 : i32
    %c0_i32_0 = arith.constant 0 : i32
    %c0_i32_1 = arith.constant 0 : i32
    return %arg0, %c0_i32, %c0_i32_0 : i32, i32, i32
  }
}

module attributes {stable_mosaic.version = 11 : i64} {
  func.func @_mm_stats_kernel(%arg0: i32, %arg1: memref<512x128xf32, #tpu.memory_space<vmem>>, %arg2: memref<128x128xf32, #tpu.memory_space<vmem>>, %arg3: memref<1x128xf32, #tpu.memory_space<vmem>>, %arg4: memref<1x128xf32, #tpu.memory_space<vmem>>, %arg5: memref<512x128xf32, #tpu.memory_space<vmem>>, %arg6: memref<1x1x128xf32, #tpu.memory_space<vmem>>, %arg7: memref<1x1x128xf32, #tpu.memory_space<vmem>>) attributes {dimension_semantics = [#tpu.dimension_semantics<parallel>], iteration_bounds = array<i64: 1>, scalar_prefetch = 0 : i64, scratch_operands = 0 : i64, tpu.core_type = #tpu.core_type<tc>, window_params = [{transform_indices = @transform_0, window_bounds = array<i64: 512, 128>}, {pipeline_mode = #tpu.pipeline_mode<synchronous>, transform_indices = @transform_1, window_bounds = array<i64: 128, 128>}, {pipeline_mode = #tpu.pipeline_mode<synchronous>, transform_indices = @transform_2, window_bounds = array<i64: 1, 128>}, {pipeline_mode = #tpu.pipeline_mode<synchronous>, transform_indices = @transform_3, window_bounds = array<i64: 1, 128>}, {transform_indices = @transform_4, window_bounds = array<i64: 512, 128>}, {transform_indices = @transform_5, window_bounds = array<i64: 1, 1, 128>}, {transform_indices = @transform_6, window_bounds = array<i64: 1, 1, 128>}]} {
    %c0 = arith.constant 0 : index
    %c0_0 = arith.constant 0 : index
    %0 = vector.load %arg1[%c0, %c0_0] : memref<512x128xf32, #tpu.memory_space<vmem>>, vector<512x128xf32>
    %c0_1 = arith.constant 0 : index
    %c0_2 = arith.constant 0 : index
    %1 = vector.load %arg3[%c0_1, %c0_2] : memref<1x128xf32, #tpu.memory_space<vmem>>, vector<1x128xf32>
    %2 = vector.broadcast %1 : vector<1x128xf32> to vector<512x128xf32>
    %3 = arith.mulf %0, %2 : vector<512x128xf32>
    %c0_3 = arith.constant 0 : index
    %c0_4 = arith.constant 0 : index
    %4 = vector.load %arg4[%c0_3, %c0_4] : memref<1x128xf32, #tpu.memory_space<vmem>>, vector<1x128xf32>
    %5 = vector.broadcast %4 : vector<1x128xf32> to vector<512x128xf32>
    %6 = arith.addf %3, %5 : vector<512x128xf32>
    %cst = arith.constant 0.000000e+00 : f32
    %7 = vector.broadcast %cst : f32 to vector<512x128xf32>
    %8 = arith.maximumf %6, %7 : vector<512x128xf32>
    %c0_5 = arith.constant 0 : index
    %c0_6 = arith.constant 0 : index
    %9 = vector.load %arg2[%c0_5, %c0_6] : memref<128x128xf32, #tpu.memory_space<vmem>>, vector<128x128xf32>
    %cst_7 = arith.constant dense<0.000000e+00> : vector<512x128xf32>
    %10 = tpu.matmul %8, %9, %cst_7 {dimension_numbers = #tpu.dot_dimension_numbers<[1], [0], [0], [1], [0, 0, 1, 1], [], []>} : vector<512x128xf32>, vector<128x128xf32>, vector<512x128xf32> -> vector<512x128xf32>
    %c0_8 = arith.constant 0 : index
    %c0_9 = arith.constant 0 : index
    %11 = vector.load %arg5[%c0_8, %c0_9] : memref<512x128xf32, #tpu.memory_space<vmem>>, vector<512x128xf32>
    tpu.vector_store %arg5[%c0_8, %c0_9], %10 {strides = array<i32>} : memref<512x128xf32, #tpu.memory_space<vmem>>, vector<512x128xf32>,
    %cst_10 = arith.constant dense<0.000000e+00> : vector<128xf32>
    %12 = vector.multi_reduction <add>, %10, %cst_10 [0] : vector<512x128xf32> to vector<128xf32>
    %13 = vector.shape_cast %12 : vector<128xf32> to vector<1x128xf32>
    %14 = vector.shape_cast %13 : vector<1x128xf32> to vector<1x1x128xf32>
    %c0_11 = arith.constant 0 : index
    %c0_12 = arith.constant 0 : index
    %c0_13 = arith.constant 0 : index
    %15 = vector.load %arg6[%c0_11, %c0_12, %c0_13] : memref<1x1x128xf32, #tpu.memory_space<vmem>>, vector<1x1x128xf32>
    tpu.vector_store %arg6[%c0_11, %c0_12, %c0_13], %14 {strides = array<i32>} : memref<1x1x128xf32, #tpu.memory_space<vmem>>, vector<1x1x128xf32>,
    %16 = arith.mulf %10, %10 : vector<512x128xf32>
    %cst_14 = arith.constant dense<0.000000e+00> : vector<128xf32>
    %17 = vector.multi_reduction <add>, %16, %cst_14 [0] : vector<512x128xf32> to vector<128xf32>
    %18 = vector.shape_cast %17 : vector<128xf32> to vector<1x128xf32>
    %19 = vector.shape_cast %18 : vector<1x128xf32> to vector<1x1x128xf32>
    %c0_15 = arith.constant 0 : index
    %c0_16 = arith.constant 0 : index
    %c0_17 = arith.constant 0 : index
    %20 = vector.load %arg7[%c0_15, %c0_16, %c0_17] : memref<1x1x128xf32, #tpu.memory_space<vmem>>, vector<1x1x128xf32>
    tpu.vector_store %arg7[%c0_15, %c0_16, %c0_17], %19 {strides = array<i32>} : memref<1x1x128xf32, #tpu.memory_space<vmem>>, vector<1x1x128xf32>,
    return
  }
  func.func @transform_0(%arg0: i32) -> (i32, i32) {
    %c0_i32 = arith.constant 0 : i32
    %c0_i32_0 = arith.constant 0 : i32
    return %arg0, %c0_i32 : i32, i32
  }
  func.func @transform_1(%arg0: i32) -> (i32, i32) {
    %c0_i32 = arith.constant 0 : i32
    %c0_i32_0 = arith.constant 0 : i32
    %c0_i32_1 = arith.constant 0 : i32
    return %c0_i32, %c0_i32_0 : i32, i32
  }
  func.func @transform_2(%arg0: i32) -> (i32, i32) {
    %c0_i32 = arith.constant 0 : i32
    %c0_i32_0 = arith.constant 0 : i32
    %c0_i32_1 = arith.constant 0 : i32
    return %c0_i32, %c0_i32_0 : i32, i32
  }
  func.func @transform_3(%arg0: i32) -> (i32, i32) {
    %c0_i32 = arith.constant 0 : i32
    %c0_i32_0 = arith.constant 0 : i32
    %c0_i32_1 = arith.constant 0 : i32
    return %c0_i32, %c0_i32_0 : i32, i32
  }
  func.func @transform_4(%arg0: i32) -> (i32, i32) {
    %c0_i32 = arith.constant 0 : i32
    %c0_i32_0 = arith.constant 0 : i32
    return %arg0, %c0_i32 : i32, i32
  }
  func.func @transform_5(%arg0: i32) -> (i32, i32, i32) {
    %c0_i32 = arith.constant 0 : i32
    %c0_i32_0 = arith.constant 0 : i32
    %c0_i32_1 = arith.constant 0 : i32
    return %arg0, %c0_i32, %c0_i32_0 : i32, i32, i32
  }
  func.func @transform_6(%arg0: i32) -> (i32, i32, i32) {
    %c0_i32 = arith.constant 0 : i32
    %c0_i32_0 = arith.constant 0 : i32
    %c0_i32_1 = arith.constant 0 : i32
    return %arg0, %c0_i32, %c0_i32_0 : i32, i32, i32
  }
}

module attributes {stable_mosaic.version = 11 : i64} {
  func.func @_bn_add_relu_kernel(%arg0: i32, %arg1: memref<512x128xf32, #tpu.memory_space<vmem>>, %arg2: memref<1x128xf32, #tpu.memory_space<vmem>>, %arg3: memref<1x128xf32, #tpu.memory_space<vmem>>, %arg4: memref<512x128xf32, #tpu.memory_space<vmem>>, %arg5: memref<1x128xf32, #tpu.memory_space<vmem>>, %arg6: memref<1x128xf32, #tpu.memory_space<vmem>>, %arg7: memref<512x128xf32, #tpu.memory_space<vmem>>) attributes {dimension_semantics = [#tpu.dimension_semantics<parallel>], iteration_bounds = array<i64: 1>, scalar_prefetch = 0 : i64, scratch_operands = 0 : i64, tpu.core_type = #tpu.core_type<tc>, window_params = [{transform_indices = @transform_0, window_bounds = array<i64: 512, 128>}, {pipeline_mode = #tpu.pipeline_mode<synchronous>, transform_indices = @transform_1, window_bounds = array<i64: 1, 128>}, {pipeline_mode = #tpu.pipeline_mode<synchronous>, transform_indices = @transform_2, window_bounds = array<i64: 1, 128>}, {transform_indices = @transform_3, window_bounds = array<i64: 512, 128>}, {pipeline_mode = #tpu.pipeline_mode<synchronous>, transform_indices = @transform_4, window_bounds = array<i64: 1, 128>}, {pipeline_mode = #tpu.pipeline_mode<synchronous>, transform_indices = @transform_5, window_bounds = array<i64: 1, 128>}, {transform_indices = @transform_6, window_bounds = array<i64: 512, 128>}]} {
    %c0 = arith.constant 0 : index
    %c0_0 = arith.constant 0 : index
    %0 = vector.load %arg1[%c0, %c0_0] : memref<512x128xf32, #tpu.memory_space<vmem>>, vector<512x128xf32>
    %c0_1 = arith.constant 0 : index
    %c0_2 = arith.constant 0 : index
    %1 = vector.load %arg2[%c0_1, %c0_2] : memref<1x128xf32, #tpu.memory_space<vmem>>, vector<1x128xf32>
    %2 = vector.broadcast %1 : vector<1x128xf32> to vector<512x128xf32>
    %3 = arith.mulf %0, %2 : vector<512x128xf32>
    %c0_3 = arith.constant 0 : index
    %c0_4 = arith.constant 0 : index
    %4 = vector.load %arg3[%c0_3, %c0_4] : memref<1x128xf32, #tpu.memory_space<vmem>>, vector<1x128xf32>
    %5 = vector.broadcast %4 : vector<1x128xf32> to vector<512x128xf32>
    %6 = arith.addf %3, %5 : vector<512x128xf32>
    %c0_5 = arith.constant 0 : index
    %c0_6 = arith.constant 0 : index
    %7 = vector.load %arg4[%c0_5, %c0_6] : memref<512x128xf32, #tpu.memory_space<vmem>>, vector<512x128xf32>
    %c0_7 = arith.constant 0 : index
    %c0_8 = arith.constant 0 : index
    %8 = vector.load %arg5[%c0_7, %c0_8] : memref<1x128xf32, #tpu.memory_space<vmem>>, vector<1x128xf32>
    %9 = vector.broadcast %8 : vector<1x128xf32> to vector<512x128xf32>
    %10 = arith.mulf %7, %9 : vector<512x128xf32>
    %c0_9 = arith.constant 0 : index
    %c0_10 = arith.constant 0 : index
    %11 = vector.load %arg6[%c0_9, %c0_10] : memref<1x128xf32, #tpu.memory_space<vmem>>, vector<1x128xf32>
    %12 = vector.broadcast %11 : vector<1x128xf32> to vector<512x128xf32>
    %13 = arith.addf %10, %12 : vector<512x128xf32>
    %14 = arith.addf %6, %13 : vector<512x128xf32>
    %cst = arith.constant 0.000000e+00 : f32
    %15 = vector.broadcast %cst : f32 to vector<512x128xf32>
    %16 = arith.maximumf %14, %15 : vector<512x128xf32>
    %c0_11 = arith.constant 0 : index
    %c0_12 = arith.constant 0 : index
    %17 = vector.load %arg7[%c0_11, %c0_12] : memref<512x128xf32, #tpu.memory_space<vmem>>, vector<512x128xf32>
    tpu.vector_store %arg7[%c0_11, %c0_12], %16 {strides = array<i32>} : memref<512x128xf32, #tpu.memory_space<vmem>>, vector<512x128xf32>,
    return
  }
  func.func @transform_0(%arg0: i32) -> (i32, i32) {
    %c0_i32 = arith.constant 0 : i32
    %c0_i32_0 = arith.constant 0 : i32
    return %arg0, %c0_i32 : i32, i32
  }
  func.func @transform_1(%arg0: i32) -> (i32, i32) {
    %c0_i32 = arith.constant 0 : i32
    %c0_i32_0 = arith.constant 0 : i32
    %c0_i32_1 = arith.constant 0 : i32
    return %c0_i32, %c0_i32_0 : i32, i32
  }
  func.func @transform_2(%arg0: i32) -> (i32, i32) {
    %c0_i32 = arith.constant 0 : i32
    %c0_i32_0 = arith.constant 0 : i32
    %c0_i32_1 = arith.constant 0 : i32
    return %c0_i32, %c0_i32_0 : i32, i32
  }
  func.func @transform_3(%arg0: i32) -> (i32, i32) {
    %c0_i32 = arith.constant 0 : i32
    %c0_i32_0 = arith.constant 0 : i32
    return %arg0, %c0_i32 : i32, i32
  }
  func.func @transform_4(%arg0: i32) -> (i32, i32) {
    %c0_i32 = arith.constant 0 : i32
    %c0_i32_0 = arith.constant 0 : i32
    %c0_i32_1 = arith.constant 0 : i32
    return %c0_i32, %c0_i32_0 : i32, i32
  }
  func.func @transform_5(%arg0: i32) -> (i32, i32) {
    %c0_i32 = arith.constant 0 : i32
    %c0_i32_0 = arith.constant 0 : i32
    %c0_i32_1 = arith.constant 0 : i32
    return %c0_i32, %c0_i32_0 : i32, i32
  }
  func.func @transform_6(%arg0: i32) -> (i32, i32) {
    %c0_i32 = arith.constant 0 : i32
    %c0_i32_0 = arith.constant 0 : i32
    return %arg0, %c0_i32 : i32, i32
  }
}

</mosaic_0001>

<llo_original>
// kernel: bottleneck_forward.5
$region0: #{bottleneck_forward.5}
  #allocation0 [shape = 'u32[]', space=smem, size = 0x4, offset = 0x4, fixed_abs, tag = 'smem constant byte address 0x4 - core index']
  #allocation1 [shape = 'u32[144,128]{1,0:T(1,128)}', space=vmem, size = 0x12000, scoped, tag = 'internal scratch']
  %s0 = inlined_call_operand.vmem [shape: f32[512,128], index: 0, kind: input, shape index: {}]
  %s1 = inlined_call_operand.vmem [shape: f32[128,128], index: 1, kind: input, shape index: {}]
  %s2 = inlined_call_operand.vmem [shape: f32[1,128], index: 2, kind: input, shape index: {}]
  %s3 = inlined_call_operand.vmem [shape: f32[1,128], index: 3, kind: input, shape index: {}]
  %s4 = inlined_call_operand.vmem [shape: f32[512,128], index: 4, kind: output, shape index: {0}]
  %s5 = inlined_call_operand.vmem [shape: f32[1,1,128], index: 5, kind: output, shape index: {1}]
  %s6 = inlined_call_operand.vmem [shape: f32[1,1,128], index: 6, kind: output, shape index: {2}]
  %7 = xla_tuple %s4, %s5, %s6
  %s8 = sld [smem:[#allocation0]]
  $region42: #{bottleneck_forward.5} parent=0
    _
  %s10 = ssub.s32 1, %s8
  %s11 = scalar_select 0, %s10, %s8
  // Predicated region
  $region2: #{bottleneck_forward.5} parent=0 // pred_check
    _
  $region3: #{bottleneck_forward.5} parent=0 // pred_check_branch
    %13 = sbr.rel (0) target = $region5
  $region4: #{bottleneck_forward.5} parent=0 // pred_region
    _
  $region5: #{bottleneck_forward.5} parent=0 // pred_fallthru
    _
  // Predicated region
  $region6: #{bottleneck_forward.5} parent=0 // pred_check
    _
  $region7: #{bottleneck_forward.5} parent=0 // pred_check_branch
    %15 = sbr.rel (0) target = $region9
  $region8: #{bottleneck_forward.5} parent=0 // pred_region
    _
  $region9: #{bottleneck_forward.5} parent=0 // pred_fallthru
    _
  // Predicated region
  $region10: #{bottleneck_forward.5} parent=0 // pred_check
    _
  $region11: #{bottleneck_forward.5} parent=0 // pred_check_branch
    %17 = sbr.rel (0) target = $region13
  $region12: #{bottleneck_forward.5} parent=0 // pred_region
    _
  $region13: #{bottleneck_forward.5} parent=0 // pred_fallthru
    _
  // Predicated region
  $region14: #{bottleneck_forward.5} parent=0 // pred_check
    _
  $region15: #{bottleneck_forward.5} parent=0 // pred_check_branch
    %19 = sbr.rel (0) target = $region17
  $region16: #{bottleneck_forward.5} parent=0 // pred_region
    _
  $region17: #{bottleneck_forward.5} parent=0 // pred_fallthru
    _
  %v20 = vld [vmem:[%s0] sm:$0xff]
  %v21 = vld [vmem:[%s0 + $0x8] sm:$0xff]
  %v22 = vld [vmem:[%s0 + $0x10] sm:$0xff]
  %v23 = vld [vmem:[%s0 + $0x18] sm:$0xff]
  %v24 = vld [vmem:[%s0 + $0x20] sm:$0xff]
  %v25 = vld [vmem:[%s0 + $0x28] sm:$0xff]
  %v26 = vld [vmem:[%s0 + $0x30] sm:$0xff]
  %v27 = vld [vmem:[%s0 + $0x38] sm:$0xff]
  %v28 = vld [vmem:[%s0 + $0x40] sm:$0xff]
  %v29 = vld [vmem:[%s0 + $0x48] sm:$0xff]
  %v30 = vld [vmem:[%s0 + $0x50] sm:$0xff]
  %v31 = vld [vmem:[%s0 + $0x58] sm:$0xff]
  %v32 = vld [vmem:[%s0 + $0x60] sm:$0xff]
  %v33 = vld [vmem:[%s0 + $0x68] sm:$0xff]
  %v34 = vld [vmem:[%s0 + $0x70] sm:$0xff]
  %v35 = vld [vmem:[%s0 + $0x78] sm:$0xff]
  %v36 = vld [vmem:[%s0 + $0x80] sm:$0xff]
  %v37 = vld [vmem:[%s0 + $0x88] sm:$0xff]
  %v38 = vld [vmem:[%s0 + $0x90] sm:$0xff]
  %v39 = vld [vmem:[%s0 + $0x98] sm:$0xff]
  %v40 = vld [vmem:[%s0 + $0xa0] sm:$0xff]
  %v41 = vld [vmem:[%s0 + $0xa8] sm:$0xff]
  %v42 = vld [vmem:[%s0 + $0xb0] sm:$0xff]
  %v43 = vld [vmem:[%s0 + $0xb8] sm:$0xff]
  %v44 = vld [vmem:[%s0 + $0xc0] sm:$0xff]
  %v45 = vld [vmem:[%s0 + $0xc8] sm:$0xff]
  %v46 = vld [vmem:[%s0 + $0xd0] sm:$0xff]
  %v47 = vld [vmem:[%s0 + $0xd8] sm:$0xff]
  %v48 = vld [vmem:[%s0 + $0xe0] sm:$0xff]
  %v49 = vld [vmem:[%s0 + $0xe8] sm:$0xff]
  %v50 = vld [vmem:[%s0 + $0xf0] sm:$0xff]
  %v51 = vld [vmem:[%s0 + $0xf8] sm:$0xff]
  %v52 = vld [vmem:[%s0 + $0x100] sm:$0xff]
  %v53 = vld [vmem:[%s0 + $0x108] sm:$0xff]
  %v54 = vld [vmem:[%s0 + $0x110] sm:$0xff]
  %v55 = vld [vmem:[%s0 + $0x118] sm:$0xff]
  %v56 = vld [vmem:[%s0 + $0x120] sm:$0xff]
  %v57 = vld [vmem:[%s0 + $0x128] sm:$0xff]
  %v58 = vld [vmem:[%s0 + $0x130] sm:$0xff]
  %v59 = vld [vmem:[%s0 + $0x138] sm:$0xff]
  %v60 = vld [vmem:[%s0 + $0x140] sm:$0xff]
  %v61 = vld [vmem:[%s0 + $0x148] sm:$0xff]
  %v62 = vld [vmem:[%s0 + $0x150] sm:$0xff]
  %v63 = vld [vmem:[%s0 + $0x158] sm:$0xff]
  %v64 = vld [vmem:[%s0 + $0x160] sm:$0xff]
  %v65 = vld [vmem:[%s0 + $0x168] sm:$0xff]
  %v66 = vld [vmem:[%s0 + $0x170] sm:$0xff]
  %v67 = vld [vmem:[%s0 + $0x178] sm:$0xff]
  %v68 = vld [vmem:[%s0 + $0x180] sm:$0xff]
  %v69 = vld [vmem:[%s0 + $0x188] sm:$0xff]
  %v70 = vld [vmem:[%s0 + $0x190] sm:$0xff]
  %v71 = vld [vmem:[%s0 + $0x198] sm:$0xff]
  %v72 = vld [vmem:[%s0 + $0x1a0] sm:$0xff]
  %v73 = vld [vmem:[%s0 + $0x1a8] sm:$0xff]
  %v74 = vld [vmem:[%s0 + $0x1b0] sm:$0xff]
  %v75 = vld [vmem:[%s0 + $0x1b8] sm:$0xff]
  %v76 = vld [vmem:[%s0 + $0x1c0] sm:$0xff]
  %v77 = vld [vmem:[%s0 + $0x1c8] sm:$0xff]
  %v78 = vld [vmem:[%s0 + $0x1d0] sm:$0xff]
  %v79 = vld [vmem:[%s0 + $0x1d8] sm:$0xff]
  %v80 = vld [vmem:[%s0 + $0x1e0] sm:$0xff]
  %v81 = vld [vmem:[%s0 + $0x1e8] sm:$0xff]
  %v82 = vld [vmem:[%s0 + $0x1f0] sm:$0xff]
  %v83 = vld [vmem:[%s0 + $0x1f8] sm:$0xff]
  %v84 = vld [vmem:[%s1] sm:$0xff]
  %v85 = vld [vmem:[%s1 + $0x8] sm:$0xff]
  %v86 = vld [vmem:[%s1 + $0x10] sm:$0xff]
  %v87 = vld [vmem:[%s1 + $0x18] sm:$0xff]
  %v88 = vld [vmem:[%s1 + $0x20] sm:$0xff]
  %v89 = vld [vmem:[%s1 + $0x28] sm:$0xff]
  %v90 = vld [vmem:[%s1 + $0x30] sm:$0xff]
  %v91 = vld [vmem:[%s1 + $0x38] sm:$0xff]
  %v92 = vld [vmem:[%s1 + $0x40] sm:$0xff]
  %v93 = vld [vmem:[%s1 + $0x48] sm:$0xff]
  %v94 = vld [vmem:[%s1 + $0x50] sm:$0xff]
  %v95 = vld [vmem:[%s1 + $0x58] sm:$0xff]
  %v96 = vld [vmem:[%s1 + $0x60] sm:$0xff]
  %v97 = vld [vmem:[%s1 + $0x68] sm:$0xff]
  %v98 = vld [vmem:[%s1 + $0x70] sm:$0xff]
  %v99 = vld [vmem:[%s1 + $0x78] sm:$0xff]
  %100 = vmatprep.subr.mxu0 0.0
  %101 = vmatpush1.msra.mxu0 %v99
  %102 = vmatprep.subr.mxu0 0.0
  %103 = vmatpush1.msra.mxu0 %v98
  %104 = vmatprep.subr.mxu0 0.0
  %105 = vmatpush1.msra.mxu0 %v97
  %106 = vmatprep.subr.mxu0 0.0
  %107 = vmatpush1.msra.mxu0 %v96
  %108 = vmatprep.subr.mxu0 0.0
  %109 = vmatpush1.msra.mxu0 %v95
  %110 = vmatprep.subr.mxu0 0.0
  %111 = vmatpush1.msra.mxu0 %v94
  %112 = vmatprep.subr.mxu0 0.0
  %113 = vmatpush1.msra.mxu0 %v93
  %114 = vmatprep.subr.mxu0 0.0
  %115 = vmatpush1.msra.mxu0 %v92
  %116 = vmatprep.subr.mxu0 0.0
  %117 = vmatpush1.msra.mxu0 %v91
  %118 = vmatprep.subr.mxu0 0.0
  %119 = vmatpush1.msra.mxu0 %v90
  %120 = vmatprep.subr.mxu0 0.0
  %121 = vmatpush1.msra.mxu0 %v89
  %122 = vmatprep.subr.mxu0 0.0
  %123 = vmatpush1.msra.mxu0 %v88
  %124 = vmatprep.subr.mxu0 0.0
  %125 = vmatpush1.msra.mxu0 %v87
  %126 = vmatprep.subr.mxu0 0.0
  %127 = vmatpush1.msra.mxu0 %v86
  %128 = vmatprep.subr.mxu0 0.0
  %129 = vmatpush1.msra.mxu0 %v85
  %130 = vmatprep.subr.mxu0 0.0
  %131 = vmatpush1.msra.mxu0 %v84
  %132 = vmatprep.subr.mxu0 0.0
  %133 = vmatpush2.msra.mxu0 0.0
  %134 = vmatprep.subr.mxu0 0.0
  %135 = vmatpush2.msra.mxu0 0.0
  %136 = vmatprep.subr.mxu0 0.0
  %137 = vmatpush2.msra.mxu0 0.0
  %138 = vmatprep.subr.mxu0 0.0
  %139 = vmatpush2.msra.mxu0 0.0
  %140 = vmatprep.subr.mxu0 0.0
  %141 = vmatpush2.msra.mxu0 0.0
  %142 = vmatprep.subr.mxu0 0.0
  %143 = vmatpush2.msra.mxu0 0.0
  %144 = vmatprep.subr.mxu0 0.0
  %145 = vmatpush2.msra.mxu0 0.0
  %146 = vmatprep.subr.mxu0 0.0
  %147 = vmatpush2.msra.mxu0 0.0
  %148 = vmatprep.subr.mxu0 0.0
  %149 = vmatpush2.msra.mxu0 0.0
  %150 = vmatprep.subr.mxu0 0.0
  %151 = vmatpush2.msra.mxu0 0.0
  %152 = vmatprep.subr.mxu0 0.0
  %153 = vmatpush2.msra.mxu0 0.0
  %154 = vmatprep.subr.mxu0 0.0
  %155 = vmatpush2.msra.mxu0 0.0
  %156 = vmatprep.subr.mxu0 0.0
  %157 = vmatpush2.msra.mxu0 0.0
  %158 = vmatprep.subr.mxu0 0.0
  %159 = vmatpush2.msra.mxu0 0.0
  %160 = vmatprep.subr.mxu0 0.0
  %161 = vmatpush2.msra.mxu0 0.0
  %162 = vmatprep.subr.mxu0 0.0
  %163 = vmatpush2.msra.mxu0 0.0
  %164 = vmatprep.mubr.f32.mxu0 0.0
  %165 = vmatmul.mubr.f32.gmra.mxu0 %v20
  %v166 = vpop.f32.mrf.mxu0
  %v167 = vadd.f32 0.0, %v166
  %v168 = vpop.f32.mrf.mxu0
  %169 = vmatprep.mubr.f32.mxu0 0.0
  %170 = vmatmul.mubr.f32.gmra.mxu0 %v21
  %v171 = vpop.f32.mrf.mxu0
  %v172 = vadd.f32 0.0, %v171
  %v173 = vpop.f32.mrf.mxu0
  %174 = vmatprep.mubr.f32.mxu0 0.0
  %175 = vmatmul.mubr.f32.gmra.mxu0 %v22
  %v176 = vpop.f32.mrf.mxu0
  %v177 = vadd.f32 0.0, %v176
  %v178 = vpop.f32.mrf.mxu0
  %179 = vmatprep.mubr.f32.mxu0 0.0
  %180 = vmatmul.mubr.f32.gmra.mxu0 %v23
  %v181 = vpop.f32.mrf.mxu0
  %v182 = vadd.f32 0.0, %v181
  %v183 = vpop.f32.mrf.mxu0
  %184 = vmatprep.mubr.f32.mxu0 0.0
  %185 = vmatmul.mubr.f32.gmra.mxu0 %v24
  %v186 = vpop.f32.mrf.mxu0
  %v187 = vadd.f32 0.0, %v186
  %v188 = vpop.f32.mrf.mxu0
  %189 = vmatprep.mubr.f32.mxu0 0.0
  %190 = vmatmul.mubr.f32.gmra.mxu0 %v25
  %v191 = vpop.f32.mrf.mxu0
  %v192 = vadd.f32 0.0, %v191
  %v193 = vpop.f32.mrf.mxu0
  %194 = vmatprep.mubr.f32.mxu0 0.0
  %195 = vmatmul.mubr.f32.gmra.mxu0 %v26
  %v196 = vpop.f32.mrf.mxu0
  %v197 = vadd.f32 0.0, %v196
  %v198 = vpop.f32.mrf.mxu0
  %199 = vmatprep.mubr.f32.mxu0 0.0
  %200 = vmatmul.mubr.f32.gmra.mxu0 %v27
  %v201 = vpop.f32.mrf.mxu0
  %v202 = vadd.f32 0.0, %v201
  %v203 = vpop.f32.mrf.mxu0
  %204 = vmatprep.mubr.f32.mxu0 0.0
  %205 = vmatmul.mubr.f32.gmra.mxu0 %v28
  %v206 = vpop.f32.mrf.mxu0
  %v207 = vadd.f32 0.0, %v206
  %v208 = vpop.f32.mrf.mxu0
  %209 = vmatprep.mubr.f32.mxu0 0.0
  %210 = vmatmul.mubr.f32.gmra.mxu0 %v29
  %v211 = vpop.f32.mrf.mxu0
  %v212 = vadd.f32 0.0, %v211
  %v213 = vpop.f32.mrf.mxu0
  %214 = vmatprep.mubr.f32.mxu0 0.0
  %215 = vmatmul.mubr.f32.gmra.mxu0 %v30
  %v216 = vpop.f32.mrf.mxu0
  %v217 = vadd.f32 0.0, %v216
  %v218 = vpop.f32.mrf.mxu0
  %219 = vmatprep.mubr.f32.mxu0 0.0
  %220 = vmatmul.mubr.f32.gmra.mxu0 %v31
  %v221 = vpop.f32.mrf.mxu0
  %v222 = vadd.f32 0.0, %v221
  %v223 = vpop.f32.mrf.mxu0
  %224 = vmatprep.mubr.f32.mxu0 0.0
  %225 = vmatmul.mubr.f32.gmra.mxu0 %v32
  %v226 = vpop.f32.mrf.mxu0
  %v227 = vadd.f32 0.0, %v226
  %v228 = vpop.f32.mrf.mxu0
  %229 = vmatprep.mubr.f32.mxu0 0.0
  %230 = vmatmul.mubr.f32.gmra.mxu0 %v33
  %v231 = vpop.f32.mrf.mxu0
  %v232 = vadd.f32 0.0, %v231
  %v233 = vpop.f32.mrf.mxu0
  %234 = vmatprep.mubr.f32.mxu0 0.0
  %235 = vmatmul.mubr.f32.gmra.mxu0 %v34
  %v236 = vpop.f32.mrf.mxu0
  %v237 = vadd.f32 0.0, %v236
  %v238 = vpop.f32.mrf.mxu0
  %239 = vmatprep.mubr.f32.mxu0 0.0
  %240 = vmatmul.mubr.f32.gmra.mxu0 %v35
  %v241 = vpop.f32.mrf.mxu0
  %v242 = vadd.f32 0.0, %v241
  %v243 = vpop.f32.mrf.mxu0
  %244 = vmatprep.mubr.f32.mxu0 0.0
  %245 = vmatmul.mubr.f32.gmra.mxu0 %v36
  %v246 = vpop.f32.mrf.mxu0
  %v247 = vadd.f32 0.0, %v246
  %v248 = vpop.f32.mrf.mxu0
  %249 = vmatprep.mubr.f32.mxu0 0.0
  %250 = vmatmul.mubr.f32.gmra.mxu0 %v37
  %v251 = vpop.f32.mrf.mxu0
  %v252 = vadd.f32 0.0, %v251
  %v253 = vpop.f32.mrf.mxu0
  %254 = vmatprep.mubr.f32.mxu0 0.0
  %255 = vmatmul.mubr.f32.gmra.mxu0 %v38
  %v256 = vpop.f32.mrf.mxu0
  %v257 = vadd.f32 0.0, %v256
  %v258 = vpop.f32.mrf.mxu0
  %259 = vmatprep.mubr.f32.mxu0 0.0
  %260 = vmatmul.mubr.f32.gmra.mxu0 %v39
  %v261 = vpop.f32.mrf.mxu0
  %v262 = vadd.f32 0.0, %v261
  %v263 = vpop.f32.mrf.mxu0
  %264 = vmatprep.mubr.f32.mxu0 0.0
  %265 = vmatmul.mubr.f32.gmra.mxu0 %v40
  %v266 = vpop.f32.mrf.mxu0
  %v267 = vadd.f32 0.0, %v266
  %v268 = vpop.f32.mrf.mxu0
  %269 = vmatprep.mubr.f32.mxu0 0.0
  %270 = vmatmul.mubr.f32.gmra.mxu0 %v41
  %v271 = vpop.f32.mrf.mxu0
  %v272 = vadd.f32 0.0, %v271
  %v273 = vpop.f32.mrf.mxu0
  %274 = vmatprep.mubr.f32.mxu0 0.0
  %275 = vmatmul.mubr.f32.gmra.mxu0 %v42
  %v276 = vpop.f32.mrf.mxu0
  %v277 = vadd.f32 0.0, %v276
  %v278 = vpop.f32.mrf.mxu0
  %279 = vmatprep.mubr.f32.mxu0 0.0
  %280 = vmatmul.mubr.f32.gmra.mxu0 %v43
  %v281 = vpop.f32.mrf.mxu0
  %v282 = vadd.f32 0.0, %v281
  %v283 = vpop.f32.mrf.mxu0
  %284 = vmatprep.mubr.f32.mxu0 0.0
  %285 = vmatmul.mubr.f32.gmra.mxu0 %v44
  %v286 = vpop.f32.mrf.mxu0
  %v287 = vadd.f32 0.0, %v286
  %v288 = vpop.f32.mrf.mxu0
  %289 = vmatprep.mubr.f32.mxu0 0.0
  %290 = vmatmul.mubr.f32.gmra.mxu0 %v45
  %v291 = vpop.f32.mrf.mxu0
  %v292 = vadd.f32 0.0, %v291
  %v293 = vpop.f32.mrf.mxu0
  %294 = vmatprep.mubr.f32.mxu0 0.0
  %295 = vmatmul.mubr.f32.gmra.mxu0 %v46
  %v296 = vpop.f32.mrf.mxu0
  %v297 = vadd.f32 0.0, %v296
  %v298 = vpop.f32.mrf.mxu0
  %299 = vmatprep.mubr.f32.mxu0 0.0
  %300 = vmatmul.mubr.f32.gmra.mxu0 %v47
  %v301 = vpop.f32.mrf.mxu0
  %v302 = vadd.f32 0.0, %v301
  %v303 = vpop.f32.mrf.mxu0
  %304 = vmatprep.mubr.f32.mxu0 0.0
  %305 = vmatmul.mubr.f32.gmra.mxu0 %v48
  %v306 = vpop.f32.mrf.mxu0
  %v307 = vadd.f32 0.0, %v306
  %v308 = vpop.f32.mrf.mxu0
  %309 = vmatprep.mubr.f32.mxu0 0.0
  %310 = vmatmul.mubr.f32.gmra.mxu0 %v49
  %v311 = vpop.f32.mrf.mxu0
  %v312 = vadd.f32 0.0, %v311
  %v313 = vpop.f32.mrf.mxu0
  %314 = vmatprep.mubr.f32.mxu0 0.0
  %315 = vmatmul.mubr.f32.gmra.mxu0 %v50
  %v316 = vpop.f32.mrf.mxu0
  %v317 = vadd.f32 0.0, %v316
  %v318 = vpop.f32.mrf.mxu0
  %319 = vmatprep.mubr.f32.mxu0 0.0
  %320 = vmatmul.mubr.f32.gmra.mxu0 %v51
  %v321 = vpop.f32.mrf.mxu0
  %v322 = vadd.f32 0.0, %v321
  %v323 = vpop.f32.mrf.mxu0
  %324 = vmatprep.mubr.f32.mxu0 0.0
  %325 = vmatmul.mubr.f32.gmra.mxu0 %v52
  %v326 = vpop.f32.mrf.mxu0
  %v327 = vadd.f32 0.0, %v326
  %v328 = vpop.f32.mrf.mxu0
  %329 = vmatprep.mubr.f32.mxu0 0.0
  %330 = vmatmul.mubr.f32.gmra.mxu0 %v53
  %v331 = vpop.f32.mrf.mxu0
  %v332 = vadd.f32 0.0, %v331
  %v333 = vpop.f32.mrf.mxu0
  %334 = vmatprep.mubr.f32.mxu0 0.0
  %335 = vmatmul.mubr.f32.gmra.mxu0 %v54
  %v336 = vpop.f32.mrf.mxu0
  %v337 = vadd.f32 0.0, %v336
  %v338 = vpop.f32.mrf.mxu0
  %339 = vmatprep.mubr.f32.mxu0 0.0
  %340 = vmatmul.mubr.f32.gmra.mxu0 %v55
  %v341 = vpop.f32.mrf.mxu0
  %v342 = vadd.f32 0.0, %v341
  %v343 = vpop.f32.mrf.mxu0
  %344 = vmatprep.mubr.f32.mxu0 0.0
  %345 = vmatmul.mubr.f32.gmra.mxu0 %v56
  %v346 = vpop.f32.mrf.mxu0
  %v347 = vadd.f32 0.0, %v346
  %v348 = vpop.f32.mrf.mxu0
  %349 = vmatprep.mubr.f32.mxu0 0.0
  %350 = vmatmul.mubr.f32.gmra.mxu0 %v57
  %v351 = vpop.f32.mrf.mxu0
  %v352 = vadd.f32 0.0, %v351
  %v353 = vpop.f32.mrf.mxu0
  %354 = vmatprep.mubr.f32.mxu0 0.0
  %355 = vmatmul.mubr.f32.gmra.mxu0 %v58
  %v356 = vpop.f32.mrf.mxu0
  %v357 = vadd.f32 0.0, %v356
  %v358 = vpop.f32.mrf.mxu0
  %359 = vmatprep.mubr.f32.mxu0 0.0
  %360 = vmatmul.mubr.f32.gmra.mxu0 %v59
  %v361 = vpop.f32.mrf.mxu0
  %v362 = vadd.f32 0.0, %v361
  %v363 = vpop.f32.mrf.mxu0
  %364 = vmatprep.mubr.f32.mxu0 0.0
  %365 = vmatmul.mubr.f32.gmra.mxu0 %v60
  %v366 = vpop.f32.mrf.mxu0
  %v367 = vadd.f32 0.0, %v366
  %v368 = vpop.f32.mrf.mxu0
  %369 = vmatprep.mubr.f32.mxu0 0.0
  %370 = vmatmul.mubr.f32.gmra.mxu0 %v61
  %v371 = vpop.f32.mrf.mxu0
  %v372 = vadd.f32 0.0, %v371
  %v373 = vpop.f32.mrf.mxu0
  %374 = vmatprep.mubr.f32.mxu0 0.0
  %375 = vmatmul.mubr.f32.gmra.mxu0 %v62
  %v376 = vpop.f32.mrf.mxu0
  %v377 = vadd.f32 0.0, %v376
  %v378 = vpop.f32.mrf.mxu0
  %379 = vmatprep.mubr.f32.mxu0 0.0
  %380 = vmatmul.mubr.f32.gmra.mxu0 %v63
  %v381 = vpop.f32.mrf.mxu0
  %v382 = vadd.f32 0.0, %v381
  %v383 = vpop.f32.mrf.mxu0
  %384 = vmatprep.mubr.f32.mxu0 0.0
  %385 = vmatmul.mubr.f32.gmra.mxu0 %v64
  %v386 = vpop.f32.mrf.mxu0
  %v387 = vadd.f32 0.0, %v386
  %v388 = vpop.f32.mrf.mxu0
  %389 = vmatprep.mubr.f32.mxu0 0.0
  %390 = vmatmul.mubr.f32.gmra.mxu0 %v65
  %v391 = vpop.f32.mrf.mxu0
  %v392 = vadd.f32 0.0, %v391
  %v393 = vpop.f32.mrf.mxu0
  %394 = vmatprep.mubr.f32.mxu0 0.0
  %395 = vmatmul.mubr.f32.gmra.mxu0 %v66
  %v396 = vpop.f32.mrf.mxu0
  %v397 = vadd.f32 0.0, %v396
  %v398 = vpop.f32.mrf.mxu0
  %399 = vmatprep.mubr.f32.mxu0 0.0
  %400 = vmatmul.mubr.f32.gmra.mxu0 %v67
  %v401 = vpop.f32.mrf.mxu0
  %v402 = vadd.f32 0.0, %v401
  %v403 = vpop.f32.mrf.mxu0
  %404 = vmatprep.mubr.f32.mxu0 0.0
  %405 = vmatmul.mubr.f32.gmra.mxu0 %v68
  %v406 = vpop.f32.mrf.mxu0
  %v407 = vadd.f32 0.0, %v406
  %v408 = vpop.f32.mrf.mxu0
  %409 = vmatprep.mubr.f32.mxu0 0.0
  %410 = vmatmul.mubr.f32.gmra.mxu0 %v69
  %v411 = vpop.f32.mrf.mxu0
  %v412 = vadd.f32 0.0, %v411
  %v413 = vpop.f32.mrf.mxu0
  %414 = vmatprep.mubr.f32.mxu0 0.0
  %415 = vmatmul.mubr.f32.gmra.mxu0 %v70
  %v416 = vpop.f32.mrf.mxu0
  %v417 = vadd.f32 0.0, %v416
  %v418 = vpop.f32.mrf.mxu0
  %419 = vmatprep.mubr.f32.mxu0 0.0
  %420 = vmatmul.mubr.f32.gmra.mxu0 %v71
  %v421 = vpop.f32.mrf.mxu0
  %v422 = vadd.f32 0.0, %v421
  %v423 = vpop.f32.mrf.mxu0
  %424 = vmatprep.mubr.f32.mxu0 0.0
  %425 = vmatmul.mubr.f32.gmra.mxu0 %v72
  %v426 = vpop.f32.mrf.mxu0
  %v427 = vadd.f32 0.0, %v426
  %v428 = vpop.f32.mrf.mxu0
  %429 = vmatprep.mubr.f32.mxu0 0.0
  %430 = vmatmul.mubr.f32.gmra.mxu0 %v73
  %v431 = vpop.f32.mrf.mxu0
  %v432 = vadd.f32 0.0, %v431
  %v433 = vpop.f32.mrf.mxu0
  %434 = vmatprep.mubr.f32.mxu0 0.0
  %435 = vmatmul.mubr.f32.gmra.mxu0 %v74
  %v436 = vpop.f32.mrf.mxu0
  %v437 = vadd.f32 0.0, %v436
  %v438 = vpop.f32.mrf.mxu0
  %439 = vmatprep.mubr.f32.mxu0 0.0
  %440 = vmatmul.mubr.f32.gmra.mxu0 %v75
  %v441 = vpop.f32.mrf.mxu0
  %v442 = vadd.f32 0.0, %v441
  %v443 = vpop.f32.mrf.mxu0
  %444 = vmatprep.mubr.f32.mxu0 0.0
  %445 = vmatmul.mubr.f32.gmra.mxu0 %v76
  %v446 = vpop.f32.mrf.mxu0
  %v447 = vadd.f32 0.0, %v446
  %v448 = vpop.f32.mrf.mxu0
  %449 = vmatprep.mubr.f32.mxu0 0.0
  %450 = vmatmul.mubr.f32.gmra.mxu0 %v77
  %v451 = vpop.f32.mrf.mxu0
  %v452 = vadd.f32 0.0, %v451
  %v453 = vpop.f32.mrf.mxu0
  %454 = vmatprep.mubr.f32.mxu0 0.0
  %455 = vmatmul.mubr.f32.gmra.mxu0 %v78
  %v456 = vpop.f32.mrf.mxu0
  %v457 = vadd.f32 0.0, %v456
  %v458 = vpop.f32.mrf.mxu0
  %459 = vmatprep.mubr.f32.mxu0 0.0
  %460 = vmatmul.mubr.f32.gmra.mxu0 %v79
  %v461 = vpop.f32.mrf.mxu0
  %v462 = vadd.f32 0.0, %v461
  %v463 = vpop.f32.mrf.mxu0
  %464 = vmatprep.mubr.f32.mxu0 0.0
  %465 = vmatmul.mubr.f32.gmra.mxu0 %v80
  %v466 = vpop.f32.mrf.mxu0
  %v467 = vadd.f32 0.0, %v466
  %v468 = vpop.f32.mrf.mxu0
  %469 = vmatprep.mubr.f32.mxu0 0.0
  %470 = vmatmul.mubr.f32.gmra.mxu0 %v81
  %v471 = vpop.f32.mrf.mxu0
  %v472 = vadd.f32 0.0, %v471
  %v473 = vpop.f32.mrf.mxu0
  %474 = vmatprep.mubr.f32.mxu0 0.0
  %475 = vmatmul.mubr.f32.gmra.mxu0 %v82
  %v476 = vpop.f32.mrf.mxu0
  %v477 = vadd.f32 0.0, %v476
  %v478 = vpop.f32.mrf.mxu0
  %479 = vmatprep.mubr.f32.mxu0 0.0
  %480 = vmatmul.mubr.f32.gmra.mxu0 %v83
  %v481 = vpop.f32.mrf.mxu0
  %v482 = vadd.f32 0.0, %v481
  %v483 = vpop.f32.mrf.mxu0
  %484 = vdwg.mxu0
  %485 = vst [vmem:[%s4] sm:$0xff] %v167
  %486 = vst [vmem:[%s4 + $0x8] sm:$0xff] %v172
  %487 = vst [vmem:[%s4 + $0x10] sm:$0xff] %v177
  %488 = vst [vmem:[%s4 + $0x18] sm:$0xff] %v182
  %489 = vst [vmem:[%s4 + $0x20] sm:$0xff] %v187
  %490 = vst [vmem:[%s4 + $0x28] sm:$0xff] %v192
  %491 = vst [vmem:[%s4 + $0x30] sm:$0xff] %v197
  %492 = vst [vmem:[%s4 + $0x38] sm:$0xff] %v202
  %493 = vst [vmem:[%s4 + $0x40] sm:$0xff] %v207
  %494 = vst [vmem:[%s4 + $0x48] sm:$0xff] %v212
  %495 = vst [vmem:[%s4 + $0x50] sm:$0xff] %v217
  %496 = vst [vmem:[%s4 + $0x58] sm:$0xff] %v222
  %497 = vst [vmem:[%s4 + $0x60] sm:$0xff] %v227
  %498 = vst [vmem:[%s4 + $0x68] sm:$0xff] %v232
  %499 = vst [vmem:[%s4 + $0x70] sm:$0xff] %v237
  %500 = vst [vmem:[%s4 + $0x78] sm:$0xff] %v242
  %501 = vst [vmem:[%s4 + $0x80] sm:$0xff] %v247
  %502 = vst [vmem:[%s4 + $0x88] sm:$0xff] %v252
  %503 = vst [vmem:[%s4 + $0x90] sm:$0xff] %v257
  %504 = vst [vmem:[%s4 + $0x98] sm:$0xff] %v262
  %505 = vst [vmem:[%s4 + $0xa0] sm:$0xff] %v267
  %506 = vst [vmem:[%s4 + $0xa8] sm:$0xff] %v272
  %507 = vst [vmem:[%s4 + $0xb0] sm:$0xff] %v277
  %508 = vst [vmem:[%s4 + $0xb8] sm:$0xff] %v282
  %509 = vst [vmem:[%s4 + $0xc0] sm:$0xff] %v287
  %510 = vst [vmem:[%s4 + $0xc8] sm:$0xff] %v292
  %511 = vst [vmem:[%s4 + $0xd0] sm:$0xff] %v297
  %512 = vst [vmem:[%s4 + $0xd8] sm:$0xff] %v302
  %513 = vst [vmem:[%s4 + $0xe0] sm:$0xff] %v307
  %514 = vst [vmem:[%s4 + $0xe8] sm:$0xff] %v312
  %515 = vst [vmem:[%s4 + $0xf0] sm:$0xff] %v317
  %516 = vst [vmem:[%s4 + $0xf8] sm:$0xff] %v322
  %517 = vst [vmem:[%s4 + $0x100] sm:$0xff] %v327
  %518 = vst [vmem:[%s4 + $0x108] sm:$0xff] %v332
  %519 = vst [vmem:[%s4 + $0x110] sm:$0xff] %v337
  %520 = vst [vmem:[%s4 + $0x118] sm:$0xff] %v342
  %521 = vst [vmem:[%s4 + $0x120] sm:$0xff] %v347
  %522 = vst [vmem:[%s4 + $0x128] sm:$0xff] %v352
  %523 = vst [vmem:[%s4 + $0x130] sm:$0xff] %v357
  %524 = vst [vmem:[%s4 + $0x138] sm:$0xff] %v362
  %525 = vst [vmem:[%s4 + $0x140] sm:$0xff] %v367
  %526 = vst [vmem:[%s4 + $0x148] sm:$0xff] %v372
  %527 = vst [vmem:[%s4 + $0x150] sm:$0xff] %v377
  %528 = vst [vmem:[%s4 + $0x158] sm:$0xff] %v382
  %529 = vst [vmem:[%s4 + $0x160] sm:$0xff] %v387
  %530 = vst [vmem:[%s4 + $0x168] sm:$0xff] %v392
  %531 = vst [vmem:[%s4 + $0x170] sm:$0xff] %v397
  %532 = vst [vmem:[%s4 + $0x178] sm:$0xff] %v402
  %533 = vst [vmem:[%s4 + $0x180] sm:$0xff] %v407
  %534 = vst [vmem:[%s4 + $0x188] sm:$0xff] %v412
  %535 = vst [vmem:[%s4 + $0x190] sm:$0xff] %v417
  %536 = vst [vmem:[%s4 + $0x198] sm:$0xff] %v422
  %537 = vst [vmem:[%s4 + $0x1a0] sm:$0xff] %v427
  %538 = vst [vmem:[%s4 + $0x1a8] sm:$0xff] %v432
  %539 = vst [vmem:[%s4 + $0x1b0] sm:$0xff] %v437
  %540 = vst [vmem:[%s4 + $0x1b8] sm:$0xff] %v442
  %541 = vst [vmem:[%s4 + $0x1c0] sm:$0xff] %v447
  %542 = vst [vmem:[%s4 + $0x1c8] sm:$0xff] %v452
  %543 = vst [vmem:[%s4 + $0x1d0] sm:$0xff] %v457
  %544 = vst [vmem:[%s4 + $0x1d8] sm:$0xff] %v462
  %545 = vst [vmem:[%s4 + $0x1e0] sm:$0xff] %v467
  %546 = vst [vmem:[%s4 + $0x1e8] sm:$0xff] %v472
  %547 = vst [vmem:[%s4 + $0x1f0] sm:$0xff] %v477
  %548 = vst [vmem:[%s4 + $0x1f8] sm:$0xff] %v482
  %v549 = vadd.f32 %v167, %v172
  %v550 = vadd.f32 %v549, %v177
  %v551 = vadd.f32 %v550, %v182
  %v552 = vadd.f32 %v551, %v187
  %v553 = vadd.f32 %v552, %v192
  %v554 = vadd.f32 %v553, %v197
  %v555 = vadd.f32 %v554, %v202
  %v556 = vadd.f32 %v555, %v207
  %v557 = vadd.f32 %v556, %v212
  %v558 = vadd.f32 %v557, %v217
  %v559 = vadd.f32 %v558, %v222
  %v560 = vadd.f32 %v559, %v227
  %v561 = vadd.f32 %v560, %v232
  %v562 = vadd.f32 %v561, %v237
  %v563 = vadd.f32 %v562, %v242
  %v564 = vadd.f32 %v563, %v247
  %v565 = vadd.f32 %v564, %v252
  %v566 = vadd.f32 %v565, %v257
  %v567 = vadd.f32 %v566, %v262
  %v568 = vadd.f32 %v567, %v267
  %v569 = vadd.f32 %v568, %v272
  %v570 = vadd.f32 %v569, %v277
  %v571 = vadd.f32 %v570, %v282
  %v572 = vadd.f32 %v571, %v287
  %v573 = vadd.f32 %v572, %v292
  %v574 = vadd.f32 %v573, %v297
  %v575 = vadd.f32 %v574, %v302
  %v576 = vadd.f32 %v575, %v307
  %v577 = vadd.f32 %v576, %v312
  %v578 = vadd.f32 %v577, %v317
  %v579 = vadd.f32 %v578, %v322
  %v580 = vadd.f32 %v579, %v327
  %v581 = vadd.f32 %v580, %v332
  %v582 = vadd.f32 %v581, %v337
  %v583 = vadd.f32 %v582, %v342
  %v584 = vadd.f32 %v583, %v347
  %v585 = vadd.f32 %v584, %v352
  %v586 = vadd.f32 %v585, %v357
  %v587 = vadd.f32 %v586, %v362
  %v588 = vadd.f32 %v587, %v367
  %v589 = vadd.f32 %v588, %v372
  %v590 = vadd.f32 %v589, %v377
  %v591 = vadd.f32 %v590, %v382
  %v592 = vadd.f32 %v591, %v387
  %v593 = vadd.f32 %v592, %v392
  %v594 = vadd.f32 %v593, %v397
  %v595 = vadd.f32 %v594, %v402
  %v596 = vadd.f32 %v595, %v407
  %v597 = vadd.f32 %v596, %v412
  %v598 = vadd.f32 %v597, %v417
  %v599 = vadd.f32 %v598, %v422
  %v600 = vadd.f32 %v599, %v427
  %v601 = vadd.f32 %v600, %v432
  %v602 = vadd.f32 %v601, %v437
  %v603 = vadd.f32 %v602, %v442
  %v604 = vadd.f32 %v603, %v447
  %v605 = vadd.f32 %v604, %v452
  %v606 = vadd.f32 %v605, %v457
  %v607 = vadd.f32 %v606, %v462
  %v608 = vadd.f32 %v607, %v467
  %v609 = vadd.f32 %v608, %v472
  %v610 = vadd.f32 %v609, %v477
  %v611 = vadd.f32 %v610, %v482
  %v612 = vrot.slane %v611, 4
  %v613 = vadd.f32 %v611, %v612
  %v614 = vrot.slane %v613, 2
  %v615 = vadd.f32 %v613, %v614
  %v616 = vrot.slane %v615, 1
  %v617 = vadd.f32 %v615, %v616
  %618 = vst [vmem:[%s5] sm:$0x1] %v617
  %v619 = vmul.f32 %v167, %v167
  %v620 = vmul.f32 %v172, %v172
  %v621 = vmul.f32 %v177, %v177
  %v622 = vmul.f32 %v182, %v182
  %v623 = vmul.f32 %v187, %v187
  %v624 = vmul.f32 %v192, %v192
  %v625 = vmul.f32 %v197, %v197
  %v626 = vmul.f32 %v202, %v202
  %v627 = vmul.f32 %v207, %v207
  %v628 = vmul.f32 %v212, %v212
  %v629 = vmul.f32 %v217, %v217
  %v630 = vmul.f32 %v222, %v222
  %v631 = vmul.f32 %v227, %v227
  %v632 = vmul.f32 %v232, %v232
  %v633 = vmul.f32 %v237, %v237
  %v634 = vmul.f32 %v242, %v242
  %v635 = vmul.f32 %v247, %v247
  %v636 = vmul.f32 %v252, %v252
  %v637 = vmul.f32 %v257, %v257
  %v638 = vmul.f32 %v262, %v262
  %v639 = vmul.f32 %v267, %v267
  %v640 = vmul.f32 %v272, %v272
  %v641 = vmul.f32 %v277, %v277
  %v642 = vmul.f32 %v282, %v282
  %v643 = vmul.f32 %v287, %v287
  %v644 = vmul.f32 %v292, %v292
  %v645 = vmul.f32 %v297, %v297
  %v646 = vmul.f32 %v302, %v302
  %v647 = vmul.f32 %v307, %v307
  %v648 = vmul.f32 %v312, %v312
  %v649 = vmul.f32 %v317, %v317
  %v650 = vmul.f32 %v322, %v322
  %v651 = vmul.f32 %v327, %v327
  %v652 = vmul.f32 %v332, %v332
  %v653 = vmul.f32 %v337, %v337
  %v654 = vmul.f32 %v342, %v342
  %v655 = vmul.f32 %v347, %v347
  %v656 = vmul.f32 %v352, %v352
  %v657 = vmul.f32 %v357, %v357
  %v658 = vmul.f32 %v362, %v362
  %v659 = vmul.f32 %v367, %v367
  %v660 = vmul.f32 %v372, %v372
  %v661 = vmul.f32 %v377, %v377
  %v662 = vmul.f32 %v382, %v382
  %v663 = vmul.f32 %v387, %v387
  %v664 = vmul.f32 %v392, %v392
  %v665 = vmul.f32 %v397, %v397
  %v666 = vmul.f32 %v402, %v402
  %v667 = vmul.f32 %v407, %v407
  %v668 = vmul.f32 %v412, %v412
  %v669 = vmul.f32 %v417, %v417
  %v670 = vmul.f32 %v422, %v422
  %v671 = vmul.f32 %v427, %v427
  %v672 = vmul.f32 %v432, %v432
  %v673 = vmul.f32 %v437, %v437
  %v674 = vmul.f32 %v442, %v442
  %v675 = vmul.f32 %v447, %v447
  %v676 = vmul.f32 %v452, %v452
  %v677 = vmul.f32 %v457, %v457
  %v678 = vmul.f32 %v462, %v462
  %v679 = vmul.f32 %v467, %v467
  %v680 = vmul.f32 %v472, %v472
  %v681 = vmul.f32 %v477, %v477
  %v682 = vmul.f32 %v482, %v482
  %v683 = vadd.f32 %v619, %v620
  %v684 = vadd.f32 %v683, %v621
  %v685 = vadd.f32 %v684, %v622
  %v686 = vadd.f32 %v685, %v623
  %v687 = vadd.f32 %v686, %v624
  %v688 = vadd.f32 %v687, %v625
  %v689 = vadd.f32 %v688, %v626
  %v690 = vadd.f32 %v689, %v627
  %v691 = vadd.f32 %v690, %v628
  %v692 = vadd.f32 %v691, %v629
  %v693 = vadd.f32 %v692, %v630
  %v694 = vadd.f32 %v693, %v631
  %v695 = vadd.f32 %v694, %v632
  %v696 = vadd.f32 %v695, %v633
  %v697 = vadd.f32 %v696, %v634
  %v698 = vadd.f32 %v697, %v635
  %v699 = vadd.f32 %v698, %v636
  %v700 = vadd.f32 %v699, %v637
  %v701 = vadd.f32 %v700, %v638
  %v702 = vadd.f32 %v701, %v639
  %v703 = vadd.f32 %v702, %v640
  %v704 = vadd.f32 %v703, %v641
  %v705 = vadd.f32 %v704, %v642
  %v706 = vadd.f32 %v705, %v643
  %v707 = vadd.f32 %v706, %v644
  %v708 = vadd.f32 %v707, %v645
  %v709 = vadd.f32 %v708, %v646
  %v710 = vadd.f32 %v709, %v647
  %v711 = vadd.f32 %v710, %v648
  %v712 = vadd.f32 %v711, %v649
  %v713 = vadd.f32 %v712, %v650
  %v714 = vadd.f32 %v713, %v651
  %v715 = vadd.f32 %v714, %v652
  %v716 = vadd.f32 %v715, %v653
  %v717 = vadd.f32 %v716, %v654
  %v718 = vadd.f32 %v717, %v655
  %v719 = vadd.f32 %v718, %v656
  %v720 = vadd.f32 %v719, %v657
  %v721 = vadd.f32 %v720, %v658
  %v722 = vadd.f32 %v721, %v659
  %v723 = vadd.f32 %v722, %v660
  %v724 = vadd.f32 %v723, %v661
  %v725 = vadd.f32 %v724, %v662
  %v726 = vadd.f32 %v725, %v663
  %v727 = vadd.f32 %v726, %v664
  %v728 = vadd.f32 %v727, %v665
  %v729 = vadd.f32 %v728, %v666
  %v730 = vadd.f32 %v729, %v667
  %v731 = vadd.f32 %v730, %v668
  %v732 = vadd.f32 %v731, %v669
  %v733 = vadd.f32 %v732, %v670
  %v734 = vadd.f32 %v733, %v671
  %v735 = vadd.f32 %v734, %v672
  %v736 = vadd.f32 %v735, %v673
  %v737 = vadd.f32 %v736, %v674
  %v738 = vadd.f32 %v737, %v675
  %v739 = vadd.f32 %v738, %v676
  %v740 = vadd.f32 %v739, %v677
  %v741 = vadd.f32 %v740, %v678
  %v742 = vadd.f32 %v741, %v679
  %v743 = vadd.f32 %v742, %v680
  %v744 = vadd.f32 %v743, %v681
  %v745 = vadd.f32 %v744, %v682
  %v746 = vrot.slane %v745, 4
  %v747 = vadd.f32 %v745, %v746
  %v748 = vrot.slane %v747, 2
  %v749 = vadd.f32 %v747, %v748
  %v750 = vrot.slane %v749, 1
  %v751 = vadd.f32 %v749, %v750
  %752 = vst [vmem:[%s6] sm:$0x1] %v751
  // Predicated region
  $region18: #{bottleneck_forward.5} parent=0 // pred_check
    _
  $region19: #{bottleneck_forward.5} parent=0 // pred_check_branch
    %754 = sbr.rel (0) target = $region21
  $region20: #{bottleneck_forward.5} parent=0 // pred_region
    _
  $region21: #{bottleneck_forward.5} parent=0 // pred_fallthru
    _
  // Predicated region
  $region22: #{bottleneck_forward.5} parent=0 // pred_check
    _
  $region23: #{bottleneck_forward.5} parent=0 // pred_check_branch
    %756 = sbr.rel (0) target = $region25
  $region24: #{bottleneck_forward.5} parent=0 // pred_region
    _
  $region25: #{bottleneck_forward.5} parent=0 // pred_fallthru
    _
  // Predicated region
  $region26: #{bottleneck_forward.5} parent=0 // pred_check
    _
  $region27: #{bottleneck_forward.5} parent=0 // pred_check_branch
    %758 = sbr.rel (0) target = $region29
  $region28: #{bottleneck_forward.5} parent=0 // pred_region
    _
  $region29: #{bottleneck_forward.5} parent=0 // pred_fallthru
    _
  // Predicated region
  $region30: #{bottleneck_forward.5} parent=0 // pred_check
    _
  $region31: #{bottleneck_forward.5} parent=0 // pred_check_branch
    %760 = sbr.rel (0) target = $region33
  $region32: #{bottleneck_forward.5} parent=0 // pred_region
    _
  $region33: #{bottleneck_forward.5} parent=0 // pred_fallthru
    _
  // Predicated region
  $region34: #{bottleneck_forward.5} parent=0 // pred_check
    _
  $region35: #{bottleneck_forward.5} parent=0 // pred_check_branch
    %762 = sbr.rel (0) target = $region37
  $region36: #{bottleneck_forward.5} parent=0 // pred_region
    _
  $region37: #{bottleneck_forward.5} parent=0 // pred_fallthru
    _
  // Predicated region
  $region38: #{bottleneck_forward.5} parent=0 // pred_check
    _
  $region39: #{bottleneck_forward.5} parent=0 // pred_check_branch
    %764 = sbr.rel (0) target = $region41
  $region40: #{bottleneck_forward.5} parent=0 // pred_region
    _
  $region41: #{bottleneck_forward.5} parent=0 // pred_fallthru
    _

// kernel: bottleneck_forward.9
$region0: #{bottleneck_forward.9}
  #allocation0 [shape = 'u32[]', space=smem, size = 0x4, offset = 0x4, fixed_abs, tag = 'smem constant byte address 0x4 - core index']
  #allocation1 [shape = 'u32[144,128]{1,0:T(1,128)}', space=vmem, size = 0x12000, scoped, tag = 'internal scratch']
  %s0 = inlined_call_operand.vmem [shape: f32[512,128], index: 0, kind: input, shape index: {}]
  %s1 = inlined_call_operand.vmem [shape: f32[1,128], index: 1, kind: input, shape index: {}]
  %s2 = inlined_call_operand.vmem [shape: f32[1,128], index: 2, kind: input, shape index: {}]
  %s3 = inlined_call_operand.vmem [shape: f32[512,128], index: 3, kind: input, shape index: {}]
  %s4 = inlined_call_operand.vmem [shape: f32[1,128], index: 4, kind: input, shape index: {}]
  %s5 = inlined_call_operand.vmem [shape: f32[1,128], index: 5, kind: input, shape index: {}]
  %s6 = inlined_call_operand.vmem [shape: f32[512,128], index: 6, kind: output, shape index: {}]
  %s7 = sld [smem:[#allocation0]]
  $region34: #{bottleneck_forward.9} parent=0
    _
  %s9 = ssub.s32 1, %s7
  %s10 = scalar_select 0, %s9, %s7
  // Predicated region
  $region2: #{bottleneck_forward.9} parent=0 // pred_check
    _
  $region3: #{bottleneck_forward.9} parent=0 // pred_check_branch
    %12 = sbr.rel (0) target = $region5
  $region4: #{bottleneck_forward.9} parent=0 // pred_region
    _
  $region5: #{bottleneck_forward.9} parent=0 // pred_fallthru
    _
  // Predicated region
  $region6: #{bottleneck_forward.9} parent=0 // pred_check
    _
  $region7: #{bottleneck_forward.9} parent=0 // pred_check_branch
    %14 = sbr.rel (0) target = $region9
  $region8: #{bottleneck_forward.9} parent=0 // pred_region
    _
  $region9: #{bottleneck_forward.9} parent=0 // pred_fallthru
    _
  // Predicated region
  $region10: #{bottleneck_forward.9} parent=0 // pred_check
    _
  $region11: #{bottleneck_forward.9} parent=0 // pred_check_branch
    %16 = sbr.rel (0) target = $region13
  $region12: #{bottleneck_forward.9} parent=0 // pred_region
    _
  $region13: #{bottleneck_forward.9} parent=0 // pred_fallthru
    _
  // Predicated region
  $region14: #{bottleneck_forward.9} parent=0 // pred_check
    _
  $region15: #{bottleneck_forward.9} parent=0 // pred_check_branch
    %18 = sbr.rel (0) target = $region17
  $region16: #{bottleneck_forward.9} parent=0 // pred_region
    _
  $region17: #{bottleneck_forward.9} parent=0 // pred_fallthru
    _
  // Predicated region
  $region18: #{bottleneck_forward.9} parent=0 // pred_check
    _
  $region19: #{bottleneck_forward.9} parent=0 // pred_check_branch
    %20 = sbr.rel (0) target = $region21
  $region20: #{bottleneck_forward.9} parent=0 // pred_region
    _
  $region21: #{bottleneck_forward.9} parent=0 // pred_fallthru
    _
  // Predicated region
  $region22: #{bottleneck_forward.9} parent=0 // pred_check
    _
  $region23: #{bottleneck_forward.9} parent=0 // pred_check_branch
    %22 = sbr.rel (0) target = $region25
  $region24: #{bottleneck_forward.9} parent=0 // pred_region
    _
  $region25: #{bottleneck_forward.9} parent=0 // pred_fallthru
    _
  %v23 = vld [vmem:[%s0] sm:$0xff]
  %v24 = vld [vmem:[%s0 + $0x8] sm:$0xff]
  %v25 = vld [vmem:[%s0 + $0x10] sm:$0xff]
  %v26 = vld [vmem:[%s0 + $0x18] sm:$0xff]
  %v27 = vld [vmem:[%s0 + $0x20] sm:$0xff]
  %v28 = vld [vmem:[%s0 + $0x28] sm:$0xff]
  %v29 = vld [vmem:[%s0 + $0x30] sm:$0xff]
  %v30 = vld [vmem:[%s0 + $0x38] sm:$0xff]
  %v31 = vld [vmem:[%s0 + $0x40] sm:$0xff]
  %v32 = vld [vmem:[%s0 + $0x48] sm:$0xff]
  %v33 = vld [vmem:[%s0 + $0x50] sm:$0xff]
  %v34 = vld [vmem:[%s0 + $0x58] sm:$0xff]
  %v35 = vld [vmem:[%s0 + $0x60] sm:$0xff]
  %v36 = vld [vmem:[%s0 + $0x68] sm:$0xff]
  %v37 = vld [vmem:[%s0 + $0x70] sm:$0xff]
  %v38 = vld [vmem:[%s0 + $0x78] sm:$0xff]
  %v39 = vld [vmem:[%s0 + $0x80] sm:$0xff]
  %v40 = vld [vmem:[%s0 + $0x88] sm:$0xff]
  %v41 = vld [vmem:[%s0 + $0x90] sm:$0xff]
  %v42 = vld [vmem:[%s0 + $0x98] sm:$0xff]
  %v43 = vld [vmem:[%s0 + $0xa0] sm:$0xff]
  %v44 = vld [vmem:[%s0 + $0xa8] sm:$0xff]
  %v45 = vld [vmem:[%s0 + $0xb0] sm:$0xff]
  %v46 = vld [vmem:[%s0 + $0xb8] sm:$0xff]
  %v47 = vld [vmem:[%s0 + $0xc0] sm:$0xff]
  %v48 = vld [vmem:[%s0 + $0xc8] sm:$0xff]
  %v49 = vld [vmem:[%s0 + $0xd0] sm:$0xff]
  %v50 = vld [vmem:[%s0 + $0xd8] sm:$0xff]
  %v51 = vld [vmem:[%s0 + $0xe0] sm:$0xff]
  %v52 = vld [vmem:[%s0 + $0xe8] sm:$0xff]
  %v53 = vld [vmem:[%s0 + $0xf0] sm:$0xff]
  %v54 = vld [vmem:[%s0 + $0xf8] sm:$0xff]
  %v55 = vld [vmem:[%s0 + $0x100] sm:$0xff]
  %v56 = vld [vmem:[%s0 + $0x108] sm:$0xff]
  %v57 = vld [vmem:[%s0 + $0x110] sm:$0xff]
  %v58 = vld [vmem:[%s0 + $0x118] sm:$0xff]
  %v59 = vld [vmem:[%s0 + $0x120] sm:$0xff]
  %v60 = vld [vmem:[%s0 + $0x128] sm:$0xff]
  %v61 = vld [vmem:[%s0 + $0x130] sm:$0xff]
  %v62 = vld [vmem:[%s0 + $0x138] sm:$0xff]
  %v63 = vld [vmem:[%s0 + $0x140] sm:$0xff]
  %v64 = vld [vmem:[%s0 + $0x148] sm:$0xff]
  %v65 = vld [vmem:[%s0 + $0x150] sm:$0xff]
  %v66 = vld [vmem:[%s0 + $0x158] sm:$0xff]
  %v67 = vld [vmem:[%s0 + $0x160] sm:$0xff]
  %v68 = vld [vmem:[%s0 + $0x168] sm:$0xff]
  %v69 = vld [vmem:[%s0 + $0x170] sm:$0xff]
  %v70 = vld [vmem:[%s0 + $0x178] sm:$0xff]
  %v71 = vld [vmem:[%s0 + $0x180] sm:$0xff]
  %v72 = vld [vmem:[%s0 + $0x188] sm:$0xff]
  %v73 = vld [vmem:[%s0 + $0x190] sm:$0xff]
  %v74 = vld [vmem:[%s0 + $0x198] sm:$0xff]
  %v75 = vld [vmem:[%s0 + $0x1a0] sm:$0xff]
  %v76 = vld [vmem:[%s0 + $0x1a8] sm:$0xff]
  %v77 = vld [vmem:[%s0 + $0x1b0] sm:$0xff]
  %v78 = vld [vmem:[%s0 + $0x1b8] sm:$0xff]
  %v79 = vld [vmem:[%s0 + $0x1c0] sm:$0xff]
  %v80 = vld [vmem:[%s0 + $0x1c8] sm:$0xff]
  %v81 = vld [vmem:[%s0 + $0x1d0] sm:$0xff]
  %v82 = vld [vmem:[%s0 + $0x1d8] sm:$0xff]
  %v83 = vld [vmem:[%s0 + $0x1e0] sm:$0xff]
  %v84 = vld [vmem:[%s0 + $0x1e8] sm:$0xff]
  %v85 = vld [vmem:[%s0 + $0x1f0] sm:$0xff]
  %v86 = vld [vmem:[%s0 + $0x1f8] sm:$0xff]
  %v87 = vld [vmem:[%s1] sm:$0x1]
  %v89 = vlaneseq
  %v90 = vshrl.u32 %v89, 7
  %v91 = vsub.s32 0, %v90
  %v92 = vrot.slane %v87, %v91
  %v94 = vmul.f32 %v23, %v92
  %v95 = vmul.f32 %v24, %v92
  %v96 = vmul.f32 %v25, %v92
  %v97 = vmul.f32 %v26, %v92
  %v98 = vmul.f32 %v27, %v92
  %v99 = vmul.f32 %v28, %v92
  %v100 = vmul.f32 %v29, %v92
  %v101 = vmul.f32 %v30, %v92
  %v102 = vmul.f32 %v31, %v92
  %v103 = vmul.f32 %v32, %v92
  %v104 = vmul.f32 %v33, %v92
  %v105 = vmul.f32 %v34, %v92
  %v106 = vmul.f32 %v35, %v92
  %v107 = vmul.f32 %v36, %v92
  %v108 = vmul.f32 %v37, %v92
  %v109 = vmul.f32 %v38, %v92
  %v110 = vmul.f32 %v39, %v92
  %v111 = vmul.f32 %v40, %v92
  %v112 = vmul.f32 %v41, %v92
  %v113 = vmul.f32 %v42, %v92
  %v114 = vmul.f32 %v43, %v92
  %v115 = vmul.f32 %v44, %v92
  %v116 = vmul.f32 %v45, %v92
  %v117 = vmul.f32 %v46, %v92
  %v118 = vmul.f32 %v47, %v92
  %v119 = vmul.f32 %v48, %v92
  %v120 = vmul.f32 %v49, %v92
  %v121 = vmul.f32 %v50, %v92
  %v122 = vmul.f32 %v51, %v92
  %v123 = vmul.f32 %v52, %v92
  %v124 = vmul.f32 %v53, %v92
  %v125 = vmul.f32 %v54, %v92
  %v126 = vmul.f32 %v55, %v92
  %v127 = vmul.f32 %v56, %v92
  %v128 = vmul.f32 %v57, %v92
  %v129 = vmul.f32 %v58, %v92
  %v130 = vmul.f32 %v59, %v92
  %v131 = vmul.f32 %v60, %v92
  %v132 = vmul.f32 %v61, %v92
  %v133 = vmul.f32 %v62, %v92
  %v134 = vmul.f32 %v63, %v92
  %v135 = vmul.f32 %v64, %v92
  %v136 = vmul.f32 %v65, %v92
  %v137 = vmul.f32 %v66, %v92
  %v138 = vmul.f32 %v67, %v92
  %v139 = vmul.f32 %v68, %v92
  %v140 = vmul.f32 %v69, %v92
  %v141 = vmul.f32 %v70, %v92
  %v142 = vmul.f32 %v71, %v92
  %v143 = vmul.f32 %v72, %v92
  %v144 = vmul.f32 %v73, %v92
  %v145 = vmul.f32 %v74, %v92
  %v146 = vmul.f32 %v75, %v92
  %v147 = vmul.f32 %v76, %v92
  %v148 = vmul.f32 %v77, %v92
  %v149 = vmul.f32 %v78, %v92
  %v150 = vmul.f32 %v79, %v92
  %v151 = vmul.f32 %v80, %v92
  %v152 = vmul.f32 %v81, %v92
  %v153 = vmul.f32 %v82, %v92
  %v154 = vmul.f32 %v83, %v92
  %v155 = vmul.f32 %v84, %v92
  %v156 = vmul.f32 %v85, %v92
  %v157 = vmul.f32 %v86, %v92
  %v158 = vld [vmem:[%s2] sm:$0x1]
  %v160 = vlaneseq
  %v161 = vshrl.u32 %v160, 7
  %v162 = vsub.s32 0, %v161
  %v163 = vrot.slane %v158, %v162
  %v165 = vadd.f32 %v94, %v163
  %v166 = vadd.f32 %v95, %v163
  %v167 = vadd.f32 %v96, %v163
  %v168 = vadd.f32 %v97, %v163
  %v169 = vadd.f32 %v98, %v163
  %v170 = vadd.f32 %v99, %v163
  %v171 = vadd.f32 %v100, %v163
  %v172 = vadd.f32 %v101, %v163
  %v173 = vadd.f32 %v102, %v163
  %v174 = vadd.f32 %v103, %v163
  %v175 = vadd.f32 %v104, %v163
  %v176 = vadd.f32 %v105, %v163
  %v177 = vadd.f32 %v106, %v163
  %v178 = vadd.f32 %v107, %v163
  %v179 = vadd.f32 %v108, %v163
  %v180 = vadd.f32 %v109, %v163
  %v181 = vadd.f32 %v110, %v163
  %v182 = vadd.f32 %v111, %v163
  %v183 = vadd.f32 %v112, %v163
  %v184 = vadd.f32 %v113, %v163
  %v185 = vadd.f32 %v114, %v163
  %v186 = vadd.f32 %v115, %v163
  %v187 = vadd.f32 %v116, %v163
  %v188 = vadd.f32 %v117, %v163
  %v189 = vadd.f32 %v118, %v163
  %v190 = vadd.f32 %v119, %v163
  %v191 = vadd.f32 %v120, %v163
  %v192 = vadd.f32 %v121, %v163
  %v193 = vadd.f32 %v122, %v163
  %v194 = vadd.f32 %v123, %v163
  %v195 = vadd.f32 %v124, %v163
  %v196 = vadd.f32 %v125, %v163
  %v197 = vadd.f32 %v126, %v163
  %v198 = vadd.f32 %v127, %v163
  %v199 = vadd.f32 %v128, %v163
  %v200 = vadd.f32 %v129, %v163
  %v201 = vadd.f32 %v130, %v163
  %v202 = vadd.f32 %v131, %v163
  %v203 = vadd.f32 %v132, %v163
  %v204 = vadd.f32 %v133, %v163
  %v205 = vadd.f32 %v134, %v163
  %v206 = vadd.f32 %v135, %v163
  %v207 = vadd.f32 %v136, %v163
  %v208 = vadd.f32 %v137, %v163
  %v209 = vadd.f32 %v138, %v163
  %v210 = vadd.f32 %v139, %v163
  %v211 = vadd.f32 %v140, %v163
  %v212 = vadd.f32 %v141, %v163
  %v213 = vadd.f32 %v142, %v163
  %v214 = vadd.f32 %v143, %v163
  %v215 = vadd.f32 %v144, %v163
  %v216 = vadd.f32 %v145, %v163
  %v217 = vadd.f32 %v146, %v163
  %v218 = vadd.f32 %v147, %v163
  %v219 = vadd.f32 %v148, %v163
  %v220 = vadd.f32 %v149, %v163
  %v221 = vadd.f32 %v150, %v163
  %v222 = vadd.f32 %v151, %v163
  %v223 = vadd.f32 %v152, %v163
  %v224 = vadd.f32 %v153, %v163
  %v225 = vadd.f32 %v154, %v163
  %v226 = vadd.f32 %v155, %v163
  %v227 = vadd.f32 %v156, %v163
  %v228 = vadd.f32 %v157, %v163
  %v229 = vld [vmem:[%s3] sm:$0xff]
  %v230 = vld [vmem:[%s3 + $0x8] sm:$0xff]
  %v231 = vld [vmem:[%s3 + $0x10] sm:$0xff]
  %v232 = vld [vmem:[%s3 + $0x18] sm:$0xff]
  %v233 = vld [vmem:[%s3 + $0x20] sm:$0xff]
  %v234 = vld [vmem:[%s3 + $0x28] sm:$0xff]
  %v235 = vld [vmem:[%s3 + $0x30] sm:$0xff]
  %v236 = vld [vmem:[%s3 + $0x38] sm:$0xff]
  %v237 = vld [vmem:[%s3 + $0x40] sm:$0xff]
  %v238 = vld [vmem:[%s3 + $0x48] sm:$0xff]
  %v239 = vld [vmem:[%s3 + $0x50] sm:$0xff]
  %v240 = vld [vmem:[%s3 + $0x58] sm:$0xff]
  %v241 = vld [vmem:[%s3 + $0x60] sm:$0xff]
  %v242 = vld [vmem:[%s3 + $0x68] sm:$0xff]
  %v243 = vld [vmem:[%s3 + $0x70] sm:$0xff]
  %v244 = vld [vmem:[%s3 + $0x78] sm:$0xff]
  %v245 = vld [vmem:[%s3 + $0x80] sm:$0xff]
  %v246 = vld [vmem:[%s3 + $0x88] sm:$0xff]
  %v247 = vld [vmem:[%s3 + $0x90] sm:$0xff]
  %v248 = vld [vmem:[%s3 + $0x98] sm:$0xff]
  %v249 = vld [vmem:[%s3 + $0xa0] sm:$0xff]
  %v250 = vld [vmem:[%s3 + $0xa8] sm:$0xff]
  %v251 = vld [vmem:[%s3 + $0xb0] sm:$0xff]
  %v252 = vld [vmem:[%s3 + $0xb8] sm:$0xff]
  %v253 = vld [vmem:[%s3 + $0xc0] sm:$0xff]
  %v254 = vld [vmem:[%s3 + $0xc8] sm:$0xff]
  %v255 = vld [vmem:[%s3 + $0xd0] sm:$0xff]
  %v256 = vld [vmem:[%s3 + $0xd8] sm:$0xff]
  %v257 = vld [vmem:[%s3 + $0xe0] sm:$0xff]
  %v258 = vld [vmem:[%s3 + $0xe8] sm:$0xff]
  %v259 = vld [vmem:[%s3 + $0xf0] sm:$0xff]
  %v260 = vld [vmem:[%s3 + $0xf8] sm:$0xff]
  %v261 = vld [vmem:[%s3 + $0x100] sm:$0xff]
  %v262 = vld [vmem:[%s3 + $0x108] sm:$0xff]
  %v263 = vld [vmem:[%s3 + $0x110] sm:$0xff]
  %v264 = vld [vmem:[%s3 + $0x118] sm:$0xff]
  %v265 = vld [vmem:[%s3 + $0x120] sm:$0xff]
  %v266 = vld [vmem:[%s3 + $0x128] sm:$0xff]
  %v267 = vld [vmem:[%s3 + $0x130] sm:$0xff]
  %v268 = vld [vmem:[%s3 + $0x138] sm:$0xff]
  %v269 = vld [vmem:[%s3 + $0x140] sm:$0xff]
  %v270 = vld [vmem:[%s3 + $0x148] sm:$0xff]
  %v271 = vld [vmem:[%s3 + $0x150] sm:$0xff]
  %v272 = vld [vmem:[%s3 + $0x158] sm:$0xff]
  %v273 = vld [vmem:[%s3 + $0x160] sm:$0xff]
  %v274 = vld [vmem:[%s3 + $0x168] sm:$0xff]
  %v275 = vld [vmem:[%s3 + $0x170] sm:$0xff]
  %v276 = vld [vmem:[%s3 + $0x178] sm:$0xff]
  %v277 = vld [vmem:[%s3 + $0x180] sm:$0xff]
  %v278 = vld [vmem:[%s3 + $0x188] sm:$0xff]
  %v279 = vld [vmem:[%s3 + $0x190] sm:$0xff]
  %v280 = vld [vmem:[%s3 + $0x198] sm:$0xff]
  %v281 = vld [vmem:[%s3 + $0x1a0] sm:$0xff]
  %v282 = vld [vmem:[%s3 + $0x1a8] sm:$0xff]
  %v283 = vld [vmem:[%s3 + $0x1b0] sm:$0xff]
  %v284 = vld [vmem:[%s3 + $0x1b8] sm:$0xff]
  %v285 = vld [vmem:[%s3 + $0x1c0] sm:$0xff]
  %v286 = vld [vmem:[%s3 + $0x1c8] sm:$0xff]
  %v287 = vld [vmem:[%s3 + $0x1d0] sm:$0xff]
  %v288 = vld [vmem:[%s3 + $0x1d8] sm:$0xff]
  %v289 = vld [vmem:[%s3 + $0x1e0] sm:$0xff]
  %v290 = vld [vmem:[%s3 + $0x1e8] sm:$0xff]
  %v291 = vld [vmem:[%s3 + $0x1f0] sm:$0xff]
  %v292 = vld [vmem:[%s3 + $0x1f8] sm:$0xff]
  %v293 = vld [vmem:[%s4] sm:$0x1]
  %v295 = vlaneseq
  %v296 = vshrl.u32 %v295, 7
  %v297 = vsub.s32 0, %v296
  %v298 = vrot.slane %v293, %v297
  %v300 = vmul.f32 %v229, %v298
  %v301 = vmul.f32 %v230, %v298
  %v302 = vmul.f32 %v231, %v298
  %v303 = vmul.f32 %v232, %v298
  %v304 = vmul.f32 %v233, %v298
  %v305 = vmul.f32 %v234, %v298
  %v306 = vmul.f32 %v235, %v298
  %v307 = vmul.f32 %v236, %v298
  %v308 = vmul.f32 %v237, %v298
  %v309 = vmul.f32 %v238, %v298
  %v310 = vmul.f32 %v239, %v298
  %v311 = vmul.f32 %v240, %v298
  %v312 = vmul.f32 %v241, %v298
  %v313 = vmul.f32 %v242, %v298
  %v314 = vmul.f32 %v243, %v298
  %v315 = vmul.f32 %v244, %v298
  %v316 = vmul.f32 %v245, %v298
  %v317 = vmul.f32 %v246, %v298
  %v318 = vmul.f32 %v247, %v298
  %v319 = vmul.f32 %v248, %v298
  %v320 = vmul.f32 %v249, %v298
  %v321 = vmul.f32 %v250, %v298
  %v322 = vmul.f32 %v251, %v298
  %v323 = vmul.f32 %v252, %v298
  %v324 = vmul.f32 %v253, %v298
  %v325 = vmul.f32 %v254, %v298
  %v326 = vmul.f32 %v255, %v298
  %v327 = vmul.f32 %v256, %v298
  %v328 = vmul.f32 %v257, %v298
  %v329 = vmul.f32 %v258, %v298
  %v330 = vmul.f32 %v259, %v298
  %v331 = vmul.f32 %v260, %v298
  %v332 = vmul.f32 %v261, %v298
  %v333 = vmul.f32 %v262, %v298
  %v334 = vmul.f32 %v263, %v298
  %v335 = vmul.f32 %v264, %v298
  %v336 = vmul.f32 %v265, %v298
  %v337 = vmul.f32 %v266, %v298
  %v338 = vmul.f32 %v267, %v298
  %v339 = vmul.f32 %v268, %v298
  %v340 = vmul.f32 %v269, %v298
  %v341 = vmul.f32 %v270, %v298
  %v342 = vmul.f32 %v271, %v298
  %v343 = vmul.f32 %v272, %v298
  %v344 = vmul.f32 %v273, %v298
  %v345 = vmul.f32 %v274, %v298
  %v346 = vmul.f32 %v275, %v298
  %v347 = vmul.f32 %v276, %v298
  %v348 = vmul.f32 %v277, %v298
  %v349 = vmul.f32 %v278, %v298
  %v350 = vmul.f32 %v279, %v298
  %v351 = vmul.f32 %v280, %v298
  %v352 = vmul.f32 %v281, %v298
  %v353 = vmul.f32 %v282, %v298
  %v354 = vmul.f32 %v283, %v298
  %v355 = vmul.f32 %v284, %v298
  %v356 = vmul.f32 %v285, %v298
  %v357 = vmul.f32 %v286, %v298
  %v358 = vmul.f32 %v287, %v298
  %v359 = vmul.f32 %v288, %v298
  %v360 = vmul.f32 %v289, %v298
  %v361 = vmul.f32 %v290, %v298
  %v362 = vmul.f32 %v291, %v298
  %v363 = vmul.f32 %v292, %v298
  %v364 = vld [vmem:[%s5] sm:$0x1]
  %v366 = vlaneseq
  %v367 = vshrl.u32 %v366, 7
  %v368 = vsub.s32 0, %v367
  %v369 = vrot.slane %v364, %v368
  %v371 = vadd.f32 %v300, %v369
  %v372 = vadd.f32 %v301, %v369
  %v373 = vadd.f32 %v302, %v369
  %v374 = vadd.f32 %v303, %v369
  %v375 = vadd.f32 %v304, %v369
  %v376 = vadd.f32 %v305, %v369
  %v377 = vadd.f32 %v306, %v369
  %v378 = vadd.f32 %v307, %v369
  %v379 = vadd.f32 %v308, %v369
  %v380 = vadd.f32 %v309, %v369
  %v381 = vadd.f32 %v310, %v369
  %v382 = vadd.f32 %v311, %v369
  %v383 = vadd.f32 %v312, %v369
  %v384 = vadd.f32 %v313, %v369
  %v385 = vadd.f32 %v314, %v369
  %v386 = vadd.f32 %v315, %v369
  %v387 = vadd.f32 %v316, %v369
  %v388 = vadd.f32 %v317, %v369
  %v389 = vadd.f32 %v318, %v369
  %v390 = vadd.f32 %v319, %v369
  %v391 = vadd.f32 %v320, %v369
  %v392 = vadd.f32 %v321, %v369
  %v393 = vadd.f32 %v322, %v369
  %v394 = vadd.f32 %v323, %v369
  %v395 = vadd.f32 %v324, %v369
  %v396 = vadd.f32 %v325, %v369
  %v397 = vadd.f32 %v326, %v369
  %v398 = vadd.f32 %v327, %v369
  %v399 = vadd.f32 %v328, %v369
  %v400 = vadd.f32 %v329, %v369
  %v401 = vadd.f32 %v330, %v369
  %v402 = vadd.f32 %v331, %v369
  %v403 = vadd.f32 %v332, %v369
  %v404 = vadd.f32 %v333, %v369
  %v405 = vadd.f32 %v334, %v369
  %v406 = vadd.f32 %v335, %v369
  %v407 = vadd.f32 %v336, %v369
  %v408 = vadd.f32 %v337, %v369
  %v409 = vadd.f32 %v338, %v369
  %v410 = vadd.f32 %v339, %v369
  %v411 = vadd.f32 %v340, %v369
  %v412 = vadd.f32 %v341, %v369
  %v413 = vadd.f32 %v342, %v369
  %v414 = vadd.f32 %v343, %v369
  %v415 = vadd.f32 %v344, %v369
  %v416 = vadd.f32 %v345, %v369
  %v417 = vadd.f32 %v346, %v369
  %v418 = vadd.f32 %v347, %v369
  %v419 = vadd.f32 %v348, %v369
  %v420 = vadd.f32 %v349, %v369
  %v421 = vadd.f32 %v350, %v369
  %v422 = vadd.f32 %v351, %v369
  %v423 = vadd.f32 %v352, %v369
  %v424 = vadd.f32 %v353, %v369
  %v425 = vadd.f32 %v354, %v369
  %v426 = vadd.f32 %v355, %v369
  %v427 = vadd.f32 %v356, %v369
  %v428 = vadd.f32 %v357, %v369
  %v429 = vadd.f32 %v358, %v369
  %v430 = vadd.f32 %v359, %v369
  %v431 = vadd.f32 %v360, %v369
  %v432 = vadd.f32 %v361, %v369
  %v433 = vadd.f32 %v362, %v369
  %v434 = vadd.f32 %v363, %v369
  %v435 = vadd.f32 %v165, %v371
  %v436 = vadd.f32 %v166, %v372
  %v437 = vadd.f32 %v167, %v373
  %v438 = vadd.f32 %v168, %v374
  %v439 = vadd.f32 %v169, %v375
  %v440 = vadd.f32 %v170, %v376
  %v441 = vadd.f32 %v171, %v377
  %v442 = vadd.f32 %v172, %v378
  %v443 = vadd.f32 %v173, %v379
  %v444 = vadd.f32 %v174, %v380
  %v445 = vadd.f32 %v175, %v381
  %v446 = vadd.f32 %v176, %v382
  %v447 = vadd.f32 %v177, %v383
  %v448 = vadd.f32 %v178, %v384
  %v449 = vadd.f32 %v179, %v385
  %v450 = vadd.f32 %v180, %v386
  %v451 = vadd.f32 %v181, %v387
  %v452 = vadd.f32 %v182, %v388
  %v453 = vadd.f32 %v183, %v389
  %v454 = vadd.f32 %v184, %v390
  %v455 = vadd.f32 %v185, %v391
  %v456 = vadd.f32 %v186, %v392
  %v457 = vadd.f32 %v187, %v393
  %v458 = vadd.f32 %v188, %v394
  %v459 = vadd.f32 %v189, %v395
  %v460 = vadd.f32 %v190, %v396
  %v461 = vadd.f32 %v191, %v397
  %v462 = vadd.f32 %v192, %v398
  %v463 = vadd.f32 %v193, %v399
  %v464 = vadd.f32 %v194, %v400
  %v465 = vadd.f32 %v195, %v401
  %v466 = vadd.f32 %v196, %v402
  %v467 = vadd.f32 %v197, %v403
  %v468 = vadd.f32 %v198, %v404
  %v469 = vadd.f32 %v199, %v405
  %v470 = vadd.f32 %v200, %v406
  %v471 = vadd.f32 %v201, %v407
  %v472 = vadd.f32 %v202, %v408
  %v473 = vadd.f32 %v203, %v409
  %v474 = vadd.f32 %v204, %v410
  %v475 = vadd.f32 %v205, %v411
  %v476 = vadd.f32 %v206, %v412
  %v477 = vadd.f32 %v207, %v413
  %v478 = vadd.f32 %v208, %v414
  %v479 = vadd.f32 %v209, %v415
  %v480 = vadd.f32 %v210, %v416
  %v481 = vadd.f32 %v211, %v417
  %v482 = vadd.f32 %v212, %v418
  %v483 = vadd.f32 %v213, %v419
  %v484 = vadd.f32 %v214, %v420
  %v485 = vadd.f32 %v215, %v421
  %v486 = vadd.f32 %v216, %v422
  %v487 = vadd.f32 %v217, %v423
  %v488 = vadd.f32 %v218, %v424
  %v489 = vadd.f32 %v219, %v425
  %v490 = vadd.f32 %v220, %v426
  %v491 = vadd.f32 %v221, %v427
  %v492 = vadd.f32 %v222, %v428
  %v493 = vadd.f32 %v223, %v429
  %v494 = vadd.f32 %v224, %v430
  %v495 = vadd.f32 %v225, %v431
  %v496 = vadd.f32 %v226, %v432
  %v497 = vadd.f32 %v227, %v433
  %v498 = vadd.f32 %v228, %v434
  %v499 = vmax.f32 %v435, 0.0
  %v500 = vmax.f32 %v436, 0.0
  %v501 = vmax.f32 %v437, 0.0
  %v502 = vmax.f32 %v438, 0.0
  %v503 = vmax.f32 %v439, 0.0
  %v504 = vmax.f32 %v440, 0.0
  %v505 = vmax.f32 %v441, 0.0
  %v506 = vmax.f32 %v442, 0.0
  %v507 = vmax.f32 %v443, 0.0
  %v508 = vmax.f32 %v444, 0.0
  %v509 = vmax.f32 %v445, 0.0
  %v510 = vmax.f32 %v446, 0.0
  %v511 = vmax.f32 %v447, 0.0
  %v512 = vmax.f32 %v448, 0.0
  %v513 = vmax.f32 %v449, 0.0
  %v514 = vmax.f32 %v450, 0.0
  %v515 = vmax.f32 %v451, 0.0
  %v516 = vmax.f32 %v452, 0.0
  %v517 = vmax.f32 %v453, 0.0
  %v518 = vmax.f32 %v454, 0.0
  %v519 = vmax.f32 %v455, 0.0
  %v520 = vmax.f32 %v456, 0.0
  %v521 = vmax.f32 %v457, 0.0
  %v522 = vmax.f32 %v458, 0.0
  %v523 = vmax.f32 %v459, 0.0
  %v524 = vmax.f32 %v460, 0.0
  %v525 = vmax.f32 %v461, 0.0
  %v526 = vmax.f32 %v462, 0.0
  %v527 = vmax.f32 %v463, 0.0
  %v528 = vmax.f32 %v464, 0.0
  %v529 = vmax.f32 %v465, 0.0
  %v530 = vmax.f32 %v466, 0.0
  %v531 = vmax.f32 %v467, 0.0
  %v532 = vmax.f32 %v468, 0.0
  %v533 = vmax.f32 %v469, 0.0
  %v534 = vmax.f32 %v470, 0.0
  %v535 = vmax.f32 %v471, 0.0
  %v536 = vmax.f32 %v472, 0.0
  %v537 = vmax.f32 %v473, 0.0
  %v538 = vmax.f32 %v474, 0.0
  %v539 = vmax.f32 %v475, 0.0
  %v540 = vmax.f32 %v476, 0.0
  %v541 = vmax.f32 %v477, 0.0
  %v542 = vmax.f32 %v478, 0.0
  %v543 = vmax.f32 %v479, 0.0
  %v544 = vmax.f32 %v480, 0.0
  %v545 = vmax.f32 %v481, 0.0
  %v546 = vmax.f32 %v482, 0.0
  %v547 = vmax.f32 %v483, 0.0
  %v548 = vmax.f32 %v484, 0.0
  %v549 = vmax.f32 %v485, 0.0
  %v550 = vmax.f32 %v486, 0.0
  %v551 = vmax.f32 %v487, 0.0
  %v552 = vmax.f32 %v488, 0.0
  %v553 = vmax.f32 %v489, 0.0
  %v554 = vmax.f32 %v490, 0.0
  %v555 = vmax.f32 %v491, 0.0
  %v556 = vmax.f32 %v492, 0.0
  %v557 = vmax.f32 %v493, 0.0
  %v558 = vmax.f32 %v494, 0.0
  %v559 = vmax.f32 %v495, 0.0
  %v560 = vmax.f32 %v496, 0.0
  %v561 = vmax.f32 %v497, 0.0
  %v562 = vmax.f32 %v498, 0.0
  %563 = vst [vmem:[%s6] sm:$0xff] %v499
  %564 = vst [vmem:[%s6 + $0x8] sm:$0xff] %v500
  %565 = vst [vmem:[%s6 + $0x10] sm:$0xff] %v501
  %566 = vst [vmem:[%s6 + $0x18] sm:$0xff] %v502
  %567 = vst [vmem:[%s6 + $0x20] sm:$0xff] %v503
  %568 = vst [vmem:[%s6 + $0x28] sm:$0xff] %v504
  %569 = vst [vmem:[%s6 + $0x30] sm:$0xff] %v505
  %570 = vst [vmem:[%s6 + $0x38] sm:$0xff] %v506
  %571 = vst [vmem:[%s6 + $0x40] sm:$0xff] %v507
  %572 = vst [vmem:[%s6 + $0x48] sm:$0xff] %v508
  %573 = vst [vmem:[%s6 + $0x50] sm:$0xff] %v509
  %574 = vst [vmem:[%s6 + $0x58] sm:$0xff] %v510
  %575 = vst [vmem:[%s6 + $0x60] sm:$0xff] %v511
  %576 = vst [vmem:[%s6 + $0x68] sm:$0xff] %v512
  %577 = vst [vmem:[%s6 + $0x70] sm:$0xff] %v513
  %578 = vst [vmem:[%s6 + $0x78] sm:$0xff] %v514
  %579 = vst [vmem:[%s6 + $0x80] sm:$0xff] %v515
  %580 = vst [vmem:[%s6 + $0x88] sm:$0xff] %v516
  %581 = vst [vmem:[%s6 + $0x90] sm:$0xff] %v517
  %582 = vst [vmem:[%s6 + $0x98] sm:$0xff] %v518
  %583 = vst [vmem:[%s6 + $0xa0] sm:$0xff] %v519
  %584 = vst [vmem:[%s6 + $0xa8] sm:$0xff] %v520
  %585 = vst [vmem:[%s6 + $0xb0] sm:$0xff] %v521
  %586 = vst [vmem:[%s6 + $0xb8] sm:$0xff] %v522
  %587 = vst [vmem:[%s6 + $0xc0] sm:$0xff] %v523
  %588 = vst [vmem:[%s6 + $0xc8] sm:$0xff] %v524
  %589 = vst [vmem:[%s6 + $0xd0] sm:$0xff] %v525
  %590 = vst [vmem:[%s6 + $0xd8] sm:$0xff] %v526
  %591 = vst [vmem:[%s6 + $0xe0] sm:$0xff] %v527
  %592 = vst [vmem:[%s6 + $0xe8] sm:$0xff] %v528
  %593 = vst [vmem:[%s6 + $0xf0] sm:$0xff] %v529
  %594 = vst [vmem:[%s6 + $0xf8] sm:$0xff] %v530
  %595 = vst [vmem:[%s6 + $0x100] sm:$0xff] %v531
  %596 = vst [vmem:[%s6 + $0x108] sm:$0xff] %v532
  %597 = vst [vmem:[%s6 + $0x110] sm:$0xff] %v533
  %598 = vst [vmem:[%s6 + $0x118] sm:$0xff] %v534
  %599 = vst [vmem:[%s6 + $0x120] sm:$0xff] %v535
  %600 = vst [vmem:[%s6 + $0x128] sm:$0xff] %v536
  %601 = vst [vmem:[%s6 + $0x130] sm:$0xff] %v537
  %602 = vst [vmem:[%s6 + $0x138] sm:$0xff] %v538
  %603 = vst [vmem:[%s6 + $0x140] sm:$0xff] %v539
  %604 = vst [vmem:[%s6 + $0x148] sm:$0xff] %v540
  %605 = vst [vmem:[%s6 + $0x150] sm:$0xff] %v541
  %606 = vst [vmem:[%s6 + $0x158] sm:$0xff] %v542
  %607 = vst [vmem:[%s6 + $0x160] sm:$0xff] %v543
  %608 = vst [vmem:[%s6 + $0x168] sm:$0xff] %v544
  %609 = vst [vmem:[%s6 + $0x170] sm:$0xff] %v545
  %610 = vst [vmem:[%s6 + $0x178] sm:$0xff] %v546
  %611 = vst [vmem:[%s6 + $0x180] sm:$0xff] %v547
  %612 = vst [vmem:[%s6 + $0x188] sm:$0xff] %v548
  %613 = vst [vmem:[%s6 + $0x190] sm:$0xff] %v549
  %614 = vst [vmem:[%s6 + $0x198] sm:$0xff] %v550
  %615 = vst [vmem:[%s6 + $0x1a0] sm:$0xff] %v551
  %616 = vst [vmem:[%s6 + $0x1a8] sm:$0xff] %v552
  %617 = vst [vmem:[%s6 + $0x1b0] sm:$0xff] %v553
  %618 = vst [vmem:[%s6 + $0x1b8] sm:$0xff] %v554
  %619 = vst [vmem:[%s6 + $0x1c0] sm:$0xff] %v555
  %620 = vst [vmem:[%s6 + $0x1c8] sm:$0xff] %v556
  %621 = vst [vmem:[%s6 + $0x1d0] sm:$0xff] %v557
  %622 = vst [vmem:[%s6 + $0x1d8] sm:$0xff] %v558
  %623 = vst [vmem:[%s6 + $0x1e0] sm:$0xff] %v559
  %624 = vst [vmem:[%s6 + $0x1e8] sm:$0xff] %v560
  %625 = vst [vmem:[%s6 + $0x1f0] sm:$0xff] %v561
  %626 = vst [vmem:[%s6 + $0x1f8] sm:$0xff] %v562
  // Predicated region
  $region26: #{bottleneck_forward.9} parent=0 // pred_check
    _
  $region27: #{bottleneck_forward.9} parent=0 // pred_check_branch
    %628 = sbr.rel (0) target = $region29
  $region28: #{bottleneck_forward.9} parent=0 // pred_region
    _
  $region29: #{bottleneck_forward.9} parent=0 // pred_fallthru
    _
  // Predicated region
  $region30: #{bottleneck_forward.9} parent=0 // pred_check
    _
  $region31: #{bottleneck_forward.9} parent=0 // pred_check_branch
    %630 = sbr.rel (0) target = $region33
  $region32: #{bottleneck_forward.9} parent=0 // pred_region
    _
  $region33: #{bottleneck_forward.9} parent=0 // pred_fallthru
    _

// kernel: bottleneck_forward.7
$region0: #{bottleneck_forward.7}
  #allocation0 [shape = 'u32[]', space=smem, size = 0x4, offset = 0x4, fixed_abs, tag = 'smem constant byte address 0x4 - core index']
  #allocation1 [shape = 'u32[144,128]{1,0:T(1,128)}', space=vmem, size = 0x12000, scoped, tag = 'internal scratch']
  %s0 = inlined_call_operand.vmem [shape: f32[512,128], index: 0, kind: input, shape index: {}]
  %s1 = inlined_call_operand.vmem [shape: f32[128,128], index: 1, kind: input, shape index: {}]
  %s2 = inlined_call_operand.vmem [shape: f32[1,128], index: 2, kind: input, shape index: {}]
  %s3 = inlined_call_operand.vmem [shape: f32[1,128], index: 3, kind: input, shape index: {}]
  %s4 = inlined_call_operand.vmem [shape: f32[512,128], index: 4, kind: output, shape index: {0}]
  %s5 = inlined_call_operand.vmem [shape: f32[1,1,128], index: 5, kind: output, shape index: {1}]
  %s6 = inlined_call_operand.vmem [shape: f32[1,1,128], index: 6, kind: output, shape index: {2}]
  %7 = xla_tuple %s4, %s5, %s6
  %s8 = sld [smem:[#allocation0]]
  $region42: #{bottleneck_forward.7} parent=0
    _
  %s10 = ssub.s32 1, %s8
  %s11 = scalar_select 0, %s10, %s8
  // Predicated region
  $region2: #{bottleneck_forward.7} parent=0 // pred_check
    _
  $region3: #{bottleneck_forward.7} parent=0 // pred_check_branch
    %13 = sbr.rel (0) target = $region5
  $region4: #{bottleneck_forward.7} parent=0 // pred_region
    _
  $region5: #{bottleneck_forward.7} parent=0 // pred_fallthru
    _
  // Predicated region
  $region6: #{bottleneck_forward.7} parent=0 // pred_check
    _
  $region7: #{bottleneck_forward.7} parent=0 // pred_check_branch
    %15 = sbr.rel (0) target = $region9
  $region8: #{bottleneck_forward.7} parent=0 // pred_region
    _
  $region9: #{bottleneck_forward.7} parent=0 // pred_fallthru
    _
  // Predicated region
  $region10: #{bottleneck_forward.7} parent=0 // pred_check
    _
  $region11: #{bottleneck_forward.7} parent=0 // pred_check_branch
    %17 = sbr.rel (0) target = $region13
  $region12: #{bottleneck_forward.7} parent=0 // pred_region
    _
  $region13: #{bottleneck_forward.7} parent=0 // pred_fallthru
    _
  // Predicated region
  $region14: #{bottleneck_forward.7} parent=0 // pred_check
    _
  $region15: #{bottleneck_forward.7} parent=0 // pred_check_branch
    %19 = sbr.rel (0) target = $region17
  $region16: #{bottleneck_forward.7} parent=0 // pred_region
    _
  $region17: #{bottleneck_forward.7} parent=0 // pred_fallthru
    _
  %v20 = vld [vmem:[%s0] sm:$0xff]
  %v21 = vld [vmem:[%s0 + $0x8] sm:$0xff]
  %v22 = vld [vmem:[%s0 + $0x10] sm:$0xff]
  %v23 = vld [vmem:[%s0 + $0x18] sm:$0xff]
  %v24 = vld [vmem:[%s0 + $0x20] sm:$0xff]
  %v25 = vld [vmem:[%s0 + $0x28] sm:$0xff]
  %v26 = vld [vmem:[%s0 + $0x30] sm:$0xff]
  %v27 = vld [vmem:[%s0 + $0x38] sm:$0xff]
  %v28 = vld [vmem:[%s0 + $0x40] sm:$0xff]
  %v29 = vld [vmem:[%s0 + $0x48] sm:$0xff]
  %v30 = vld [vmem:[%s0 + $0x50] sm:$0xff]
  %v31 = vld [vmem:[%s0 + $0x58] sm:$0xff]
  %v32 = vld [vmem:[%s0 + $0x60] sm:$0xff]
  %v33 = vld [vmem:[%s0 + $0x68] sm:$0xff]
  %v34 = vld [vmem:[%s0 + $0x70] sm:$0xff]
  %v35 = vld [vmem:[%s0 + $0x78] sm:$0xff]
  %v36 = vld [vmem:[%s0 + $0x80] sm:$0xff]
  %v37 = vld [vmem:[%s0 + $0x88] sm:$0xff]
  %v38 = vld [vmem:[%s0 + $0x90] sm:$0xff]
  %v39 = vld [vmem:[%s0 + $0x98] sm:$0xff]
  %v40 = vld [vmem:[%s0 + $0xa0] sm:$0xff]
  %v41 = vld [vmem:[%s0 + $0xa8] sm:$0xff]
  %v42 = vld [vmem:[%s0 + $0xb0] sm:$0xff]
  %v43 = vld [vmem:[%s0 + $0xb8] sm:$0xff]
  %v44 = vld [vmem:[%s0 + $0xc0] sm:$0xff]
  %v45 = vld [vmem:[%s0 + $0xc8] sm:$0xff]
  %v46 = vld [vmem:[%s0 + $0xd0] sm:$0xff]
  %v47 = vld [vmem:[%s0 + $0xd8] sm:$0xff]
  %v48 = vld [vmem:[%s0 + $0xe0] sm:$0xff]
  %v49 = vld [vmem:[%s0 + $0xe8] sm:$0xff]
  %v50 = vld [vmem:[%s0 + $0xf0] sm:$0xff]
  %v51 = vld [vmem:[%s0 + $0xf8] sm:$0xff]
  %v52 = vld [vmem:[%s0 + $0x100] sm:$0xff]
  %v53 = vld [vmem:[%s0 + $0x108] sm:$0xff]
  %v54 = vld [vmem:[%s0 + $0x110] sm:$0xff]
  %v55 = vld [vmem:[%s0 + $0x118] sm:$0xff]
  %v56 = vld [vmem:[%s0 + $0x120] sm:$0xff]
  %v57 = vld [vmem:[%s0 + $0x128] sm:$0xff]
  %v58 = vld [vmem:[%s0 + $0x130] sm:$0xff]
  %v59 = vld [vmem:[%s0 + $0x138] sm:$0xff]
  %v60 = vld [vmem:[%s0 + $0x140] sm:$0xff]
  %v61 = vld [vmem:[%s0 + $0x148] sm:$0xff]
  %v62 = vld [vmem:[%s0 + $0x150] sm:$0xff]
  %v63 = vld [vmem:[%s0 + $0x158] sm:$0xff]
  %v64 = vld [vmem:[%s0 + $0x160] sm:$0xff]
  %v65 = vld [vmem:[%s0 + $0x168] sm:$0xff]
  %v66 = vld [vmem:[%s0 + $0x170] sm:$0xff]
  %v67 = vld [vmem:[%s0 + $0x178] sm:$0xff]
  %v68 = vld [vmem:[%s0 + $0x180] sm:$0xff]
  %v69 = vld [vmem:[%s0 + $0x188] sm:$0xff]
  %v70 = vld [vmem:[%s0 + $0x190] sm:$0xff]
  %v71 = vld [vmem:[%s0 + $0x198] sm:$0xff]
  %v72 = vld [vmem:[%s0 + $0x1a0] sm:$0xff]
  %v73 = vld [vmem:[%s0 + $0x1a8] sm:$0xff]
  %v74 = vld [vmem:[%s0 + $0x1b0] sm:$0xff]
  %v75 = vld [vmem:[%s0 + $0x1b8] sm:$0xff]
  %v76 = vld [vmem:[%s0 + $0x1c0] sm:$0xff]
  %v77 = vld [vmem:[%s0 + $0x1c8] sm:$0xff]
  %v78 = vld [vmem:[%s0 + $0x1d0] sm:$0xff]
  %v79 = vld [vmem:[%s0 + $0x1d8] sm:$0xff]
  %v80 = vld [vmem:[%s0 + $0x1e0] sm:$0xff]
  %v81 = vld [vmem:[%s0 + $0x1e8] sm:$0xff]
  %v82 = vld [vmem:[%s0 + $0x1f0] sm:$0xff]
  %v83 = vld [vmem:[%s0 + $0x1f8] sm:$0xff]
  %v84 = vld [vmem:[%s2] sm:$0x1]
  %v86 = vlaneseq
  %v87 = vshrl.u32 %v86, 7
  %v88 = vsub.s32 0, %v87
  %v89 = vrot.slane %v84, %v88
  %v91 = vmul.f32 %v20, %v89
  %v92 = vmul.f32 %v21, %v89
  %v93 = vmul.f32 %v22, %v89
  %v94 = vmul.f32 %v23, %v89
  %v95 = vmul.f32 %v24, %v89
  %v96 = vmul.f32 %v25, %v89
  %v97 = vmul.f32 %v26, %v89
  %v98 = vmul.f32 %v27, %v89
  %v99 = vmul.f32 %v28, %v89
  %v100 = vmul.f32 %v29, %v89
  %v101 = vmul.f32 %v30, %v89
  %v102 = vmul.f32 %v31, %v89
  %v103 = vmul.f32 %v32, %v89
  %v104 = vmul.f32 %v33, %v89
  %v105 = vmul.f32 %v34, %v89
  %v106 = vmul.f32 %v35, %v89
  %v107 = vmul.f32 %v36, %v89
  %v108 = vmul.f32 %v37, %v89
  %v109 = vmul.f32 %v38, %v89
  %v110 = vmul.f32 %v39, %v89
  %v111 = vmul.f32 %v40, %v89
  %v112 = vmul.f32 %v41, %v89
  %v113 = vmul.f32 %v42, %v89
  %v114 = vmul.f32 %v43, %v89
  %v115 = vmul.f32 %v44, %v89
  %v116 = vmul.f32 %v45, %v89
  %v117 = vmul.f32 %v46, %v89
  %v118 = vmul.f32 %v47, %v89
  %v119 = vmul.f32 %v48, %v89
  %v120 = vmul.f32 %v49, %v89
  %v121 = vmul.f32 %v50, %v89
  %v122 = vmul.f32 %v51, %v89
  %v123 = vmul.f32 %v52, %v89
  %v124 = vmul.f32 %v53, %v89
  %v125 = vmul.f32 %v54, %v89
  %v126 = vmul.f32 %v55, %v89
  %v127 = vmul.f32 %v56, %v89
  %v128 = vmul.f32 %v57, %v89
  %v129 = vmul.f32 %v58, %v89
  %v130 = vmul.f32 %v59, %v89
  %v131 = vmul.f32 %v60, %v89
  %v132 = vmul.f32 %v61, %v89
  %v133 = vmul.f32 %v62, %v89
  %v134 = vmul.f32 %v63, %v89
  %v135 = vmul.f32 %v64, %v89
  %v136 = vmul.f32 %v65, %v89
  %v137 = vmul.f32 %v66, %v89
  %v138 = vmul.f32 %v67, %v89
  %v139 = vmul.f32 %v68, %v89
  %v140 = vmul.f32 %v69, %v89
  %v141 = vmul.f32 %v70, %v89
  %v142 = vmul.f32 %v71, %v89
  %v143 = vmul.f32 %v72, %v89
  %v144 = vmul.f32 %v73, %v89
  %v145 = vmul.f32 %v74, %v89
  %v146 = vmul.f32 %v75, %v89
  %v147 = vmul.f32 %v76, %v89
  %v148 = vmul.f32 %v77, %v89
  %v149 = vmul.f32 %v78, %v89
  %v150 = vmul.f32 %v79, %v89
  %v151 = vmul.f32 %v80, %v89
  %v152 = vmul.f32 %v81, %v89
  %v153 = vmul.f32 %v82, %v89
  %v154 = vmul.f32 %v83, %v89
  %v155 = vld [vmem:[%s3] sm:$0x1]
  %v157 = vlaneseq
  %v158 = vshrl.u32 %v157, 7
  %v159 = vsub.s32 0, %v158
  %v160 = vrot.slane %v155, %v159
  %v162 = vadd.f32 %v91, %v160
  %v163 = vadd.f32 %v92, %v160
  %v164 = vadd.f32 %v93, %v160
  %v165 = vadd.f32 %v94, %v160
  %v166 = vadd.f32 %v95, %v160
  %v167 = vadd.f32 %v96, %v160
  %v168 = vadd.f32 %v97, %v160
  %v169 = vadd.f32 %v98, %v160
  %v170 = vadd.f32 %v99, %v160
  %v171 = vadd.f32 %v100, %v160
  %v172 = vadd.f32 %v101, %v160
  %v173 = vadd.f32 %v102, %v160
  %v174 = vadd.f32 %v103, %v160
  %v175 = vadd.f32 %v104, %v160
  %v176 = vadd.f32 %v105, %v160
  %v177 = vadd.f32 %v106, %v160
  %v178 = vadd.f32 %v107, %v160
  %v179 = vadd.f32 %v108, %v160
  %v180 = vadd.f32 %v109, %v160
  %v181 = vadd.f32 %v110, %v160
  %v182 = vadd.f32 %v111, %v160
  %v183 = vadd.f32 %v112, %v160
  %v184 = vadd.f32 %v113, %v160
  %v185 = vadd.f32 %v114, %v160
  %v186 = vadd.f32 %v115, %v160
  %v187 = vadd.f32 %v116, %v160
  %v188 = vadd.f32 %v117, %v160
  %v189 = vadd.f32 %v118, %v160
  %v190 = vadd.f32 %v119, %v160
  %v191 = vadd.f32 %v120, %v160
  %v192 = vadd.f32 %v121, %v160
  %v193 = vadd.f32 %v122, %v160
  %v194 = vadd.f32 %v123, %v160
  %v195 = vadd.f32 %v124, %v160
  %v196 = vadd.f32 %v125, %v160
  %v197 = vadd.f32 %v126, %v160
  %v198 = vadd.f32 %v127, %v160
  %v199 = vadd.f32 %v128, %v160
  %v200 = vadd.f32 %v129, %v160
  %v201 = vadd.f32 %v130, %v160
  %v202 = vadd.f32 %v131, %v160
  %v203 = vadd.f32 %v132, %v160
  %v204 = vadd.f32 %v133, %v160
  %v205 = vadd.f32 %v134, %v160
  %v206 = vadd.f32 %v135, %v160
  %v207 = vadd.f32 %v136, %v160
  %v208 = vadd.f32 %v137, %v160
  %v209 = vadd.f32 %v138, %v160
  %v210 = vadd.f32 %v139, %v160
  %v211 = vadd.f32 %v140, %v160
  %v212 = vadd.f32 %v141, %v160
  %v213 = vadd.f32 %v142, %v160
  %v214 = vadd.f32 %v143, %v160
  %v215 = vadd.f32 %v144, %v160
  %v216 = vadd.f32 %v145, %v160
  %v217 = vadd.f32 %v146, %v160
  %v218 = vadd.f32 %v147, %v160
  %v219 = vadd.f32 %v148, %v160
  %v220 = vadd.f32 %v149, %v160
  %v221 = vadd.f32 %v150, %v160
  %v222 = vadd.f32 %v151, %v160
  %v223 = vadd.f32 %v152, %v160
  %v224 = vadd.f32 %v153, %v160
  %v225 = vadd.f32 %v154, %v160
  %v226 = vmax.f32 %v162, 0.0
  %v227 = vmax.f32 %v163, 0.0
  %v228 = vmax.f32 %v164, 0.0
  %v229 = vmax.f32 %v165, 0.0
  %v230 = vmax.f32 %v166, 0.0
  %v231 = vmax.f32 %v167, 0.0
  %v232 = vmax.f32 %v168, 0.0
  %v233 = vmax.f32 %v169, 0.0
  %v234 = vmax.f32 %v170, 0.0
  %v235 = vmax.f32 %v171, 0.0
  %v236 = vmax.f32 %v172, 0.0
  %v237 = vmax.f32 %v173, 0.0
  %v238 = vmax.f32 %v174, 0.0
  %v239 = vmax.f32 %v175, 0.0
  %v240 = vmax.f32 %v176, 0.0
  %v241 = vmax.f32 %v177, 0.0
  %v242 = vmax.f32 %v178, 0.0
  %v243 = vmax.f32 %v179, 0.0
  %v244 = vmax.f32 %v180, 0.0
  %v245 = vmax.f32 %v181, 0.0
  %v246 = vmax.f32 %v182, 0.0
  %v247 = vmax.f32 %v183, 0.0
  %v248 = vmax.f32 %v184, 0.0
  %v249 = vmax.f32 %v185, 0.0
  %v250 = vmax.f32 %v186, 0.0
  %v251 = vmax.f32 %v187, 0.0
  %v252 = vmax.f32 %v188, 0.0
  %v253 = vmax.f32 %v189, 0.0
  %v254 = vmax.f32 %v190, 0.0
  %v255 = vmax.f32 %v191, 0.0
  %v256 = vmax.f32 %v192, 0.0
  %v257 = vmax.f32 %v193, 0.0
  %v258 = vmax.f32 %v194, 0.0
  %v259 = vmax.f32 %v195, 0.0
  %v260 = vmax.f32 %v196, 0.0
  %v261 = vmax.f32 %v197, 0.0
  %v262 = vmax.f32 %v198, 0.0
  %v263 = vmax.f32 %v199, 0.0
  %v264 = vmax.f32 %v200, 0.0
  %v265 = vmax.f32 %v201, 0.0
  %v266 = vmax.f32 %v202, 0.0
  %v267 = vmax.f32 %v203, 0.0
  %v268 = vmax.f32 %v204, 0.0
  %v269 = vmax.f32 %v205, 0.0
  %v270 = vmax.f32 %v206, 0.0
  %v271 = vmax.f32 %v207, 0.0
  %v272 = vmax.f32 %v208, 0.0
  %v273 = vmax.f32 %v209, 0.0
  %v274 = vmax.f32 %v210, 0.0
  %v275 = vmax.f32 %v211, 0.0
  %v276 = vmax.f32 %v212, 0.0
  %v277 = vmax.f32 %v213, 0.0
  %v278 = vmax.f32 %v214, 0.0
  %v279 = vmax.f32 %v215, 0.0
  %v280 = vmax.f32 %v216, 0.0
  %v281 = vmax.f32 %v217, 0.0
  %v282 = vmax.f32 %v218, 0.0
  %v283 = vmax.f32 %v219, 0.0
  %v284 = vmax.f32 %v220, 0.0
  %v285 = vmax.f32 %v221, 0.0
  %v286 = vmax.f32 %v222, 0.0
  %v287 = vmax.f32 %v223, 0.0
  %v288 = vmax.f32 %v224, 0.0
  %v289 = vmax.f32 %v225, 0.0
  %v290 = vld [vmem:[%s1] sm:$0xff]
  %v291 = vld [vmem:[%s1 + $0x8] sm:$0xff]
  %v292 = vld [vmem:[%s1 + $0x10] sm:$0xff]
  %v293 = vld [vmem:[%s1 + $0x18] sm:$0xff]
  %v294 = vld [vmem:[%s1 + $0x20] sm:$0xff]
  %v295 = vld [vmem:[%s1 + $0x28] sm:$0xff]
  %v296 = vld [vmem:[%s1 + $0x30] sm:$0xff]
  %v297 = vld [vmem:[%s1 + $0x38] sm:$0xff]
  %v298 = vld [vmem:[%s1 + $0x40] sm:$0xff]
  %v299 = vld [vmem:[%s1 + $0x48] sm:$0xff]
  %v300 = vld [vmem:[%s1 + $0x50] sm:$0xff]
  %v301 = vld [vmem:[%s1 + $0x58] sm:$0xff]
  %v302 = vld [vmem:[%s1 + $0x60] sm:$0xff]
  %v303 = vld [vmem:[%s1 + $0x68] sm:$0xff]
  %v304 = vld [vmem:[%s1 + $0x70] sm:$0xff]
  %v305 = vld [vmem:[%s1 + $0x78] sm:$0xff]
  %306 = vmatprep.subr.mxu0 0.0
  %307 = vmatpush1.msra.mxu0 %v305
  %308 = vmatprep.subr.mxu0 0.0
  %309 = vmatpush1.msra.mxu0 %v304
  %310 = vmatprep.subr.mxu0 0.0
  %311 = vmatpush1.msra.mxu0 %v303
  %312 = vmatprep.subr.mxu0 0.0
  %313 = vmatpush1.msra.mxu0 %v302
  %314 = vmatprep.subr.mxu0 0.0
  %315 = vmatpush1.msra.mxu0 %v301
  %316 = vmatprep.subr.mxu0 0.0
  %317 = vmatpush1.msra.mxu0 %v300
  %318 = vmatprep.subr.mxu0 0.0
  %319 = vmatpush1.msra.mxu0 %v299
  %320 = vmatprep.subr.mxu0 0.0
  %321 = vmatpush1.msra.mxu0 %v298
  %322 = vmatprep.subr.mxu0 0.0
  %323 = vmatpush1.msra.mxu0 %v297
  %324 = vmatprep.subr.mxu0 0.0
  %325 = vmatpush1.msra.mxu0 %v296
  %326 = vmatprep.subr.mxu0 0.0
  %327 = vmatpush1.msra.mxu0 %v295
  %328 = vmatprep.subr.mxu0 0.0
  %329 = vmatpush1.msra.mxu0 %v294
  %330 = vmatprep.subr.mxu0 0.0
  %331 = vmatpush1.msra.mxu0 %v293
  %332 = vmatprep.subr.mxu0 0.0
  %333 = vmatpush1.msra.mxu0 %v292
  %334 = vmatprep.subr.mxu0 0.0
  %335 = vmatpush1.msra.mxu0 %v291
  %336 = vmatprep.subr.mxu0 0.0
  %337 = vmatpush1.msra.mxu0 %v290
  %338 = vmatprep.subr.mxu0 0.0
  %339 = vmatpush2.msra.mxu0 0.0
  %340 = vmatprep.subr.mxu0 0.0
  %341 = vmatpush2.msra.mxu0 0.0
  %342 = vmatprep.subr.mxu0 0.0
  %343 = vmatpush2.msra.mxu0 0.0
  %344 = vmatprep.subr.mxu0 0.0
  %345 = vmatpush2.msra.mxu0 0.0
  %346 = vmatprep.subr.mxu0 0.0
  %347 = vmatpush2.msra.mxu0 0.0
  %348 = vmatprep.subr.mxu0 0.0
  %349 = vmatpush2.msra.mxu0 0.0
  %350 = vmatprep.subr.mxu0 0.0
  %351 = vmatpush2.msra.mxu0 0.0
  %352 = vmatprep.subr.mxu0 0.0
  %353 = vmatpush2.msra.mxu0 0.0
  %354 = vmatprep.subr.mxu0 0.0
  %355 = vmatpush2.msra.mxu0 0.0
  %356 = vmatprep.subr.mxu0 0.0
  %357 = vmatpush2.msra.mxu0 0.0
  %358 = vmatprep.subr.mxu0 0.0
  %359 = vmatpush2.msra.mxu0 0.0
  %360 = vmatprep.subr.mxu0 0.0
  %361 = vmatpush2.msra.mxu0 0.0
  %362 = vmatprep.subr.mxu0 0.0
  %363 = vmatpush2.msra.mxu0 0.0
  %364 = vmatprep.subr.mxu0 0.0
  %365 = vmatpush2.msra.mxu0 0.0
  %366 = vmatprep.subr.mxu0 0.0
  %367 = vmatpush2.msra.mxu0 0.0
  %368 = vmatprep.subr.mxu0 0.0
  %369 = vmatpush2.msra.mxu0 0.0
  %370 = vmatprep.mubr.f32.mxu0 0.0
  %371 = vmatmul.mubr.f32.gmra.mxu0 %v226
  %v372 = vpop.f32.mrf.mxu0
  %v373 = vadd.f32 0.0, %v372
  %v374 = vpop.f32.mrf.mxu0
  %375 = vmatprep.mubr.f32.mxu0 0.0
  %376 = vmatmul.mubr.f32.gmra.mxu0 %v227
  %v377 = vpop.f32.mrf.mxu0
  %v378 = vadd.f32 0.0, %v377
  %v379 = vpop.f32.mrf.mxu0
  %380 = vmatprep.mubr.f32.mxu0 0.0
  %381 = vmatmul.mubr.f32.gmra.mxu0 %v228
  %v382 = vpop.f32.mrf.mxu0
  %v383 = vadd.f32 0.0, %v382
  %v384 = vpop.f32.mrf.mxu0
  %385 = vmatprep.mubr.f32.mxu0 0.0
  %386 = vmatmul.mubr.f32.gmra.mxu0 %v229
  %v387 = vpop.f32.mrf.mxu0
  %v388 = vadd.f32 0.0, %v387
  %v389 = vpop.f32.mrf.mxu0
  %390 = vmatprep.mubr.f32.mxu0 0.0
  %391 = vmatmul.mubr.f32.gmra.mxu0 %v230
  %v392 = vpop.f32.mrf.mxu0
  %v393 = vadd.f32 0.0, %v392
  %v394 = vpop.f32.mrf.mxu0
  %395 = vmatprep.mubr.f32.mxu0 0.0
  %396 = vmatmul.mubr.f32.gmra.mxu0 %v231
  %v397 = vpop.f32.mrf.mxu0
  %v398 = vadd.f32 0.0, %v397
  %v399 = vpop.f32.mrf.mxu0
  %400 = vmatprep.mubr.f32.mxu0 0.0
  %401 = vmatmul.mubr.f32.gmra.mxu0 %v232
  %v402 = vpop.f32.mrf.mxu0
  %v403 = vadd.f32 0.0, %v402
  %v404 = vpop.f32.mrf.mxu0
  %405 = vmatprep.mubr.f32.mxu0 0.0
  %406 = vmatmul.mubr.f32.gmra.mxu0 %v233
  %v407 = vpop.f32.mrf.mxu0
  %v408 = vadd.f32 0.0, %v407
  %v409 = vpop.f32.mrf.mxu0
  %410 = vmatprep.mubr.f32.mxu0 0.0
  %411 = vmatmul.mubr.f32.gmra.mxu0 %v234
  %v412 = vpop.f32.mrf.mxu0
  %v413 = vadd.f32 0.0, %v412
  %v414 = vpop.f32.mrf.mxu0
  %415 = vmatprep.mubr.f32.mxu0 0.0
  %416 = vmatmul.mubr.f32.gmra.mxu0 %v235
  %v417 = vpop.f32.mrf.mxu0
  %v418 = vadd.f32 0.0, %v417
  %v419 = vpop.f32.mrf.mxu0
  %420 = vmatprep.mubr.f32.mxu0 0.0
  %421 = vmatmul.mubr.f32.gmra.mxu0 %v236
  %v422 = vpop.f32.mrf.mxu0
  %v423 = vadd.f32 0.0, %v422
  %v424 = vpop.f32.mrf.mxu0
  %425 = vmatprep.mubr.f32.mxu0 0.0
  %426 = vmatmul.mubr.f32.gmra.mxu0 %v237
  %v427 = vpop.f32.mrf.mxu0
  %v428 = vadd.f32 0.0, %v427
  %v429 = vpop.f32.mrf.mxu0
  %430 = vmatprep.mubr.f32.mxu0 0.0
  %431 = vmatmul.mubr.f32.gmra.mxu0 %v238
  %v432 = vpop.f32.mrf.mxu0
  %v433 = vadd.f32 0.0, %v432
  %v434 = vpop.f32.mrf.mxu0
  %435 = vmatprep.mubr.f32.mxu0 0.0
  %436 = vmatmul.mubr.f32.gmra.mxu0 %v239
  %v437 = vpop.f32.mrf.mxu0
  %v438 = vadd.f32 0.0, %v437
  %v439 = vpop.f32.mrf.mxu0
  %440 = vmatprep.mubr.f32.mxu0 0.0
  %441 = vmatmul.mubr.f32.gmra.mxu0 %v240
  %v442 = vpop.f32.mrf.mxu0
  %v443 = vadd.f32 0.0, %v442
  %v444 = vpop.f32.mrf.mxu0
  %445 = vmatprep.mubr.f32.mxu0 0.0
  %446 = vmatmul.mubr.f32.gmra.mxu0 %v241
  %v447 = vpop.f32.mrf.mxu0
  %v448 = vadd.f32 0.0, %v447
  %v449 = vpop.f32.mrf.mxu0
  %450 = vmatprep.mubr.f32.mxu0 0.0
  %451 = vmatmul.mubr.f32.gmra.mxu0 %v242
  %v452 = vpop.f32.mrf.mxu0
  %v453 = vadd.f32 0.0, %v452
  %v454 = vpop.f32.mrf.mxu0
  %455 = vmatprep.mubr.f32.mxu0 0.0
  %456 = vmatmul.mubr.f32.gmra.mxu0 %v243
  %v457 = vpop.f32.mrf.mxu0
  %v458 = vadd.f32 0.0, %v457
  %v459 = vpop.f32.mrf.mxu0
  %460 = vmatprep.mubr.f32.mxu0 0.0
  %461 = vmatmul.mubr.f32.gmra.mxu0 %v244
  %v462 = vpop.f32.mrf.mxu0
  %v463 = vadd.f32 0.0, %v462
  %v464 = vpop.f32.mrf.mxu0
  %465 = vmatprep.mubr.f32.mxu0 0.0
  %466 = vmatmul.mubr.f32.gmra.mxu0 %v245
  %v467 = vpop.f32.mrf.mxu0
  %v468 = vadd.f32 0.0, %v467
  %v469 = vpop.f32.mrf.mxu0
  %470 = vmatprep.mubr.f32.mxu0 0.0
  %471 = vmatmul.mubr.f32.gmra.mxu0 %v246
  %v472 = vpop.f32.mrf.mxu0
  %v473 = vadd.f32 0.0, %v472
  %v474 = vpop.f32.mrf.mxu0
  %475 = vmatprep.mubr.f32.mxu0 0.0
  %476 = vmatmul.mubr.f32.gmra.mxu0 %v247
  %v477 = vpop.f32.mrf.mxu0
  %v478 = vadd.f32 0.0, %v477
  %v479 = vpop.f32.mrf.mxu0
  %480 = vmatprep.mubr.f32.mxu0 0.0
  %481 = vmatmul.mubr.f32.gmra.mxu0 %v248
  %v482 = vpop.f32.mrf.mxu0
  %v483 = vadd.f32 0.0, %v482
  %v484 = vpop.f32.mrf.mxu0
  %485 = vmatprep.mubr.f32.mxu0 0.0
  %486 = vmatmul.mubr.f32.gmra.mxu0 %v249
  %v487 = vpop.f32.mrf.mxu0
  %v488 = vadd.f32 0.0, %v487
  %v489 = vpop.f32.mrf.mxu0
  %490 = vmatprep.mubr.f32.mxu0 0.0
  %491 = vmatmul.mubr.f32.gmra.mxu0 %v250
  %v492 = vpop.f32.mrf.mxu0
  %v493 = vadd.f32 0.0, %v492
  %v494 = vpop.f32.mrf.mxu0
  %495 = vmatprep.mubr.f32.mxu0 0.0
  %496 = vmatmul.mubr.f32.gmra.mxu0 %v251
  %v497 = vpop.f32.mrf.mxu0
  %v498 = vadd.f32 0.0, %v497
  %v499 = vpop.f32.mrf.mxu0
  %500 = vmatprep.mubr.f32.mxu0 0.0
  %501 = vmatmul.mubr.f32.gmra.mxu0 %v252
  %v502 = vpop.f32.mrf.mxu0
  %v503 = vadd.f32 0.0, %v502
  %v504 = vpop.f32.mrf.mxu0
  %505 = vmatprep.mubr.f32.mxu0 0.0
  %506 = vmatmul.mubr.f32.gmra.mxu0 %v253
  %v507 = vpop.f32.mrf.mxu0
  %v508 = vadd.f32 0.0, %v507
  %v509 = vpop.f32.mrf.mxu0
  %510 = vmatprep.mubr.f32.mxu0 0.0
  %511 = vmatmul.mubr.f32.gmra.mxu0 %v254
  %v512 = vpop.f32.mrf.mxu0
  %v513 = vadd.f32 0.0, %v512
  %v514 = vpop.f32.mrf.mxu0
  %515 = vmatprep.mubr.f32.mxu0 0.0
  %516 = vmatmul.mubr.f32.gmra.mxu0 %v255
  %v517 = vpop.f32.mrf.mxu0
  %v518 = vadd.f32 0.0, %v517
  %v519 = vpop.f32.mrf.mxu0
  %520 = vmatprep.mubr.f32.mxu0 0.0
  %521 = vmatmul.mubr.f32.gmra.mxu0 %v256
  %v522 = vpop.f32.mrf.mxu0
  %v523 = vadd.f32 0.0, %v522
  %v524 = vpop.f32.mrf.mxu0
  %525 = vmatprep.mubr.f32.mxu0 0.0
  %526 = vmatmul.mubr.f32.gmra.mxu0 %v257
  %v527 = vpop.f32.mrf.mxu0
  %v528 = vadd.f32 0.0, %v527
  %v529 = vpop.f32.mrf.mxu0
  %530 = vmatprep.mubr.f32.mxu0 0.0
  %531 = vmatmul.mubr.f32.gmra.mxu0 %v258
  %v532 = vpop.f32.mrf.mxu0
  %v533 = vadd.f32 0.0, %v532
  %v534 = vpop.f32.mrf.mxu0
  %535 = vmatprep.mubr.f32.mxu0 0.0
  %536 = vmatmul.mubr.f32.gmra.mxu0 %v259
  %v537 = vpop.f32.mrf.mxu0
  %v538 = vadd.f32 0.0, %v537
  %v539 = vpop.f32.mrf.mxu0
  %540 = vmatprep.mubr.f32.mxu0 0.0
  %541 = vmatmul.mubr.f32.gmra.mxu0 %v260
  %v542 = vpop.f32.mrf.mxu0
  %v543 = vadd.f32 0.0, %v542
  %v544 = vpop.f32.mrf.mxu0
  %545 = vmatprep.mubr.f32.mxu0 0.0
  %546 = vmatmul.mubr.f32.gmra.mxu0 %v261
  %v547 = vpop.f32.mrf.mxu0
  %v548 = vadd.f32 0.0, %v547
  %v549 = vpop.f32.mrf.mxu0
  %550 = vmatprep.mubr.f32.mxu0 0.0
  %551 = vmatmul.mubr.f32.gmra.mxu0 %v262
  %v552 = vpop.f32.mrf.mxu0
  %v553 = vadd.f32 0.0, %v552
  %v554 = vpop.f32.mrf.mxu0
  %555 = vmatprep.mubr.f32.mxu0 0.0
  %556 = vmatmul.mubr.f32.gmra.mxu0 %v263
  %v557 = vpop.f32.mrf.mxu0
  %v558 = vadd.f32 0.0, %v557
  %v559 = vpop.f32.mrf.mxu0
  %560 = vmatprep.mubr.f32.mxu0 0.0
  %561 = vmatmul.mubr.f32.gmra.mxu0 %v264
  %v562 = vpop.f32.mrf.mxu0
  %v563 = vadd.f32 0.0, %v562
  %v564 = vpop.f32.mrf.mxu0
  %565 = vmatprep.mubr.f32.mxu0 0.0
  %566 = vmatmul.mubr.f32.gmra.mxu0 %v265
  %v567 = vpop.f32.mrf.mxu0
  %v568 = vadd.f32 0.0, %v567
  %v569 = vpop.f32.mrf.mxu0
  %570 = vmatprep.mubr.f32.mxu0 0.0
  %571 = vmatmul.mubr.f32.gmra.mxu0 %v266
  %v572 = vpop.f32.mrf.mxu0
  %v573 = vadd.f32 0.0, %v572
  %v574 = vpop.f32.mrf.mxu0
  %575 = vmatprep.mubr.f32.mxu0 0.0
  %576 = vmatmul.mubr.f32.gmra.mxu0 %v267
  %v577 = vpop.f32.mrf.mxu0
  %v578 = vadd.f32 0.0, %v577
  %v579 = vpop.f32.mrf.mxu0
  %580 = vmatprep.mubr.f32.mxu0 0.0
  %581 = vmatmul.mubr.f32.gmra.mxu0 %v268
  %v582 = vpop.f32.mrf.mxu0
  %v583 = vadd.f32 0.0, %v582
  %v584 = vpop.f32.mrf.mxu0
  %585 = vmatprep.mubr.f32.mxu0 0.0
  %586 = vmatmul.mubr.f32.gmra.mxu0 %v269
  %v587 = vpop.f32.mrf.mxu0
  %v588 = vadd.f32 0.0, %v587
  %v589 = vpop.f32.mrf.mxu0
  %590 = vmatprep.mubr.f32.mxu0 0.0
  %591 = vmatmul.mubr.f32.gmra.mxu0 %v270
  %v592 = vpop.f32.mrf.mxu0
  %v593 = vadd.f32 0.0, %v592
  %v594 = vpop.f32.mrf.mxu0
  %595 = vmatprep.mubr.f32.mxu0 0.0
  %596 = vmatmul.mubr.f32.gmra.mxu0 %v271
  %v597 = vpop.f32.mrf.mxu0
  %v598 = vadd.f32 0.0, %v597
  %v599 = vpop.f32.mrf.mxu0
  %600 = vmatprep.mubr.f32.mxu0 0.0
  %601 = vmatmul.mubr.f32.gmra.mxu0 %v272
  %v602 = vpop.f32.mrf.mxu0
  %v603 = vadd.f32 0.0, %v602
  %v604 = vpop.f32.mrf.mxu0
  %605 = vmatprep.mubr.f32.mxu0 0.0
  %606 = vmatmul.mubr.f32.gmra.mxu0 %v273
  %v607 = vpop.f32.mrf.mxu0
  %v608 = vadd.f32 0.0, %v607
  %v609 = vpop.f32.mrf.mxu0
  %610 = vmatprep.mubr.f32.mxu0 0.0
  %611 = vmatmul.mubr.f32.gmra.mxu0 %v274
  %v612 = vpop.f32.mrf.mxu0
  %v613 = vadd.f32 0.0, %v612
  %v614 = vpop.f32.mrf.mxu0
  %615 = vmatprep.mubr.f32.mxu0 0.0
  %616 = vmatmul.mubr.f32.gmra.mxu0 %v275
  %v617 = vpop.f32.mrf.mxu0
  %v618 = vadd.f32 0.0, %v617
  %v619 = vpop.f32.mrf.mxu0
  %620 = vmatprep.mubr.f32.mxu0 0.0
  %621 = vmatmul.mubr.f32.gmra.mxu0 %v276
  %v622 = vpop.f32.mrf.mxu0
  %v623 = vadd.f32 0.0, %v622
  %v624 = vpop.f32.mrf.mxu0
  %625 = vmatprep.mubr.f32.mxu0 0.0
  %626 = vmatmul.mubr.f32.gmra.mxu0 %v277
  %v627 = vpop.f32.mrf.mxu0
  %v628 = vadd.f32 0.0, %v627
  %v629 = vpop.f32.mrf.mxu0
  %630 = vmatprep.mubr.f32.mxu0 0.0
  %631 = vmatmul.mubr.f32.gmra.mxu0 %v278
  %v632 = vpop.f32.mrf.mxu0
  %v633 = vadd.f32 0.0, %v632
  %v634 = vpop.f32.mrf.mxu0
  %635 = vmatprep.mubr.f32.mxu0 0.0
  %636 = vmatmul.mubr.f32.gmra.mxu0 %v279
  %v637 = vpop.f32.mrf.mxu0
  %v638 = vadd.f32 0.0, %v637
  %v639 = vpop.f32.mrf.mxu0
  %640 = vmatprep.mubr.f32.mxu0 0.0
  %641 = vmatmul.mubr.f32.gmra.mxu0 %v280
  %v642 = vpop.f32.mrf.mxu0
  %v643 = vadd.f32 0.0, %v642
  %v644 = vpop.f32.mrf.mxu0
  %645 = vmatprep.mubr.f32.mxu0 0.0
  %646 = vmatmul.mubr.f32.gmra.mxu0 %v281
  %v647 = vpop.f32.mrf.mxu0
  %v648 = vadd.f32 0.0, %v647
  %v649 = vpop.f32.mrf.mxu0
  %650 = vmatprep.mubr.f32.mxu0 0.0
  %651 = vmatmul.mubr.f32.gmra.mxu0 %v282
  %v652 = vpop.f32.mrf.mxu0
  %v653 = vadd.f32 0.0, %v652
  %v654 = vpop.f32.mrf.mxu0
  %655 = vmatprep.mubr.f32.mxu0 0.0
  %656 = vmatmul.mubr.f32.gmra.mxu0 %v283
  %v657 = vpop.f32.mrf.mxu0
  %v658 = vadd.f32 0.0, %v657
  %v659 = vpop.f32.mrf.mxu0
  %660 = vmatprep.mubr.f32.mxu0 0.0
  %661 = vmatmul.mubr.f32.gmra.mxu0 %v284
  %v662 = vpop.f32.mrf.mxu0
  %v663 = vadd.f32 0.0, %v662
  %v664 = vpop.f32.mrf.mxu0
  %665 = vmatprep.mubr.f32.mxu0 0.0
  %666 = vmatmul.mubr.f32.gmra.mxu0 %v285
  %v667 = vpop.f32.mrf.mxu0
  %v668 = vadd.f32 0.0, %v667
  %v669 = vpop.f32.mrf.mxu0
  %670 = vmatprep.mubr.f32.mxu0 0.0
  %671 = vmatmul.mubr.f32.gmra.mxu0 %v286
  %v672 = vpop.f32.mrf.mxu0
  %v673 = vadd.f32 0.0, %v672
  %v674 = vpop.f32.mrf.mxu0
  %675 = vmatprep.mubr.f32.mxu0 0.0
  %676 = vmatmul.mubr.f32.gmra.mxu0 %v287
  %v677 = vpop.f32.mrf.mxu0
  %v678 = vadd.f32 0.0, %v677
  %v679 = vpop.f32.mrf.mxu0
  %680 = vmatprep.mubr.f32.mxu0 0.0
  %681 = vmatmul.mubr.f32.gmra.mxu0 %v288
  %v682 = vpop.f32.mrf.mxu0
  %v683 = vadd.f32 0.0, %v682
  %v684 = vpop.f32.mrf.mxu0
  %685 = vmatprep.mubr.f32.mxu0 0.0
  %686 = vmatmul.mubr.f32.gmra.mxu0 %v289
  %v687 = vpop.f32.mrf.mxu0
  %v688 = vadd.f32 0.0, %v687
  %v689 = vpop.f32.mrf.mxu0
  %690 = vdwg.mxu0
  %691 = vst [vmem:[%s4] sm:$0xff] %v373
  %692 = vst [vmem:[%s4 + $0x8] sm:$0xff] %v378
  %693 = vst [vmem:[%s4 + $0x10] sm:$0xff] %v383
  %694 = vst [vmem:[%s4 + $0x18] sm:$0xff] %v388
  %695 = vst [vmem:[%s4 + $0x20] sm:$0xff] %v393
  %696 = vst [vmem:[%s4 + $0x28] sm:$0xff] %v398
  %697 = vst [vmem:[%s4 + $0x30] sm:$0xff] %v403
  %698 = vst [vmem:[%s4 + $0x38] sm:$0xff] %v408
  %699 = vst [vmem:[%s4 + $0x40] sm:$0xff] %v413
  %700 = vst [vmem:[%s4 + $0x48] sm:$0xff] %v418
  %701 = vst [vmem:[%s4 + $0x50] sm:$0xff] %v423
  %702 = vst [vmem:[%s4 + $0x58] sm:$0xff] %v428
  %703 = vst [vmem:[%s4 + $0x60] sm:$0xff] %v433
  %704 = vst [vmem:[%s4 + $0x68] sm:$0xff] %v438
  %705 = vst [vmem:[%s4 + $0x70] sm:$0xff] %v443
  %706 = vst [vmem:[%s4 + $0x78] sm:$0xff] %v448
  %707 = vst [vmem:[%s4 + $0x80] sm:$0xff] %v453
  %708 = vst [vmem:[%s4 + $0x88] sm:$0xff] %v458
  %709 = vst [vmem:[%s4 + $0x90] sm:$0xff] %v463
  %710 = vst [vmem:[%s4 + $0x98] sm:$0xff] %v468
  %711 = vst [vmem:[%s4 + $0xa0] sm:$0xff] %v473
  %712 = vst [vmem:[%s4 + $0xa8] sm:$0xff] %v478
  %713 = vst [vmem:[%s4 + $0xb0] sm:$0xff] %v483
  %714 = vst [vmem:[%s4 + $0xb8] sm:$0xff] %v488
  %715 = vst [vmem:[%s4 + $0xc0] sm:$0xff] %v493
  %716 = vst [vmem:[%s4 + $0xc8] sm:$0xff] %v498
  %717 = vst [vmem:[%s4 + $0xd0] sm:$0xff] %v503
  %718 = vst [vmem:[%s4 + $0xd8] sm:$0xff] %v508
  %719 = vst [vmem:[%s4 + $0xe0] sm:$0xff] %v513
  %720 = vst [vmem:[%s4 + $0xe8] sm:$0xff] %v518
  %721 = vst [vmem:[%s4 + $0xf0] sm:$0xff] %v523
  %722 = vst [vmem:[%s4 + $0xf8] sm:$0xff] %v528
  %723 = vst [vmem:[%s4 + $0x100] sm:$0xff] %v533
  %724 = vst [vmem:[%s4 + $0x108] sm:$0xff] %v538
  %725 = vst [vmem:[%s4 + $0x110] sm:$0xff] %v543
  %726 = vst [vmem:[%s4 + $0x118] sm:$0xff] %v548
  %727 = vst [vmem:[%s4 + $0x120] sm:$0xff] %v553
  %728 = vst [vmem:[%s4 + $0x128] sm:$0xff] %v558
  %729 = vst [vmem:[%s4 + $0x130] sm:$0xff] %v563
  %730 = vst [vmem:[%s4 + $0x138] sm:$0xff] %v568
  %731 = vst [vmem:[%s4 + $0x140] sm:$0xff] %v573
  %732 = vst [vmem:[%s4 + $0x148] sm:$0xff] %v578
  %733 = vst [vmem:[%s4 + $0x150] sm:$0xff] %v583
  %734 = vst [vmem:[%s4 + $0x158] sm:$0xff] %v588
  %735 = vst [vmem:[%s4 + $0x160] sm:$0xff] %v593
  %736 = vst [vmem:[%s4 + $0x168] sm:$0xff] %v598
  %737 = vst [vmem:[%s4 + $0x170] sm:$0xff] %v603
  %738 = vst [vmem:[%s4 + $0x178] sm:$0xff] %v608
  %739 = vst [vmem:[%s4 + $0x180] sm:$0xff] %v613
  %740 = vst [vmem:[%s4 + $0x188] sm:$0xff] %v618
  %741 = vst [vmem:[%s4 + $0x190] sm:$0xff] %v623
  %742 = vst [vmem:[%s4 + $0x198] sm:$0xff] %v628
  %743 = vst [vmem:[%s4 + $0x1a0] sm:$0xff] %v633
  %744 = vst [vmem:[%s4 + $0x1a8] sm:$0xff] %v638
  %745 = vst [vmem:[%s4 + $0x1b0] sm:$0xff] %v643
  %746 = vst [vmem:[%s4 + $0x1b8] sm:$0xff] %v648
  %747 = vst [vmem:[%s4 + $0x1c0] sm:$0xff] %v653
  %748 = vst [vmem:[%s4 + $0x1c8] sm:$0xff] %v658
  %749 = vst [vmem:[%s4 + $0x1d0] sm:$0xff] %v663
  %750 = vst [vmem:[%s4 + $0x1d8] sm:$0xff] %v668
  %751 = vst [vmem:[%s4 + $0x1e0] sm:$0xff] %v673
  %752 = vst [vmem:[%s4 + $0x1e8] sm:$0xff] %v678
  %753 = vst [vmem:[%s4 + $0x1f0] sm:$0xff] %v683
  %754 = vst [vmem:[%s4 + $0x1f8] sm:$0xff] %v688
  %v755 = vadd.f32 %v373, %v378
  %v756 = vadd.f32 %v755, %v383
  %v757 = vadd.f32 %v756, %v388
  %v758 = vadd.f32 %v757, %v393
  %v759 = vadd.f32 %v758, %v398
  %v760 = vadd.f32 %v759, %v403
  %v761 = vadd.f32 %v760, %v408
  %v762 = vadd.f32 %v761, %v413
  %v763 = vadd.f32 %v762, %v418
  %v764 = vadd.f32 %v763, %v423
  %v765 = vadd.f32 %v764, %v428
  %v766 = vadd.f32 %v765, %v433
  %v767 = vadd.f32 %v766, %v438
  %v768 = vadd.f32 %v767, %v443
  %v769 = vadd.f32 %v768, %v448
  %v770 = vadd.f32 %v769, %v453
  %v771 = vadd.f32 %v770, %v458
  %v772 = vadd.f32 %v771, %v463
  %v773 = vadd.f32 %v772, %v468
  %v774 = vadd.f32 %v773, %v473
  %v775 = vadd.f32 %v774, %v478
  %v776 = vadd.f32 %v775, %v483
  %v777 = vadd.f32 %v776, %v488
  %v778 = vadd.f32 %v777, %v493
  %v779 = vadd.f32 %v778, %v498
  %v780 = vadd.f32 %v779, %v503
  %v781 = vadd.f32 %v780, %v508
  %v782 = vadd.f32 %v781, %v513
  %v783 = vadd.f32 %v782, %v518
  %v784 = vadd.f32 %v783, %v523
  %v785 = vadd.f32 %v784, %v528
  %v786 = vadd.f32 %v785, %v533
  %v787 = vadd.f32 %v786, %v538
  %v788 = vadd.f32 %v787, %v543
  %v789 = vadd.f32 %v788, %v548
  %v790 = vadd.f32 %v789, %v553
  %v791 = vadd.f32 %v790, %v558
  %v792 = vadd.f32 %v791, %v563
  %v793 = vadd.f32 %v792, %v568
  %v794 = vadd.f32 %v793, %v573
  %v795 = vadd.f32 %v794, %v578
  %v796 = vadd.f32 %v795, %v583
  %v797 = vadd.f32 %v796, %v588
  %v798 = vadd.f32 %v797, %v593
  %v799 = vadd.f32 %v798, %v598
  %v800 = vadd.f32 %v799, %v603
  %v801 = vadd.f32 %v800, %v608
  %v802 = vadd.f32 %v801, %v613
  %v803 = vadd.f32 %v802, %v618
  %v804 = vadd.f32 %v803, %v623
  %v805 = vadd.f32 %v804, %v628
  %v806 = vadd.f32 %v805, %v633
  %v807 = vadd.f32 %v806, %v638
  %v808 = vadd.f32 %v807, %v643
  %v809 = vadd.f32 %v808, %v648
  %v810 = vadd.f32 %v809, %v653
  %v811 = vadd.f32 %v810, %v658
  %v812 = vadd.f32 %v811, %v663
  %v813 = vadd.f32 %v812, %v668
  %v814 = vadd.f32 %v813, %v673
  %v815 = vadd.f32 %v814, %v678
  %v816 = vadd.f32 %v815, %v683
  %v817 = vadd.f32 %v816, %v688
  %v818 = vrot.slane %v817, 4
  %v819 = vadd.f32 %v817, %v818
  %v820 = vrot.slane %v819, 2
  %v821 = vadd.f32 %v819, %v820
  %v822 = vrot.slane %v821, 1
  %v823 = vadd.f32 %v821, %v822
  %824 = vst [vmem:[%s5] sm:$0x1] %v823
  %v825 = vmul.f32 %v373, %v373
  %v826 = vmul.f32 %v378, %v378
  %v827 = vmul.f32 %v383, %v383
  %v828 = vmul.f32 %v388, %v388
  %v829 = vmul.f32 %v393, %v393
  %v830 = vmul.f32 %v398, %v398
  %v831 = vmul.f32 %v403, %v403
  %v832 = vmul.f32 %v408, %v408
  %v833 = vmul.f32 %v413, %v413
  %v834 = vmul.f32 %v418, %v418
  %v835 = vmul.f32 %v423, %v423
  %v836 = vmul.f32 %v428, %v428
  %v837 = vmul.f32 %v433, %v433
  %v838 = vmul.f32 %v438, %v438
  %v839 = vmul.f32 %v443, %v443
  %v840 = vmul.f32 %v448, %v448
  %v841 = vmul.f32 %v453, %v453
  %v842 = vmul.f32 %v458, %v458
  %v843 = vmul.f32 %v463, %v463
  %v844 = vmul.f32 %v468, %v468
  %v845 = vmul.f32 %v473, %v473
  %v846 = vmul.f32 %v478, %v478
  %v847 = vmul.f32 %v483, %v483
  %v848 = vmul.f32 %v488, %v488
  %v849 = vmul.f32 %v493, %v493
  %v850 = vmul.f32 %v498, %v498
  %v851 = vmul.f32 %v503, %v503
  %v852 = vmul.f32 %v508, %v508
  %v853 = vmul.f32 %v513, %v513
  %v854 = vmul.f32 %v518, %v518
  %v855 = vmul.f32 %v523, %v523
  %v856 = vmul.f32 %v528, %v528
  %v857 = vmul.f32 %v533, %v533
  %v858 = vmul.f32 %v538, %v538
  %v859 = vmul.f32 %v543, %v543
  %v860 = vmul.f32 %v548, %v548
  %v861 = vmul.f32 %v553, %v553
  %v862 = vmul.f32 %v558, %v558
  %v863 = vmul.f32 %v563, %v563
  %v864 = vmul.f32 %v568, %v568
  %v865 = vmul.f32 %v573, %v573
  %v866 = vmul.f32 %v578, %v578
  %v867 = vmul.f32 %v583, %v583
  %v868 = vmul.f32 %v588, %v588
  %v869 = vmul.f32 %v593, %v593
  %v870 = vmul.f32 %v598, %v598
  %v871 = vmul.f32 %v603, %v603
  %v872 = vmul.f32 %v608, %v608
  %v873 = vmul.f32 %v613, %v613
  %v874 = vmul.f32 %v618, %v618
  %v875 = vmul.f32 %v623, %v623
  %v876 = vmul.f32 %v628, %v628
  %v877 = vmul.f32 %v633, %v633
  %v878 = vmul.f32 %v638, %v638
  %v879 = vmul.f32 %v643, %v643
  %v880 = vmul.f32 %v648, %v648
  %v881 = vmul.f32 %v653, %v653
  %v882 = vmul.f32 %v658, %v658
  %v883 = vmul.f32 %v663, %v663
  %v884 = vmul.f32 %v668, %v668
  %v885 = vmul.f32 %v673, %v673
  %v886 = vmul.f32 %v678, %v678
  %v887 = vmul.f32 %v683, %v683
  %v888 = vmul.f32 %v688, %v688
  %v889 = vadd.f32 %v825, %v826
  %v890 = vadd.f32 %v889, %v827
  %v891 = vadd.f32 %v890, %v828
  %v892 = vadd.f32 %v891, %v829
  %v893 = vadd.f32 %v892, %v830
  %v894 = vadd.f32 %v893, %v831
  %v895 = vadd.f32 %v894, %v832
  %v896 = vadd.f32 %v895, %v833
  %v897 = vadd.f32 %v896, %v834
  %v898 = vadd.f32 %v897, %v835
  %v899 = vadd.f32 %v898, %v836
  %v900 = vadd.f32 %v899, %v837
  %v901 = vadd.f32 %v900, %v838
  %v902 = vadd.f32 %v901, %v839
  %v903 = vadd.f32 %v902, %v840
  %v904 = vadd.f32 %v903, %v841
  %v905 = vadd.f32 %v904, %v842
  %v906 = vadd.f32 %v905, %v843
  %v907 = vadd.f32 %v906, %v844
  %v908 = vadd.f32 %v907, %v845
  %v909 = vadd.f32 %v908, %v846
  %v910 = vadd.f32 %v909, %v847
  %v911 = vadd.f32 %v910, %v848
  %v912 = vadd.f32 %v911, %v849
  %v913 = vadd.f32 %v912, %v850
  %v914 = vadd.f32 %v913, %v851
  %v915 = vadd.f32 %v914, %v852
  %v916 = vadd.f32 %v915, %v853
  %v917 = vadd.f32 %v916, %v854
  %v918 = vadd.f32 %v917, %v855
  %v919 = vadd.f32 %v918, %v856
  %v920 = vadd.f32 %v919, %v857
  %v921 = vadd.f32 %v920, %v858
  %v922 = vadd.f32 %v921, %v859
  %v923 = vadd.f32 %v922, %v860
  %v924 = vadd.f32 %v923, %v861
  %v925 = vadd.f32 %v924, %v862
  %v926 = vadd.f32 %v925, %v863
  %v927 = vadd.f32 %v926, %v864
  %v928 = vadd.f32 %v927, %v865
  %v929 = vadd.f32 %v928, %v866
  %v930 = vadd.f32 %v929, %v867
  %v931 = vadd.f32 %v930, %v868
  %v932 = vadd.f32 %v931, %v869
  %v933 = vadd.f32 %v932, %v870
  %v934 = vadd.f32 %v933, %v871
  %v935 = vadd.f32 %v934, %v872
  %v936 = vadd.f32 %v935, %v873
  %v937 = vadd.f32 %v936, %v874
  %v938 = vadd.f32 %v937, %v875
  %v939 = vadd.f32 %v938, %v876
  %v940 = vadd.f32 %v939, %v877
  %v941 = vadd.f32 %v940, %v878
  %v942 = vadd.f32 %v941, %v879
  %v943 = vadd.f32 %v942, %v880
  %v944 = vadd.f32 %v943, %v881
  %v945 = vadd.f32 %v944, %v882
  %v946 = vadd.f32 %v945, %v883
  %v947 = vadd.f32 %v946, %v884
  %v948 = vadd.f32 %v947, %v885
  %v949 = vadd.f32 %v948, %v886
  %v950 = vadd.f32 %v949, %v887
  %v951 = vadd.f32 %v950, %v888
  %v952 = vrot.slane %v951, 4
  %v953 = vadd.f32 %v951, %v952
  %v954 = vrot.slane %v953, 2
  %v955 = vadd.f32 %v953, %v954
  %v956 = vrot.slane %v955, 1
  %v957 = vadd.f32 %v955, %v956
  %958 = vst [vmem:[%s6] sm:$0x1] %v957
  // Predicated region
  $region18: #{bottleneck_forward.7} parent=0 // pred_check
    _
  $region19: #{bottleneck_forward.7} parent=0 // pred_check_branch
    %960 = sbr.rel (0) target = $region21
  $region20: #{bottleneck_forward.7} parent=0 // pred_region
    _
  $region21: #{bottleneck_forward.7} parent=0 // pred_fallthru
    _
  // Predicated region
  $region22: #{bottleneck_forward.7} parent=0 // pred_check
    _
  $region23: #{bottleneck_forward.7} parent=0 // pred_check_branch
    %962 = sbr.rel (0) target = $region25
  $region24: #{bottleneck_forward.7} parent=0 // pred_region
    _
  $region25: #{bottleneck_forward.7} parent=0 // pred_fallthru
    _
  // Predicated region
  $region26: #{bottleneck_forward.7} parent=0 // pred_check
    _
  $region27: #{bottleneck_forward.7} parent=0 // pred_check_branch
    %964 = sbr.rel (0) target = $region29
  $region28: #{bottleneck_forward.7} parent=0 // pred_region
    _
  $region29: #{bottleneck_forward.7} parent=0 // pred_fallthru
    _
  // Predicated region
  $region30: #{bottleneck_forward.7} parent=0 // pred_check
    _
  $region31: #{bottleneck_forward.7} parent=0 // pred_check_branch
    %966 = sbr.rel (0) target = $region33
  $region32: #{bottleneck_forward.7} parent=0 // pred_region
    _
  $region33: #{bottleneck_forward.7} parent=0 // pred_fallthru
    _
  // Predicated region
  $region34: #{bottleneck_forward.7} parent=0 // pred_check
    _
  $region35: #{bottleneck_forward.7} parent=0 // pred_check_branch
    %968 = sbr.rel (0) target = $region37
  $region36: #{bottleneck_forward.7} parent=0 // pred_region
    _
  $region37: #{bottleneck_forward.7} parent=0 // pred_fallthru
    _
  // Predicated region
  $region38: #{bottleneck_forward.7} parent=0 // pred_check
    _
  $region39: #{bottleneck_forward.7} parent=0 // pred_check_branch
    %970 = sbr.rel (0) target = $region41
  $region40: #{bottleneck_forward.7} parent=0 // pred_region
    _
  $region41: #{bottleneck_forward.7} parent=0 // pred_fallthru
    _

// kernel: bottleneck_forward.6
$region0: #{bottleneck_forward.6}
  #allocation0 [shape = 'u32[]', space=smem, size = 0x4, offset = 0x4, fixed_abs, tag = 'smem constant byte address 0x4 - core index']
  #allocation1 [shape = 'u32[144,128]{1,0:T(1,128)}', space=vmem, size = 0x12000, scoped, tag = 'internal scratch']
  #allocation2 [shape = 'f32[18,18,128]{2,1,0:T(8,128)}', space=vmem, size = 0x36000, scoped, tag = 'scratch operand']
  %s0 = inlined_call_operand.vmem [shape: f32[2,16,16,128], index: 0, kind: input, shape index: {}]
  %s1 = inlined_call_operand.vmem [shape: f32[3,3,128,128], index: 1, kind: input, shape index: {}]
  %s2 = inlined_call_operand.vmem [shape: f32[1,128], index: 2, kind: input, shape index: {}]
  %s3 = inlined_call_operand.vmem [shape: f32[1,128], index: 3, kind: input, shape index: {}]
  %s4 = inlined_call_operand.vmem [shape: f32[512,128], index: 4, kind: output, shape index: {0}]
  %s5 = inlined_call_operand.vmem [shape: f32[2,1,128], index: 5, kind: output, shape index: {1}]
  %s6 = inlined_call_operand.vmem [shape: f32[2,1,128], index: 6, kind: output, shape index: {2}]
  %7 = xla_tuple %s4, %s5, %s6
  %s8 = sld [smem:[#allocation0]]
  $region65: #{bottleneck_forward.6} parent=0
    _
  %s10 = ssub.s32 1, %s8
  %s11 = scalar_select 0, %s10, %s8
  loop: start=0, step=1, limit=4
  $region2: #{bottleneck_forward.6} parent=0 // loop_pre_header
    _
  $region3: #{bottleneck_forward.6} parent=0 // loop_header
    %s13 = sphi 0, %s17
    %p14 = scmp.ge.s32.totalorder %s13, 4
    %s23 = sphi 0, %s25
    %s26 = sphi 0, %s23
    %s27 = sphi 0, %s26
    %s43 = sphi 0, %s27
    %s47 = sphi 0, %s47
    %s49 = sphi 0, %s47
    %s50 = sphi 0, %s49
    %s64 = sphi 0, %s50
    %s68 = sphi 0, %s68
    %s70 = sphi 0, %s68
    %s71 = sphi 0, %s70
    %s85 = sphi 0, %s71
    %s89 = sphi 0, %s89
    %s91 = sphi 0, %s89
    %s92 = sphi 0, %s91
    %s106 = sphi 0, %s92
    %s112 = sphi 0, %s114
    %s115 = sphi 0, %s112
    %s116 = sphi 0, %s115
    %s132 = sphi 0, %s116
    %s138 = sphi 0, %s140
    %s141 = sphi 0, %s138
    %s142 = sphi 0, %s141
    %s158 = sphi 0, %s142
    %s164 = sphi 0, %s166
    %s167 = sphi 0, %s164
    %s168 = sphi 0, %s167
    %s184 = sphi 0, %s168
  $region4: #{bottleneck_forward.6} parent=0 // loop_header_branch
    %16 = sbr.rel (%p14) target = $region8
  $region5: #{bottleneck_forward.6} parent=0 // loop_body
    %s18 = ssub.s32 %s13, 1
    %s19 = ssub.s32 %s13, 2
    %s20 = sadd.s32 %s13, 1
    %s21 = ssub.s32 %s13, %s20
    %p22 = scmp.eq.s32.totalorder %s21, 0
    %s24 = sadd.s32 %s23, 1
    %s25 = scalar_select %p22, %s23, %s24
    %p28 = pneg %p22
    %p29 = scmp.eq.s32.totalorder %s13, 1
    %p30 = por %p28, %p29
    %p31 = scmp.ne.s32.totalorder %s23, %s26
    %p32 = scmp.eq.s32.totalorder %s13, 0
    %p33 = por %p31, %p32
    %p34 = scmp.ne.s32.totalorder %s23, %s26
    %p35 = scmp.eq.s32.totalorder %s18, 1
    %p36 = por %p34, %p35
    %p37 = scmp.ne.s32.totalorder %s26, %s27
    %p38 = scmp.eq.s32.totalorder %s18, 0
    %p39 = por %p37, %p38
    %p40 = scmp.ne.s32.totalorder %s26, %s27
    %p41 = scmp.eq.s32.totalorder %s19, 1
    %p42 = por %p40, %p41
    %p44 = scmp.ne.s32.totalorder %s27, %s43
    %p45 = scmp.eq.s32.totalorder %s19, 0
    %p46 = por %p44, %p45
    %s48 = sadd.s32 %s47, 1
    %p51 = scmp.eq.s32.totalorder %s13, 1
    %p52 = scmp.ne.s32.totalorder %s47, %s49
    %p53 = scmp.eq.s32.totalorder %s13, 0
    %p54 = por %p52, %p53
    %p55 = scmp.ne.s32.totalorder %s47, %s49
    %p56 = scmp.eq.s32.totalorder %s18, 1
    %p57 = por %p55, %p56
    %p58 = scmp.ne.s32.totalorder %s49, %s50
    %p59 = scmp.eq.s32.totalorder %s18, 0
    %p60 = por %p58, %p59
    %p61 = scmp.ne.s32.totalorder %s49, %s50
    %p62 = scmp.eq.s32.totalorder %s19, 1
    %p63 = por %p61, %p62
    %p65 = scmp.ne.s32.totalorder %s50, %s64
    %p66 = scmp.eq.s32.totalorder %s19, 0
    %p67 = por %p65, %p66
    %s69 = sadd.s32 %s68, 1
    %p72 = scmp.eq.s32.totalorder %s13, 1
    %p73 = scmp.ne.s32.totalorder %s68, %s70
    %p74 = scmp.eq.s32.totalorder %s13, 0
    %p75 = por %p73, %p74
    %p76 = scmp.ne.s32.totalorder %s68, %s70
    %p77 = scmp.eq.s32.totalorder %s18, 1
    %p78 = por %p76, %p77
    %p79 = scmp.ne.s32.totalorder %s70, %s71
    %p80 = scmp.eq.s32.totalorder %s18, 0
    %p81 = por %p79, %p80
    %p82 = scmp.ne.s32.totalorder %s70, %s71
    %p83 = scmp.eq.s32.totalorder %s19, 1
    %p84 = por %p82, %p83
    %p86 = scmp.ne.s32.totalorder %s71, %s85
    %p87 = scmp.eq.s32.totalorder %s19, 0
    %p88 = por %p86, %p87
    %s90 = sadd.s32 %s89, 1
    %p93 = scmp.eq.s32.totalorder %s13, 1
    %p94 = scmp.ne.s32.totalorder %s89, %s91
    %p95 = scmp.eq.s32.totalorder %s13, 0
    %p96 = por %p94, %p95
    %p97 = scmp.ne.s32.totalorder %s89, %s91
    %p98 = scmp.eq.s32.totalorder %s18, 1
    %p99 = por %p97, %p98
    %p100 = scmp.ne.s32.totalorder %s91, %s92
    %p101 = scmp.eq.s32.totalorder %s18, 0
    %p102 = por %p100, %p101
    %p103 = scmp.ne.s32.totalorder %s91, %s92
    %p104 = scmp.eq.s32.totalorder %s19, 1
    %p105 = por %p103, %p104
    %p107 = scmp.ne.s32.totalorder %s92, %s106
    %p108 = scmp.eq.s32.totalorder %s19, 0
    %p109 = por %p107, %p108
    %s110 = ssub.s32 %s13, %s20
    %p111 = scmp.eq.s32.totalorder %s110, 0
    %s113 = sadd.s32 %s112, 1
    %s114 = scalar_select %p111, %s112, %s113
    %p117 = pneg %p111
    %p118 = scmp.eq.s32.totalorder %s13, 1
    %p119 = por %p117, %p118
    %p120 = scmp.ne.s32.totalorder %s112, %s115
    %p121 = scmp.eq.s32.totalorder %s13, 0
    %p122 = por %p120, %p121
    %p123 = scmp.ne.s32.totalorder %s112, %s115
    %p124 = scmp.eq.s32.totalorder %s18, 1
    %p125 = por %p123, %p124
    %p126 = scmp.ne.s32.totalorder %s115, %s116
    %p127 = scmp.eq.s32.totalorder %s18, 0
    %p128 = por %p126, %p127
    %p129 = scmp.ne.s32.totalorder %s115, %s116
    %p130 = scmp.eq.s32.totalorder %s19, 1
    %p131 = por %p129, %p130
    %p133 = scmp.ne.s32.totalorder %s116, %s132
    %p134 = scmp.eq.s32.totalorder %s19, 0
    %p135 = por %p133, %p134
    %s136 = ssub.s32 %s13, %s20
    %p137 = scmp.eq.s32.totalorder %s136, 0
    %s139 = sadd.s32 %s138, 1
    %s140 = scalar_select %p137, %s138, %s139
    %p143 = pneg %p137
    %p144 = scmp.eq.s32.totalorder %s13, 1
    %p145 = por %p143, %p144
    %p146 = scmp.ne.s32.totalorder %s138, %s141
    %p147 = scmp.eq.s32.totalorder %s13, 0
    %p148 = por %p146, %p147
    %p149 = scmp.ne.s32.totalorder %s138, %s141
    %p150 = scmp.eq.s32.totalorder %s18, 1
    %p151 = por %p149, %p150
    %p152 = scmp.ne.s32.totalorder %s141, %s142
    %p153 = scmp.eq.s32.totalorder %s18, 0
    %p154 = por %p152, %p153
    %p155 = scmp.ne.s32.totalorder %s141, %s142
    %p156 = scmp.eq.s32.totalorder %s19, 1
    %p157 = por %p155, %p156
    %p159 = scmp.ne.s32.totalorder %s142, %s158
    %p160 = scmp.eq.s32.totalorder %s19, 0
    %p161 = por %p159, %p160
    %s162 = ssub.s32 %s13, %s20
    %p163 = scmp.eq.s32.totalorder %s162, 0
    %s165 = sadd.s32 %s164, 1
    %s166 = scalar_select %p163, %s164, %s165
    %p169 = pneg %p163
    %p170 = scmp.eq.s32.totalorder %s13, 1
    %p171 = por %p169, %p170
    %p172 = scmp.ne.s32.totalorder %s164, %s167
    %p173 = scmp.eq.s32.totalorder %s13, 0
    %p174 = por %p172, %p173
    %p175 = scmp.ne.s32.totalorder %s164, %s167
    %p176 = scmp.eq.s32.totalorder %s18, 1
    %p177 = por %p175, %p176
    %p178 = scmp.ne.s32.totalorder %s167, %s168
    %p179 = scmp.eq.s32.totalorder %s18, 0
    %p180 = por %p178, %p179
    %p181 = scmp.ne.s32.totalorder %s167, %s168
    %p182 = scmp.eq.s32.totalorder %s19, 1
    %p183 = por %p181, %p182
    %p185 = scmp.ne.s32.totalorder %s168, %s184
    %p186 = scmp.eq.s32.totalorder %s19, 0
    %p187 = por %p185, %p186
    %p188 = scmp.le.s32.totalorder 1, %s13
    %p189 = scmp.lt.s32.totalorder %s13, 3
    %p190 = pnand %p188, %p189
    %p191 = pneg %p190
    // Predicated region
    $region9: #{bottleneck_forward.6} parent=5 // pred_check
      _
    $region10: #{bottleneck_forward.6} parent=5 // pred_check_branch
      %193 = sbr.rel (%p190) target = $region12
    $region11: #{bottleneck_forward.6} parent=5 // pred_region
      %s194 = ssub.s32 %s13, 1
      // Predicated region
      $region13: #{bottleneck_forward.6} parent=11 // pred_check
        %p195 = pneg %p60
      $region14: #{bottleneck_forward.6} parent=11 // pred_check_branch
        %197 = sbr.rel (%p195) target = $region16
      $region15: #{bottleneck_forward.6} parent=11 // pred_region
        _
      $region16: #{bottleneck_forward.6} parent=11 // pred_fallthru
        _
      // Predicated region
      $region17: #{bottleneck_forward.6} parent=11 // pred_check
        %p198 = pneg %p81
      $region18: #{bottleneck_forward.6} parent=11 // pred_check_branch
        %200 = sbr.rel (%p198) target = $region20
      $region19: #{bottleneck_forward.6} parent=11 // pred_region
        _
      $region20: #{bottleneck_forward.6} parent=11 // pred_fallthru
        _
      // Predicated region
      $region21: #{bottleneck_forward.6} parent=11 // pred_check
        %p201 = pneg %p102
      $region22: #{bottleneck_forward.6} parent=11 // pred_check_branch
        %203 = sbr.rel (%p201) target = $region24
      $region23: #{bottleneck_forward.6} parent=11 // pred_region
        _
      $region24: #{bottleneck_forward.6} parent=11 // pred_fallthru
        _
    $region12: #{bottleneck_forward.6} parent=5 // pred_fallthru
      _
    %p204 = scmp.lt.s32.totalorder %s13, 2
    // Predicated region
    $region25: #{bottleneck_forward.6} parent=5 // pred_check
      %p205 = pneg %p204
    $region26: #{bottleneck_forward.6} parent=5 // pred_check_branch
      %207 = sbr.rel (%p205) target = $region28
    $region27: #{bottleneck_forward.6} parent=5 // pred_region
      // Predicated region
      $region29: #{bottleneck_forward.6} parent=27 // pred_check
        %p208 = pneg %p33
      $region30: #{bottleneck_forward.6} parent=27 // pred_check_branch
        %210 = sbr.rel (%p208) target = $region32
      $region31: #{bottleneck_forward.6} parent=27 // pred_region
        %p211 = scmp.lt.s32.totalorder %s13, 1
        %s212 = scalar_select %p211, %s13, 1
        %s213 = smul.addr %s212, 32
        %s214 = smul.addr %s213, 8
        %s215 = scalar_lea.vmem %s0, %s214
      $region32: #{bottleneck_forward.6} parent=27 // pred_fallthru
        _
    $region28: #{bottleneck_forward.6} parent=5 // pred_fallthru
      _
    %p216 = scmp.le.s32.totalorder 1, %s13
    %p217 = scmp.lt.s32.totalorder %s13, 3
    %p218 = pnand %p216, %p217
    %p219 = pneg %p218
    // Predicated region
    $region33: #{bottleneck_forward.6} parent=5 // pred_check
      _
    $region34: #{bottleneck_forward.6} parent=5 // pred_check_branch
      %221 = sbr.rel (%p218) target = $region36
    $region35: #{bottleneck_forward.6} parent=5 // pred_region
      %s222 = ssub.s32 %s13, 1
      %p223 = scmp.lt.s32.totalorder %s18, 1
      %s224 = scalar_select %p223, %s18, 1
      %s225 = smul.addr %s224, 32
      %s226 = smul.addr %s225, 8
      %s227 = scalar_lea.vmem %s0, %s226
      %p228 = pneg %p39
      %p229 = pneg %p36
      %p230 = pneg %p60
      %p231 = pneg %p57
      %p232 = pneg %p81
      %p233 = pneg %p78
      %p234 = pneg %p102
      %p235 = pneg %p99
      %p236 = pneg %p128
      %p237 = pneg %p125
      %s238 = smul.u32 32, %s18
      %p239 = scmp.lt.s32.totalorder %s238, 63
      %s240 = scalar_select %p239, %s238, 63
      %s241 = smul.addr %s240, 8
      %s242 = scalar_lea.vmem %s4, %s241
      %p243 = pneg %p154
      %p244 = pneg %p151
      %p245 = scmp.lt.s32.totalorder %s18, 1
      %s246 = scalar_select %p245, %s18, 1
      %s247 = scalar_lea.vmem %s5, %s246
      %p248 = pneg %p180
      %p249 = pneg %p177
      %p250 = scmp.lt.s32.totalorder %s18, 1
      %s251 = scalar_select %p250, %s18, 1
      %s252 = scalar_lea.vmem %s6, %s251
      %p253 = scmp.lt.s32.totalorder %s18, 1
      %s254 = scalar_select %p253, %s18, 1
      %s255 = smul.addr %s254, 32
      %s256 = smul.addr %s255, 8
      %s257 = scalar_lea.vmem %s0, %s256
      %s258 = smul.u32 32, %s18
      %p259 = scmp.lt.s32.totalorder %s258, 63
      %s260 = scalar_select %p259, %s258, 63
      %s261 = smul.addr %s260, 8
      %s262 = scalar_lea.vmem %s4, %s261
      %s263 = smul.u32 32, %s18
      %p264 = scmp.lt.s32.totalorder %s18, 1
      %s265 = scalar_select %p264, %s18, 1
      %s266 = scalar_lea.vmem %s5, %s265
      %p267 = scmp.lt.s32.totalorder %s18, 1
      %s268 = scalar_select %p267, %s18, 1
      %s269 = scalar_lea.vmem %s6, %s268
      %270 = vst [vmem:[#allocation2] sm:$0xff] 0.0
      %271 = vst [vmem:[#allocation2 + $0x8] sm:$0xff] 0.0
      %272 = vst [vmem:[#allocation2 + $0x10] sm:$0x3] 0.0
      %273 = vst [vmem:[#allocation2 + $0x18] sm:$0xff] 0.0
      %274 = vst [vmem:[#allocation2 + $0x20] sm:$0xff] 0.0
      %275 = vst [vmem:[#allocation2 + $0x28] sm:$0x3] 0.0
      %276 = vst [vmem:[#allocation2 + $0x30] sm:$0xff] 0.0
      %277 = vst [vmem:[#allocation2 + $0x38] sm:$0xff] 0.0
      %278 = vst [vmem:[#allocation2 + $0x40] sm:$0x3] 0.0
      %279 = vst [vmem:[#allocation2 + $0x48] sm:$0xff] 0.0
      %280 = vst [vmem:[#allocation2 + $0x50] sm:$0xff] 0.0
      %281 = vst [vmem:[#allocation2 + $0x58] sm:$0x3] 0.0
      %282 = vst [vmem:[#allocation2 + $0x60] sm:$0xff] 0.0
      %283 = vst [vmem:[#allocation2 + $0x68] sm:$0xff] 0.0
      %284 = vst [vmem:[#allocation2 + $0x70] sm:$0x3] 0.0
      %285 = vst [vmem:[#allocation2 + $0x78] sm:$0xff] 0.0
      %286 = vst [vmem:[#allocation2 + $0x80] sm:$0xff] 0.0
      %287 = vst [vmem:[#allocation2 + $0x88] sm:$0x3] 0.0
      %288 = vst [vmem:[#allocation2 + $0x90] sm:$0xff] 0.0
      %289 = vst [vmem:[#allocation2 + $0x98] sm:$0xff] 0.0
      %290 = vst [vmem:[#allocation2 + $0xa0] sm:$0x3] 0.0
      %291 = vst [vmem:[#allocation2 + $0xa8] sm:$0xff] 0.0
      %292 = vst [vmem:[#allocation2 + $0xb0] sm:$0xff] 0.0
      %293 = vst [vmem:[#allocation2 + $0xb8] sm:$0x3] 0.0
      %294 = vst [vmem:[#allocation2 + $0xc0] sm:$0xff] 0.0
      %295 = vst [vmem:[#allocation2 + $0xc8] sm:$0xff] 0.0
      %296 = vst [vmem:[#allocation2 + $0xd0] sm:$0x3] 0.0
      %297 = vst [vmem:[#allocation2 + $0xd8] sm:$0xff] 0.0
      %298 = vst [vmem:[#allocation2 + $0xe0] sm:$0xff] 0.0
      %299 = vst [vmem:[#allocation2 + $0xe8] sm:$0x3] 0.0
      %300 = vst [vmem:[#allocation2 + $0xf0] sm:$0xff] 0.0
      %301 = vst [vmem:[#allocation2 + $0xf8] sm:$0xff] 0.0
      %302 = vst [vmem:[#allocation2 + $0x100] sm:$0x3] 0.0
      %303 = vst [vmem:[#allocation2 + $0x108] sm:$0xff] 0.0
      %304 = vst [vmem:[#allocation2 + $0x110] sm:$0xff] 0.0
      %305 = vst [vmem:[#allocation2 + $0x118] sm:$0x3] 0.0
      %306 = vst [vmem:[#allocation2 + $0x120] sm:$0xff] 0.0
      %307 = vst [vmem:[#allocation2 + $0x128] sm:$0xff] 0.0
      %308 = vst [vmem:[#allocation2 + $0x130] sm:$0x3] 0.0
      %309 = vst [vmem:[#allocation2 + $0x138] sm:$0xff] 0.0
      %310 = vst [vmem:[#allocation2 + $0x140] sm:$0xff] 0.0
      %311 = vst [vmem:[#allocation2 + $0x148] sm:$0x3] 0.0
      %312 = vst [vmem:[#allocation2 + $0x150] sm:$0xff] 0.0
      %313 = vst [vmem:[#allocation2 + $0x158] sm:$0xff] 0.0
      %314 = vst [vmem:[#allocation2 + $0x160] sm:$0x3] 0.0
      %315 = vst [vmem:[#allocation2 + $0x168] sm:$0xff] 0.0
      %316 = vst [vmem:[#allocation2 + $0x170] sm:$0xff] 0.0
      %317 = vst [vmem:[#allocation2 + $0x178] sm:$0x3] 0.0
      %318 = vst [vmem:[#allocation2 + $0x180] sm:$0xff] 0.0
      %319 = vst [vmem:[#allocation2 + $0x188] sm:$0xff] 0.0
      %320 = vst [vmem:[#allocation2 + $0x190] sm:$0x3] 0.0
      %321 = vst [vmem:[#allocation2 + $0x198] sm:$0xff] 0.0
      %322 = vst [vmem:[#allocation2 + $0x1a0] sm:$0xff] 0.0
      %323 = vst [vmem:[#allocation2 + $0x1a8] sm:$0x3] 0.0
      %v324 = vld [vmem:[%s257] sm:$0xff]
      %v325 = vld [vmem:[%s257 + $0x8] sm:$0xff]
      %v326 = vld [vmem:[%s257 + $0x10] sm:$0xff]
      %v327 = vld [vmem:[%s257 + $0x18] sm:$0xff]
      %v328 = vld [vmem:[%s257 + $0x20] sm:$0xff]
      %v329 = vld [vmem:[%s257 + $0x28] sm:$0xff]
      %v330 = vld [vmem:[%s257 + $0x30] sm:$0xff]
      %v331 = vld [vmem:[%s257 + $0x38] sm:$0xff]
      %v332 = vld [vmem:[%s257 + $0x40] sm:$0xff]
      %v333 = vld [vmem:[%s257 + $0x48] sm:$0xff]
      %v334 = vld [vmem:[%s257 + $0x50] sm:$0xff]
      %v335 = vld [vmem:[%s257 + $0x58] sm:$0xff]
      %v336 = vld [vmem:[%s257 + $0x60] sm:$0xff]
      %v337 = vld [vmem:[%s257 + $0x68] sm:$0xff]
      %v338 = vld [vmem:[%s257 + $0x70] sm:$0xff]
      %v339 = vld [vmem:[%s257 + $0x78] sm:$0xff]
      %v340 = vld [vmem:[%s257 + $0x80] sm:$0xff]
      %v341 = vld [vmem:[%s257 + $0x88] sm:$0xff]
      %v342 = vld [vmem:[%s257 + $0x90] sm:$0xff]
      %v343 = vld [vmem:[%s257 + $0x98] sm:$0xff]
      %v344 = vld [vmem:[%s257 + $0xa0] sm:$0xff]
      %v345 = vld [vmem:[%s257 + $0xa8] sm:$0xff]
      %v346 = vld [vmem:[%s257 + $0xb0] sm:$0xff]
      %v347 = vld [vmem:[%s257 + $0xb8] sm:$0xff]
      %v348 = vld [vmem:[%s257 + $0xc0] sm:$0xff]
      %v349 = vld [vmem:[%s257 + $0xc8] sm:$0xff]
      %v350 = vld [vmem:[%s257 + $0xd0] sm:$0xff]
      %v351 = vld [vmem:[%s257 + $0xd8] sm:$0xff]
      %v352 = vld [vmem:[%s257 + $0xe0] sm:$0xff]
      %v353 = vld [vmem:[%s257 + $0xe8] sm:$0xff]
      %v354 = vld [vmem:[%s257 + $0xf0] sm:$0xff]
      %v355 = vld [vmem:[%s257 + $0xf8] sm:$0xff]
      %v356 = vld [vmem:[%s2] sm:$0x1]
      %v358 = vlaneseq
      %v359 = vshrl.u32 %v358, 7
      %v360 = vsub.s32 0, %v359
      %v361 = vrot.slane %v356, %v360
      %v363 = vmul.f32 %v324, %v361
      %v364 = vmul.f32 %v325, %v361
      %v365 = vmul.f32 %v326, %v361
      %v366 = vmul.f32 %v327, %v361
      %v367 = vmul.f32 %v328, %v361
      %v368 = vmul.f32 %v329, %v361
      %v369 = vmul.f32 %v330, %v361
      %v370 = vmul.f32 %v331, %v361
      %v371 = vmul.f32 %v332, %v361
      %v372 = vmul.f32 %v333, %v361
      %v373 = vmul.f32 %v334, %v361
      %v374 = vmul.f32 %v335, %v361
      %v375 = vmul.f32 %v336, %v361
      %v376 = vmul.f32 %v337, %v361
      %v377 = vmul.f32 %v338, %v361
      %v378 = vmul.f32 %v339, %v361
      %v379 = vmul.f32 %v340, %v361
      %v380 = vmul.f32 %v341, %v361
      %v381 = vmul.f32 %v342, %v361
      %v382 = vmul.f32 %v343, %v361
      %v383 = vmul.f32 %v344, %v361
      %v384 = vmul.f32 %v345, %v361
      %v385 = vmul.f32 %v346, %v361
      %v386 = vmul.f32 %v347, %v361
      %v387 = vmul.f32 %v348, %v361
      %v388 = vmul.f32 %v349, %v361
      %v389 = vmul.f32 %v350, %v361
      %v390 = vmul.f32 %v351, %v361
      %v391 = vmul.f32 %v352, %v361
      %v392 = vmul.f32 %v353, %v361
      %v393 = vmul.f32 %v354, %v361
      %v394 = vmul.f32 %v355, %v361
      %v395 = vld [vmem:[%s3] sm:$0x1]
      %v397 = vlaneseq
      %v398 = vshrl.u32 %v397, 7
      %v399 = vsub.s32 0, %v398
      %v400 = vrot.slane %v395, %v399
      %v402 = vadd.f32 %v363, %v400
      %v403 = vadd.f32 %v364, %v400
      %v404 = vadd.f32 %v365, %v400
      %v405 = vadd.f32 %v366, %v400
      %v406 = vadd.f32 %v367, %v400
      %v407 = vadd.f32 %v368, %v400
      %v408 = vadd.f32 %v369, %v400
      %v409 = vadd.f32 %v370, %v400
      %v410 = vadd.f32 %v371, %v400
      %v411 = vadd.f32 %v372, %v400
      %v412 = vadd.f32 %v373, %v400
      %v413 = vadd.f32 %v374, %v400
      %v414 = vadd.f32 %v375, %v400
      %v415 = vadd.f32 %v376, %v400
      %v416 = vadd.f32 %v377, %v400
      %v417 = vadd.f32 %v378, %v400
      %v418 = vadd.f32 %v379, %v400
      %v419 = vadd.f32 %v380, %v400
      %v420 = vadd.f32 %v381, %v400
      %v421 = vadd.f32 %v382, %v400
      %v422 = vadd.f32 %v383, %v400
      %v423 = vadd.f32 %v384, %v400
      %v424 = vadd.f32 %v385, %v400
      %v425 = vadd.f32 %v386, %v400
      %v426 = vadd.f32 %v387, %v400
      %v427 = vadd.f32 %v388, %v400
      %v428 = vadd.f32 %v389, %v400
      %v429 = vadd.f32 %v390, %v400
      %v430 = vadd.f32 %v391, %v400
      %v431 = vadd.f32 %v392, %v400
      %v432 = vadd.f32 %v393, %v400
      %v433 = vadd.f32 %v394, %v400
      %v434 = vmax.f32 %v402, 0.0
      %v435 = vmax.f32 %v403, 0.0
      %v436 = vmax.f32 %v404, 0.0
      %v437 = vmax.f32 %v405, 0.0
      %v438 = vmax.f32 %v406, 0.0
      %v439 = vmax.f32 %v407, 0.0
      %v440 = vmax.f32 %v408, 0.0
      %v441 = vmax.f32 %v409, 0.0
      %v442 = vmax.f32 %v410, 0.0
      %v443 = vmax.f32 %v411, 0.0
      %v444 = vmax.f32 %v412, 0.0
      %v445 = vmax.f32 %v413, 0.0
      %v446 = vmax.f32 %v414, 0.0
      %v447 = vmax.f32 %v415, 0.0
      %v448 = vmax.f32 %v416, 0.0
      %v449 = vmax.f32 %v417, 0.0
      %v450 = vmax.f32 %v418, 0.0
      %v451 = vmax.f32 %v419, 0.0
      %v452 = vmax.f32 %v420, 0.0
      %v453 = vmax.f32 %v421, 0.0
      %v454 = vmax.f32 %v422, 0.0
      %v455 = vmax.f32 %v423, 0.0
      %v456 = vmax.f32 %v424, 0.0
      %v457 = vmax.f32 %v425, 0.0
      %v458 = vmax.f32 %v426, 0.0
      %v459 = vmax.f32 %v427, 0.0
      %v460 = vmax.f32 %v428, 0.0
      %v461 = vmax.f32 %v429, 0.0
      %v462 = vmax.f32 %v430, 0.0
      %v463 = vmax.f32 %v431, 0.0
      %v464 = vmax.f32 %v432, 0.0
      %v465 = vmax.f32 %v433, 0.0
      %s466 = scalar_lea.vmem [#allocation2], 24
      %467 = vst [vmem:[%s466 + $0x1] sm:$0xff] %v434
      %468 = vst [vmem:[%s466 + $0x9] sm:$0xff] %v435
      %469 = vst [vmem:[%s466 + $0x19] sm:$0xff] %v436
      %470 = vst [vmem:[%s466 + $0x21] sm:$0xff] %v437
      %471 = vst [vmem:[%s466 + $0x31] sm:$0xff] %v438
      %472 = vst [vmem:[%s466 + $0x39] sm:$0xff] %v439
      %473 = vst [vmem:[%s466 + $0x49] sm:$0xff] %v440
      %474 = vst [vmem:[%s466 + $0x51] sm:$0xff] %v441
      %475 = vst [vmem:[%s466 + $0x61] sm:$0xff] %v442
      %476 = vst [vmem:[%s466 + $0x69] sm:$0xff] %v443
      %477 = vst [vmem:[%s466 + $0x79] sm:$0xff] %v444
      %478 = vst [vmem:[%s466 + $0x81] sm:$0xff] %v445
      %479 = vst [vmem:[%s466 + $0x91] sm:$0xff] %v446
      %480 = vst [vmem:[%s466 + $0x99] sm:$0xff] %v447
      %481 = vst [vmem:[%s466 + $0xa9] sm:$0xff] %v448
      %482 = vst [vmem:[%s466 + $0xb1] sm:$0xff] %v449
      %483 = vst [vmem:[%s466 + $0xc1] sm:$0xff] %v450
      %484 = vst [vmem:[%s466 + $0xc9] sm:$0xff] %v451
      %485 = vst [vmem:[%s466 + $0xd9] sm:$0xff] %v452
      %486 = vst [vmem:[%s466 + $0xe1] sm:$0xff] %v453
      %487 = vst [vmem:[%s466 + $0xf1] sm:$0xff] %v454
      %488 = vst [vmem:[%s466 + $0xf9] sm:$0xff] %v455
      %489 = vst [vmem:[%s466 + $0x109] sm:$0xff] %v456
      %490 = vst [vmem:[%s466 + $0x111] sm:$0xff] %v457
      %491 = vst [vmem:[%s466 + $0x121] sm:$0xff] %v458
      %492 = vst [vmem:[%s466 + $0x129] sm:$0xff] %v459
      %493 = vst [vmem:[%s466 + $0x139] sm:$0xff] %v460
      %494 = vst [vmem:[%s466 + $0x141] sm:$0xff] %v461
      %495 = vst [vmem:[%s466 + $0x151] sm:$0xff] %v462
      %496 = vst [vmem:[%s466 + $0x159] sm:$0xff] %v463
      %497 = vst [vmem:[%s466 + $0x169] sm:$0xff] %v464
      %498 = vst [vmem:[%s466 + $0x171] sm:$0xff] %v465
      %v499 = vld [vmem:[#allocation2] sm:$0xff]
      %v500 = vld [vmem:[#allocation2 + $0x8] sm:$0xff]
      %v501 = vld [vmem:[#allocation2 + $0x10] sm:$0x3]
      %v502 = vld [vmem:[#allocation2 + $0x18] sm:$0xff]
      %v503 = vld [vmem:[#allocation2 + $0x20] sm:$0xff]
      %v504 = vld [vmem:[#allocation2 + $0x28] sm:$0x3]
      %v505 = vld [vmem:[#allocation2 + $0x30] sm:$0xff]
      %v506 = vld [vmem:[#allocation2 + $0x38] sm:$0xff]
      %v507 = vld [vmem:[#allocation2 + $0x40] sm:$0x3]
      %v508 = vld [vmem:[#allocation2 + $0x48] sm:$0xff]
      %v509 = vld [vmem:[#allocation2 + $0x50] sm:$0xff]
      %v510 = vld [vmem:[#allocation2 + $0x58] sm:$0x3]
      %v511 = vld [vmem:[#allocation2 + $0x60] sm:$0xff]
      %v512 = vld [vmem:[#allocation2 + $0x68] sm:$0xff]
      %v513 = vld [vmem:[#allocation2 + $0x70] sm:$0x3]
      %v514 = vld [vmem:[#allocation2 + $0x78] sm:$0xff]
      %v515 = vld [vmem:[#allocation2 + $0x80] sm:$0xff]
      %v516 = vld [vmem:[#allocation2 + $0x88] sm:$0x3]
      %v517 = vld [vmem:[#allocation2 + $0x90] sm:$0xff]
      %v518 = vld [vmem:[#allocation2 + $0x98] sm:$0xff]
      %v519 = vld [vmem:[#allocation2 + $0xa0] sm:$0x3]
      %v520 = vld [vmem:[#allocation2 + $0xa8] sm:$0xff]
      %v521 = vld [vmem:[#allocation2 + $0xb0] sm:$0xff]
      %v522 = vld [vmem:[#allocation2 + $0xb8] sm:$0x3]
      %v523 = vld [vmem:[#allocation2 + $0xc0] sm:$0xff]
      %v524 = vld [vmem:[#allocation2 + $0xc8] sm:$0xff]
      %v525 = vld [vmem:[#allocation2 + $0xd0] sm:$0x3]
      %v526 = vld [vmem:[#allocation2 + $0xd8] sm:$0xff]
      %v527 = vld [vmem:[#allocation2 + $0xe0] sm:$0xff]
      %v528 = vld [vmem:[#allocation2 + $0xe8] sm:$0x3]
      %v529 = vld [vmem:[#allocation2 + $0xf0] sm:$0xff]
      %v530 = vld [vmem:[#allocation2 + $0xf8] sm:$0xff]
      %v531 = vld [vmem:[#allocation2 + $0x100] sm:$0x3]
      %v532 = vld [vmem:[#allocation2 + $0x108] sm:$0xff]
      %v533 = vld [vmem:[#allocation2 + $0x110] sm:$0xff]
      %v534 = vld [vmem:[#allocation2 + $0x118] sm:$0x3]
      %v535 = vld [vmem:[#allocation2 + $0x120] sm:$0xff]
      %v536 = vld [vmem:[#allocation2 + $0x128] sm:$0xff]
      %v537 = vld [vmem:[#allocation2 + $0x130] sm:$0x3]
      %v538 = vld [vmem:[#allocation2 + $0x138] sm:$0xff]
      %v539 = vld [vmem:[#allocation2 + $0x140] sm:$0xff]
      %v540 = vld [vmem:[#allocation2 + $0x148] sm:$0x3]
      %v541 = vld [vmem:[#allocation2 + $0x150] sm:$0xff]
      %v542 = vld [vmem:[#allocation2 + $0x158] sm:$0xff]
      %v543 = vld [vmem:[#allocation2 + $0x160] sm:$0x3]
      %v544 = vld [vmem:[#allocation2 + $0x168] sm:$0xff]
      %v545 = vld [vmem:[#allocation2 + $0x170] sm:$0xff]
      %v546 = vld [vmem:[#allocation2 + $0x178] sm:$0x3]
      %v547 = vld [vmem:[#allocation2 + $0x180] sm:$0xff]
      %v548 = vld [vmem:[#allocation2 + $0x188] sm:$0xff]
      %v549 = vld [vmem:[#allocation2 + $0x190] sm:$0x3]
      %v550 = vld [vmem:[#allocation2 + $0x198] sm:$0xff]
      %v551 = vld [vmem:[#allocation2 + $0x1a0] sm:$0xff]
      %v552 = vld [vmem:[#allocation2 + $0x1a8] sm:$0x3]
      %v553 = vld [vmem:[%s1] sm:$0xff]
      %v554 = vld [vmem:[%s1 + $0x8] sm:$0xff]
      %v555 = vld [vmem:[%s1 + $0x10] sm:$0xff]
      %v556 = vld [vmem:[%s1 + $0x18] sm:$0xff]
      %v557 = vld [vmem:[%s1 + $0x20] sm:$0xff]
      %v558 = vld [vmem:[%s1 + $0x28] sm:$0xff]
      %v559 = vld [vmem:[%s1 + $0x30] sm:$0xff]
      %v560 = vld [vmem:[%s1 + $0x38] sm:$0xff]
      %v561 = vld [vmem:[%s1 + $0x40] sm:$0xff]
      %v562 = vld [vmem:[%s1 + $0x48] sm:$0xff]
      %v563 = vld [vmem:[%s1 + $0x50] sm:$0xff]
      %v564 = vld [vmem:[%s1 + $0x58] sm:$0xff]
      %v565 = vld [vmem:[%s1 + $0x60] sm:$0xff]
      %v566 = vld [vmem:[%s1 + $0x68] sm:$0xff]
      %v567 = vld [vmem:[%s1 + $0x70] sm:$0xff]
      %v568 = vld [vmem:[%s1 + $0x78] sm:$0xff]
      %vm617 = vcmask 1046528
      %v618 = vrot.slane %v499, 1
      %v619 = vrot.slane %v500, 1
      %v620 = vsel %vm617, %v618, %v619
      %v621 = vrot.slane %v501, 1
      %v622 = vsel %vm617, %v619, %v621
      %v623 = vrot.slane %v502, 1
      %v624 = vrot.slane %v503, 1
      %v625 = vsel %vm617, %v623, %v624
      %v626 = vrot.slane %v504, 1
      %v627 = vsel %vm617, %v624, %v626
      %v628 = vrot.slane %v505, 1
      %v629 = vrot.slane %v506, 1
      %v630 = vsel %vm617, %v628, %v629
      %v631 = vrot.slane %v507, 1
      %v632 = vsel %vm617, %v629, %v631
      %v633 = vrot.slane %v508, 1
      %v634 = vrot.slane %v509, 1
      %v635 = vsel %vm617, %v633, %v634
      %v636 = vrot.slane %v510, 1
      %v637 = vsel %vm617, %v634, %v636
      %v638 = vrot.slane %v511, 1
      %v639 = vrot.slane %v512, 1
      %v640 = vsel %vm617, %v638, %v639
      %v641 = vrot.slane %v513, 1
      %v642 = vsel %vm617, %v639, %v641
      %v643 = vrot.slane %v514, 1
      %v644 = vrot.slane %v515, 1
      %v645 = vsel %vm617, %v643, %v644
      %v646 = vrot.slane %v516, 1
      %v647 = vsel %vm617, %v644, %v646
      %v648 = vrot.slane %v517, 1
      %v649 = vrot.slane %v518, 1
      %v650 = vsel %vm617, %v648, %v649
      %v651 = vrot.slane %v519, 1
      %v652 = vsel %vm617, %v649, %v651
      %v653 = vrot.slane %v520, 1
      %v654 = vrot.slane %v521, 1
      %v655 = vsel %vm617, %v653, %v654
      %v656 = vrot.slane %v522, 1
      %v657 = vsel %vm617, %v654, %v656
      %v658 = vrot.slane %v523, 1
      %v659 = vrot.slane %v524, 1
      %v660 = vsel %vm617, %v658, %v659
      %v661 = vrot.slane %v525, 1
      %v662 = vsel %vm617, %v659, %v661
      %v663 = vrot.slane %v526, 1
      %v664 = vrot.slane %v527, 1
      %v665 = vsel %vm617, %v663, %v664
      %v666 = vrot.slane %v528, 1
      %v667 = vsel %vm617, %v664, %v666
      %v668 = vrot.slane %v529, 1
      %v669 = vrot.slane %v530, 1
      %v670 = vsel %vm617, %v668, %v669
      %v671 = vrot.slane %v531, 1
      %v672 = vsel %vm617, %v669, %v671
      %v673 = vrot.slane %v532, 1
      %v674 = vrot.slane %v533, 1
      %v675 = vsel %vm617, %v673, %v674
      %v676 = vrot.slane %v534, 1
      %v677 = vsel %vm617, %v674, %v676
      %v678 = vrot.slane %v535, 1
      %v679 = vrot.slane %v536, 1
      %v680 = vsel %vm617, %v678, %v679
      %v681 = vrot.slane %v537, 1
      %v682 = vsel %vm617, %v679, %v681
      %v683 = vrot.slane %v538, 1
      %v684 = vrot.slane %v539, 1
      %v685 = vsel %vm617, %v683, %v684
      %v686 = vrot.slane %v540, 1
      %v687 = vsel %vm617, %v684, %v686
      %v688 = vrot.slane %v541, 1
      %v689 = vrot.slane %v542, 1
      %v690 = vsel %vm617, %v688, %v689
      %v691 = vrot.slane %v543, 1
      %v692 = vsel %vm617, %v689, %v691
      %v693 = vrot.slane %v544, 1
      %v694 = vrot.slane %v545, 1
      %v695 = vsel %vm617, %v693, %v694
      %v696 = vrot.slane %v546, 1
      %v697 = vsel %vm617, %v694, %v696
      %s730 = scalar_lea.vmem %s1, 128
      %v731 = vld [vmem:[%s730] sm:$0xff]
      %v732 = vld [vmem:[%s730 + $0x8] sm:$0xff]
      %v733 = vld [vmem:[%s730 + $0x10] sm:$0xff]
      %v734 = vld [vmem:[%s730 + $0x18] sm:$0xff]
      %v735 = vld [vmem:[%s730 + $0x20] sm:$0xff]
      %v736 = vld [vmem:[%s730 + $0x28] sm:$0xff]
      %v737 = vld [vmem:[%s730 + $0x30] sm:$0xff]
      %v738 = vld [vmem:[%s730 + $0x38] sm:$0xff]
      %v739 = vld [vmem:[%s730 + $0x40] sm:$0xff]
      %v740 = vld [vmem:[%s730 + $0x48] sm:$0xff]
      %v741 = vld [vmem:[%s730 + $0x50] sm:$0xff]
      %v742 = vld [vmem:[%s730 + $0x58] sm:$0xff]
      %v743 = vld [vmem:[%s730 + $0x60] sm:$0xff]
      %v744 = vld [vmem:[%s730 + $0x68] sm:$0xff]
      %v745 = vld [vmem:[%s730 + $0x70] sm:$0xff]
      %v746 = vld [vmem:[%s730 + $0x78] sm:$0xff]
      %747 = vmatprep.subr.mxu0 0.0
      %748 = vmatpush1.msra.mxu0 %v746
      %749 = vmatprep.subr.mxu0 0.0
      %750 = vmatpush1.msra.mxu0 %v745
      %751 = vmatprep.subr.mxu0 0.0
      %752 = vmatpush1.msra.mxu0 %v744
      %753 = vmatprep.subr.mxu0 0.0
      %754 = vmatpush1.msra.mxu0 %v743
      %755 = vmatprep.subr.mxu0 0.0
      %756 = vmatpush1.msra.mxu0 %v742
      %757 = vmatprep.subr.mxu0 0.0
      %758 = vmatpush1.msra.mxu0 %v741
      %759 = vmatprep.subr.mxu0 0.0
      %760 = vmatpush1.msra.mxu0 %v740
      %761 = vmatprep.subr.mxu0 0.0
      %762 = vmatpush1.msra.mxu0 %v739
      %763 = vmatprep.subr.mxu0 0.0
      %764 = vmatpush1.msra.mxu0 %v738
      %765 = vmatprep.subr.mxu0 0.0
      %766 = vmatpush1.msra.mxu0 %v737
      %767 = vmatprep.subr.mxu0 0.0
      %768 = vmatpush1.msra.mxu0 %v736
      %769 = vmatprep.subr.mxu0 0.0
      %770 = vmatpush1.msra.mxu0 %v735
      %771 = vmatprep.subr.mxu0 0.0
      %772 = vmatpush1.msra.mxu0 %v734
      %773 = vmatprep.subr.mxu0 0.0
      %774 = vmatpush1.msra.mxu0 %v733
      %775 = vmatprep.subr.mxu0 0.0
      %776 = vmatpush1.msra.mxu0 %v732
      %777 = vmatprep.subr.mxu0 0.0
      %778 = vmatpush1.msra.mxu0 %v731
      %779 = vmatprep.subr.mxu0 0.0
      %780 = vmatpush2.msra.mxu0 0.0
      %781 = vmatprep.subr.mxu0 0.0
      %782 = vmatpush2.msra.mxu0 0.0
      %783 = vmatprep.subr.mxu0 0.0
      %784 = vmatpush2.msra.mxu0 0.0
      %785 = vmatprep.subr.mxu0 0.0
      %786 = vmatpush2.msra.mxu0 0.0
      %787 = vmatprep.subr.mxu0 0.0
      %788 = vmatpush2.msra.mxu0 0.0
      %789 = vmatprep.subr.mxu0 0.0
      %790 = vmatpush2.msra.mxu0 0.0
      %791 = vmatprep.subr.mxu0 0.0
      %792 = vmatpush2.msra.mxu0 0.0
      %793 = vmatprep.subr.mxu0 0.0
      %794 = vmatpush2.msra.mxu0 0.0
      %795 = vmatprep.subr.mxu0 0.0
      %796 = vmatpush2.msra.mxu0 0.0
      %797 = vmatprep.subr.mxu0 0.0
      %798 = vmatpush2.msra.mxu0 0.0
      %799 = vmatprep.subr.mxu0 0.0
      %800 = vmatpush2.msra.mxu0 0.0
      %801 = vmatprep.subr.mxu0 0.0
      %802 = vmatpush2.msra.mxu0 0.0
      %803 = vmatprep.subr.mxu0 0.0
      %804 = vmatpush2.msra.mxu0 0.0
      %805 = vmatprep.subr.mxu0 0.0
      %806 = vmatpush2.msra.mxu0 0.0
      %807 = vmatprep.subr.mxu0 0.0
      %808 = vmatpush2.msra.mxu0 0.0
      %809 = vmatprep.subr.mxu0 0.0
      %810 = vmatpush2.msra.mxu0 0.0
      %811 = vmatprep.mubr.f32.mxu0 0.0
      %812 = vmatmul.mubr.f32.gmra.mxu0 %v620
      %v813 = vpop.f32.mrf.mxu0
      %v814 = vadd.f32 0.0, %v813
      %v815 = vpop.f32.mrf.mxu0
      %816 = vmatprep.mubr.f32.mxu0 0.0
      %817 = vmatmul.mubr.f32.gmra.mxu0 %v622
      %v818 = vpop.f32.mrf.mxu0
      %v819 = vadd.f32 0.0, %v818
      %v820 = vpop.f32.mrf.mxu0
      %821 = vmatprep.mubr.f32.mxu0 0.0
      %822 = vmatmul.mubr.f32.gmra.mxu0 %v625
      %v823 = vpop.f32.mrf.mxu0
      %v824 = vadd.f32 0.0, %v823
      %v825 = vpop.f32.mrf.mxu0
      %826 = vmatprep.mubr.f32.mxu0 0.0
      %827 = vmatmul.mubr.f32.gmra.mxu0 %v627
      %v828 = vpop.f32.mrf.mxu0
      %v829 = vadd.f32 0.0, %v828
      %v830 = vpop.f32.mrf.mxu0
      %831 = vmatprep.mubr.f32.mxu0 0.0
      %832 = vmatmul.mubr.f32.gmra.mxu0 %v630
      %v833 = vpop.f32.mrf.mxu0
      %v834 = vadd.f32 0.0, %v833
      %v835 = vpop.f32.mrf.mxu0
      %836 = vmatprep.mubr.f32.mxu0 0.0
      %837 = vmatmul.mubr.f32.gmra.mxu0 %v632
      %v838 = vpop.f32.mrf.mxu0
      %v839 = vadd.f32 0.0, %v838
      %v840 = vpop.f32.mrf.mxu0
      %841 = vmatprep.mubr.f32.mxu0 0.0
      %842 = vmatmul.mubr.f32.gmra.mxu0 %v635
      %v843 = vpop.f32.mrf.mxu0
      %v844 = vadd.f32 0.0, %v843
      %v845 = vpop.f32.mrf.mxu0
      %846 = vmatprep.mubr.f32.mxu0 0.0
      %847 = vmatmul.mubr.f32.gmra.mxu0 %v637
      %v848 = vpop.f32.mrf.mxu0
      %v849 = vadd.f32 0.0, %v848
      %v850 = vpop.f32.mrf.mxu0
      %851 = vmatprep.mubr.f32.mxu0 0.0
      %852 = vmatmul.mubr.f32.gmra.mxu0 %v640
      %v853 = vpop.f32.mrf.mxu0
      %v854 = vadd.f32 0.0, %v853
      %v855 = vpop.f32.mrf.mxu0
      %856 = vmatprep.mubr.f32.mxu0 0.0
      %857 = vmatmul.mubr.f32.gmra.mxu0 %v642
      %v858 = vpop.f32.mrf.mxu0
      %v859 = vadd.f32 0.0, %v858
      %v860 = vpop.f32.mrf.mxu0
      %861 = vmatprep.mubr.f32.mxu0 0.0
      %862 = vmatmul.mubr.f32.gmra.mxu0 %v645
      %v863 = vpop.f32.mrf.mxu0
      %v864 = vadd.f32 0.0, %v863
      %v865 = vpop.f32.mrf.mxu0
      %866 = vmatprep.mubr.f32.mxu0 0.0
      %867 = vmatmul.mubr.f32.gmra.mxu0 %v647
      %v868 = vpop.f32.mrf.mxu0
      %v869 = vadd.f32 0.0, %v868
      %v870 = vpop.f32.mrf.mxu0
      %871 = vmatprep.mubr.f32.mxu0 0.0
      %872 = vmatmul.mubr.f32.gmra.mxu0 %v650
      %v873 = vpop.f32.mrf.mxu0
      %v874 = vadd.f32 0.0, %v873
      %v875 = vpop.f32.mrf.mxu0
      %876 = vmatprep.mubr.f32.mxu0 0.0
      %877 = vmatmul.mubr.f32.gmra.mxu0 %v652
      %v878 = vpop.f32.mrf.mxu0
      %v879 = vadd.f32 0.0, %v878
      %v880 = vpop.f32.mrf.mxu0
      %881 = vmatprep.mubr.f32.mxu0 0.0
      %882 = vmatmul.mubr.f32.gmra.mxu0 %v655
      %v883 = vpop.f32.mrf.mxu0
      %v884 = vadd.f32 0.0, %v883
      %v885 = vpop.f32.mrf.mxu0
      %886 = vmatprep.mubr.f32.mxu0 0.0
      %887 = vmatmul.mubr.f32.gmra.mxu0 %v657
      %v888 = vpop.f32.mrf.mxu0
      %v889 = vadd.f32 0.0, %v888
      %v890 = vpop.f32.mrf.mxu0
      %891 = vmatprep.mubr.f32.mxu0 0.0
      %892 = vmatmul.mubr.f32.gmra.mxu0 %v660
      %v893 = vpop.f32.mrf.mxu0
      %v894 = vadd.f32 0.0, %v893
      %v895 = vpop.f32.mrf.mxu0
      %896 = vmatprep.mubr.f32.mxu0 0.0
      %897 = vmatmul.mubr.f32.gmra.mxu0 %v662
      %v898 = vpop.f32.mrf.mxu0
      %v899 = vadd.f32 0.0, %v898
      %v900 = vpop.f32.mrf.mxu0
      %901 = vmatprep.mubr.f32.mxu0 0.0
      %902 = vmatmul.mubr.f32.gmra.mxu0 %v665
      %v903 = vpop.f32.mrf.mxu0
      %v904 = vadd.f32 0.0, %v903
      %v905 = vpop.f32.mrf.mxu0
      %906 = vmatprep.mubr.f32.mxu0 0.0
      %907 = vmatmul.mubr.f32.gmra.mxu0 %v667
      %v908 = vpop.f32.mrf.mxu0
      %v909 = vadd.f32 0.0, %v908
      %v910 = vpop.f32.mrf.mxu0
      %911 = vmatprep.mubr.f32.mxu0 0.0
      %912 = vmatmul.mubr.f32.gmra.mxu0 %v670
      %v913 = vpop.f32.mrf.mxu0
      %v914 = vadd.f32 0.0, %v913
      %v915 = vpop.f32.mrf.mxu0
      %916 = vmatprep.mubr.f32.mxu0 0.0
      %917 = vmatmul.mubr.f32.gmra.mxu0 %v672
      %v918 = vpop.f32.mrf.mxu0
      %v919 = vadd.f32 0.0, %v918
      %v920 = vpop.f32.mrf.mxu0
      %921 = vmatprep.mubr.f32.mxu0 0.0
      %922 = vmatmul.mubr.f32.gmra.mxu0 %v675
      %v923 = vpop.f32.mrf.mxu0
      %v924 = vadd.f32 0.0, %v923
      %v925 = vpop.f32.mrf.mxu0
      %926 = vmatprep.mubr.f32.mxu0 0.0
      %927 = vmatmul.mubr.f32.gmra.mxu0 %v677
      %v928 = vpop.f32.mrf.mxu0
      %v929 = vadd.f32 0.0, %v928
      %v930 = vpop.f32.mrf.mxu0
      %931 = vmatprep.mubr.f32.mxu0 0.0
      %932 = vmatmul.mubr.f32.gmra.mxu0 %v680
      %v933 = vpop.f32.mrf.mxu0
      %v934 = vadd.f32 0.0, %v933
      %v935 = vpop.f32.mrf.mxu0
      %936 = vmatprep.mubr.f32.mxu0 0.0
      %937 = vmatmul.mubr.f32.gmra.mxu0 %v682
      %v938 = vpop.f32.mrf.mxu0
      %v939 = vadd.f32 0.0, %v938
      %v940 = vpop.f32.mrf.mxu0
      %941 = vmatprep.mubr.f32.mxu0 0.0
      %942 = vmatmul.mubr.f32.gmra.mxu0 %v685
      %v943 = vpop.f32.mrf.mxu0
      %v944 = vadd.f32 0.0, %v943
      %v945 = vpop.f32.mrf.mxu0
      %946 = vmatprep.mubr.f32.mxu0 0.0
      %947 = vmatmul.mubr.f32.gmra.mxu0 %v687
      %v948 = vpop.f32.mrf.mxu0
      %v949 = vadd.f32 0.0, %v948
      %v950 = vpop.f32.mrf.mxu0
      %951 = vmatprep.mubr.f32.mxu0 0.0
      %952 = vmatmul.mubr.f32.gmra.mxu0 %v690
      %v953 = vpop.f32.mrf.mxu0
      %v954 = vadd.f32 0.0, %v953
      %v955 = vpop.f32.mrf.mxu0
      %956 = vmatprep.mubr.f32.mxu0 0.0
      %957 = vmatmul.mubr.f32.gmra.mxu0 %v692
      %v958 = vpop.f32.mrf.mxu0
      %v959 = vadd.f32 0.0, %v958
      %v960 = vpop.f32.mrf.mxu0
      %961 = vmatprep.mubr.f32.mxu0 0.0
      %962 = vmatmul.mubr.f32.gmra.mxu0 %v695
      %v963 = vpop.f32.mrf.mxu0
      %v964 = vadd.f32 0.0, %v963
      %v965 = vpop.f32.mrf.mxu0
      %966 = vmatprep.mubr.f32.mxu0 0.0
      %967 = vmatmul.mubr.f32.gmra.mxu0 %v697
      %v968 = vpop.f32.mrf.mxu0
      %v969 = vadd.f32 0.0, %v968
      %v970 = vpop.f32.mrf.mxu0
      %971 = vdwg.mxu0
      %972 = vmatprep.subr.mxu0 0.0
      %973 = vmatpush1.msra.mxu0 %v568
      %974 = vmatprep.subr.mxu0 0.0
      %975 = vmatpush1.msra.mxu0 %v567
      %976 = vmatprep.subr.mxu0 0.0
      %977 = vmatpush1.msra.mxu0 %v566
      %978 = vmatprep.subr.mxu0 0.0
      %979 = vmatpush1.msra.mxu0 %v565
      %980 = vmatprep.subr.mxu0 0.0
      %981 = vmatpush1.msra.mxu0 %v564
      %982 = vmatprep.subr.mxu0 0.0
      %983 = vmatpush1.msra.mxu0 %v563
      %984 = vmatprep.subr.mxu0 0.0
      %985 = vmatpush1.msra.mxu0 %v562
      %986 = vmatprep.subr.mxu0 0.0
      %987 = vmatpush1.msra.mxu0 %v561
      %988 = vmatprep.subr.mxu0 0.0
      %989 = vmatpush1.msra.mxu0 %v560
      %990 = vmatprep.subr.mxu0 0.0
      %991 = vmatpush1.msra.mxu0 %v559
      %992 = vmatprep.subr.mxu0 0.0
      %993 = vmatpush1.msra.mxu0 %v558
      %994 = vmatprep.subr.mxu0 0.0
      %995 = vmatpush1.msra.mxu0 %v557
      %996 = vmatprep.subr.mxu0 0.0
      %997 = vmatpush1.msra.mxu0 %v556
      %998 = vmatprep.subr.mxu0 0.0
      %999 = vmatpush1.msra.mxu0 %v555
      %1000 = vmatprep.subr.mxu0 0.0
      %1001 = vmatpush1.msra.mxu0 %v554
      %1002 = vmatprep.subr.mxu0 0.0
      %1003 = vmatpush1.msra.mxu0 %v553
      %1004 = vmatprep.subr.mxu0 0.0
      %1005 = vmatpush2.msra.mxu0 0.0
      %1006 = vmatprep.subr.mxu0 0.0
      %1007 = vmatpush2.msra.mxu0 0.0
      %1008 = vmatprep.subr.mxu0 0.0
      %1009 = vmatpush2.msra.mxu0 0.0
      %1010 = vmatprep.subr.mxu0 0.0
      %1011 = vmatpush2.msra.mxu0 0.0
      %1012 = vmatprep.subr.mxu0 0.0
      %1013 = vmatpush2.msra.mxu0 0.0
      %1014 = vmatprep.subr.mxu0 0.0
      %1015 = vmatpush2.msra.mxu0 0.0
      %1016 = vmatprep.subr.mxu0 0.0
      %1017 = vmatpush2.msra.mxu0 0.0
      %1018 = vmatprep.subr.mxu0 0.0
      %1019 = vmatpush2.msra.mxu0 0.0
      %1020 = vmatprep.subr.mxu0 0.0
      %1021 = vmatpush2.msra.mxu0 0.0
      %1022 = vmatprep.subr.mxu0 0.0
      %1023 = vmatpush2.msra.mxu0 0.0
      %1024 = vmatprep.subr.mxu0 0.0
      %1025 = vmatpush2.msra.mxu0 0.0
      %1026 = vmatprep.subr.mxu0 0.0
      %1027 = vmatpush2.msra.mxu0 0.0
      %1028 = vmatprep.subr.mxu0 0.0
      %1029 = vmatpush2.msra.mxu0 0.0
      %1030 = vmatprep.subr.mxu0 0.0
      %1031 = vmatpush2.msra.mxu0 0.0
      %1032 = vmatprep.subr.mxu0 0.0
      %1033 = vmatpush2.msra.mxu0 0.0
      %1034 = vmatprep.subr.mxu0 0.0
      %1035 = vmatpush2.msra.mxu0 0.0
      %1036 = vmatprep.mubr.f32.mxu0 0.0
      %1037 = vmatmul.mubr.f32.gmra.mxu0 %v499
      %v1038 = vpop.f32.mrf.mxu0
      %v1039 = vadd.f32 %v814, %v1038
      %v1040 = vpop.f32.mrf.mxu0
      %1041 = vmatprep.mubr.f32.mxu0 0.0
      %1042 = vmatmul.mubr.f32.gmra.mxu0 %v500
      %v1043 = vpop.f32.mrf.mxu0
      %v1044 = vadd.f32 %v819, %v1043
      %v1045 = vpop.f32.mrf.mxu0
      %1046 = vmatprep.mubr.f32.mxu0 0.0
      %1047 = vmatmul.mubr.f32.gmra.mxu0 %v502
      %v1048 = vpop.f32.mrf.mxu0
      %v1049 = vadd.f32 %v824, %v1048
      %v1050 = vpop.f32.mrf.mxu0
      %1051 = vmatprep.mubr.f32.mxu0 0.0
      %1052 = vmatmul.mubr.f32.gmra.mxu0 %v503
      %v1053 = vpop.f32.mrf.mxu0
      %v1054 = vadd.f32 %v829, %v1053
      %v1055 = vpop.f32.mrf.mxu0
      %1056 = vmatprep.mubr.f32.mxu0 0.0
      %1057 = vmatmul.mubr.f32.gmra.mxu0 %v505
      %v1058 = vpop.f32.mrf.mxu0
      %v1059 = vadd.f32 %v834, %v1058
      %v1060 = vpop.f32.mrf.mxu0
      %1061 = vmatprep.mubr.f32.mxu0 0.0
      %1062 = vmatmul.mubr.f32.gmra.mxu0 %v506
      %v1063 = vpop.f32.mrf.mxu0
      %v1064 = vadd.f32 %v839, %v1063
      %v1065 = vpop.f32.mrf.mxu0
      %1066 = vmatprep.mubr.f32.mxu0 0.0
      %1067 = vmatmul.mubr.f32.gmra.mxu0 %v508
      %v1068 = vpop.f32.mrf.mxu0
      %v1069 = vadd.f32 %v844, %v1068
      %v1070 = vpop.f32.mrf.mxu0
      %1071 = vmatprep.mubr.f32.mxu0 0.0
      %1072 = vmatmul.mubr.f32.gmra.mxu0 %v509
      %v1073 = vpop.f32.mrf.mxu0
      %v1074 = vadd.f32 %v849, %v1073
      %v1075 = vpop.f32.mrf.mxu0
      %1076 = vmatprep.mubr.f32.mxu0 0.0
      %1077 = vmatmul.mubr.f32.gmra.mxu0 %v511
      %v1078 = vpop.f32.mrf.mxu0
      %v1079 = vadd.f32 %v854, %v1078
      %v1080 = vpop.f32.mrf.mxu0
      %1081 = vmatprep.mubr.f32.mxu0 0.0
      %1082 = vmatmul.mubr.f32.gmra.mxu0 %v512
      %v1083 = vpop.f32.mrf.mxu0
      %v1084 = vadd.f32 %v859, %v1083
      %v1085 = vpop.f32.mrf.mxu0
      %1086 = vmatprep.mubr.f32.mxu0 0.0
      %1087 = vmatmul.mubr.f32.gmra.mxu0 %v514
      %v1088 = vpop.f32.mrf.mxu0
      %v1089 = vadd.f32 %v864, %v1088
      %v1090 = vpop.f32.mrf.mxu0
      %1091 = vmatprep.mubr.f32.mxu0 0.0
      %1092 = vmatmul.mubr.f32.gmra.mxu0 %v515
      %v1093 = vpop.f32.mrf.mxu0
      %v1094 = vadd.f32 %v869, %v1093
      %v1095 = vpop.f32.mrf.mxu0
      %1096 = vmatprep.mubr.f32.mxu0 0.0
      %1097 = vmatmul.mubr.f32.gmra.mxu0 %v517
      %v1098 = vpop.f32.mrf.mxu0
      %v1099 = vadd.f32 %v874, %v1098
      %v1100 = vpop.f32.mrf.mxu0
      %1101 = vmatprep.mubr.f32.mxu0 0.0
      %1102 = vmatmul.mubr.f32.gmra.mxu0 %v518
      %v1103 = vpop.f32.mrf.mxu0
      %v1104 = vadd.f32 %v879, %v1103
      %v1105 = vpop.f32.mrf.mxu0
      %1106 = vmatprep.mubr.f32.mxu0 0.0
      %1107 = vmatmul.mubr.f32.gmra.mxu0 %v520
      %v1108 = vpop.f32.mrf.mxu0
      %v1109 = vadd.f32 %v884, %v1108
      %v1110 = vpop.f32.mrf.mxu0
      %1111 = vmatprep.mubr.f32.mxu0 0.0
      %1112 = vmatmul.mubr.f32.gmra.mxu0 %v521
      %v1113 = vpop.f32.mrf.mxu0
      %v1114 = vadd.f32 %v889, %v1113
      %v1115 = vpop.f32.mrf.mxu0
      %1116 = vmatprep.mubr.f32.mxu0 0.0
      %1117 = vmatmul.mubr.f32.gmra.mxu0 %v523
      %v1118 = vpop.f32.mrf.mxu0
      %v1119 = vadd.f32 %v894, %v1118
      %v1120 = vpop.f32.mrf.mxu0
      %1121 = vmatprep.mubr.f32.mxu0 0.0
      %1122 = vmatmul.mubr.f32.gmra.mxu0 %v524
      %v1123 = vpop.f32.mrf.mxu0
      %v1124 = vadd.f32 %v899, %v1123
      %v1125 = vpop.f32.mrf.mxu0
      %1126 = vmatprep.mubr.f32.mxu0 0.0
      %1127 = vmatmul.mubr.f32.gmra.mxu0 %v526
      %v1128 = vpop.f32.mrf.mxu0
      %v1129 = vadd.f32 %v904, %v1128
      %v1130 = vpop.f32.mrf.mxu0
      %1131 = vmatprep.mubr.f32.mxu0 0.0
      %1132 = vmatmul.mubr.f32.gmra.mxu0 %v527
      %v1133 = vpop.f32.mrf.mxu0
      %v1134 = vadd.f32 %v909, %v1133
      %v1135 = vpop.f32.mrf.mxu0
      %1136 = vmatprep.mubr.f32.mxu0 0.0
      %1137 = vmatmul.mubr.f32.gmra.mxu0 %v529
      %v1138 = vpop.f32.mrf.mxu0
      %v1139 = vadd.f32 %v914, %v1138
      %v1140 = vpop.f32.mrf.mxu0
      %1141 = vmatprep.mubr.f32.mxu0 0.0
      %1142 = vmatmul.mubr.f32.gmra.mxu0 %v530
      %v1143 = vpop.f32.mrf.mxu0
      %v1144 = vadd.f32 %v919, %v1143
      %v1145 = vpop.f32.mrf.mxu0
      %1146 = vmatprep.mubr.f32.mxu0 0.0
      %1147 = vmatmul.mubr.f32.gmra.mxu0 %v532
      %v1148 = vpop.f32.mrf.mxu0
      %v1149 = vadd.f32 %v924, %v1148
      %v1150 = vpop.f32.mrf.mxu0
      %1151 = vmatprep.mubr.f32.mxu0 0.0
      %1152 = vmatmul.mubr.f32.gmra.mxu0 %v533
      %v1153 = vpop.f32.mrf.mxu0
      %v1154 = vadd.f32 %v929, %v1153
      %v1155 = vpop.f32.mrf.mxu0
      %1156 = vmatprep.mubr.f32.mxu0 0.0
      %1157 = vmatmul.mubr.f32.gmra.mxu0 %v535
      %v1158 = vpop.f32.mrf.mxu0
      %v1159 = vadd.f32 %v934, %v1158
      %v1160 = vpop.f32.mrf.mxu0
      %1161 = vmatprep.mubr.f32.mxu0 0.0
      %1162 = vmatmul.mubr.f32.gmra.mxu0 %v536
      %v1163 = vpop.f32.mrf.mxu0
      %v1164 = vadd.f32 %v939, %v1163
      %v1165 = vpop.f32.mrf.mxu0
      %1166 = vmatprep.mubr.f32.mxu0 0.0
      %1167 = vmatmul.mubr.f32.gmra.mxu0 %v538
      %v1168 = vpop.f32.mrf.mxu0
      %v1169 = vadd.f32 %v944, %v1168
      %v1170 = vpop.f32.mrf.mxu0
      %1171 = vmatprep.mubr.f32.mxu0 0.0
      %1172 = vmatmul.mubr.f32.gmra.mxu0 %v539
      %v1173 = vpop.f32.mrf.mxu0
      %v1174 = vadd.f32 %v949, %v1173
      %v1175 = vpop.f32.mrf.mxu0
      %1176 = vmatprep.mubr.f32.mxu0 0.0
      %1177 = vmatmul.mubr.f32.gmra.mxu0 %v541
      %v1178 = vpop.f32.mrf.mxu0
      %v1179 = vadd.f32 %v954, %v1178
      %v1180 = vpop.f32.mrf.mxu0
      %1181 = vmatprep.mubr.f32.mxu0 0.0
      %1182 = vmatmul.mubr.f32.gmra.mxu0 %v542
      %v1183 = vpop.f32.mrf.mxu0
      %v1184 = vadd.f32 %v959, %v1183
      %v1185 = vpop.f32.mrf.mxu0
      %1186 = vmatprep.mubr.f32.mxu0 0.0
      %1187 = vmatmul.mubr.f32.gmra.mxu0 %v544
      %v1188 = vpop.f32.mrf.mxu0
      %v1189 = vadd.f32 %v964, %v1188
      %v1190 = vpop.f32.mrf.mxu0
      %1191 = vmatprep.mubr.f32.mxu0 0.0
      %1192 = vmatmul.mubr.f32.gmra.mxu0 %v545
      %v1193 = vpop.f32.mrf.mxu0
      %v1194 = vadd.f32 %v969, %v1193
      %v1195 = vpop.f32.mrf.mxu0
      %1196 = vdwg.mxu0
      %vm1197 = vcmask 1045504
      %v1198 = vrot.slane %v499, 2
      %v1199 = vrot.slane %v500, 2
      %v1200 = vsel %vm1197, %v1198, %v1199
      %v1201 = vrot.slane %v501, 2
      %v1202 = vsel %vm1197, %v1199, %v1201
      %v1203 = vrot.slane %v502, 2
      %v1204 = vrot.slane %v503, 2
      %v1205 = vsel %vm1197, %v1203, %v1204
      %v1206 = vrot.slane %v504, 2
      %v1207 = vsel %vm1197, %v1204, %v1206
      %v1208 = vrot.slane %v505, 2
      %v1209 = vrot.slane %v506, 2
      %v1210 = vsel %vm1197, %v1208, %v1209
      %v1211 = vrot.slane %v507, 2
      %v1212 = vsel %vm1197, %v1209, %v1211
      %v1213 = vrot.slane %v508, 2
      %v1214 = vrot.slane %v509, 2
      %v1215 = vsel %vm1197, %v1213, %v1214
      %v1216 = vrot.slane %v510, 2
      %v1217 = vsel %vm1197, %v1214, %v1216
      %v1218 = vrot.slane %v511, 2
      %v1219 = vrot.slane %v512, 2
      %v1220 = vsel %vm1197, %v1218, %v1219
      %v1221 = vrot.slane %v513, 2
      %v1222 = vsel %vm1197, %v1219, %v1221
      %v1223 = vrot.slane %v514, 2
      %v1224 = vrot.slane %v515, 2
      %v1225 = vsel %vm1197, %v1223, %v1224
      %v1226 = vrot.slane %v516, 2
      %v1227 = vsel %vm1197, %v1224, %v1226
      %v1228 = vrot.slane %v517, 2
      %v1229 = vrot.slane %v518, 2
      %v1230 = vsel %vm1197, %v1228, %v1229
      %v1231 = vrot.slane %v519, 2
      %v1232 = vsel %vm1197, %v1229, %v1231
      %v1233 = vrot.slane %v520, 2
      %v1234 = vrot.slane %v521, 2
      %v1235 = vsel %vm1197, %v1233, %v1234
      %v1236 = vrot.slane %v522, 2
      %v1237 = vsel %vm1197, %v1234, %v1236
      %v1238 = vrot.slane %v523, 2
      %v1239 = vrot.slane %v524, 2
      %v1240 = vsel %vm1197, %v1238, %v1239
      %v1241 = vrot.slane %v525, 2
      %v1242 = vsel %vm1197, %v1239, %v1241
      %v1243 = vrot.slane %v526, 2
      %v1244 = vrot.slane %v527, 2
      %v1245 = vsel %vm1197, %v1243, %v1244
      %v1246 = vrot.slane %v528, 2
      %v1247 = vsel %vm1197, %v1244, %v1246
      %v1248 = vrot.slane %v529, 2
      %v1249 = vrot.slane %v530, 2
      %v1250 = vsel %vm1197, %v1248, %v1249
      %v1251 = vrot.slane %v531, 2
      %v1252 = vsel %vm1197, %v1249, %v1251
      %v1253 = vrot.slane %v532, 2
      %v1254 = vrot.slane %v533, 2
      %v1255 = vsel %vm1197, %v1253, %v1254
      %v1256 = vrot.slane %v534, 2
      %v1257 = vsel %vm1197, %v1254, %v1256
      %v1258 = vrot.slane %v535, 2
      %v1259 = vrot.slane %v536, 2
      %v1260 = vsel %vm1197, %v1258, %v1259
      %v1261 = vrot.slane %v537, 2
      %v1262 = vsel %vm1197, %v1259, %v1261
      %v1263 = vrot.slane %v538, 2
      %v1264 = vrot.slane %v539, 2
      %v1265 = vsel %vm1197, %v1263, %v1264
      %v1266 = vrot.slane %v540, 2
      %v1267 = vsel %vm1197, %v1264, %v1266
      %v1268 = vrot.slane %v541, 2
      %v1269 = vrot.slane %v542, 2
      %v1270 = vsel %vm1197, %v1268, %v1269
      %v1271 = vrot.slane %v543, 2
      %v1272 = vsel %vm1197, %v1269, %v1271
      %v1273 = vrot.slane %v544, 2
      %v1274 = vrot.slane %v545, 2
      %v1275 = vsel %vm1197, %v1273, %v1274
      %v1276 = vrot.slane %v546, 2
      %v1277 = vsel %vm1197, %v1274, %v1276
      %s1310 = scalar_lea.vmem %s1, 256
      %v1311 = vld [vmem:[%s1310] sm:$0xff]
      %v1312 = vld [vmem:[%s1310 + $0x8] sm:$0xff]
      %v1313 = vld [vmem:[%s1310 + $0x10] sm:$0xff]
      %v1314 = vld [vmem:[%s1310 + $0x18] sm:$0xff]
      %v1315 = vld [vmem:[%s1310 + $0x20] sm:$0xff]
      %v1316 = vld [vmem:[%s1310 + $0x28] sm:$0xff]
      %v1317 = vld [vmem:[%s1310 + $0x30] sm:$0xff]
      %v1318 = vld [vmem:[%s1310 + $0x38] sm:$0xff]
      %v1319 = vld [vmem:[%s1310 + $0x40] sm:$0xff]
      %v1320 = vld [vmem:[%s1310 + $0x48] sm:$0xff]
      %v1321 = vld [vmem:[%s1310 + $0x50] sm:$0xff]
      %v1322 = vld [vmem:[%s1310 + $0x58] sm:$0xff]
      %v1323 = vld [vmem:[%s1310 + $0x60] sm:$0xff]
      %v1324 = vld [vmem:[%s1310 + $0x68] sm:$0xff]
      %v1325 = vld [vmem:[%s1310 + $0x70] sm:$0xff]
      %v1326 = vld [vmem:[%s1310 + $0x78] sm:$0xff]
      %1327 = vmatprep.subr.mxu0 0.0
      %1328 = vmatpush1.msra.mxu0 %v1326
      %1329 = vmatprep.subr.mxu0 0.0
      %1330 = vmatpush1.msra.mxu0 %v1325
      %1331 = vmatprep.subr.mxu0 0.0
      %1332 = vmatpush1.msra.mxu0 %v1324
      %1333 = vmatprep.subr.mxu0 0.0
      %1334 = vmatpush1.msra.mxu0 %v1323
      %1335 = vmatprep.subr.mxu0 0.0
      %1336 = vmatpush1.msra.mxu0 %v1322
      %1337 = vmatprep.subr.mxu0 0.0
      %1338 = vmatpush1.msra.mxu0 %v1321
      %1339 = vmatprep.subr.mxu0 0.0
      %1340 = vmatpush1.msra.mxu0 %v1320
      %1341 = vmatprep.subr.mxu0 0.0
      %1342 = vmatpush1.msra.mxu0 %v1319
      %1343 = vmatprep.subr.mxu0 0.0
      %1344 = vmatpush1.msra.mxu0 %v1318
      %1345 = vmatprep.subr.mxu0 0.0
      %1346 = vmatpush1.msra.mxu0 %v1317
      %1347 = vmatprep.subr.mxu0 0.0
      %1348 = vmatpush1.msra.mxu0 %v1316
      %1349 = vmatprep.subr.mxu0 0.0
      %1350 = vmatpush1.msra.mxu0 %v1315
      %1351 = vmatprep.subr.mxu0 0.0
      %1352 = vmatpush1.msra.mxu0 %v1314
      %1353 = vmatprep.subr.mxu0 0.0
      %1354 = vmatpush1.msra.mxu0 %v1313
      %1355 = vmatprep.subr.mxu0 0.0
      %1356 = vmatpush1.msra.mxu0 %v1312
      %1357 = vmatprep.subr.mxu0 0.0
      %1358 = vmatpush1.msra.mxu0 %v1311
      %1359 = vmatprep.subr.mxu0 0.0
      %1360 = vmatpush2.msra.mxu0 0.0
      %1361 = vmatprep.subr.mxu0 0.0
      %1362 = vmatpush2.msra.mxu0 0.0
      %1363 = vmatprep.subr.mxu0 0.0
      %1364 = vmatpush2.msra.mxu0 0.0
      %1365 = vmatprep.subr.mxu0 0.0
      %1366 = vmatpush2.msra.mxu0 0.0
      %1367 = vmatprep.subr.mxu0 0.0
      %1368 = vmatpush2.msra.mxu0 0.0
      %1369 = vmatprep.subr.mxu0 0.0
      %1370 = vmatpush2.msra.mxu0 0.0
      %1371 = vmatprep.subr.mxu0 0.0
      %1372 = vmatpush2.msra.mxu0 0.0
      %1373 = vmatprep.subr.mxu0 0.0
      %1374 = vmatpush2.msra.mxu0 0.0
      %1375 = vmatprep.subr.mxu0 0.0
      %1376 = vmatpush2.msra.mxu0 0.0
      %1377 = vmatprep.subr.mxu0 0.0
      %1378 = vmatpush2.msra.mxu0 0.0
      %1379 = vmatprep.subr.mxu0 0.0
      %1380 = vmatpush2.msra.mxu0 0.0
      %1381 = vmatprep.subr.mxu0 0.0
      %1382 = vmatpush2.msra.mxu0 0.0
      %1383 = vmatprep.subr.mxu0 0.0
      %1384 = vmatpush2.msra.mxu0 0.0
      %1385 = vmatprep.subr.mxu0 0.0
      %1386 = vmatpush2.msra.mxu0 0.0
      %1387 = vmatprep.subr.mxu0 0.0
      %1388 = vmatpush2.msra.mxu0 0.0
      %1389 = vmatprep.subr.mxu0 0.0
      %1390 = vmatpush2.msra.mxu0 0.0
      %1391 = vmatprep.mubr.f32.mxu0 0.0
      %1392 = vmatmul.mubr.f32.gmra.mxu0 %v1200
      %v1393 = vpop.f32.mrf.mxu0
      %v1394 = vadd.f32 0.0, %v1393
      %v1395 = vpop.f32.mrf.mxu0
      %1396 = vmatprep.mubr.f32.mxu0 0.0
      %1397 = vmatmul.mubr.f32.gmra.mxu0 %v1202
      %v1398 = vpop.f32.mrf.mxu0
      %v1399 = vadd.f32 0.0, %v1398
      %v1400 = vpop.f32.mrf.mxu0
      %1401 = vmatprep.mubr.f32.mxu0 0.0
      %1402 = vmatmul.mubr.f32.gmra.mxu0 %v1205
      %v1403 = vpop.f32.mrf.mxu0
      %v1404 = vadd.f32 0.0, %v1403
      %v1405 = vpop.f32.mrf.mxu0
      %1406 = vmatprep.mubr.f32.mxu0 0.0
      %1407 = vmatmul.mubr.f32.gmra.mxu0 %v1207
      %v1408 = vpop.f32.mrf.mxu0
      %v1409 = vadd.f32 0.0, %v1408
      %v1410 = vpop.f32.mrf.mxu0
      %1411 = vmatprep.mubr.f32.mxu0 0.0
      %1412 = vmatmul.mubr.f32.gmra.mxu0 %v1210
      %v1413 = vpop.f32.mrf.mxu0
      %v1414 = vadd.f32 0.0, %v1413
      %v1415 = vpop.f32.mrf.mxu0
      %1416 = vmatprep.mubr.f32.mxu0 0.0
      %1417 = vmatmul.mubr.f32.gmra.mxu0 %v1212
      %v1418 = vpop.f32.mrf.mxu0
      %v1419 = vadd.f32 0.0, %v1418
      %v1420 = vpop.f32.mrf.mxu0
      %1421 = vmatprep.mubr.f32.mxu0 0.0
      %1422 = vmatmul.mubr.f32.gmra.mxu0 %v1215
      %v1423 = vpop.f32.mrf.mxu0
      %v1424 = vadd.f32 0.0, %v1423
      %v1425 = vpop.f32.mrf.mxu0
      %1426 = vmatprep.mubr.f32.mxu0 0.0
      %1427 = vmatmul.mubr.f32.gmra.mxu0 %v1217
      %v1428 = vpop.f32.mrf.mxu0
      %v1429 = vadd.f32 0.0, %v1428
      %v1430 = vpop.f32.mrf.mxu0
      %1431 = vmatprep.mubr.f32.mxu0 0.0
      %1432 = vmatmul.mubr.f32.gmra.mxu0 %v1220
      %v1433 = vpop.f32.mrf.mxu0
      %v1434 = vadd.f32 0.0, %v1433
      %v1435 = vpop.f32.mrf.mxu0
      %1436 = vmatprep.mubr.f32.mxu0 0.0
      %1437 = vmatmul.mubr.f32.gmra.mxu0 %v1222
      %v1438 = vpop.f32.mrf.mxu0
      %v1439 = vadd.f32 0.0, %v1438
      %v1440 = vpop.f32.mrf.mxu0
      %1441 = vmatprep.mubr.f32.mxu0 0.0
      %1442 = vmatmul.mubr.f32.gmra.mxu0 %v1225
      %v1443 = vpop.f32.mrf.mxu0
      %v1444 = vadd.f32 0.0, %v1443
      %v1445 = vpop.f32.mrf.mxu0
      %1446 = vmatprep.mubr.f32.mxu0 0.0
      %1447 = vmatmul.mubr.f32.gmra.mxu0 %v1227
      %v1448 = vpop.f32.mrf.mxu0
      %v1449 = vadd.f32 0.0, %v1448
      %v1450 = vpop.f32.mrf.mxu0
      %1451 = vmatprep.mubr.f32.mxu0 0.0
      %1452 = vmatmul.mubr.f32.gmra.mxu0 %v1230
      %v1453 = vpop.f32.mrf.mxu0
      %v1454 = vadd.f32 0.0, %v1453
      %v1455 = vpop.f32.mrf.mxu0
      %1456 = vmatprep.mubr.f32.mxu0 0.0
      %1457 = vmatmul.mubr.f32.gmra.mxu0 %v1232
      %v1458 = vpop.f32.mrf.mxu0
      %v1459 = vadd.f32 0.0, %v1458
      %v1460 = vpop.f32.mrf.mxu0
      %1461 = vmatprep.mubr.f32.mxu0 0.0
      %1462 = vmatmul.mubr.f32.gmra.mxu0 %v1235
      %v1463 = vpop.f32.mrf.mxu0
      %v1464 = vadd.f32 0.0, %v1463
      %v1465 = vpop.f32.mrf.mxu0
      %1466 = vmatprep.mubr.f32.mxu0 0.0
      %1467 = vmatmul.mubr.f32.gmra.mxu0 %v1237
      %v1468 = vpop.f32.mrf.mxu0
      %v1469 = vadd.f32 0.0, %v1468
      %v1470 = vpop.f32.mrf.mxu0
      %1471 = vmatprep.mubr.f32.mxu0 0.0
      %1472 = vmatmul.mubr.f32.gmra.mxu0 %v1240
      %v1473 = vpop.f32.mrf.mxu0
      %v1474 = vadd.f32 0.0, %v1473
      %v1475 = vpop.f32.mrf.mxu0
      %1476 = vmatprep.mubr.f32.mxu0 0.0
      %1477 = vmatmul.mubr.f32.gmra.mxu0 %v1242
      %v1478 = vpop.f32.mrf.mxu0
      %v1479 = vadd.f32 0.0, %v1478
      %v1480 = vpop.f32.mrf.mxu0
      %1481 = vmatprep.mubr.f32.mxu0 0.0
      %1482 = vmatmul.mubr.f32.gmra.mxu0 %v1245
      %v1483 = vpop.f32.mrf.mxu0
      %v1484 = vadd.f32 0.0, %v1483
      %v1485 = vpop.f32.mrf.mxu0
      %1486 = vmatprep.mubr.f32.mxu0 0.0
      %1487 = vmatmul.mubr.f32.gmra.mxu0 %v1247
      %v1488 = vpop.f32.mrf.mxu0
      %v1489 = vadd.f32 0.0, %v1488
      %v1490 = vpop.f32.mrf.mxu0
      %1491 = vmatprep.mubr.f32.mxu0 0.0
      %1492 = vmatmul.mubr.f32.gmra.mxu0 %v1250
      %v1493 = vpop.f32.mrf.mxu0
      %v1494 = vadd.f32 0.0, %v1493
      %v1495 = vpop.f32.mrf.mxu0
      %1496 = vmatprep.mubr.f32.mxu0 0.0
      %1497 = vmatmul.mubr.f32.gmra.mxu0 %v1252
      %v1498 = vpop.f32.mrf.mxu0
      %v1499 = vadd.f32 0.0, %v1498
      %v1500 = vpop.f32.mrf.mxu0
      %1501 = vmatprep.mubr.f32.mxu0 0.0
      %1502 = vmatmul.mubr.f32.gmra.mxu0 %v1255
      %v1503 = vpop.f32.mrf.mxu0
      %v1504 = vadd.f32 0.0, %v1503
      %v1505 = vpop.f32.mrf.mxu0
      %1506 = vmatprep.mubr.f32.mxu0 0.0
      %1507 = vmatmul.mubr.f32.gmra.mxu0 %v1257
      %v1508 = vpop.f32.mrf.mxu0
      %v1509 = vadd.f32 0.0, %v1508
      %v1510 = vpop.f32.mrf.mxu0
      %1511 = vmatprep.mubr.f32.mxu0 0.0
      %1512 = vmatmul.mubr.f32.gmra.mxu0 %v1260
      %v1513 = vpop.f32.mrf.mxu0
      %v1514 = vadd.f32 0.0, %v1513
      %v1515 = vpop.f32.mrf.mxu0
      %1516 = vmatprep.mubr.f32.mxu0 0.0
      %1517 = vmatmul.mubr.f32.gmra.mxu0 %v1262
      %v1518 = vpop.f32.mrf.mxu0
      %v1519 = vadd.f32 0.0, %v1518
      %v1520 = vpop.f32.mrf.mxu0
      %1521 = vmatprep.mubr.f32.mxu0 0.0
      %1522 = vmatmul.mubr.f32.gmra.mxu0 %v1265
      %v1523 = vpop.f32.mrf.mxu0
      %v1524 = vadd.f32 0.0, %v1523
      %v1525 = vpop.f32.mrf.mxu0
      %1526 = vmatprep.mubr.f32.mxu0 0.0
      %1527 = vmatmul.mubr.f32.gmra.mxu0 %v1267
      %v1528 = vpop.f32.mrf.mxu0
      %v1529 = vadd.f32 0.0, %v1528
      %v1530 = vpop.f32.mrf.mxu0
      %1531 = vmatprep.mubr.f32.mxu0 0.0
      %1532 = vmatmul.mubr.f32.gmra.mxu0 %v1270
      %v1533 = vpop.f32.mrf.mxu0
      %v1534 = vadd.f32 0.0, %v1533
      %v1535 = vpop.f32.mrf.mxu0
      %1536 = vmatprep.mubr.f32.mxu0 0.0
      %1537 = vmatmul.mubr.f32.gmra.mxu0 %v1272
      %v1538 = vpop.f32.mrf.mxu0
      %v1539 = vadd.f32 0.0, %v1538
      %v1540 = vpop.f32.mrf.mxu0
      %1541 = vmatprep.mubr.f32.mxu0 0.0
      %1542 = vmatmul.mubr.f32.gmra.mxu0 %v1275
      %v1543 = vpop.f32.mrf.mxu0
      %v1544 = vadd.f32 0.0, %v1543
      %v1545 = vpop.f32.mrf.mxu0
      %1546 = vmatprep.mubr.f32.mxu0 0.0
      %1547 = vmatmul.mubr.f32.gmra.mxu0 %v1277
      %v1548 = vpop.f32.mrf.mxu0
      %v1549 = vadd.f32 0.0, %v1548
      %v1550 = vpop.f32.mrf.mxu0
      %1551 = vdwg.mxu0
      %v1552 = vadd.f32 %v1039, %v1394
      %v1553 = vadd.f32 %v1044, %v1399
      %v1554 = vadd.f32 %v1049, %v1404
      %v1555 = vadd.f32 %v1054, %v1409
      %v1556 = vadd.f32 %v1059, %v1414
      %v1557 = vadd.f32 %v1064, %v1419
      %v1558 = vadd.f32 %v1069, %v1424
      %v1559 = vadd.f32 %v1074, %v1429
      %v1560 = vadd.f32 %v1079, %v1434
      %v1561 = vadd.f32 %v1084, %v1439
      %v1562 = vadd.f32 %v1089, %v1444
      %v1563 = vadd.f32 %v1094, %v1449
      %v1564 = vadd.f32 %v1099, %v1454
      %v1565 = vadd.f32 %v1104, %v1459
      %v1566 = vadd.f32 %v1109, %v1464
      %v1567 = vadd.f32 %v1114, %v1469
      %v1568 = vadd.f32 %v1119, %v1474
      %v1569 = vadd.f32 %v1124, %v1479
      %v1570 = vadd.f32 %v1129, %v1484
      %v1571 = vadd.f32 %v1134, %v1489
      %v1572 = vadd.f32 %v1139, %v1494
      %v1573 = vadd.f32 %v1144, %v1499
      %v1574 = vadd.f32 %v1149, %v1504
      %v1575 = vadd.f32 %v1154, %v1509
      %v1576 = vadd.f32 %v1159, %v1514
      %v1577 = vadd.f32 %v1164, %v1519
      %v1578 = vadd.f32 %v1169, %v1524
      %v1579 = vadd.f32 %v1174, %v1529
      %v1580 = vadd.f32 %v1179, %v1534
      %v1581 = vadd.f32 %v1184, %v1539
      %v1582 = vadd.f32 %v1189, %v1544
      %v1583 = vadd.f32 %v1194, %v1549
      %s1584 = scalar_lea.vmem %s1, 384
      %v1585 = vld [vmem:[%s1584] sm:$0xff]
      %v1586 = vld [vmem:[%s1584 + $0x8] sm:$0xff]
      %v1587 = vld [vmem:[%s1584 + $0x10] sm:$0xff]
      %v1588 = vld [vmem:[%s1584 + $0x18] sm:$0xff]
      %v1589 = vld [vmem:[%s1584 + $0x20] sm:$0xff]
      %v1590 = vld [vmem:[%s1584 + $0x28] sm:$0xff]
      %v1591 = vld [vmem:[%s1584 + $0x30] sm:$0xff]
      %v1592 = vld [vmem:[%s1584 + $0x38] sm:$0xff]
      %v1593 = vld [vmem:[%s1584 + $0x40] sm:$0xff]
      %v1594 = vld [vmem:[%s1584 + $0x48] sm:$0xff]
      %v1595 = vld [vmem:[%s1584 + $0x50] sm:$0xff]
      %v1596 = vld [vmem:[%s1584 + $0x58] sm:$0xff]
      %v1597 = vld [vmem:[%s1584 + $0x60] sm:$0xff]
      %v1598 = vld [vmem:[%s1584 + $0x68] sm:$0xff]
      %v1599 = vld [vmem:[%s1584 + $0x70] sm:$0xff]
      %v1600 = vld [vmem:[%s1584 + $0x78] sm:$0xff]
      %1601 = vmatprep.subr.mxu0 0.0
      %1602 = vmatpush1.msra.mxu0 %v1600
      %1603 = vmatprep.subr.mxu0 0.0
      %1604 = vmatpush1.msra.mxu0 %v1599
      %1605 = vmatprep.subr.mxu0 0.0
      %1606 = vmatpush1.msra.mxu0 %v1598
      %1607 = vmatprep.subr.mxu0 0.0
      %1608 = vmatpush1.msra.mxu0 %v1597
      %1609 = vmatprep.subr.mxu0 0.0
      %1610 = vmatpush1.msra.mxu0 %v1596
      %1611 = vmatprep.subr.mxu0 0.0
      %1612 = vmatpush1.msra.mxu0 %v1595
      %1613 = vmatprep.subr.mxu0 0.0
      %1614 = vmatpush1.msra.mxu0 %v1594
      %1615 = vmatprep.subr.mxu0 0.0
      %1616 = vmatpush1.msra.mxu0 %v1593
      %1617 = vmatprep.subr.mxu0 0.0
      %1618 = vmatpush1.msra.mxu0 %v1592
      %1619 = vmatprep.subr.mxu0 0.0
      %1620 = vmatpush1.msra.mxu0 %v1591
      %1621 = vmatprep.subr.mxu0 0.0
      %1622 = vmatpush1.msra.mxu0 %v1590
      %1623 = vmatprep.subr.mxu0 0.0
      %1624 = vmatpush1.msra.mxu0 %v1589
      %1625 = vmatprep.subr.mxu0 0.0
      %1626 = vmatpush1.msra.mxu0 %v1588
      %1627 = vmatprep.subr.mxu0 0.0
      %1628 = vmatpush1.msra.mxu0 %v1587
      %1629 = vmatprep.subr.mxu0 0.0
      %1630 = vmatpush1.msra.mxu0 %v1586
      %1631 = vmatprep.subr.mxu0 0.0
      %1632 = vmatpush1.msra.mxu0 %v1585
      %1633 = vmatprep.subr.mxu0 0.0
      %1634 = vmatpush2.msra.mxu0 0.0
      %1635 = vmatprep.subr.mxu0 0.0
      %1636 = vmatpush2.msra.mxu0 0.0
      %1637 = vmatprep.subr.mxu0 0.0
      %1638 = vmatpush2.msra.mxu0 0.0
      %1639 = vmatprep.subr.mxu0 0.0
      %1640 = vmatpush2.msra.mxu0 0.0
      %1641 = vmatprep.subr.mxu0 0.0
      %1642 = vmatpush2.msra.mxu0 0.0
      %1643 = vmatprep.subr.mxu0 0.0
      %1644 = vmatpush2.msra.mxu0 0.0
      %1645 = vmatprep.subr.mxu0 0.0
      %1646 = vmatpush2.msra.mxu0 0.0
      %1647 = vmatprep.subr.mxu0 0.0
      %1648 = vmatpush2.msra.mxu0 0.0
      %1649 = vmatprep.subr.mxu0 0.0
      %1650 = vmatpush2.msra.mxu0 0.0
      %1651 = vmatprep.subr.mxu0 0.0
      %1652 = vmatpush2.msra.mxu0 0.0
      %1653 = vmatprep.subr.mxu0 0.0
      %1654 = vmatpush2.msra.mxu0 0.0
      %1655 = vmatprep.subr.mxu0 0.0
      %1656 = vmatpush2.msra.mxu0 0.0
      %1657 = vmatprep.subr.mxu0 0.0
      %1658 = vmatpush2.msra.mxu0 0.0
      %1659 = vmatprep.subr.mxu0 0.0
      %1660 = vmatpush2.msra.mxu0 0.0
      %1661 = vmatprep.subr.mxu0 0.0
      %1662 = vmatpush2.msra.mxu0 0.0
      %1663 = vmatprep.subr.mxu0 0.0
      %1664 = vmatpush2.msra.mxu0 0.0
      %1665 = vmatprep.mubr.f32.mxu0 0.0
      %1666 = vmatmul.mubr.f32.gmra.mxu0 %v502
      %v1667 = vpop.f32.mrf.mxu0
      %v1668 = vadd.f32 0.0, %v1667
      %v1669 = vpop.f32.mrf.mxu0
      %1670 = vmatprep.mubr.f32.mxu0 0.0
      %1671 = vmatmul.mubr.f32.gmra.mxu0 %v503
      %v1672 = vpop.f32.mrf.mxu0
      %v1673 = vadd.f32 0.0, %v1672
      %v1674 = vpop.f32.mrf.mxu0
      %1675 = vmatprep.mubr.f32.mxu0 0.0
      %1676 = vmatmul.mubr.f32.gmra.mxu0 %v505
      %v1677 = vpop.f32.mrf.mxu0
      %v1678 = vadd.f32 0.0, %v1677
      %v1679 = vpop.f32.mrf.mxu0
      %1680 = vmatprep.mubr.f32.mxu0 0.0
      %1681 = vmatmul.mubr.f32.gmra.mxu0 %v506
      %v1682 = vpop.f32.mrf.mxu0
      %v1683 = vadd.f32 0.0, %v1682
      %v1684 = vpop.f32.mrf.mxu0
      %1685 = vmatprep.mubr.f32.mxu0 0.0
      %1686 = vmatmul.mubr.f32.gmra.mxu0 %v508
      %v1687 = vpop.f32.mrf.mxu0
      %v1688 = vadd.f32 0.0, %v1687
      %v1689 = vpop.f32.mrf.mxu0
      %1690 = vmatprep.mubr.f32.mxu0 0.0
      %1691 = vmatmul.mubr.f32.gmra.mxu0 %v509
      %v1692 = vpop.f32.mrf.mxu0
      %v1693 = vadd.f32 0.0, %v1692
      %v1694 = vpop.f32.mrf.mxu0
      %1695 = vmatprep.mubr.f32.mxu0 0.0
      %1696 = vmatmul.mubr.f32.gmra.mxu0 %v511
      %v1697 = vpop.f32.mrf.mxu0
      %v1698 = vadd.f32 0.0, %v1697
      %v1699 = vpop.f32.mrf.mxu0
      %1700 = vmatprep.mubr.f32.mxu0 0.0
      %1701 = vmatmul.mubr.f32.gmra.mxu0 %v512
      %v1702 = vpop.f32.mrf.mxu0
      %v1703 = vadd.f32 0.0, %v1702
      %v1704 = vpop.f32.mrf.mxu0
      %1705 = vmatprep.mubr.f32.mxu0 0.0
      %1706 = vmatmul.mubr.f32.gmra.mxu0 %v514
      %v1707 = vpop.f32.mrf.mxu0
      %v1708 = vadd.f32 0.0, %v1707
      %v1709 = vpop.f32.mrf.mxu0
      %1710 = vmatprep.mubr.f32.mxu0 0.0
      %1711 = vmatmul.mubr.f32.gmra.mxu0 %v515
      %v1712 = vpop.f32.mrf.mxu0
      %v1713 = vadd.f32 0.0, %v1712
      %v1714 = vpop.f32.mrf.mxu0
      %1715 = vmatprep.mubr.f32.mxu0 0.0
      %1716 = vmatmul.mubr.f32.gmra.mxu0 %v517
      %v1717 = vpop.f32.mrf.mxu0
      %v1718 = vadd.f32 0.0, %v1717
      %v1719 = vpop.f32.mrf.mxu0
      %1720 = vmatprep.mubr.f32.mxu0 0.0
      %1721 = vmatmul.mubr.f32.gmra.mxu0 %v518
      %v1722 = vpop.f32.mrf.mxu0
      %v1723 = vadd.f32 0.0, %v1722
      %v1724 = vpop.f32.mrf.mxu0
      %1725 = vmatprep.mubr.f32.mxu0 0.0
      %1726 = vmatmul.mubr.f32.gmra.mxu0 %v520
      %v1727 = vpop.f32.mrf.mxu0
      %v1728 = vadd.f32 0.0, %v1727
      %v1729 = vpop.f32.mrf.mxu0
      %1730 = vmatprep.mubr.f32.mxu0 0.0
      %1731 = vmatmul.mubr.f32.gmra.mxu0 %v521
      %v1732 = vpop.f32.mrf.mxu0
      %v1733 = vadd.f32 0.0, %v1732
      %v1734 = vpop.f32.mrf.mxu0
      %1735 = vmatprep.mubr.f32.mxu0 0.0
      %1736 = vmatmul.mubr.f32.gmra.mxu0 %v523
      %v1737 = vpop.f32.mrf.mxu0
      %v1738 = vadd.f32 0.0, %v1737
      %v1739 = vpop.f32.mrf.mxu0
      %1740 = vmatprep.mubr.f32.mxu0 0.0
      %1741 = vmatmul.mubr.f32.gmra.mxu0 %v524
      %v1742 = vpop.f32.mrf.mxu0
      %v1743 = vadd.f32 0.0, %v1742
      %v1744 = vpop.f32.mrf.mxu0
      %1745 = vmatprep.mubr.f32.mxu0 0.0
      %1746 = vmatmul.mubr.f32.gmra.mxu0 %v526
      %v1747 = vpop.f32.mrf.mxu0
      %v1748 = vadd.f32 0.0, %v1747
      %v1749 = vpop.f32.mrf.mxu0
      %1750 = vmatprep.mubr.f32.mxu0 0.0
      %1751 = vmatmul.mubr.f32.gmra.mxu0 %v527
      %v1752 = vpop.f32.mrf.mxu0
      %v1753 = vadd.f32 0.0, %v1752
      %v1754 = vpop.f32.mrf.mxu0
      %1755 = vmatprep.mubr.f32.mxu0 0.0
      %1756 = vmatmul.mubr.f32.gmra.mxu0 %v529
      %v1757 = vpop.f32.mrf.mxu0
      %v1758 = vadd.f32 0.0, %v1757
      %v1759 = vpop.f32.mrf.mxu0
      %1760 = vmatprep.mubr.f32.mxu0 0.0
      %1761 = vmatmul.mubr.f32.gmra.mxu0 %v530
      %v1762 = vpop.f32.mrf.mxu0
      %v1763 = vadd.f32 0.0, %v1762
      %v1764 = vpop.f32.mrf.mxu0
      %1765 = vmatprep.mubr.f32.mxu0 0.0
      %1766 = vmatmul.mubr.f32.gmra.mxu0 %v532
      %v1767 = vpop.f32.mrf.mxu0
      %v1768 = vadd.f32 0.0, %v1767
      %v1769 = vpop.f32.mrf.mxu0
      %1770 = vmatprep.mubr.f32.mxu0 0.0
      %1771 = vmatmul.mubr.f32.gmra.mxu0 %v533
      %v1772 = vpop.f32.mrf.mxu0
      %v1773 = vadd.f32 0.0, %v1772
      %v1774 = vpop.f32.mrf.mxu0
      %1775 = vmatprep.mubr.f32.mxu0 0.0
      %1776 = vmatmul.mubr.f32.gmra.mxu0 %v535
      %v1777 = vpop.f32.mrf.mxu0
      %v1778 = vadd.f32 0.0, %v1777
      %v1779 = vpop.f32.mrf.mxu0
      %1780 = vmatprep.mubr.f32.mxu0 0.0
      %1781 = vmatmul.mubr.f32.gmra.mxu0 %v536
      %v1782 = vpop.f32.mrf.mxu0
      %v1783 = vadd.f32 0.0, %v1782
      %v1784 = vpop.f32.mrf.mxu0
      %1785 = vmatprep.mubr.f32.mxu0 0.0
      %1786 = vmatmul.mubr.f32.gmra.mxu0 %v538
      %v1787 = vpop.f32.mrf.mxu0
      %v1788 = vadd.f32 0.0, %v1787
      %v1789 = vpop.f32.mrf.mxu0
      %1790 = vmatprep.mubr.f32.mxu0 0.0
      %1791 = vmatmul.mubr.f32.gmra.mxu0 %v539
      %v1792 = vpop.f32.mrf.mxu0
      %v1793 = vadd.f32 0.0, %v1792
      %v1794 = vpop.f32.mrf.mxu0
      %1795 = vmatprep.mubr.f32.mxu0 0.0
      %1796 = vmatmul.mubr.f32.gmra.mxu0 %v541
      %v1797 = vpop.f32.mrf.mxu0
      %v1798 = vadd.f32 0.0, %v1797
      %v1799 = vpop.f32.mrf.mxu0
      %1800 = vmatprep.mubr.f32.mxu0 0.0
      %1801 = vmatmul.mubr.f32.gmra.mxu0 %v542
      %v1802 = vpop.f32.mrf.mxu0
      %v1803 = vadd.f32 0.0, %v1802
      %v1804 = vpop.f32.mrf.mxu0
      %1805 = vmatprep.mubr.f32.mxu0 0.0
      %1806 = vmatmul.mubr.f32.gmra.mxu0 %v544
      %v1807 = vpop.f32.mrf.mxu0
      %v1808 = vadd.f32 0.0, %v1807
      %v1809 = vpop.f32.mrf.mxu0
      %1810 = vmatprep.mubr.f32.mxu0 0.0
      %1811 = vmatmul.mubr.f32.gmra.mxu0 %v545
      %v1812 = vpop.f32.mrf.mxu0
      %v1813 = vadd.f32 0.0, %v1812
      %v1814 = vpop.f32.mrf.mxu0
      %1815 = vmatprep.mubr.f32.mxu0 0.0
      %1816 = vmatmul.mubr.f32.gmra.mxu0 %v547
      %v1817 = vpop.f32.mrf.mxu0
      %v1818 = vadd.f32 0.0, %v1817
      %v1819 = vpop.f32.mrf.mxu0
      %1820 = vmatprep.mubr.f32.mxu0 0.0
      %1821 = vmatmul.mubr.f32.gmra.mxu0 %v548
      %v1822 = vpop.f32.mrf.mxu0
      %v1823 = vadd.f32 0.0, %v1822
      %v1824 = vpop.f32.mrf.mxu0
      %1825 = vdwg.mxu0
      %v1826 = vadd.f32 %v1552, %v1668
      %v1827 = vadd.f32 %v1553, %v1673
      %v1828 = vadd.f32 %v1554, %v1678
      %v1829 = vadd.f32 %v1555, %v1683
      %v1830 = vadd.f32 %v1556, %v1688
      %v1831 = vadd.f32 %v1557, %v1693
      %v1832 = vadd.f32 %v1558, %v1698
      %v1833 = vadd.f32 %v1559, %v1703
      %v1834 = vadd.f32 %v1560, %v1708
      %v1835 = vadd.f32 %v1561, %v1713
      %v1836 = vadd.f32 %v1562, %v1718
      %v1837 = vadd.f32 %v1563, %v1723
      %v1838 = vadd.f32 %v1564, %v1728
      %v1839 = vadd.f32 %v1565, %v1733
      %v1840 = vadd.f32 %v1566, %v1738
      %v1841 = vadd.f32 %v1567, %v1743
      %v1842 = vadd.f32 %v1568, %v1748
      %v1843 = vadd.f32 %v1569, %v1753
      %v1844 = vadd.f32 %v1570, %v1758
      %v1845 = vadd.f32 %v1571, %v1763
      %v1846 = vadd.f32 %v1572, %v1768
      %v1847 = vadd.f32 %v1573, %v1773
      %v1848 = vadd.f32 %v1574, %v1778
      %v1849 = vadd.f32 %v1575, %v1783
      %v1850 = vadd.f32 %v1576, %v1788
      %v1851 = vadd.f32 %v1577, %v1793
      %v1852 = vadd.f32 %v1578, %v1798
      %v1853 = vadd.f32 %v1579, %v1803
      %v1854 = vadd.f32 %v1580, %v1808
      %v1855 = vadd.f32 %v1581, %v1813
      %v1856 = vadd.f32 %v1582, %v1818
      %v1857 = vadd.f32 %v1583, %v1823
      %v1861 = vrot.slane %v547, 1
      %v1862 = vrot.slane %v548, 1
      %v1863 = vsel %vm617, %v1861, %v1862
      %v1864 = vrot.slane %v549, 1
      %v1865 = vsel %vm617, %v1862, %v1864
      %s1868 = scalar_lea.vmem %s1, 512
      %v1869 = vld [vmem:[%s1868] sm:$0xff]
      %v1870 = vld [vmem:[%s1868 + $0x8] sm:$0xff]
      %v1871 = vld [vmem:[%s1868 + $0x10] sm:$0xff]
      %v1872 = vld [vmem:[%s1868 + $0x18] sm:$0xff]
      %v1873 = vld [vmem:[%s1868 + $0x20] sm:$0xff]
      %v1874 = vld [vmem:[%s1868 + $0x28] sm:$0xff]
      %v1875 = vld [vmem:[%s1868 + $0x30] sm:$0xff]
      %v1876 = vld [vmem:[%s1868 + $0x38] sm:$0xff]
      %v1877 = vld [vmem:[%s1868 + $0x40] sm:$0xff]
      %v1878 = vld [vmem:[%s1868 + $0x48] sm:$0xff]
      %v1879 = vld [vmem:[%s1868 + $0x50] sm:$0xff]
      %v1880 = vld [vmem:[%s1868 + $0x58] sm:$0xff]
      %v1881 = vld [vmem:[%s1868 + $0x60] sm:$0xff]
      %v1882 = vld [vmem:[%s1868 + $0x68] sm:$0xff]
      %v1883 = vld [vmem:[%s1868 + $0x70] sm:$0xff]
      %v1884 = vld [vmem:[%s1868 + $0x78] sm:$0xff]
      %1885 = vmatprep.subr.mxu0 0.0
      %1886 = vmatpush1.msra.mxu0 %v1884
      %1887 = vmatprep.subr.mxu0 0.0
      %1888 = vmatpush1.msra.mxu0 %v1883
      %1889 = vmatprep.subr.mxu0 0.0
      %1890 = vmatpush1.msra.mxu0 %v1882
      %1891 = vmatprep.subr.mxu0 0.0
      %1892 = vmatpush1.msra.mxu0 %v1881
      %1893 = vmatprep.subr.mxu0 0.0
      %1894 = vmatpush1.msra.mxu0 %v1880
      %1895 = vmatprep.subr.mxu0 0.0
      %1896 = vmatpush1.msra.mxu0 %v1879
      %1897 = vmatprep.subr.mxu0 0.0
      %1898 = vmatpush1.msra.mxu0 %v1878
      %1899 = vmatprep.subr.mxu0 0.0
      %1900 = vmatpush1.msra.mxu0 %v1877
      %1901 = vmatprep.subr.mxu0 0.0
      %1902 = vmatpush1.msra.mxu0 %v1876
      %1903 = vmatprep.subr.mxu0 0.0
      %1904 = vmatpush1.msra.mxu0 %v1875
      %1905 = vmatprep.subr.mxu0 0.0
      %1906 = vmatpush1.msra.mxu0 %v1874
      %1907 = vmatprep.subr.mxu0 0.0
      %1908 = vmatpush1.msra.mxu0 %v1873
      %1909 = vmatprep.subr.mxu0 0.0
      %1910 = vmatpush1.msra.mxu0 %v1872
      %1911 = vmatprep.subr.mxu0 0.0
      %1912 = vmatpush1.msra.mxu0 %v1871
      %1913 = vmatprep.subr.mxu0 0.0
      %1914 = vmatpush1.msra.mxu0 %v1870
      %1915 = vmatprep.subr.mxu0 0.0
      %1916 = vmatpush1.msra.mxu0 %v1869
      %1917 = vmatprep.subr.mxu0 0.0
      %1918 = vmatpush2.msra.mxu0 0.0
      %1919 = vmatprep.subr.mxu0 0.0
      %1920 = vmatpush2.msra.mxu0 0.0
      %1921 = vmatprep.subr.mxu0 0.0
      %1922 = vmatpush2.msra.mxu0 0.0
      %1923 = vmatprep.subr.mxu0 0.0
      %1924 = vmatpush2.msra.mxu0 0.0
      %1925 = vmatprep.subr.mxu0 0.0
      %1926 = vmatpush2.msra.mxu0 0.0
      %1927 = vmatprep.subr.mxu0 0.0
      %1928 = vmatpush2.msra.mxu0 0.0
      %1929 = vmatprep.subr.mxu0 0.0
      %1930 = vmatpush2.msra.mxu0 0.0
      %1931 = vmatprep.subr.mxu0 0.0
      %1932 = vmatpush2.msra.mxu0 0.0
      %1933 = vmatprep.subr.mxu0 0.0
      %1934 = vmatpush2.msra.mxu0 0.0
      %1935 = vmatprep.subr.mxu0 0.0
      %1936 = vmatpush2.msra.mxu0 0.0
      %1937 = vmatprep.subr.mxu0 0.0
      %1938 = vmatpush2.msra.mxu0 0.0
      %1939 = vmatprep.subr.mxu0 0.0
      %1940 = vmatpush2.msra.mxu0 0.0
      %1941 = vmatprep.subr.mxu0 0.0
      %1942 = vmatpush2.msra.mxu0 0.0
      %1943 = vmatprep.subr.mxu0 0.0
      %1944 = vmatpush2.msra.mxu0 0.0
      %1945 = vmatprep.subr.mxu0 0.0
      %1946 = vmatpush2.msra.mxu0 0.0
      %1947 = vmatprep.subr.mxu0 0.0
      %1948 = vmatpush2.msra.mxu0 0.0
      %1949 = vmatprep.mubr.f32.mxu0 0.0
      %1950 = vmatmul.mubr.f32.gmra.mxu0 %v625
      %v1951 = vpop.f32.mrf.mxu0
      %v1952 = vadd.f32 0.0, %v1951
      %v1953 = vpop.f32.mrf.mxu0
      %1954 = vmatprep.mubr.f32.mxu0 0.0
      %1955 = vmatmul.mubr.f32.gmra.mxu0 %v627
      %v1956 = vpop.f32.mrf.mxu0
      %v1957 = vadd.f32 0.0, %v1956
      %v1958 = vpop.f32.mrf.mxu0
      %1959 = vmatprep.mubr.f32.mxu0 0.0
      %1960 = vmatmul.mubr.f32.gmra.mxu0 %v630
      %v1961 = vpop.f32.mrf.mxu0
      %v1962 = vadd.f32 0.0, %v1961
      %v1963 = vpop.f32.mrf.mxu0
      %1964 = vmatprep.mubr.f32.mxu0 0.0
      %1965 = vmatmul.mubr.f32.gmra.mxu0 %v632
      %v1966 = vpop.f32.mrf.mxu0
      %v1967 = vadd.f32 0.0, %v1966
      %v1968 = vpop.f32.mrf.mxu0
      %1969 = vmatprep.mubr.f32.mxu0 0.0
      %1970 = vmatmul.mubr.f32.gmra.mxu0 %v635
      %v1971 = vpop.f32.mrf.mxu0
      %v1972 = vadd.f32 0.0, %v1971
      %v1973 = vpop.f32.mrf.mxu0
      %1974 = vmatprep.mubr.f32.mxu0 0.0
      %1975 = vmatmul.mubr.f32.gmra.mxu0 %v637
      %v1976 = vpop.f32.mrf.mxu0
      %v1977 = vadd.f32 0.0, %v1976
      %v1978 = vpop.f32.mrf.mxu0
      %1979 = vmatprep.mubr.f32.mxu0 0.0
      %1980 = vmatmul.mubr.f32.gmra.mxu0 %v640
      %v1981 = vpop.f32.mrf.mxu0
      %v1982 = vadd.f32 0.0, %v1981
      %v1983 = vpop.f32.mrf.mxu0
      %1984 = vmatprep.mubr.f32.mxu0 0.0
      %1985 = vmatmul.mubr.f32.gmra.mxu0 %v642
      %v1986 = vpop.f32.mrf.mxu0
      %v1987 = vadd.f32 0.0, %v1986
      %v1988 = vpop.f32.mrf.mxu0
      %1989 = vmatprep.mubr.f32.mxu0 0.0
      %1990 = vmatmul.mubr.f32.gmra.mxu0 %v645
      %v1991 = vpop.f32.mrf.mxu0
      %v1992 = vadd.f32 0.0, %v1991
      %v1993 = vpop.f32.mrf.mxu0
      %1994 = vmatprep.mubr.f32.mxu0 0.0
      %1995 = vmatmul.mubr.f32.gmra.mxu0 %v647
      %v1996 = vpop.f32.mrf.mxu0
      %v1997 = vadd.f32 0.0, %v1996
      %v1998 = vpop.f32.mrf.mxu0
      %1999 = vmatprep.mubr.f32.mxu0 0.0
      %2000 = vmatmul.mubr.f32.gmra.mxu0 %v650
      %v2001 = vpop.f32.mrf.mxu0
      %v2002 = vadd.f32 0.0, %v2001
      %v2003 = vpop.f32.mrf.mxu0
      %2004 = vmatprep.mubr.f32.mxu0 0.0
      %2005 = vmatmul.mubr.f32.gmra.mxu0 %v652
      %v2006 = vpop.f32.mrf.mxu0
      %v2007 = vadd.f32 0.0, %v2006
      %v2008 = vpop.f32.mrf.mxu0
      %2009 = vmatprep.mubr.f32.mxu0 0.0
      %2010 = vmatmul.mubr.f32.gmra.mxu0 %v655
      %v2011 = vpop.f32.mrf.mxu0
      %v2012 = vadd.f32 0.0, %v2011
      %v2013 = vpop.f32.mrf.mxu0
      %2014 = vmatprep.mubr.f32.mxu0 0.0
      %2015 = vmatmul.mubr.f32.gmra.mxu0 %v657
      %v2016 = vpop.f32.mrf.mxu0
      %v2017 = vadd.f32 0.0, %v2016
      %v2018 = vpop.f32.mrf.mxu0
      %2019 = vmatprep.mubr.f32.mxu0 0.0
      %2020 = vmatmul.mubr.f32.gmra.mxu0 %v660
      %v2021 = vpop.f32.mrf.mxu0
      %v2022 = vadd.f32 0.0, %v2021
      %v2023 = vpop.f32.mrf.mxu0
      %2024 = vmatprep.mubr.f32.mxu0 0.0
      %2025 = vmatmul.mubr.f32.gmra.mxu0 %v662
      %v2026 = vpop.f32.mrf.mxu0
      %v2027 = vadd.f32 0.0, %v2026
      %v2028 = vpop.f32.mrf.mxu0
      %2029 = vmatprep.mubr.f32.mxu0 0.0
      %2030 = vmatmul.mubr.f32.gmra.mxu0 %v665
      %v2031 = vpop.f32.mrf.mxu0
      %v2032 = vadd.f32 0.0, %v2031
      %v2033 = vpop.f32.mrf.mxu0
      %2034 = vmatprep.mubr.f32.mxu0 0.0
      %2035 = vmatmul.mubr.f32.gmra.mxu0 %v667
      %v2036 = vpop.f32.mrf.mxu0
      %v2037 = vadd.f32 0.0, %v2036
      %v2038 = vpop.f32.mrf.mxu0
      %2039 = vmatprep.mubr.f32.mxu0 0.0
      %2040 = vmatmul.mubr.f32.gmra.mxu0 %v670
      %v2041 = vpop.f32.mrf.mxu0
      %v2042 = vadd.f32 0.0, %v2041
      %v2043 = vpop.f32.mrf.mxu0
      %2044 = vmatprep.mubr.f32.mxu0 0.0
      %2045 = vmatmul.mubr.f32.gmra.mxu0 %v672
      %v2046 = vpop.f32.mrf.mxu0
      %v2047 = vadd.f32 0.0, %v2046
      %v2048 = vpop.f32.mrf.mxu0
      %2049 = vmatprep.mubr.f32.mxu0 0.0
      %2050 = vmatmul.mubr.f32.gmra.mxu0 %v675
      %v2051 = vpop.f32.mrf.mxu0
      %v2052 = vadd.f32 0.0, %v2051
      %v2053 = vpop.f32.mrf.mxu0
      %2054 = vmatprep.mubr.f32.mxu0 0.0
      %2055 = vmatmul.mubr.f32.gmra.mxu0 %v677
      %v2056 = vpop.f32.mrf.mxu0
      %v2057 = vadd.f32 0.0, %v2056
      %v2058 = vpop.f32.mrf.mxu0
      %2059 = vmatprep.mubr.f32.mxu0 0.0
      %2060 = vmatmul.mubr.f32.gmra.mxu0 %v680
      %v2061 = vpop.f32.mrf.mxu0
      %v2062 = vadd.f32 0.0, %v2061
      %v2063 = vpop.f32.mrf.mxu0
      %2064 = vmatprep.mubr.f32.mxu0 0.0
      %2065 = vmatmul.mubr.f32.gmra.mxu0 %v682
      %v2066 = vpop.f32.mrf.mxu0
      %v2067 = vadd.f32 0.0, %v2066
      %v2068 = vpop.f32.mrf.mxu0
      %2069 = vmatprep.mubr.f32.mxu0 0.0
      %2070 = vmatmul.mubr.f32.gmra.mxu0 %v685
      %v2071 = vpop.f32.mrf.mxu0
      %v2072 = vadd.f32 0.0, %v2071
      %v2073 = vpop.f32.mrf.mxu0
      %2074 = vmatprep.mubr.f32.mxu0 0.0
      %2075 = vmatmul.mubr.f32.gmra.mxu0 %v687
      %v2076 = vpop.f32.mrf.mxu0
      %v2077 = vadd.f32 0.0, %v2076
      %v2078 = vpop.f32.mrf.mxu0
      %2079 = vmatprep.mubr.f32.mxu0 0.0
      %2080 = vmatmul.mubr.f32.gmra.mxu0 %v690
      %v2081 = vpop.f32.mrf.mxu0
      %v2082 = vadd.f32 0.0, %v2081
      %v2083 = vpop.f32.mrf.mxu0
      %2084 = vmatprep.mubr.f32.mxu0 0.0
      %2085 = vmatmul.mubr.f32.gmra.mxu0 %v692
      %v2086 = vpop.f32.mrf.mxu0
      %v2087 = vadd.f32 0.0, %v2086
      %v2088 = vpop.f32.mrf.mxu0
      %2089 = vmatprep.mubr.f32.mxu0 0.0
      %2090 = vmatmul.mubr.f32.gmra.mxu0 %v695
      %v2091 = vpop.f32.mrf.mxu0
      %v2092 = vadd.f32 0.0, %v2091
      %v2093 = vpop.f32.mrf.mxu0
      %2094 = vmatprep.mubr.f32.mxu0 0.0
      %2095 = vmatmul.mubr.f32.gmra.mxu0 %v697
      %v2096 = vpop.f32.mrf.mxu0
      %v2097 = vadd.f32 0.0, %v2096
      %v2098 = vpop.f32.mrf.mxu0
      %2099 = vmatprep.mubr.f32.mxu0 0.0
      %2100 = vmatmul.mubr.f32.gmra.mxu0 %v1863
      %v2101 = vpop.f32.mrf.mxu0
      %v2102 = vadd.f32 0.0, %v2101
      %v2103 = vpop.f32.mrf.mxu0
      %2104 = vmatprep.mubr.f32.mxu0 0.0
      %2105 = vmatmul.mubr.f32.gmra.mxu0 %v1865
      %v2106 = vpop.f32.mrf.mxu0
      %v2107 = vadd.f32 0.0, %v2106
      %v2108 = vpop.f32.mrf.mxu0
      %2109 = vdwg.mxu0
      %v2110 = vadd.f32 %v1826, %v1952
      %v2111 = vadd.f32 %v1827, %v1957
      %v2112 = vadd.f32 %v1828, %v1962
      %v2113 = vadd.f32 %v1829, %v1967
      %v2114 = vadd.f32 %v1830, %v1972
      %v2115 = vadd.f32 %v1831, %v1977
      %v2116 = vadd.f32 %v1832, %v1982
      %v2117 = vadd.f32 %v1833, %v1987
      %v2118 = vadd.f32 %v1834, %v1992
      %v2119 = vadd.f32 %v1835, %v1997
      %v2120 = vadd.f32 %v1836, %v2002
      %v2121 = vadd.f32 %v1837, %v2007
      %v2122 = vadd.f32 %v1838, %v2012
      %v2123 = vadd.f32 %v1839, %v2017
      %v2124 = vadd.f32 %v1840, %v2022
      %v2125 = vadd.f32 %v1841, %v2027
      %v2126 = vadd.f32 %v1842, %v2032
      %v2127 = vadd.f32 %v1843, %v2037
      %v2128 = vadd.f32 %v1844, %v2042
      %v2129 = vadd.f32 %v1845, %v2047
      %v2130 = vadd.f32 %v1846, %v2052
      %v2131 = vadd.f32 %v1847, %v2057
      %v2132 = vadd.f32 %v1848, %v2062
      %v2133 = vadd.f32 %v1849, %v2067
      %v2134 = vadd.f32 %v1850, %v2072
      %v2135 = vadd.f32 %v1851, %v2077
      %v2136 = vadd.f32 %v1852, %v2082
      %v2137 = vadd.f32 %v1853, %v2087
      %v2138 = vadd.f32 %v1854, %v2092
      %v2139 = vadd.f32 %v1855, %v2097
      %v2140 = vadd.f32 %v1856, %v2102
      %v2141 = vadd.f32 %v1857, %v2107
      %v2142 = vrot.slane %v547, 2
      %v2143 = vrot.slane %v548, 2
      %v2144 = vsel %vm1197, %v2142, %v2143
      %v2145 = vrot.slane %v549, 2
      %v2146 = vsel %vm1197, %v2143, %v2145
      %s2149 = scalar_lea.vmem %s1, 640
      %v2150 = vld [vmem:[%s2149] sm:$0xff]
      %v2151 = vld [vmem:[%s2149 + $0x8] sm:$0xff]
      %v2152 = vld [vmem:[%s2149 + $0x10] sm:$0xff]
      %v2153 = vld [vmem:[%s2149 + $0x18] sm:$0xff]
      %v2154 = vld [vmem:[%s2149 + $0x20] sm:$0xff]
      %v2155 = vld [vmem:[%s2149 + $0x28] sm:$0xff]
      %v2156 = vld [vmem:[%s2149 + $0x30] sm:$0xff]
      %v2157 = vld [vmem:[%s2149 + $0x38] sm:$0xff]
      %v2158 = vld [vmem:[%s2149 + $0x40] sm:$0xff]
      %v2159 = vld [vmem:[%s2149 + $0x48] sm:$0xff]
      %v2160 = vld [vmem:[%s2149 + $0x50] sm:$0xff]
      %v2161 = vld [vmem:[%s2149 + $0x58] sm:$0xff]
      %v2162 = vld [vmem:[%s2149 + $0x60] sm:$0xff]
      %v2163 = vld [vmem:[%s2149 + $0x68] sm:$0xff]
      %v2164 = vld [vmem:[%s2149 + $0x70] sm:$0xff]
      %v2165 = vld [vmem:[%s2149 + $0x78] sm:$0xff]
      %2166 = vmatprep.subr.mxu0 0.0
      %2167 = vmatpush1.msra.mxu0 %v2165
      %2168 = vmatprep.subr.mxu0 0.0
      %2169 = vmatpush1.msra.mxu0 %v2164
      %2170 = vmatprep.subr.mxu0 0.0
      %2171 = vmatpush1.msra.mxu0 %v2163
      %2172 = vmatprep.subr.mxu0 0.0
      %2173 = vmatpush1.msra.mxu0 %v2162
      %2174 = vmatprep.subr.mxu0 0.0
      %2175 = vmatpush1.msra.mxu0 %v2161
      %2176 = vmatprep.subr.mxu0 0.0
      %2177 = vmatpush1.msra.mxu0 %v2160
      %2178 = vmatprep.subr.mxu0 0.0
      %2179 = vmatpush1.msra.mxu0 %v2159
      %2180 = vmatprep.subr.mxu0 0.0
      %2181 = vmatpush1.msra.mxu0 %v2158
      %2182 = vmatprep.subr.mxu0 0.0
      %2183 = vmatpush1.msra.mxu0 %v2157
      %2184 = vmatprep.subr.mxu0 0.0
      %2185 = vmatpush1.msra.mxu0 %v2156
      %2186 = vmatprep.subr.mxu0 0.0
      %2187 = vmatpush1.msra.mxu0 %v2155
      %2188 = vmatprep.subr.mxu0 0.0
      %2189 = vmatpush1.msra.mxu0 %v2154
      %2190 = vmatprep.subr.mxu0 0.0
      %2191 = vmatpush1.msra.mxu0 %v2153
      %2192 = vmatprep.subr.mxu0 0.0
      %2193 = vmatpush1.msra.mxu0 %v2152
      %2194 = vmatprep.subr.mxu0 0.0
      %2195 = vmatpush1.msra.mxu0 %v2151
      %2196 = vmatprep.subr.mxu0 0.0
      %2197 = vmatpush1.msra.mxu0 %v2150
      %2198 = vmatprep.subr.mxu0 0.0
      %2199 = vmatpush2.msra.mxu0 0.0
      %2200 = vmatprep.subr.mxu0 0.0
      %2201 = vmatpush2.msra.mxu0 0.0
      %2202 = vmatprep.subr.mxu0 0.0
      %2203 = vmatpush2.msra.mxu0 0.0
      %2204 = vmatprep.subr.mxu0 0.0
      %2205 = vmatpush2.msra.mxu0 0.0
      %2206 = vmatprep.subr.mxu0 0.0
      %2207 = vmatpush2.msra.mxu0 0.0
      %2208 = vmatprep.subr.mxu0 0.0
      %2209 = vmatpush2.msra.mxu0 0.0
      %2210 = vmatprep.subr.mxu0 0.0
      %2211 = vmatpush2.msra.mxu0 0.0
      %2212 = vmatprep.subr.mxu0 0.0
      %2213 = vmatpush2.msra.mxu0 0.0
      %2214 = vmatprep.subr.mxu0 0.0
      %2215 = vmatpush2.msra.mxu0 0.0
      %2216 = vmatprep.subr.mxu0 0.0
      %2217 = vmatpush2.msra.mxu0 0.0
      %2218 = vmatprep.subr.mxu0 0.0
      %2219 = vmatpush2.msra.mxu0 0.0
      %2220 = vmatprep.subr.mxu0 0.0
      %2221 = vmatpush2.msra.mxu0 0.0
      %2222 = vmatprep.subr.mxu0 0.0
      %2223 = vmatpush2.msra.mxu0 0.0
      %2224 = vmatprep.subr.mxu0 0.0
      %2225 = vmatpush2.msra.mxu0 0.0
      %2226 = vmatprep.subr.mxu0 0.0
      %2227 = vmatpush2.msra.mxu0 0.0
      %2228 = vmatprep.subr.mxu0 0.0
      %2229 = vmatpush2.msra.mxu0 0.0
      %2230 = vmatprep.mubr.f32.mxu0 0.0
      %2231 = vmatmul.mubr.f32.gmra.mxu0 %v1205
      %v2232 = vpop.f32.mrf.mxu0
      %v2233 = vadd.f32 0.0, %v2232
      %v2234 = vpop.f32.mrf.mxu0
      %2235 = vmatprep.mubr.f32.mxu0 0.0
      %2236 = vmatmul.mubr.f32.gmra.mxu0 %v1207
      %v2237 = vpop.f32.mrf.mxu0
      %v2238 = vadd.f32 0.0, %v2237
      %v2239 = vpop.f32.mrf.mxu0
      %2240 = vmatprep.mubr.f32.mxu0 0.0
      %2241 = vmatmul.mubr.f32.gmra.mxu0 %v1210
      %v2242 = vpop.f32.mrf.mxu0
      %v2243 = vadd.f32 0.0, %v2242
      %v2244 = vpop.f32.mrf.mxu0
      %2245 = vmatprep.mubr.f32.mxu0 0.0
      %2246 = vmatmul.mubr.f32.gmra.mxu0 %v1212
      %v2247 = vpop.f32.mrf.mxu0
      %v2248 = vadd.f32 0.0, %v2247
      %v2249 = vpop.f32.mrf.mxu0
      %2250 = vmatprep.mubr.f32.mxu0 0.0
      %2251 = vmatmul.mubr.f32.gmra.mxu0 %v1215
      %v2252 = vpop.f32.mrf.mxu0
      %v2253 = vadd.f32 0.0, %v2252
      %v2254 = vpop.f32.mrf.mxu0
      %2255 = vmatprep.mubr.f32.mxu0 0.0
      %2256 = vmatmul.mubr.f32.gmra.mxu0 %v1217
      %v2257 = vpop.f32.mrf.mxu0
      %v2258 = vadd.f32 0.0, %v2257
      %v2259 = vpop.f32.mrf.mxu0
      %2260 = vmatprep.mubr.f32.mxu0 0.0
      %2261 = vmatmul.mubr.f32.gmra.mxu0 %v1220
      %v2262 = vpop.f32.mrf.mxu0
      %v2263 = vadd.f32 0.0, %v2262
      %v2264 = vpop.f32.mrf.mxu0
      %2265 = vmatprep.mubr.f32.mxu0 0.0
      %2266 = vmatmul.mubr.f32.gmra.mxu0 %v1222
      %v2267 = vpop.f32.mrf.mxu0
      %v2268 = vadd.f32 0.0, %v2267
      %v2269 = vpop.f32.mrf.mxu0
      %2270 = vmatprep.mubr.f32.mxu0 0.0
      %2271 = vmatmul.mubr.f32.gmra.mxu0 %v1225
      %v2272 = vpop.f32.mrf.mxu0
      %v2273 = vadd.f32 0.0, %v2272
      %v2274 = vpop.f32.mrf.mxu0
      %2275 = vmatprep.mubr.f32.mxu0 0.0
      %2276 = vmatmul.mubr.f32.gmra.mxu0 %v1227
      %v2277 = vpop.f32.mrf.mxu0
      %v2278 = vadd.f32 0.0, %v2277
      %v2279 = vpop.f32.mrf.mxu0
      %2280 = vmatprep.mubr.f32.mxu0 0.0
      %2281 = vmatmul.mubr.f32.gmra.mxu0 %v1230
      %v2282 = vpop.f32.mrf.mxu0
      %v2283 = vadd.f32 0.0, %v2282
      %v2284 = vpop.f32.mrf.mxu0
      %2285 = vmatprep.mubr.f32.mxu0 0.0
      %2286 = vmatmul.mubr.f32.gmra.mxu0 %v1232
      %v2287 = vpop.f32.mrf.mxu0
      %v2288 = vadd.f32 0.0, %v2287
      %v2289 = vpop.f32.mrf.mxu0
      %2290 = vmatprep.mubr.f32.mxu0 0.0
      %2291 = vmatmul.mubr.f32.gmra.mxu0 %v1235
      %v2292 = vpop.f32.mrf.mxu0
      %v2293 = vadd.f32 0.0, %v2292
      %v2294 = vpop.f32.mrf.mxu0
      %2295 = vmatprep.mubr.f32.mxu0 0.0
      %2296 = vmatmul.mubr.f32.gmra.mxu0 %v1237
      %v2297 = vpop.f32.mrf.mxu0
      %v2298 = vadd.f32 0.0, %v2297
      %v2299 = vpop.f32.mrf.mxu0
      %2300 = vmatprep.mubr.f32.mxu0 0.0
      %2301 = vmatmul.mubr.f32.gmra.mxu0 %v1240
      %v2302 = vpop.f32.mrf.mxu0
      %v2303 = vadd.f32 0.0, %v2302
      %v2304 = vpop.f32.mrf.mxu0
      %2305 = vmatprep.mubr.f32.mxu0 0.0
      %2306 = vmatmul.mubr.f32.gmra.mxu0 %v1242
      %v2307 = vpop.f32.mrf.mxu0
      %v2308 = vadd.f32 0.0, %v2307
      %v2309 = vpop.f32.mrf.mxu0
      %2310 = vmatprep.mubr.f32.mxu0 0.0
      %2311 = vmatmul.mubr.f32.gmra.mxu0 %v1245
      %v2312 = vpop.f32.mrf.mxu0
      %v2313 = vadd.f32 0.0, %v2312
      %v2314 = vpop.f32.mrf.mxu0
      %2315 = vmatprep.mubr.f32.mxu0 0.0
      %2316 = vmatmul.mubr.f32.gmra.mxu0 %v1247
      %v2317 = vpop.f32.mrf.mxu0
      %v2318 = vadd.f32 0.0, %v2317
      %v2319 = vpop.f32.mrf.mxu0
      %2320 = vmatprep.mubr.f32.mxu0 0.0
      %2321 = vmatmul.mubr.f32.gmra.mxu0 %v1250
      %v2322 = vpop.f32.mrf.mxu0
      %v2323 = vadd.f32 0.0, %v2322
      %v2324 = vpop.f32.mrf.mxu0
      %2325 = vmatprep.mubr.f32.mxu0 0.0
      %2326 = vmatmul.mubr.f32.gmra.mxu0 %v1252
      %v2327 = vpop.f32.mrf.mxu0
      %v2328 = vadd.f32 0.0, %v2327
      %v2329 = vpop.f32.mrf.mxu0
      %2330 = vmatprep.mubr.f32.mxu0 0.0
      %2331 = vmatmul.mubr.f32.gmra.mxu0 %v1255
      %v2332 = vpop.f32.mrf.mxu0
      %v2333 = vadd.f32 0.0, %v2332
      %v2334 = vpop.f32.mrf.mxu0
      %2335 = vmatprep.mubr.f32.mxu0 0.0
      %2336 = vmatmul.mubr.f32.gmra.mxu0 %v1257
      %v2337 = vpop.f32.mrf.mxu0
      %v2338 = vadd.f32 0.0, %v2337
      %v2339 = vpop.f32.mrf.mxu0
      %2340 = vmatprep.mubr.f32.mxu0 0.0
      %2341 = vmatmul.mubr.f32.gmra.mxu0 %v1260
      %v2342 = vpop.f32.mrf.mxu0
      %v2343 = vadd.f32 0.0, %v2342
      %v2344 = vpop.f32.mrf.mxu0
      %2345 = vmatprep.mubr.f32.mxu0 0.0
      %2346 = vmatmul.mubr.f32.gmra.mxu0 %v1262
      %v2347 = vpop.f32.mrf.mxu0
      %v2348 = vadd.f32 0.0, %v2347
      %v2349 = vpop.f32.mrf.mxu0
      %2350 = vmatprep.mubr.f32.mxu0 0.0
      %2351 = vmatmul.mubr.f32.gmra.mxu0 %v1265
      %v2352 = vpop.f32.mrf.mxu0
      %v2353 = vadd.f32 0.0, %v2352
      %v2354 = vpop.f32.mrf.mxu0
      %2355 = vmatprep.mubr.f32.mxu0 0.0
      %2356 = vmatmul.mubr.f32.gmra.mxu0 %v1267
      %v2357 = vpop.f32.mrf.mxu0
      %v2358 = vadd.f32 0.0, %v2357
      %v2359 = vpop.f32.mrf.mxu0
      %2360 = vmatprep.mubr.f32.mxu0 0.0
      %2361 = vmatmul.mubr.f32.gmra.mxu0 %v1270
      %v2362 = vpop.f32.mrf.mxu0
      %v2363 = vadd.f32 0.0, %v2362
      %v2364 = vpop.f32.mrf.mxu0
      %2365 = vmatprep.mubr.f32.mxu0 0.0
      %2366 = vmatmul.mubr.f32.gmra.mxu0 %v1272
      %v2367 = vpop.f32.mrf.mxu0
      %v2368 = vadd.f32 0.0, %v2367
      %v2369 = vpop.f32.mrf.mxu0
      %2370 = vmatprep.mubr.f32.mxu0 0.0
      %2371 = vmatmul.mubr.f32.gmra.mxu0 %v1275
      %v2372 = vpop.f32.mrf.mxu0
      %v2373 = vadd.f32 0.0, %v2372
      %v2374 = vpop.f32.mrf.mxu0
      %2375 = vmatprep.mubr.f32.mxu0 0.0
      %2376 = vmatmul.mubr.f32.gmra.mxu0 %v1277
      %v2377 = vpop.f32.mrf.mxu0
      %v2378 = vadd.f32 0.0, %v2377
      %v2379 = vpop.f32.mrf.mxu0
      %2380 = vmatprep.mubr.f32.mxu0 0.0
      %2381 = vmatmul.mubr.f32.gmra.mxu0 %v2144
      %v2382 = vpop.f32.mrf.mxu0
      %v2383 = vadd.f32 0.0, %v2382
      %v2384 = vpop.f32.mrf.mxu0
      %2385 = vmatprep.mubr.f32.mxu0 0.0
      %2386 = vmatmul.mubr.f32.gmra.mxu0 %v2146
      %v2387 = vpop.f32.mrf.mxu0
      %v2388 = vadd.f32 0.0, %v2387
      %v2389 = vpop.f32.mrf.mxu0
      %2390 = vdwg.mxu0
      %v2391 = vadd.f32 %v2110, %v2233
      %v2392 = vadd.f32 %v2111, %v2238
      %v2393 = vadd.f32 %v2112, %v2243
      %v2394 = vadd.f32 %v2113, %v2248
      %v2395 = vadd.f32 %v2114, %v2253
      %v2396 = vadd.f32 %v2115, %v2258
      %v2397 = vadd.f32 %v2116, %v2263
      %v2398 = vadd.f32 %v2117, %v2268
      %v2399 = vadd.f32 %v2118, %v2273
      %v2400 = vadd.f32 %v2119, %v2278
      %v2401 = vadd.f32 %v2120, %v2283
      %v2402 = vadd.f32 %v2121, %v2288
      %v2403 = vadd.f32 %v2122, %v2293
      %v2404 = vadd.f32 %v2123, %v2298
      %v2405 = vadd.f32 %v2124, %v2303
      %v2406 = vadd.f32 %v2125, %v2308
      %v2407 = vadd.f32 %v2126, %v2313
      %v2408 = vadd.f32 %v2127, %v2318
      %v2409 = vadd.f32 %v2128, %v2323
      %v2410 = vadd.f32 %v2129, %v2328
      %v2411 = vadd.f32 %v2130, %v2333
      %v2412 = vadd.f32 %v2131, %v2338
      %v2413 = vadd.f32 %v2132, %v2343
      %v2414 = vadd.f32 %v2133, %v2348
      %v2415 = vadd.f32 %v2134, %v2353
      %v2416 = vadd.f32 %v2135, %v2358
      %v2417 = vadd.f32 %v2136, %v2363
      %v2418 = vadd.f32 %v2137, %v2368
      %v2419 = vadd.f32 %v2138, %v2373
      %v2420 = vadd.f32 %v2139, %v2378
      %v2421 = vadd.f32 %v2140, %v2383
      %v2422 = vadd.f32 %v2141, %v2388
      %s2423 = scalar_lea.vmem %s1, 768
      %v2424 = vld [vmem:[%s2423] sm:$0xff]
      %v2425 = vld [vmem:[%s2423 + $0x8] sm:$0xff]
      %v2426 = vld [vmem:[%s2423 + $0x10] sm:$0xff]
      %v2427 = vld [vmem:[%s2423 + $0x18] sm:$0xff]
      %v2428 = vld [vmem:[%s2423 + $0x20] sm:$0xff]
      %v2429 = vld [vmem:[%s2423 + $0x28] sm:$0xff]
      %v2430 = vld [vmem:[%s2423 + $0x30] sm:$0xff]
      %v2431 = vld [vmem:[%s2423 + $0x38] sm:$0xff]
      %v2432 = vld [vmem:[%s2423 + $0x40] sm:$0xff]
      %v2433 = vld [vmem:[%s2423 + $0x48] sm:$0xff]
      %v2434 = vld [vmem:[%s2423 + $0x50] sm:$0xff]
      %v2435 = vld [vmem:[%s2423 + $0x58] sm:$0xff]
      %v2436 = vld [vmem:[%s2423 + $0x60] sm:$0xff]
      %v2437 = vld [vmem:[%s2423 + $0x68] sm:$0xff]
      %v2438 = vld [vmem:[%s2423 + $0x70] sm:$0xff]
      %v2439 = vld [vmem:[%s2423 + $0x78] sm:$0xff]
      %2440 = vmatprep.subr.mxu0 0.0
      %2441 = vmatpush1.msra.mxu0 %v2439
      %2442 = vmatprep.subr.mxu0 0.0
      %2443 = vmatpush1.msra.mxu0 %v2438
      %2444 = vmatprep.subr.mxu0 0.0
      %2445 = vmatpush1.msra.mxu0 %v2437
      %2446 = vmatprep.subr.mxu0 0.0
      %2447 = vmatpush1.msra.mxu0 %v2436
      %2448 = vmatprep.subr.mxu0 0.0
      %2449 = vmatpush1.msra.mxu0 %v2435
      %2450 = vmatprep.subr.mxu0 0.0
      %2451 = vmatpush1.msra.mxu0 %v2434
      %2452 = vmatprep.subr.mxu0 0.0
      %2453 = vmatpush1.msra.mxu0 %v2433
      %2454 = vmatprep.subr.mxu0 0.0
      %2455 = vmatpush1.msra.mxu0 %v2432
      %2456 = vmatprep.subr.mxu0 0.0
      %2457 = vmatpush1.msra.mxu0 %v2431
      %2458 = vmatprep.subr.mxu0 0.0
      %2459 = vmatpush1.msra.mxu0 %v2430
      %2460 = vmatprep.subr.mxu0 0.0
      %2461 = vmatpush1.msra.mxu0 %v2429
      %2462 = vmatprep.subr.mxu0 0.0
      %2463 = vmatpush1.msra.mxu0 %v2428
      %2464 = vmatprep.subr.mxu0 0.0
      %2465 = vmatpush1.msra.mxu0 %v2427
      %2466 = vmatprep.subr.mxu0 0.0
      %2467 = vmatpush1.msra.mxu0 %v2426
      %2468 = vmatprep.subr.mxu0 0.0
      %2469 = vmatpush1.msra.mxu0 %v2425
      %2470 = vmatprep.subr.mxu0 0.0
      %2471 = vmatpush1.msra.mxu0 %v2424
      %2472 = vmatprep.subr.mxu0 0.0
      %2473 = vmatpush2.msra.mxu0 0.0
      %2474 = vmatprep.subr.mxu0 0.0
      %2475 = vmatpush2.msra.mxu0 0.0
      %2476 = vmatprep.subr.mxu0 0.0
      %2477 = vmatpush2.msra.mxu0 0.0
      %2478 = vmatprep.subr.mxu0 0.0
      %2479 = vmatpush2.msra.mxu0 0.0
      %2480 = vmatprep.subr.mxu0 0.0
      %2481 = vmatpush2.msra.mxu0 0.0
      %2482 = vmatprep.subr.mxu0 0.0
      %2483 = vmatpush2.msra.mxu0 0.0
      %2484 = vmatprep.subr.mxu0 0.0
      %2485 = vmatpush2.msra.mxu0 0.0
      %2486 = vmatprep.subr.mxu0 0.0
      %2487 = vmatpush2.msra.mxu0 0.0
      %2488 = vmatprep.subr.mxu0 0.0
      %2489 = vmatpush2.msra.mxu0 0.0
      %2490 = vmatprep.subr.mxu0 0.0
      %2491 = vmatpush2.msra.mxu0 0.0
      %2492 = vmatprep.subr.mxu0 0.0
      %2493 = vmatpush2.msra.mxu0 0.0
      %2494 = vmatprep.subr.mxu0 0.0
      %2495 = vmatpush2.msra.mxu0 0.0
      %2496 = vmatprep.subr.mxu0 0.0
      %2497 = vmatpush2.msra.mxu0 0.0
      %2498 = vmatprep.subr.mxu0 0.0
      %2499 = vmatpush2.msra.mxu0 0.0
      %2500 = vmatprep.subr.mxu0 0.0
      %2501 = vmatpush2.msra.mxu0 0.0
      %2502 = vmatprep.subr.mxu0 0.0
      %2503 = vmatpush2.msra.mxu0 0.0
      %2504 = vmatprep.mubr.f32.mxu0 0.0
      %2505 = vmatmul.mubr.f32.gmra.mxu0 %v505
      %v2506 = vpop.f32.mrf.mxu0
      %v2507 = vadd.f32 0.0, %v2506
      %v2508 = vpop.f32.mrf.mxu0
      %2509 = vmatprep.mubr.f32.mxu0 0.0
      %2510 = vmatmul.mubr.f32.gmra.mxu0 %v506
      %v2511 = vpop.f32.mrf.mxu0
      %v2512 = vadd.f32 0.0, %v2511
      %v2513 = vpop.f32.mrf.mxu0
      %2514 = vmatprep.mubr.f32.mxu0 0.0
      %2515 = vmatmul.mubr.f32.gmra.mxu0 %v508
      %v2516 = vpop.f32.mrf.mxu0
      %v2517 = vadd.f32 0.0, %v2516
      %v2518 = vpop.f32.mrf.mxu0
      %2519 = vmatprep.mubr.f32.mxu0 0.0
      %2520 = vmatmul.mubr.f32.gmra.mxu0 %v509
      %v2521 = vpop.f32.mrf.mxu0
      %v2522 = vadd.f32 0.0, %v2521
      %v2523 = vpop.f32.mrf.mxu0
      %2524 = vmatprep.mubr.f32.mxu0 0.0
      %2525 = vmatmul.mubr.f32.gmra.mxu0 %v511
      %v2526 = vpop.f32.mrf.mxu0
      %v2527 = vadd.f32 0.0, %v2526
      %v2528 = vpop.f32.mrf.mxu0
      %2529 = vmatprep.mubr.f32.mxu0 0.0
      %2530 = vmatmul.mubr.f32.gmra.mxu0 %v512
      %v2531 = vpop.f32.mrf.mxu0
      %v2532 = vadd.f32 0.0, %v2531
      %v2533 = vpop.f32.mrf.mxu0
      %2534 = vmatprep.mubr.f32.mxu0 0.0
      %2535 = vmatmul.mubr.f32.gmra.mxu0 %v514
      %v2536 = vpop.f32.mrf.mxu0
      %v2537 = vadd.f32 0.0, %v2536
      %v2538 = vpop.f32.mrf.mxu0
      %2539 = vmatprep.mubr.f32.mxu0 0.0
      %2540 = vmatmul.mubr.f32.gmra.mxu0 %v515
      %v2541 = vpop.f32.mrf.mxu0
      %v2542 = vadd.f32 0.0, %v2541
      %v2543 = vpop.f32.mrf.mxu0
      %2544 = vmatprep.mubr.f32.mxu0 0.0
      %2545 = vmatmul.mubr.f32.gmra.mxu0 %v517
      %v2546 = vpop.f32.mrf.mxu0
      %v2547 = vadd.f32 0.0, %v2546
      %v2548 = vpop.f32.mrf.mxu0
      %2549 = vmatprep.mubr.f32.mxu0 0.0
      %2550 = vmatmul.mubr.f32.gmra.mxu0 %v518
      %v2551 = vpop.f32.mrf.mxu0
      %v2552 = vadd.f32 0.0, %v2551
      %v2553 = vpop.f32.mrf.mxu0
      %2554 = vmatprep.mubr.f32.mxu0 0.0
      %2555 = vmatmul.mubr.f32.gmra.mxu0 %v520
      %v2556 = vpop.f32.mrf.mxu0
      %v2557 = vadd.f32 0.0, %v2556
      %v2558 = vpop.f32.mrf.mxu0
      %2559 = vmatprep.mubr.f32.mxu0 0.0
      %2560 = vmatmul.mubr.f32.gmra.mxu0 %v521
      %v2561 = vpop.f32.mrf.mxu0
      %v2562 = vadd.f32 0.0, %v2561
      %v2563 = vpop.f32.mrf.mxu0
      %2564 = vmatprep.mubr.f32.mxu0 0.0
      %2565 = vmatmul.mubr.f32.gmra.mxu0 %v523
      %v2566 = vpop.f32.mrf.mxu0
      %v2567 = vadd.f32 0.0, %v2566
      %v2568 = vpop.f32.mrf.mxu0
      %2569 = vmatprep.mubr.f32.mxu0 0.0
      %2570 = vmatmul.mubr.f32.gmra.mxu0 %v524
      %v2571 = vpop.f32.mrf.mxu0
      %v2572 = vadd.f32 0.0, %v2571
      %v2573 = vpop.f32.mrf.mxu0
      %2574 = vmatprep.mubr.f32.mxu0 0.0
      %2575 = vmatmul.mubr.f32.gmra.mxu0 %v526
      %v2576 = vpop.f32.mrf.mxu0
      %v2577 = vadd.f32 0.0, %v2576
      %v2578 = vpop.f32.mrf.mxu0
      %2579 = vmatprep.mubr.f32.mxu0 0.0
      %2580 = vmatmul.mubr.f32.gmra.mxu0 %v527
      %v2581 = vpop.f32.mrf.mxu0
      %v2582 = vadd.f32 0.0, %v2581
      %v2583 = vpop.f32.mrf.mxu0
      %2584 = vmatprep.mubr.f32.mxu0 0.0
      %2585 = vmatmul.mubr.f32.gmra.mxu0 %v529
      %v2586 = vpop.f32.mrf.mxu0
      %v2587 = vadd.f32 0.0, %v2586
      %v2588 = vpop.f32.mrf.mxu0
      %2589 = vmatprep.mubr.f32.mxu0 0.0
      %2590 = vmatmul.mubr.f32.gmra.mxu0 %v530
      %v2591 = vpop.f32.mrf.mxu0
      %v2592 = vadd.f32 0.0, %v2591
      %v2593 = vpop.f32.mrf.mxu0
      %2594 = vmatprep.mubr.f32.mxu0 0.0
      %2595 = vmatmul.mubr.f32.gmra.mxu0 %v532
      %v2596 = vpop.f32.mrf.mxu0
      %v2597 = vadd.f32 0.0, %v2596
      %v2598 = vpop.f32.mrf.mxu0
      %2599 = vmatprep.mubr.f32.mxu0 0.0
      %2600 = vmatmul.mubr.f32.gmra.mxu0 %v533
      %v2601 = vpop.f32.mrf.mxu0
      %v2602 = vadd.f32 0.0, %v2601
      %v2603 = vpop.f32.mrf.mxu0
      %2604 = vmatprep.mubr.f32.mxu0 0.0
      %2605 = vmatmul.mubr.f32.gmra.mxu0 %v535
      %v2606 = vpop.f32.mrf.mxu0
      %v2607 = vadd.f32 0.0, %v2606
      %v2608 = vpop.f32.mrf.mxu0
      %2609 = vmatprep.mubr.f32.mxu0 0.0
      %2610 = vmatmul.mubr.f32.gmra.mxu0 %v536
      %v2611 = vpop.f32.mrf.mxu0
      %v2612 = vadd.f32 0.0, %v2611
      %v2613 = vpop.f32.mrf.mxu0
      %2614 = vmatprep.mubr.f32.mxu0 0.0
      %2615 = vmatmul.mubr.f32.gmra.mxu0 %v538
      %v2616 = vpop.f32.mrf.mxu0
      %v2617 = vadd.f32 0.0, %v2616
      %v2618 = vpop.f32.mrf.mxu0
      %2619 = vmatprep.mubr.f32.mxu0 0.0
      %2620 = vmatmul.mubr.f32.gmra.mxu0 %v539
      %v2621 = vpop.f32.mrf.mxu0
      %v2622 = vadd.f32 0.0, %v2621
      %v2623 = vpop.f32.mrf.mxu0
      %2624 = vmatprep.mubr.f32.mxu0 0.0
      %2625 = vmatmul.mubr.f32.gmra.mxu0 %v541
      %v2626 = vpop.f32.mrf.mxu0
      %v2627 = vadd.f32 0.0, %v2626
      %v2628 = vpop.f32.mrf.mxu0
      %2629 = vmatprep.mubr.f32.mxu0 0.0
      %2630 = vmatmul.mubr.f32.gmra.mxu0 %v542
      %v2631 = vpop.f32.mrf.mxu0
      %v2632 = vadd.f32 0.0, %v2631
      %v2633 = vpop.f32.mrf.mxu0
      %2634 = vmatprep.mubr.f32.mxu0 0.0
      %2635 = vmatmul.mubr.f32.gmra.mxu0 %v544
      %v2636 = vpop.f32.mrf.mxu0
      %v2637 = vadd.f32 0.0, %v2636
      %v2638 = vpop.f32.mrf.mxu0
      %2639 = vmatprep.mubr.f32.mxu0 0.0
      %2640 = vmatmul.mubr.f32.gmra.mxu0 %v545
      %v2641 = vpop.f32.mrf.mxu0
      %v2642 = vadd.f32 0.0, %v2641
      %v2643 = vpop.f32.mrf.mxu0
      %2644 = vmatprep.mubr.f32.mxu0 0.0
      %2645 = vmatmul.mubr.f32.gmra.mxu0 %v547
      %v2646 = vpop.f32.mrf.mxu0
      %v2647 = vadd.f32 0.0, %v2646
      %v2648 = vpop.f32.mrf.mxu0
      %2649 = vmatprep.mubr.f32.mxu0 0.0
      %2650 = vmatmul.mubr.f32.gmra.mxu0 %v548
      %v2651 = vpop.f32.mrf.mxu0
      %v2652 = vadd.f32 0.0, %v2651
      %v2653 = vpop.f32.mrf.mxu0
      %2654 = vmatprep.mubr.f32.mxu0 0.0
      %2655 = vmatmul.mubr.f32.gmra.mxu0 %v550
      %v2656 = vpop.f32.mrf.mxu0
      %v2657 = vadd.f32 0.0, %v2656
      %v2658 = vpop.f32.mrf.mxu0
      %2659 = vmatprep.mubr.f32.mxu0 0.0
      %2660 = vmatmul.mubr.f32.gmra.mxu0 %v551
      %v2661 = vpop.f32.mrf.mxu0
      %v2662 = vadd.f32 0.0, %v2661
      %v2663 = vpop.f32.mrf.mxu0
      %2664 = vdwg.mxu0
      %v2665 = vadd.f32 %v2391, %v2507
      %v2666 = vadd.f32 %v2392, %v2512
      %v2667 = vadd.f32 %v2393, %v2517
      %v2668 = vadd.f32 %v2394, %v2522
      %v2669 = vadd.f32 %v2395, %v2527
      %v2670 = vadd.f32 %v2396, %v2532
      %v2671 = vadd.f32 %v2397, %v2537
      %v2672 = vadd.f32 %v2398, %v2542
      %v2673 = vadd.f32 %v2399, %v2547
      %v2674 = vadd.f32 %v2400, %v2552
      %v2675 = vadd.f32 %v2401, %v2557
      %v2676 = vadd.f32 %v2402, %v2562
      %v2677 = vadd.f32 %v2403, %v2567
      %v2678 = vadd.f32 %v2404, %v2572
      %v2679 = vadd.f32 %v2405, %v2577
      %v2680 = vadd.f32 %v2406, %v2582
      %v2681 = vadd.f32 %v2407, %v2587
      %v2682 = vadd.f32 %v2408, %v2592
      %v2683 = vadd.f32 %v2409, %v2597
      %v2684 = vadd.f32 %v2410, %v2602
      %v2685 = vadd.f32 %v2411, %v2607
      %v2686 = vadd.f32 %v2412, %v2612
      %v2687 = vadd.f32 %v2413, %v2617
      %v2688 = vadd.f32 %v2414, %v2622
      %v2689 = vadd.f32 %v2415, %v2627
      %v2690 = vadd.f32 %v2416, %v2632
      %v2691 = vadd.f32 %v2417, %v2637
      %v2692 = vadd.f32 %v2418, %v2642
      %v2693 = vadd.f32 %v2419, %v2647
      %v2694 = vadd.f32 %v2420, %v2652
      %v2695 = vadd.f32 %v2421, %v2657
      %v2696 = vadd.f32 %v2422, %v2662
      %v2700 = vrot.slane %v550, 1
      %v2701 = vrot.slane %v551, 1
      %v2702 = vsel %vm617, %v2700, %v2701
      %v2703 = vrot.slane %v552, 1
      %v2704 = vsel %vm617, %v2701, %v2703
      %s2707 = scalar_lea.vmem %s1, 896
      %v2708 = vld [vmem:[%s2707] sm:$0xff]
      %v2709 = vld [vmem:[%s2707 + $0x8] sm:$0xff]
      %v2710 = vld [vmem:[%s2707 + $0x10] sm:$0xff]
      %v2711 = vld [vmem:[%s2707 + $0x18] sm:$0xff]
      %v2712 = vld [vmem:[%s2707 + $0x20] sm:$0xff]
      %v2713 = vld [vmem:[%s2707 + $0x28] sm:$0xff]
      %v2714 = vld [vmem:[%s2707 + $0x30] sm:$0xff]
      %v2715 = vld [vmem:[%s2707 + $0x38] sm:$0xff]
      %v2716 = vld [vmem:[%s2707 + $0x40] sm:$0xff]
      %v2717 = vld [vmem:[%s2707 + $0x48] sm:$0xff]
      %v2718 = vld [vmem:[%s2707 + $0x50] sm:$0xff]
      %v2719 = vld [vmem:[%s2707 + $0x58] sm:$0xff]
      %v2720 = vld [vmem:[%s2707 + $0x60] sm:$0xff]
      %v2721 = vld [vmem:[%s2707 + $0x68] sm:$0xff]
      %v2722 = vld [vmem:[%s2707 + $0x70] sm:$0xff]
      %v2723 = vld [vmem:[%s2707 + $0x78] sm:$0xff]
      %2724 = vmatprep.subr.mxu0 0.0
      %2725 = vmatpush1.msra.mxu0 %v2723
      %2726 = vmatprep.subr.mxu0 0.0
      %2727 = vmatpush1.msra.mxu0 %v2722
      %2728 = vmatprep.subr.mxu0 0.0
      %2729 = vmatpush1.msra.mxu0 %v2721
      %2730 = vmatprep.subr.mxu0 0.0
      %2731 = vmatpush1.msra.mxu0 %v2720
      %2732 = vmatprep.subr.mxu0 0.0
      %2733 = vmatpush1.msra.mxu0 %v2719
      %2734 = vmatprep.subr.mxu0 0.0
      %2735 = vmatpush1.msra.mxu0 %v2718
      %2736 = vmatprep.subr.mxu0 0.0
      %2737 = vmatpush1.msra.mxu0 %v2717
      %2738 = vmatprep.subr.mxu0 0.0
      %2739 = vmatpush1.msra.mxu0 %v2716
      %2740 = vmatprep.subr.mxu0 0.0
      %2741 = vmatpush1.msra.mxu0 %v2715
      %2742 = vmatprep.subr.mxu0 0.0
      %2743 = vmatpush1.msra.mxu0 %v2714
      %2744 = vmatprep.subr.mxu0 0.0
      %2745 = vmatpush1.msra.mxu0 %v2713
      %2746 = vmatprep.subr.mxu0 0.0
      %2747 = vmatpush1.msra.mxu0 %v2712
      %2748 = vmatprep.subr.mxu0 0.0
      %2749 = vmatpush1.msra.mxu0 %v2711
      %2750 = vmatprep.subr.mxu0 0.0
      %2751 = vmatpush1.msra.mxu0 %v2710
      %2752 = vmatprep.subr.mxu0 0.0
      %2753 = vmatpush1.msra.mxu0 %v2709
      %2754 = vmatprep.subr.mxu0 0.0
      %2755 = vmatpush1.msra.mxu0 %v2708
      %2756 = vmatprep.subr.mxu0 0.0
      %2757 = vmatpush2.msra.mxu0 0.0
      %2758 = vmatprep.subr.mxu0 0.0
      %2759 = vmatpush2.msra.mxu0 0.0
      %2760 = vmatprep.subr.mxu0 0.0
      %2761 = vmatpush2.msra.mxu0 0.0
      %2762 = vmatprep.subr.mxu0 0.0
      %2763 = vmatpush2.msra.mxu0 0.0
      %2764 = vmatprep.subr.mxu0 0.0
      %2765 = vmatpush2.msra.mxu0 0.0
      %2766 = vmatprep.subr.mxu0 0.0
      %2767 = vmatpush2.msra.mxu0 0.0
      %2768 = vmatprep.subr.mxu0 0.0
      %2769 = vmatpush2.msra.mxu0 0.0
      %2770 = vmatprep.subr.mxu0 0.0
      %2771 = vmatpush2.msra.mxu0 0.0
      %2772 = vmatprep.subr.mxu0 0.0
      %2773 = vmatpush2.msra.mxu0 0.0
      %2774 = vmatprep.subr.mxu0 0.0
      %2775 = vmatpush2.msra.mxu0 0.0
      %2776 = vmatprep.subr.mxu0 0.0
      %2777 = vmatpush2.msra.mxu0 0.0
      %2778 = vmatprep.subr.mxu0 0.0
      %2779 = vmatpush2.msra.mxu0 0.0
      %2780 = vmatprep.subr.mxu0 0.0
      %2781 = vmatpush2.msra.mxu0 0.0
      %2782 = vmatprep.subr.mxu0 0.0
      %2783 = vmatpush2.msra.mxu0 0.0
      %2784 = vmatprep.subr.mxu0 0.0
      %2785 = vmatpush2.msra.mxu0 0.0
      %2786 = vmatprep.subr.mxu0 0.0
      %2787 = vmatpush2.msra.mxu0 0.0
      %2788 = vmatprep.mubr.f32.mxu0 0.0
      %2789 = vmatmul.mubr.f32.gmra.mxu0 %v630
      %v2790 = vpop.f32.mrf.mxu0
      %v2791 = vadd.f32 0.0, %v2790
      %v2792 = vpop.f32.mrf.mxu0
      %2793 = vmatprep.mubr.f32.mxu0 0.0
      %2794 = vmatmul.mubr.f32.gmra.mxu0 %v632
      %v2795 = vpop.f32.mrf.mxu0
      %v2796 = vadd.f32 0.0, %v2795
      %v2797 = vpop.f32.mrf.mxu0
      %2798 = vmatprep.mubr.f32.mxu0 0.0
      %2799 = vmatmul.mubr.f32.gmra.mxu0 %v635
      %v2800 = vpop.f32.mrf.mxu0
      %v2801 = vadd.f32 0.0, %v2800
      %v2802 = vpop.f32.mrf.mxu0
      %2803 = vmatprep.mubr.f32.mxu0 0.0
      %2804 = vmatmul.mubr.f32.gmra.mxu0 %v637
      %v2805 = vpop.f32.mrf.mxu0
      %v2806 = vadd.f32 0.0, %v2805
      %v2807 = vpop.f32.mrf.mxu0
      %2808 = vmatprep.mubr.f32.mxu0 0.0
      %2809 = vmatmul.mubr.f32.gmra.mxu0 %v640
      %v2810 = vpop.f32.mrf.mxu0
      %v2811 = vadd.f32 0.0, %v2810
      %v2812 = vpop.f32.mrf.mxu0
      %2813 = vmatprep.mubr.f32.mxu0 0.0
      %2814 = vmatmul.mubr.f32.gmra.mxu0 %v642
      %v2815 = vpop.f32.mrf.mxu0
      %v2816 = vadd.f32 0.0, %v2815
      %v2817 = vpop.f32.mrf.mxu0
      %2818 = vmatprep.mubr.f32.mxu0 0.0
      %2819 = vmatmul.mubr.f32.gmra.mxu0 %v645
      %v2820 = vpop.f32.mrf.mxu0
      %v2821 = vadd.f32 0.0, %v2820
      %v2822 = vpop.f32.mrf.mxu0
      %2823 = vmatprep.mubr.f32.mxu0 0.0
      %2824 = vmatmul.mubr.f32.gmra.mxu0 %v647
      %v2825 = vpop.f32.mrf.mxu0
      %v2826 = vadd.f32 0.0, %v2825
      %v2827 = vpop.f32.mrf.mxu0
      %2828 = vmatprep.mubr.f32.mxu0 0.0
      %2829 = vmatmul.mubr.f32.gmra.mxu0 %v650
      %v2830 = vpop.f32.mrf.mxu0
      %v2831 = vadd.f32 0.0, %v2830
      %v2832 = vpop.f32.mrf.mxu0
      %2833 = vmatprep.mubr.f32.mxu0 0.0
      %2834 = vmatmul.mubr.f32.gmra.mxu0 %v652
      %v2835 = vpop.f32.mrf.mxu0
      %v2836 = vadd.f32 0.0, %v2835
      %v2837 = vpop.f32.mrf.mxu0
      %2838 = vmatprep.mubr.f32.mxu0 0.0
      %2839 = vmatmul.mubr.f32.gmra.mxu0 %v655
      %v2840 = vpop.f32.mrf.mxu0
      %v2841 = vadd.f32 0.0, %v2840
      %v2842 = vpop.f32.mrf.mxu0
      %2843 = vmatprep.mubr.f32.mxu0 0.0
      %2844 = vmatmul.mubr.f32.gmra.mxu0 %v657
      %v2845 = vpop.f32.mrf.mxu0
      %v2846 = vadd.f32 0.0, %v2845
      %v2847 = vpop.f32.mrf.mxu0
      %2848 = vmatprep.mubr.f32.mxu0 0.0
      %2849 = vmatmul.mubr.f32.gmra.mxu0 %v660
      %v2850 = vpop.f32.mrf.mxu0
      %v2851 = vadd.f32 0.0, %v2850
      %v2852 = vpop.f32.mrf.mxu0
      %2853 = vmatprep.mubr.f32.mxu0 0.0
      %2854 = vmatmul.mubr.f32.gmra.mxu0 %v662
      %v2855 = vpop.f32.mrf.mxu0
      %v2856 = vadd.f32 0.0, %v2855
      %v2857 = vpop.f32.mrf.mxu0
      %2858 = vmatprep.mubr.f32.mxu0 0.0
      %2859 = vmatmul.mubr.f32.gmra.mxu0 %v665
      %v2860 = vpop.f32.mrf.mxu0
      %v2861 = vadd.f32 0.0, %v2860
      %v2862 = vpop.f32.mrf.mxu0
      %2863 = vmatprep.mubr.f32.mxu0 0.0
      %2864 = vmatmul.mubr.f32.gmra.mxu0 %v667
      %v2865 = vpop.f32.mrf.mxu0
      %v2866 = vadd.f32 0.0, %v2865
      %v2867 = vpop.f32.mrf.mxu0
      %2868 = vmatprep.mubr.f32.mxu0 0.0
      %2869 = vmatmul.mubr.f32.gmra.mxu0 %v670
      %v2870 = vpop.f32.mrf.mxu0
      %v2871 = vadd.f32 0.0, %v2870
      %v2872 = vpop.f32.mrf.mxu0
      %2873 = vmatprep.mubr.f32.mxu0 0.0
      %2874 = vmatmul.mubr.f32.gmra.mxu0 %v672
      %v2875 = vpop.f32.mrf.mxu0
      %v2876 = vadd.f32 0.0, %v2875
      %v2877 = vpop.f32.mrf.mxu0
      %2878 = vmatprep.mubr.f32.mxu0 0.0
      %2879 = vmatmul.mubr.f32.gmra.mxu0 %v675
      %v2880 = vpop.f32.mrf.mxu0
      %v2881 = vadd.f32 0.0, %v2880
      %v2882 = vpop.f32.mrf.mxu0
      %2883 = vmatprep.mubr.f32.mxu0 0.0
      %2884 = vmatmul.mubr.f32.gmra.mxu0 %v677
      %v2885 = vpop.f32.mrf.mxu0
      %v2886 = vadd.f32 0.0, %v2885
      %v2887 = vpop.f32.mrf.mxu0
      %2888 = vmatprep.mubr.f32.mxu0 0.0
      %2889 = vmatmul.mubr.f32.gmra.mxu0 %v680
      %v2890 = vpop.f32.mrf.mxu0
      %v2891 = vadd.f32 0.0, %v2890
      %v2892 = vpop.f32.mrf.mxu0
      %2893 = vmatprep.mubr.f32.mxu0 0.0
      %2894 = vmatmul.mubr.f32.gmra.mxu0 %v682
      %v2895 = vpop.f32.mrf.mxu0
      %v2896 = vadd.f32 0.0, %v2895
      %v2897 = vpop.f32.mrf.mxu0
      %2898 = vmatprep.mubr.f32.mxu0 0.0
      %2899 = vmatmul.mubr.f32.gmra.mxu0 %v685
      %v2900 = vpop.f32.mrf.mxu0
      %v2901 = vadd.f32 0.0, %v2900
      %v2902 = vpop.f32.mrf.mxu0
      %2903 = vmatprep.mubr.f32.mxu0 0.0
      %2904 = vmatmul.mubr.f32.gmra.mxu0 %v687
      %v2905 = vpop.f32.mrf.mxu0
      %v2906 = vadd.f32 0.0, %v2905
      %v2907 = vpop.f32.mrf.mxu0
      %2908 = vmatprep.mubr.f32.mxu0 0.0
      %2909 = vmatmul.mubr.f32.gmra.mxu0 %v690
      %v2910 = vpop.f32.mrf.mxu0
      %v2911 = vadd.f32 0.0, %v2910
      %v2912 = vpop.f32.mrf.mxu0
      %2913 = vmatprep.mubr.f32.mxu0 0.0
      %2914 = vmatmul.mubr.f32.gmra.mxu0 %v692
      %v2915 = vpop.f32.mrf.mxu0
      %v2916 = vadd.f32 0.0, %v2915
      %v2917 = vpop.f32.mrf.mxu0
      %2918 = vmatprep.mubr.f32.mxu0 0.0
      %2919 = vmatmul.mubr.f32.gmra.mxu0 %v695
      %v2920 = vpop.f32.mrf.mxu0
      %v2921 = vadd.f32 0.0, %v2920
      %v2922 = vpop.f32.mrf.mxu0
      %2923 = vmatprep.mubr.f32.mxu0 0.0
      %2924 = vmatmul.mubr.f32.gmra.mxu0 %v697
      %v2925 = vpop.f32.mrf.mxu0
      %v2926 = vadd.f32 0.0, %v2925
      %v2927 = vpop.f32.mrf.mxu0
      %2928 = vmatprep.mubr.f32.mxu0 0.0
      %2929 = vmatmul.mubr.f32.gmra.mxu0 %v1863
      %v2930 = vpop.f32.mrf.mxu0
      %v2931 = vadd.f32 0.0, %v2930
      %v2932 = vpop.f32.mrf.mxu0
      %2933 = vmatprep.mubr.f32.mxu0 0.0
      %2934 = vmatmul.mubr.f32.gmra.mxu0 %v1865
      %v2935 = vpop.f32.mrf.mxu0
      %v2936 = vadd.f32 0.0, %v2935
      %v2937 = vpop.f32.mrf.mxu0
      %2938 = vmatprep.mubr.f32.mxu0 0.0
      %2939 = vmatmul.mubr.f32.gmra.mxu0 %v2702
      %v2940 = vpop.f32.mrf.mxu0
      %v2941 = vadd.f32 0.0, %v2940
      %v2942 = vpop.f32.mrf.mxu0
      %2943 = vmatprep.mubr.f32.mxu0 0.0
      %2944 = vmatmul.mubr.f32.gmra.mxu0 %v2704
      %v2945 = vpop.f32.mrf.mxu0
      %v2946 = vadd.f32 0.0, %v2945
      %v2947 = vpop.f32.mrf.mxu0
      %2948 = vdwg.mxu0
      %v2949 = vadd.f32 %v2665, %v2791
      %v2950 = vadd.f32 %v2666, %v2796
      %v2951 = vadd.f32 %v2667, %v2801
      %v2952 = vadd.f32 %v2668, %v2806
      %v2953 = vadd.f32 %v2669, %v2811
      %v2954 = vadd.f32 %v2670, %v2816
      %v2955 = vadd.f32 %v2671, %v2821
      %v2956 = vadd.f32 %v2672, %v2826
      %v2957 = vadd.f32 %v2673, %v2831
      %v2958 = vadd.f32 %v2674, %v2836
      %v2959 = vadd.f32 %v2675, %v2841
      %v2960 = vadd.f32 %v2676, %v2846
      %v2961 = vadd.f32 %v2677, %v2851
      %v2962 = vadd.f32 %v2678, %v2856
      %v2963 = vadd.f32 %v2679, %v2861
      %v2964 = vadd.f32 %v2680, %v2866
      %v2965 = vadd.f32 %v2681, %v2871
      %v2966 = vadd.f32 %v2682, %v2876
      %v2967 = vadd.f32 %v2683, %v2881
      %v2968 = vadd.f32 %v2684, %v2886
      %v2969 = vadd.f32 %v2685, %v2891
      %v2970 = vadd.f32 %v2686, %v2896
      %v2971 = vadd.f32 %v2687, %v2901
      %v2972 = vadd.f32 %v2688, %v2906
      %v2973 = vadd.f32 %v2689, %v2911
      %v2974 = vadd.f32 %v2690, %v2916
      %v2975 = vadd.f32 %v2691, %v2921
      %v2976 = vadd.f32 %v2692, %v2926
      %v2977 = vadd.f32 %v2693, %v2931
      %v2978 = vadd.f32 %v2694, %v2936
      %v2979 = vadd.f32 %v2695, %v2941
      %v2980 = vadd.f32 %v2696, %v2946
      %v2981 = vrot.slane %v550, 2
      %v2982 = vrot.slane %v551, 2
      %v2983 = vsel %vm1197, %v2981, %v2982
      %v2984 = vrot.slane %v552, 2
      %v2985 = vsel %vm1197, %v2982, %v2984
      %s2988 = scalar_lea.vmem %s1, 1024
      %v2989 = vld [vmem:[%s2988] sm:$0xff]
      %v2990 = vld [vmem:[%s2988 + $0x8] sm:$0xff]
      %v2991 = vld [vmem:[%s2988 + $0x10] sm:$0xff]
      %v2992 = vld [vmem:[%s2988 + $0x18] sm:$0xff]
      %v2993 = vld [vmem:[%s2988 + $0x20] sm:$0xff]
      %v2994 = vld [vmem:[%s2988 + $0x28] sm:$0xff]
      %v2995 = vld [vmem:[%s2988 + $0x30] sm:$0xff]
      %v2996 = vld [vmem:[%s2988 + $0x38] sm:$0xff]
      %v2997 = vld [vmem:[%s2988 + $0x40] sm:$0xff]
      %v2998 = vld [vmem:[%s2988 + $0x48] sm:$0xff]
      %v2999 = vld [vmem:[%s2988 + $0x50] sm:$0xff]
      %v3000 = vld [vmem:[%s2988 + $0x58] sm:$0xff]
      %v3001 = vld [vmem:[%s2988 + $0x60] sm:$0xff]
      %v3002 = vld [vmem:[%s2988 + $0x68] sm:$0xff]
      %v3003 = vld [vmem:[%s2988 + $0x70] sm:$0xff]
      %v3004 = vld [vmem:[%s2988 + $0x78] sm:$0xff]
      %3005 = vmatprep.subr.mxu0 0.0
      %3006 = vmatpush1.msra.mxu0 %v3004
      %3007 = vmatprep.subr.mxu0 0.0
      %3008 = vmatpush1.msra.mxu0 %v3003
      %3009 = vmatprep.subr.mxu0 0.0
      %3010 = vmatpush1.msra.mxu0 %v3002
      %3011 = vmatprep.subr.mxu0 0.0
      %3012 = vmatpush1.msra.mxu0 %v3001
      %3013 = vmatprep.subr.mxu0 0.0
      %3014 = vmatpush1.msra.mxu0 %v3000
      %3015 = vmatprep.subr.mxu0 0.0
      %3016 = vmatpush1.msra.mxu0 %v2999
      %3017 = vmatprep.subr.mxu0 0.0
      %3018 = vmatpush1.msra.mxu0 %v2998
      %3019 = vmatprep.subr.mxu0 0.0
      %3020 = vmatpush1.msra.mxu0 %v2997
      %3021 = vmatprep.subr.mxu0 0.0
      %3022 = vmatpush1.msra.mxu0 %v2996
      %3023 = vmatprep.subr.mxu0 0.0
      %3024 = vmatpush1.msra.mxu0 %v2995
      %3025 = vmatprep.subr.mxu0 0.0
      %3026 = vmatpush1.msra.mxu0 %v2994
      %3027 = vmatprep.subr.mxu0 0.0
      %3028 = vmatpush1.msra.mxu0 %v2993
      %3029 = vmatprep.subr.mxu0 0.0
      %3030 = vmatpush1.msra.mxu0 %v2992
      %3031 = vmatprep.subr.mxu0 0.0
      %3032 = vmatpush1.msra.mxu0 %v2991
      %3033 = vmatprep.subr.mxu0 0.0
      %3034 = vmatpush1.msra.mxu0 %v2990
      %3035 = vmatprep.subr.mxu0 0.0
      %3036 = vmatpush1.msra.mxu0 %v2989
      %3037 = vmatprep.subr.mxu0 0.0
      %3038 = vmatpush2.msra.mxu0 0.0
      %3039 = vmatprep.subr.mxu0 0.0
      %3040 = vmatpush2.msra.mxu0 0.0
      %3041 = vmatprep.subr.mxu0 0.0
      %3042 = vmatpush2.msra.mxu0 0.0
      %3043 = vmatprep.subr.mxu0 0.0
      %3044 = vmatpush2.msra.mxu0 0.0
      %3045 = vmatprep.subr.mxu0 0.0
      %3046 = vmatpush2.msra.mxu0 0.0
      %3047 = vmatprep.subr.mxu0 0.0
      %3048 = vmatpush2.msra.mxu0 0.0
      %3049 = vmatprep.subr.mxu0 0.0
      %3050 = vmatpush2.msra.mxu0 0.0
      %3051 = vmatprep.subr.mxu0 0.0
      %3052 = vmatpush2.msra.mxu0 0.0
      %3053 = vmatprep.subr.mxu0 0.0
      %3054 = vmatpush2.msra.mxu0 0.0
      %3055 = vmatprep.subr.mxu0 0.0
      %3056 = vmatpush2.msra.mxu0 0.0
      %3057 = vmatprep.subr.mxu0 0.0
      %3058 = vmatpush2.msra.mxu0 0.0
      %3059 = vmatprep.subr.mxu0 0.0
      %3060 = vmatpush2.msra.mxu0 0.0
      %3061 = vmatprep.subr.mxu0 0.0
      %3062 = vmatpush2.msra.mxu0 0.0
      %3063 = vmatprep.subr.mxu0 0.0
      %3064 = vmatpush2.msra.mxu0 0.0
      %3065 = vmatprep.subr.mxu0 0.0
      %3066 = vmatpush2.msra.mxu0 0.0
      %3067 = vmatprep.subr.mxu0 0.0
      %3068 = vmatpush2.msra.mxu0 0.0
      %3069 = vmatprep.mubr.f32.mxu0 0.0
      %3070 = vmatmul.mubr.f32.gmra.mxu0 %v1210
      %v3071 = vpop.f32.mrf.mxu0
      %v3072 = vadd.f32 0.0, %v3071
      %v3073 = vpop.f32.mrf.mxu0
      %3074 = vmatprep.mubr.f32.mxu0 0.0
      %3075 = vmatmul.mubr.f32.gmra.mxu0 %v1212
      %v3076 = vpop.f32.mrf.mxu0
      %v3077 = vadd.f32 0.0, %v3076
      %v3078 = vpop.f32.mrf.mxu0
      %3079 = vmatprep.mubr.f32.mxu0 0.0
      %3080 = vmatmul.mubr.f32.gmra.mxu0 %v1215
      %v3081 = vpop.f32.mrf.mxu0
      %v3082 = vadd.f32 0.0, %v3081
      %v3083 = vpop.f32.mrf.mxu0
      %3084 = vmatprep.mubr.f32.mxu0 0.0
      %3085 = vmatmul.mubr.f32.gmra.mxu0 %v1217
      %v3086 = vpop.f32.mrf.mxu0
      %v3087 = vadd.f32 0.0, %v3086
      %v3088 = vpop.f32.mrf.mxu0
      %3089 = vmatprep.mubr.f32.mxu0 0.0
      %3090 = vmatmul.mubr.f32.gmra.mxu0 %v1220
      %v3091 = vpop.f32.mrf.mxu0
      %v3092 = vadd.f32 0.0, %v3091
      %v3093 = vpop.f32.mrf.mxu0
      %3094 = vmatprep.mubr.f32.mxu0 0.0
      %3095 = vmatmul.mubr.f32.gmra.mxu0 %v1222
      %v3096 = vpop.f32.mrf.mxu0
      %v3097 = vadd.f32 0.0, %v3096
      %v3098 = vpop.f32.mrf.mxu0
      %3099 = vmatprep.mubr.f32.mxu0 0.0
      %3100 = vmatmul.mubr.f32.gmra.mxu0 %v1225
      %v3101 = vpop.f32.mrf.mxu0
      %v3102 = vadd.f32 0.0, %v3101
      %v3103 = vpop.f32.mrf.mxu0
      %3104 = vmatprep.mubr.f32.mxu0 0.0
      %3105 = vmatmul.mubr.f32.gmra.mxu0 %v1227
      %v3106 = vpop.f32.mrf.mxu0
      %v3107 = vadd.f32 0.0, %v3106
      %v3108 = vpop.f32.mrf.mxu0
      %3109 = vmatprep.mubr.f32.mxu0 0.0
      %3110 = vmatmul.mubr.f32.gmra.mxu0 %v1230
      %v3111 = vpop.f32.mrf.mxu0
      %v3112 = vadd.f32 0.0, %v3111
      %v3113 = vpop.f32.mrf.mxu0
      %3114 = vmatprep.mubr.f32.mxu0 0.0
      %3115 = vmatmul.mubr.f32.gmra.mxu0 %v1232
      %v3116 = vpop.f32.mrf.mxu0
      %v3117 = vadd.f32 0.0, %v3116
      %v3118 = vpop.f32.mrf.mxu0
      %3119 = vmatprep.mubr.f32.mxu0 0.0
      %3120 = vmatmul.mubr.f32.gmra.mxu0 %v1235
      %v3121 = vpop.f32.mrf.mxu0
      %v3122 = vadd.f32 0.0, %v3121
      %v3123 = vpop.f32.mrf.mxu0
      %3124 = vmatprep.mubr.f32.mxu0 0.0
      %3125 = vmatmul.mubr.f32.gmra.mxu0 %v1237
      %v3126 = vpop.f32.mrf.mxu0
      %v3127 = vadd.f32 0.0, %v3126
      %v3128 = vpop.f32.mrf.mxu0
      %3129 = vmatprep.mubr.f32.mxu0 0.0
      %3130 = vmatmul.mubr.f32.gmra.mxu0 %v1240
      %v3131 = vpop.f32.mrf.mxu0
      %v3132 = vadd.f32 0.0, %v3131
      %v3133 = vpop.f32.mrf.mxu0
      %3134 = vmatprep.mubr.f32.mxu0 0.0
      %3135 = vmatmul.mubr.f32.gmra.mxu0 %v1242
      %v3136 = vpop.f32.mrf.mxu0
      %v3137 = vadd.f32 0.0, %v3136
      %v3138 = vpop.f32.mrf.mxu0
      %3139 = vmatprep.mubr.f32.mxu0 0.0
      %3140 = vmatmul.mubr.f32.gmra.mxu0 %v1245
      %v3141 = vpop.f32.mrf.mxu0
      %v3142 = vadd.f32 0.0, %v3141
      %v3143 = vpop.f32.mrf.mxu0
      %3144 = vmatprep.mubr.f32.mxu0 0.0
      %3145 = vmatmul.mubr.f32.gmra.mxu0 %v1247
      %v3146 = vpop.f32.mrf.mxu0
      %v3147 = vadd.f32 0.0, %v3146
      %v3148 = vpop.f32.mrf.mxu0
      %3149 = vmatprep.mubr.f32.mxu0 0.0
      %3150 = vmatmul.mubr.f32.gmra.mxu0 %v1250
      %v3151 = vpop.f32.mrf.mxu0
      %v3152 = vadd.f32 0.0, %v3151
      %v3153 = vpop.f32.mrf.mxu0
      %3154 = vmatprep.mubr.f32.mxu0 0.0
      %3155 = vmatmul.mubr.f32.gmra.mxu0 %v1252
      %v3156 = vpop.f32.mrf.mxu0
      %v3157 = vadd.f32 0.0, %v3156
      %v3158 = vpop.f32.mrf.mxu0
      %3159 = vmatprep.mubr.f32.mxu0 0.0
      %3160 = vmatmul.mubr.f32.gmra.mxu0 %v1255
      %v3161 = vpop.f32.mrf.mxu0
      %v3162 = vadd.f32 0.0, %v3161
      %v3163 = vpop.f32.mrf.mxu0
      %3164 = vmatprep.mubr.f32.mxu0 0.0
      %3165 = vmatmul.mubr.f32.gmra.mxu0 %v1257
      %v3166 = vpop.f32.mrf.mxu0
      %v3167 = vadd.f32 0.0, %v3166
      %v3168 = vpop.f32.mrf.mxu0
      %3169 = vmatprep.mubr.f32.mxu0 0.0
      %3170 = vmatmul.mubr.f32.gmra.mxu0 %v1260
      %v3171 = vpop.f32.mrf.mxu0
      %v3172 = vadd.f32 0.0, %v3171
      %v3173 = vpop.f32.mrf.mxu0
      %3174 = vmatprep.mubr.f32.mxu0 0.0
      %3175 = vmatmul.mubr.f32.gmra.mxu0 %v1262
      %v3176 = vpop.f32.mrf.mxu0
      %v3177 = vadd.f32 0.0, %v3176
      %v3178 = vpop.f32.mrf.mxu0
      %3179 = vmatprep.mubr.f32.mxu0 0.0
      %3180 = vmatmul.mubr.f32.gmra.mxu0 %v1265
      %v3181 = vpop.f32.mrf.mxu0
      %v3182 = vadd.f32 0.0, %v3181
      %v3183 = vpop.f32.mrf.mxu0
      %3184 = vmatprep.mubr.f32.mxu0 0.0
      %3185 = vmatmul.mubr.f32.gmra.mxu0 %v1267
      %v3186 = vpop.f32.mrf.mxu0
      %v3187 = vadd.f32 0.0, %v3186
      %v3188 = vpop.f32.mrf.mxu0
      %3189 = vmatprep.mubr.f32.mxu0 0.0
      %3190 = vmatmul.mubr.f32.gmra.mxu0 %v1270
      %v3191 = vpop.f32.mrf.mxu0
      %v3192 = vadd.f32 0.0, %v3191
      %v3193 = vpop.f32.mrf.mxu0
      %3194 = vmatprep.mubr.f32.mxu0 0.0
      %3195 = vmatmul.mubr.f32.gmra.mxu0 %v1272
      %v3196 = vpop.f32.mrf.mxu0
      %v3197 = vadd.f32 0.0, %v3196
      %v3198 = vpop.f32.mrf.mxu0
      %3199 = vmatprep.mubr.f32.mxu0 0.0
      %3200 = vmatmul.mubr.f32.gmra.mxu0 %v1275
      %v3201 = vpop.f32.mrf.mxu0
      %v3202 = vadd.f32 0.0, %v3201
      %v3203 = vpop.f32.mrf.mxu0
      %3204 = vmatprep.mubr.f32.mxu0 0.0
      %3205 = vmatmul.mubr.f32.gmra.mxu0 %v1277
      %v3206 = vpop.f32.mrf.mxu0
      %v3207 = vadd.f32 0.0, %v3206
      %v3208 = vpop.f32.mrf.mxu0
      %3209 = vmatprep.mubr.f32.mxu0 0.0
      %3210 = vmatmul.mubr.f32.gmra.mxu0 %v2144
      %v3211 = vpop.f32.mrf.mxu0
      %v3212 = vadd.f32 0.0, %v3211
      %v3213 = vpop.f32.mrf.mxu0
      %3214 = vmatprep.mubr.f32.mxu0 0.0
      %3215 = vmatmul.mubr.f32.gmra.mxu0 %v2146
      %v3216 = vpop.f32.mrf.mxu0
      %v3217 = vadd.f32 0.0, %v3216
      %v3218 = vpop.f32.mrf.mxu0
      %3219 = vmatprep.mubr.f32.mxu0 0.0
      %3220 = vmatmul.mubr.f32.gmra.mxu0 %v2983
      %v3221 = vpop.f32.mrf.mxu0
      %v3222 = vadd.f32 0.0, %v3221
      %v3223 = vpop.f32.mrf.mxu0
      %3224 = vmatprep.mubr.f32.mxu0 0.0
      %3225 = vmatmul.mubr.f32.gmra.mxu0 %v2985
      %v3226 = vpop.f32.mrf.mxu0
      %v3227 = vadd.f32 0.0, %v3226
      %v3228 = vpop.f32.mrf.mxu0
      %3229 = vdwg.mxu0
      %v3230 = vadd.f32 %v2949, %v3072
      %v3231 = vadd.f32 %v2950, %v3077
      %v3232 = vadd.f32 %v2951, %v3082
      %v3233 = vadd.f32 %v2952, %v3087
      %v3234 = vadd.f32 %v2953, %v3092
      %v3235 = vadd.f32 %v2954, %v3097
      %v3236 = vadd.f32 %v2955, %v3102
      %v3237 = vadd.f32 %v2956, %v3107
      %v3238 = vadd.f32 %v2957, %v3112
      %v3239 = vadd.f32 %v2958, %v3117
      %v3240 = vadd.f32 %v2959, %v3122
      %v3241 = vadd.f32 %v2960, %v3127
      %v3242 = vadd.f32 %v2961, %v3132
      %v3243 = vadd.f32 %v2962, %v3137
      %v3244 = vadd.f32 %v2963, %v3142
      %v3245 = vadd.f32 %v2964, %v3147
      %v3246 = vadd.f32 %v2965, %v3152
      %v3247 = vadd.f32 %v2966, %v3157
      %v3248 = vadd.f32 %v2967, %v3162
      %v3249 = vadd.f32 %v2968, %v3167
      %v3250 = vadd.f32 %v2969, %v3172
      %v3251 = vadd.f32 %v2970, %v3177
      %v3252 = vadd.f32 %v2971, %v3182
      %v3253 = vadd.f32 %v2972, %v3187
      %v3254 = vadd.f32 %v2973, %v3192
      %v3255 = vadd.f32 %v2974, %v3197
      %v3256 = vadd.f32 %v2975, %v3202
      %v3257 = vadd.f32 %v2976, %v3207
      %v3258 = vadd.f32 %v2977, %v3212
      %v3259 = vadd.f32 %v2978, %v3217
      %v3260 = vadd.f32 %v2979, %v3222
      %v3261 = vadd.f32 %v2980, %v3227
      %3262 = vst [vmem:[%s262] sm:$0xff] %v3230
      %3263 = vst [vmem:[%s262 + $0x8] sm:$0xff] %v3231
      %3264 = vst [vmem:[%s262 + $0x10] sm:$0xff] %v3232
      %3265 = vst [vmem:[%s262 + $0x18] sm:$0xff] %v3233
      %3266 = vst [vmem:[%s262 + $0x20] sm:$0xff] %v3234
      %3267 = vst [vmem:[%s262 + $0x28] sm:$0xff] %v3235
      %3268 = vst [vmem:[%s262 + $0x30] sm:$0xff] %v3236
      %3269 = vst [vmem:[%s262 + $0x38] sm:$0xff] %v3237
      %3270 = vst [vmem:[%s262 + $0x40] sm:$0xff] %v3238
      %3271 = vst [vmem:[%s262 + $0x48] sm:$0xff] %v3239
      %3272 = vst [vmem:[%s262 + $0x50] sm:$0xff] %v3240
      %3273 = vst [vmem:[%s262 + $0x58] sm:$0xff] %v3241
      %3274 = vst [vmem:[%s262 + $0x60] sm:$0xff] %v3242
      %3275 = vst [vmem:[%s262 + $0x68] sm:$0xff] %v3243
      %3276 = vst [vmem:[%s262 + $0x70] sm:$0xff] %v3244
      %3277 = vst [vmem:[%s262 + $0x78] sm:$0xff] %v3245
      %3278 = vst [vmem:[%s262 + $0x80] sm:$0xff] %v3246
      %3279 = vst [vmem:[%s262 + $0x88] sm:$0xff] %v3247
      %3280 = vst [vmem:[%s262 + $0x90] sm:$0xff] %v3248
      %3281 = vst [vmem:[%s262 + $0x98] sm:$0xff] %v3249
      %3282 = vst [vmem:[%s262 + $0xa0] sm:$0xff] %v3250
      %3283 = vst [vmem:[%s262 + $0xa8] sm:$0xff] %v3251
      %3284 = vst [vmem:[%s262 + $0xb0] sm:$0xff] %v3252
      %3285 = vst [vmem:[%s262 + $0xb8] sm:$0xff] %v3253
      %3286 = vst [vmem:[%s262 + $0xc0] sm:$0xff] %v3254
      %3287 = vst [vmem:[%s262 + $0xc8] sm:$0xff] %v3255
      %3288 = vst [vmem:[%s262 + $0xd0] sm:$0xff] %v3256
      %3289 = vst [vmem:[%s262 + $0xd8] sm:$0xff] %v3257
      %3290 = vst [vmem:[%s262 + $0xe0] sm:$0xff] %v3258
      %3291 = vst [vmem:[%s262 + $0xe8] sm:$0xff] %v3259
      %3292 = vst [vmem:[%s262 + $0xf0] sm:$0xff] %v3260
      %3293 = vst [vmem:[%s262 + $0xf8] sm:$0xff] %v3261
      %v3294 = vadd.f32 %v3230, %v3231
      %v3295 = vadd.f32 %v3294, %v3232
      %v3296 = vadd.f32 %v3295, %v3233
      %v3297 = vadd.f32 %v3296, %v3234
      %v3298 = vadd.f32 %v3297, %v3235
      %v3299 = vadd.f32 %v3298, %v3236
      %v3300 = vadd.f32 %v3299, %v3237
      %v3301 = vadd.f32 %v3300, %v3238
      %v3302 = vadd.f32 %v3301, %v3239
      %v3303 = vadd.f32 %v3302, %v3240
      %v3304 = vadd.f32 %v3303, %v3241
      %v3305 = vadd.f32 %v3304, %v3242
      %v3306 = vadd.f32 %v3305, %v3243
      %v3307 = vadd.f32 %v3306, %v3244
      %v3308 = vadd.f32 %v3307, %v3245
      %v3309 = vadd.f32 %v3308, %v3246
      %v3310 = vadd.f32 %v3309, %v3247
      %v3311 = vadd.f32 %v3310, %v3248
      %v3312 = vadd.f32 %v3311, %v3249
      %v3313 = vadd.f32 %v3312, %v3250
      %v3314 = vadd.f32 %v3313, %v3251
      %v3315 = vadd.f32 %v3314, %v3252
      %v3316 = vadd.f32 %v3315, %v3253
      %v3317 = vadd.f32 %v3316, %v3254
      %v3318 = vadd.f32 %v3317, %v3255
      %v3319 = vadd.f32 %v3318, %v3256
      %v3320 = vadd.f32 %v3319, %v3257
      %v3321 = vadd.f32 %v3320, %v3258
      %v3322 = vadd.f32 %v3321, %v3259
      %v3323 = vadd.f32 %v3322, %v3260
      %v3324 = vadd.f32 %v3323, %v3261
      %v3325 = vrot.slane %v3324, 4
      %v3326 = vadd.f32 %v3324, %v3325
      %v3327 = vrot.slane %v3326, 2
      %v3328 = vadd.f32 %v3326, %v3327
      %v3329 = vrot.slane %v3328, 1
      %v3330 = vadd.f32 %v3328, %v3329
      %3331 = vst [vmem:[%s266] sm:$0x1] %v3330
      %v3332 = vmul.f32 %v3230, %v3230
      %v3333 = vmul.f32 %v3231, %v3231
      %v3334 = vmul.f32 %v3232, %v3232
      %v3335 = vmul.f32 %v3233, %v3233
      %v3336 = vmul.f32 %v3234, %v3234
      %v3337 = vmul.f32 %v3235, %v3235
      %v3338 = vmul.f32 %v3236, %v3236
      %v3339 = vmul.f32 %v3237, %v3237
      %v3340 = vmul.f32 %v3238, %v3238
      %v3341 = vmul.f32 %v3239, %v3239
      %v3342 = vmul.f32 %v3240, %v3240
      %v3343 = vmul.f32 %v3241, %v3241
      %v3344 = vmul.f32 %v3242, %v3242
      %v3345 = vmul.f32 %v3243, %v3243
      %v3346 = vmul.f32 %v3244, %v3244
      %v3347 = vmul.f32 %v3245, %v3245
      %v3348 = vmul.f32 %v3246, %v3246
      %v3349 = vmul.f32 %v3247, %v3247
      %v3350 = vmul.f32 %v3248, %v3248
      %v3351 = vmul.f32 %v3249, %v3249
      %v3352 = vmul.f32 %v3250, %v3250
      %v3353 = vmul.f32 %v3251, %v3251
      %v3354 = vmul.f32 %v3252, %v3252
      %v3355 = vmul.f32 %v3253, %v3253
      %v3356 = vmul.f32 %v3254, %v3254
      %v3357 = vmul.f32 %v3255, %v3255
      %v3358 = vmul.f32 %v3256, %v3256
      %v3359 = vmul.f32 %v3257, %v3257
      %v3360 = vmul.f32 %v3258, %v3258
      %v3361 = vmul.f32 %v3259, %v3259
      %v3362 = vmul.f32 %v3260, %v3260
      %v3363 = vmul.f32 %v3261, %v3261
      %v3364 = vadd.f32 %v3332, %v3333
      %v3365 = vadd.f32 %v3364, %v3334
      %v3366 = vadd.f32 %v3365, %v3335
      %v3367 = vadd.f32 %v3366, %v3336
      %v3368 = vadd.f32 %v3367, %v3337
      %v3369 = vadd.f32 %v3368, %v3338
      %v3370 = vadd.f32 %v3369, %v3339
      %v3371 = vadd.f32 %v3370, %v3340
      %v3372 = vadd.f32 %v3371, %v3341
      %v3373 = vadd.f32 %v3372, %v3342
      %v3374 = vadd.f32 %v3373, %v3343
      %v3375 = vadd.f32 %v3374, %v3344
      %v3376 = vadd.f32 %v3375, %v3345
      %v3377 = vadd.f32 %v3376, %v3346
      %v3378 = vadd.f32 %v3377, %v3347
      %v3379 = vadd.f32 %v3378, %v3348
      %v3380 = vadd.f32 %v3379, %v3349
      %v3381 = vadd.f32 %v3380, %v3350
      %v3382 = vadd.f32 %v3381, %v3351
      %v3383 = vadd.f32 %v3382, %v3352
      %v3384 = vadd.f32 %v3383, %v3353
      %v3385 = vadd.f32 %v3384, %v3354
      %v3386 = vadd.f32 %v3385, %v3355
      %v3387 = vadd.f32 %v3386, %v3356
      %v3388 = vadd.f32 %v3387, %v3357
      %v3389 = vadd.f32 %v3388, %v3358
      %v3390 = vadd.f32 %v3389, %v3359
      %v3391 = vadd.f32 %v3390, %v3360
      %v3392 = vadd.f32 %v3391, %v3361
      %v3393 = vadd.f32 %v3392, %v3362
      %v3394 = vadd.f32 %v3393, %v3363
      %v3395 = vrot.slane %v3394, 4
      %v3396 = vadd.f32 %v3394, %v3395
      %v3397 = vrot.slane %v3396, 2
      %v3398 = vadd.f32 %v3396, %v3397
      %v3399 = vrot.slane %v3398, 1
      %v3400 = vadd.f32 %v3398, %v3399
      %3401 = vst [vmem:[%s269] sm:$0x1] %v3400
      %s3402 = smul.u32 32, %s18
      %p3403 = scmp.lt.s32.totalorder %s3402, 63
      %s3404 = scalar_select %p3403, %s3402, 63
      %s3405 = smul.addr %s3404, 8
      %s3406 = scalar_lea.vmem %s4, %s3405
      %p3407 = scmp.lt.s32.totalorder %s18, 1
      %s3408 = scalar_select %p3407, %s18, 1
      %s3409 = scalar_lea.vmem %s5, %s3408
      %p3410 = scmp.lt.s32.totalorder %s18, 1
      %s3411 = scalar_select %p3410, %s18, 1
      %s3412 = scalar_lea.vmem %s6, %s3411
      // Predicated region
      $region37: #{bottleneck_forward.6} parent=35 // pred_check
        %p3413 = pneg %p125
      $region38: #{bottleneck_forward.6} parent=35 // pred_check_branch
        %3415 = sbr.rel (%p3413) target = $region40
      $region39: #{bottleneck_forward.6} parent=35 // pred_region
        %s3416 = smul.u32 32, %s18
      $region40: #{bottleneck_forward.6} parent=35 // pred_fallthru
        _
      // Predicated region
      $region41: #{bottleneck_forward.6} parent=35 // pred_check
        %p3417 = pneg %p151
      $region42: #{bottleneck_forward.6} parent=35 // pred_check_branch
        %3419 = sbr.rel (%p3417) target = $region44
      $region43: #{bottleneck_forward.6} parent=35 // pred_region
        _
      $region44: #{bottleneck_forward.6} parent=35 // pred_fallthru
        _
      // Predicated region
      $region45: #{bottleneck_forward.6} parent=35 // pred_check
        %p3420 = pneg %p177
      $region46: #{bottleneck_forward.6} parent=35 // pred_check_branch
        %3422 = sbr.rel (%p3420) target = $region48
      $region47: #{bottleneck_forward.6} parent=35 // pred_region
        _
      $region48: #{bottleneck_forward.6} parent=35 // pred_fallthru
        _
    $region36: #{bottleneck_forward.6} parent=5 // pred_fallthru
      _
    %p3423 = scmp.le.s32.totalorder 2, %s13
    // Predicated region
    $region49: #{bottleneck_forward.6} parent=5 // pred_check
      %p3424 = pneg %p3423
    $region50: #{bottleneck_forward.6} parent=5 // pred_check_branch
      %3426 = sbr.rel (%p3424) target = $region52
    $region51: #{bottleneck_forward.6} parent=5 // pred_region
      %s3427 = ssub.s32 %s13, 2
      // Predicated region
      $region53: #{bottleneck_forward.6} parent=51 // pred_check
        %p3428 = pneg %p131
      $region54: #{bottleneck_forward.6} parent=51 // pred_check_branch
        %3430 = sbr.rel (%p3428) target = $region56
      $region55: #{bottleneck_forward.6} parent=51 // pred_region
        %s3431 = smul.u32 32, %s19
        %p3432 = scmp.lt.s32.totalorder %s3431, 63
        %s3433 = scalar_select %p3432, %s3431, 63
        %s3434 = smul.addr %s3433, 8
        %s3435 = scalar_lea.vmem %s4, %s3434
      $region56: #{bottleneck_forward.6} parent=51 // pred_fallthru
        _
      // Predicated region
      $region57: #{bottleneck_forward.6} parent=51 // pred_check
        %p3436 = pneg %p157
      $region58: #{bottleneck_forward.6} parent=51 // pred_check_branch
        %3438 = sbr.rel (%p3436) target = $region60
      $region59: #{bottleneck_forward.6} parent=51 // pred_region
        %p3439 = scmp.lt.s32.totalorder %s19, 1
        %s3440 = scalar_select %p3439, %s19, 1
        %s3441 = scalar_lea.vmem %s5, %s3440
      $region60: #{bottleneck_forward.6} parent=51 // pred_fallthru
        _
      // Predicated region
      $region61: #{bottleneck_forward.6} parent=51 // pred_check
        %p3442 = pneg %p183
      $region62: #{bottleneck_forward.6} parent=51 // pred_check_branch
        %3444 = sbr.rel (%p3442) target = $region64
      $region63: #{bottleneck_forward.6} parent=51 // pred_region
        %p3445 = scmp.lt.s32.totalorder %s19, 1
        %s3446 = scalar_select %p3445, %s19, 1
        %s3447 = scalar_lea.vmem %s6, %s3446
      $region64: #{bottleneck_forward.6} parent=51 // pred_fallthru
        _
    $region52: #{bottleneck_forward.6} parent=5 // pred_fallthru
      _
  $region6: #{bottleneck_forward.6} parent=0 // loop_footer
    %s17 = sadd.s32 1, %s13
  $region7: #{bottleneck_forward.6} parent=0 // loop_footer_branch
    %12 = sbr.rel target = $region3
  $region8: #{bottleneck_forward.6} parent=0 // loop_exit
    _

</llo_original>
